<compile_context>
chip_gen: v6e
topology: v6e:2x2x1
jax: 0.10.0
libtpu: 0.0.40
codegen_flags: <defaults>
</compile_context>

<pallas_src>
import jax
import jax.numpy as jnp
from jax import lax
from jax.experimental import pallas as pl
from jax.experimental.pallas import tpu as pltpu

MM_DTYPE = jnp.bfloat16   # MXU operand dtype; accumulation stays f32


def make_dense_block_kernel(H, W, Cin, gc, Cout, relu_slope=0.1,
                            dense_slope=0.2, eps=1e-5):
    HW = H * W
    Ch = gc // 2

    def leaky(v, s):
        return jnp.where(v >= 0, v, v * s)

    def kernel(x_ref,
               w1a_ref, b1a_ref, ga_ref, bta_ref, w2a_ref, b2a_ref,
               wida_ref, bida_ref,
               w1b_ref, b1b_ref, gb_ref, btb_ref, w2b_ref, b2b_ref,
               widb_ref, bidb_ref,
               w3a_ref, w3b_ref, w3c_ref, b3_ref,
               o_ref, pad_ref):

        # Zero the halo'd scratch once; only the interior is rewritten below,
        # so the 1-pixel border stays zero for every conv stage.
        pad_ref[...] = jnp.zeros_like(pad_ref)

        def im2col(feat_hwc, C):
            """feat_hwc: (H, W, C) f32 -> (H*W, 9*C) bf16 im2col patches."""
            pad_ref[1:H + 1, 1:W + 1, :C] = feat_hwc
            cols = []
            for dy in range(3):
                for dx in range(3):
                    cols.append(
                        pad_ref[dy:dy + H, dx:dx + W, :C].reshape(HW, C))
            return jnp.concatenate(cols, axis=-1).astype(MM_DTYPE)

        def dot32(a, w_ref):
            return jnp.dot(a, w_ref[...], preferred_element_type=jnp.float32)

        def hin(out, g_ref, bt_ref):
            # Half-Instance-Norm: normalize first gc//2 channels over H*W.
            o1 = out[:, :Ch]
            o2 = out[:, Ch:]
            mean = jnp.mean(o1, axis=0, keepdims=True)
            var = jnp.mean(jnp.square(o1 - mean), axis=0, keepdims=True)
            o1 = (o1 - mean) * lax.rsqrt(var + eps)
            o1 = o1 * g_ref[...] + bt_ref[...]
            return jnp.concatenate([o1, o2], axis=-1)

        def unet_block(feat_hwc, feat_mm, C,
                       w1_ref, b1_ref, g_ref, bt_ref, w2_ref, b2_ref,
                       wid_ref, bid_ref):
            # conv_1 (3x3) -> HIN on first half -> lrelu(0.1)
            p_in = im2col(feat_hwc, C)                    # reused later by conv3
            out = dot32(p_in, w1_ref) + b1_ref[...]
            out = leaky(hin(out, g_ref, bt_ref), relu_slope)
            # conv_2 (3x3) -> lrelu(0.1)
            p_mid = im2col(out.reshape(H, W, gc), gc)
            out = leaky(dot32(p_mid, w2_ref) + b2_ref[...], relu_slope)
            # identity 1x1 branch added AFTER relu_2 (matches PyTorch order)
            idn = dot32(feat_mm, wid_ref) + bid_ref[...]
            return out + idn, p_in

        x_hwc = x_ref[0].astype(jnp.float32)              # (H, W, Cin)
        x_mm = x_hwc.reshape(HW, Cin).astype(MM_DTYPE)

        # --- UNetConvBlock 1 + outer lrelu(0.2) -> x1 ----------------------
        u1, px = unet_block(x_hwc, x_mm, Cin,
                            w1a_ref, b1a_ref, ga_ref, bta_ref,
                            w2a_ref, b2a_ref, wida_ref, bida_ref)
        x1 = leaky(u1, dense_slope)                       # (HW, gc) f32

        # --- UNetConvBlock 2 + outer lrelu(0.2) -> x2 ----------------------
        u2, px1 = unet_block(x1.reshape(H, W, gc), x1.astype(MM_DTYPE), gc,
                             w1b_ref, b1b_ref, gb_ref, btb_ref,
                             w2b_ref, b2b_ref, widb_ref, bidb_ref)
        x2 = leaky(u2, dense_slope)                       # (HW, gc) f32

        # --- conv3 over concat([x, x1, x2]) as three partial dots ----------
        px2 = im2col(x2.reshape(H, W, gc), gc)
        y = (dot32(px, w3a_ref) + dot32(px1, w3b_ref) + dot32(px2, w3c_ref)
             + b3_ref[...])
        y = leaky(y, dense_slope)                         # (HW, Cout)

        o_ref[0] = y.reshape(H, W, Cout).astype(o_ref.dtype)

    return kernel


def dense_block(x, params):
    """x: (N, H, W, Cin) float32, NHWC.  Returns (N, H, W, Cout)."""
    N, H, W_, Cin = x.shape
    gc = params["c1"]["w1"].shape[-1]
    Cout = params["w3"].shape[-1]

    def flat3(w):      # (9, Ci, Co) -> (9*Ci, Co) bf16 (im2col-matched layout)
        return w.reshape(-1, w.shape[-1]).astype(MM_DTYPE)

    def row(b):        # (C,) -> (1, C) f32
        return b.reshape(1, -1).astype(jnp.float32)

    c1, c2, w3 = params["c1"], params["c2"], params["w3"]
    weight_args = [
        flat3(c1["w1"]), row(c1["b1"]), row(c1["gamma"]), row(c1["beta"]),
        flat3(c1["w2"]), row(c1["b2"]),
        c1["wid"].astype(MM_DTYPE), row(c1["bid"]),
        flat3(c2["w1"]), row(c2["b1"]), row(c2["gamma"]), row(c2["beta"]),
        flat3(c2["w2"]), row(c2["b2"]),
        c2["wid"].astype(MM_DTYPE), row(c2["bid"]),
        flat3(w3[:, :Cin, :]),
        flat3(w3[:, Cin:Cin + gc, :]),
        flat3(w3[:, Cin + gc:, :]),
        row(params["b3"]),
    ]

    in_specs = [pl.BlockSpec((1, H, W_, Cin), lambda n: (n, 0, 0, 0))]
    in_specs += [pl.BlockSpec(a.shape, lambda n: (0, 0)) for a in weight_args]

    kernel = make_dense_block_kernel(H, W_, Cin, gc, Cout)
    cpad = max(Cin, gc)

    return pl.pallas_call(
        kernel,
        out_shape=jax.ShapeDtypeStruct((N, H, W_, Cout), x.dtype),
        grid=(N,),
        in_specs=in_specs,
        out_specs=pl.BlockSpec((1, H, W_, Cout), lambda n: (n, 0, 0, 0)),
        scratch_shapes=[pltpu.VMEM((H + 2, W_ + 2, cpad), jnp.float32)],
        compiler_params=pltpu.CompilerParams(
            dimension_semantics=("parallel",)),
    )(x, *weight_args)


# ---------------- deterministic parameter init (xavier_normal * 0.1) ----------
def _xavier(key, shape, fan_in, fan_out, scale=0.1):
    std = (2.0 / (fan_in + fan_out)) ** 0.5
    return jax.random.normal(key, shape, jnp.float32) * std * scale


def init_unet_params(key, cin, cout):
    k0, k1, k2 = jax.random.split(key, 3)
    return dict(
        w1=_xavier(k0, (9, cin, cout), cin * 9, cout * 9),
        b1=jnp.zeros((cout,), jnp.float32),
        w2=_xavier(k1, (9, cout, cout), cout * 9, cout * 9),
        b2=jnp.zeros((cout,), jnp.float32),
        wid=_xavier(k2, (cin, cout), cin, cout),
        bid=jnp.zeros((cout,), jnp.float32),
        # InstanceNorm2d(affine=True) defaults: gamma=1, beta=0
        gamma=jnp.ones((cout // 2,), jnp.float32),
        beta=jnp.zeros((cout // 2,), jnp.float32),
    )


def init_dense_block_params(key, channel_in, channel_out, gc=16):
    k1, k2, k3 = jax.random.split(key, 3)
    cin3 = channel_in + 2 * gc
    return dict(
        c1=init_unet_params(k1, channel_in, gc),
        c2=init_unet_params(k2, gc, gc),
        w3=_xavier(k3, (9, cin3, channel_out), cin3 * 9, channel_out * 9),
        b3=jnp.zeros((channel_out,), jnp.float32),
    )


if __name__ == "__main__":
    key = jax.random.PRNGKey(0)
    kx, kp = jax.random.split(key)

    batch, channel_in, channel_out, gc, spatial = 2, 4, 4, 16, 16
    # NHWC input (equivalent to PyTorch NCHW [2, 4, 16, 16])
    x = jax.random.normal(kx, (batch, spatial, spatial, channel_in), jnp.float32)
    params = init_dense_block_params(kp, channel_in, channel_out, gc=gc)

    out = jax.jit(dense_block)(x, params)
    out = jax.block_until_ready(out)
    assert out.shape == (batch, spatial, spatial, channel_out)
    print("KERNEL_OK")
</pallas_src>

<mosaic_0001>
module attributes {stable_mosaic.version = 11 : i64} {
  func.func @kernel(%arg0: i32, %arg1: memref<1x16x16x4xf32, #tpu.memory_space<vmem>>, %arg2: memref<36x16xbf16, #tpu.memory_space<vmem>>, %arg3: memref<1x16xf32, #tpu.memory_space<vmem>>, %arg4: memref<1x8xf32, #tpu.memory_space<vmem>>, %arg5: memref<1x8xf32, #tpu.memory_space<vmem>>, %arg6: memref<144x16xbf16, #tpu.memory_space<vmem>>, %arg7: memref<1x16xf32, #tpu.memory_space<vmem>>, %arg8: memref<4x16xbf16, #tpu.memory_space<vmem>>, %arg9: memref<1x16xf32, #tpu.memory_space<vmem>>, %arg10: memref<144x16xbf16, #tpu.memory_space<vmem>>, %arg11: memref<1x16xf32, #tpu.memory_space<vmem>>, %arg12: memref<1x8xf32, #tpu.memory_space<vmem>>, %arg13: memref<1x8xf32, #tpu.memory_space<vmem>>, %arg14: memref<144x16xbf16, #tpu.memory_space<vmem>>, %arg15: memref<1x16xf32, #tpu.memory_space<vmem>>, %arg16: memref<16x16xbf16, #tpu.memory_space<vmem>>, %arg17: memref<1x16xf32, #tpu.memory_space<vmem>>, %arg18: memref<36x4xbf16, #tpu.memory_space<vmem>>, %arg19: memref<144x4xbf16, #tpu.memory_space<vmem>>, %arg20: memref<144x4xbf16, #tpu.memory_space<vmem>>, %arg21: memref<1x4xf32, #tpu.memory_space<vmem>>, %arg22: memref<1x16x16x4xf32, #tpu.memory_space<vmem>>, %arg23: memref<18x18x16xf32, #tpu.memory_space<vmem>>) attributes {dimension_semantics = [#tpu.dimension_semantics<parallel>], iteration_bounds = array<i64: 2>, scalar_prefetch = 0 : i64, scratch_operands = 1 : i64, tpu.core_type = #tpu.core_type<tc>, window_params = [{transform_indices = @transform_0, window_bounds = array<i64: 1, 16, 16, 4>}, {pipeline_mode = #tpu.pipeline_mode<synchronous>, transform_indices = @transform_1, window_bounds = array<i64: 36, 16>}, {pipeline_mode = #tpu.pipeline_mode<synchronous>, transform_indices = @transform_2, window_bounds = array<i64: 1, 16>}, {pipeline_mode = #tpu.pipeline_mode<synchronous>, transform_indices = @transform_3, window_bounds = array<i64: 1, 8>}, {pipeline_mode = #tpu.pipeline_mode<synchronous>, transform_indices = @transform_4, window_bounds = array<i64: 1, 8>}, {pipeline_mode = #tpu.pipeline_mode<synchronous>, transform_indices = @transform_5, window_bounds = array<i64: 144, 16>}, {pipeline_mode = #tpu.pipeline_mode<synchronous>, transform_indices = @transform_6, window_bounds = array<i64: 1, 16>}, {pipeline_mode = #tpu.pipeline_mode<synchronous>, transform_indices = @transform_7, window_bounds = array<i64: 4, 16>}, {pipeline_mode = #tpu.pipeline_mode<synchronous>, transform_indices = @transform_8, window_bounds = array<i64: 1, 16>}, {pipeline_mode = #tpu.pipeline_mode<synchronous>, transform_indices = @transform_9, window_bounds = array<i64: 144, 16>}, {pipeline_mode = #tpu.pipeline_mode<synchronous>, transform_indices = @transform_10, window_bounds = array<i64: 1, 16>}, {pipeline_mode = #tpu.pipeline_mode<synchronous>, transform_indices = @transform_11, window_bounds = array<i64: 1, 8>}, {pipeline_mode = #tpu.pipeline_mode<synchronous>, transform_indices = @transform_12, window_bounds = array<i64: 1, 8>}, {pipeline_mode = #tpu.pipeline_mode<synchronous>, transform_indices = @transform_13, window_bounds = array<i64: 144, 16>}, {pipeline_mode = #tpu.pipeline_mode<synchronous>, transform_indices = @transform_14, window_bounds = array<i64: 1, 16>}, {pipeline_mode = #tpu.pipeline_mode<synchronous>, transform_indices = @transform_15, window_bounds = array<i64: 16, 16>}, {pipeline_mode = #tpu.pipeline_mode<synchronous>, transform_indices = @transform_16, window_bounds = array<i64: 1, 16>}, {pipeline_mode = #tpu.pipeline_mode<synchronous>, transform_indices = @transform_17, window_bounds = array<i64: 36, 4>}, {pipeline_mode = #tpu.pipeline_mode<synchronous>, transform_indices = @transform_18, window_bounds = array<i64: 144, 4>}, {pipeline_mode = #tpu.pipeline_mode<synchronous>, transform_indices = @transform_19, window_bounds = array<i64: 144, 4>}, {pipeline_mode = #tpu.pipeline_mode<synchronous>, transform_indices = @transform_20, window_bounds = array<i64: 1, 4>}, {transform_indices = @transform_21, window_bounds = array<i64: 1, 16, 16, 4>}]} {
    %cst = arith.constant 0.000000e+00 : f32
    %0 = vector.broadcast %cst : f32 to vector<18x18x16xf32>
    %c0 = arith.constant 0 : index
    %c0_0 = arith.constant 0 : index
    %c0_1 = arith.constant 0 : index
    %1 = vector.load %arg23[%c0, %c0_0, %c0_1] : memref<18x18x16xf32, #tpu.memory_space<vmem>>, vector<18x18x16xf32>
    tpu.vector_store %arg23[%c0, %c0_0, %c0_1], %0 {strides = array<i32>} : memref<18x18x16xf32, #tpu.memory_space<vmem>>, vector<18x18x16xf32>,
    %c0_2 = arith.constant 0 : index
    %c0_3 = arith.constant 0 : index
    %c0_4 = arith.constant 0 : index
    %c0_5 = arith.constant 0 : index
    %2 = vector.load %arg1[%c0_2, %c0_3, %c0_4, %c0_5] : memref<1x16x16x4xf32, #tpu.memory_space<vmem>>, vector<1x16x16x4xf32>
    %3 = vector.shape_cast %2 : vector<1x16x16x4xf32> to vector<16x16x4xf32>
    %4 = vector.shape_cast %3 : vector<16x16x4xf32> to vector<256x4xf32>
    %5 = arith.truncf %4 : vector<256x4xf32> to vector<256x4xbf16>
    %c1 = arith.constant 1 : index
    %c1_6 = arith.constant 1 : index
    %c0_7 = arith.constant 0 : index
    %6 = vector.load %arg23[%c1, %c1_6, %c0_7] : memref<18x18x16xf32, #tpu.memory_space<vmem>>, vector<16x16x4xf32>
    tpu.vector_store %arg23[%c1, %c1_6, %c0_7], %3 {strides = array<i32>} : memref<18x18x16xf32, #tpu.memory_space<vmem>>, vector<16x16x4xf32>,
    %c0_8 = arith.constant 0 : index
    %c0_9 = arith.constant 0 : index
    %c0_10 = arith.constant 0 : index
    %7 = vector.load %arg23[%c0_8, %c0_9, %c0_10] : memref<18x18x16xf32, #tpu.memory_space<vmem>>, vector<16x16x4xf32>
    %8 = vector.shape_cast %7 : vector<16x16x4xf32> to vector<256x4xf32>
    %c0_11 = arith.constant 0 : index
    %c1_12 = arith.constant 1 : index
    %c0_13 = arith.constant 0 : index
    %9 = vector.load %arg23[%c0_11, %c1_12, %c0_13] : memref<18x18x16xf32, #tpu.memory_space<vmem>>, vector<16x16x4xf32>
    %10 = vector.shape_cast %9 : vector<16x16x4xf32> to vector<256x4xf32>
    %c0_14 = arith.constant 0 : index
    %c2 = arith.constant 2 : index
    %c0_15 = arith.constant 0 : index
    %11 = vector.load %arg23[%c0_14, %c2, %c0_15] : memref<18x18x16xf32, #tpu.memory_space<vmem>>, vector<16x16x4xf32>
    %12 = vector.shape_cast %11 : vector<16x16x4xf32> to vector<256x4xf32>
    %c1_16 = arith.constant 1 : index
    %c0_17 = arith.constant 0 : index
    %c0_18 = arith.constant 0 : index
    %13 = vector.load %arg23[%c1_16, %c0_17, %c0_18] : memref<18x18x16xf32, #tpu.memory_space<vmem>>, vector<16x16x4xf32>
    %14 = vector.shape_cast %13 : vector<16x16x4xf32> to vector<256x4xf32>
    %c1_19 = arith.constant 1 : index
    %c1_20 = arith.constant 1 : index
    %c0_21 = arith.constant 0 : index
    %15 = vector.load %arg23[%c1_19, %c1_20, %c0_21] : memref<18x18x16xf32, #tpu.memory_space<vmem>>, vector<16x16x4xf32>
    %16 = vector.shape_cast %15 : vector<16x16x4xf32> to vector<256x4xf32>
    %c1_22 = arith.constant 1 : index
    %c2_23 = arith.constant 2 : index
    %c0_24 = arith.constant 0 : index
    %17 = vector.load %arg23[%c1_22, %c2_23, %c0_24] : memref<18x18x16xf32, #tpu.memory_space<vmem>>, vector<16x16x4xf32>
    %18 = vector.shape_cast %17 : vector<16x16x4xf32> to vector<256x4xf32>
    %c2_25 = arith.constant 2 : index
    %c0_26 = arith.constant 0 : index
    %c0_27 = arith.constant 0 : index
    %19 = vector.load %arg23[%c2_25, %c0_26, %c0_27] : memref<18x18x16xf32, #tpu.memory_space<vmem>>, vector<16x16x4xf32>
    %20 = vector.shape_cast %19 : vector<16x16x4xf32> to vector<256x4xf32>
    %c2_28 = arith.constant 2 : index
    %c1_29 = arith.constant 1 : index
    %c0_30 = arith.constant 0 : index
    %21 = vector.load %arg23[%c2_28, %c1_29, %c0_30] : memref<18x18x16xf32, #tpu.memory_space<vmem>>, vector<16x16x4xf32>
    %22 = vector.shape_cast %21 : vector<16x16x4xf32> to vector<256x4xf32>
    %c2_31 = arith.constant 2 : index
    %c2_32 = arith.constant 2 : index
    %c0_33 = arith.constant 0 : index
    %23 = vector.load %arg23[%c2_31, %c2_32, %c0_33] : memref<18x18x16xf32, #tpu.memory_space<vmem>>, vector<16x16x4xf32>
    %24 = vector.shape_cast %23 : vector<16x16x4xf32> to vector<256x4xf32>
    %25 = tpu.concatenate %8, %10, %12, %14, %16, %18, %20, %22, %24 in 1 : vector<256x4xf32>, vector<256x4xf32>, vector<256x4xf32>, vector<256x4xf32>, vector<256x4xf32>, vector<256x4xf32>, vector<256x4xf32>, vector<256x4xf32>, vector<256x4xf32> -> vector<256x36xf32>
    %26 = arith.truncf %25 : vector<256x36xf32> to vector<256x36xbf16>
    %c0_34 = arith.constant 0 : index
    %c0_35 = arith.constant 0 : index
    %27 = vector.load %arg2[%c0_34, %c0_35] : memref<36x16xbf16, #tpu.memory_space<vmem>>, vector<36x16xbf16>
    %cst_36 = arith.constant dense<0.000000e+00> : vector<256x16xf32>
    %28 = tpu.matmul %26, %27, %cst_36 {dimension_numbers = #tpu.dot_dimension_numbers<[1], [0], [0], [1], [0, 0, 1, 1], [], []>} : vector<256x36xbf16>, vector<36x16xbf16>, vector<256x16xf32> -> vector<256x16xf32>
    %c0_37 = arith.constant 0 : index
    %c0_38 = arith.constant 0 : index
    %29 = vector.load %arg3[%c0_37, %c0_38] : memref<1x16xf32, #tpu.memory_space<vmem>>, vector<1x16xf32>
    %30 = vector.broadcast %29 : vector<1x16xf32> to vector<256x16xf32>
    %31 = arith.addf %28, %30 : vector<256x16xf32>
    %32 = vector.extract_strided_slice %31 {offsets = [0, 0], sizes = [256, 8], strides = [1, 1]} : vector<256x16xf32> to vector<256x8xf32>
    %33 = vector.extract_strided_slice %31 {offsets = [0, 8], sizes = [256, 8], strides = [1, 1]} : vector<256x16xf32> to vector<256x8xf32>
    %cst_39 = arith.constant dense<0.000000e+00> : vector<8xf32>
    %34 = vector.multi_reduction <add>, %32, %cst_39 [0] : vector<256x8xf32> to vector<8xf32>
    %35 = vector.shape_cast %34 : vector<8xf32> to vector<1x8xf32>
    %cst_40 = arith.constant 2.560000e+02 : f32
    %36 = vector.broadcast %cst_40 : f32 to vector<1x8xf32>
    %37 = arith.divf %35, %36 : vector<1x8xf32>
    %38 = vector.broadcast %37 : vector<1x8xf32> to vector<256x8xf32>
    %39 = arith.subf %32, %38 : vector<256x8xf32>
    %40 = arith.mulf %39, %39 : vector<256x8xf32>
    %cst_41 = arith.constant dense<0.000000e+00> : vector<8xf32>
    %41 = vector.multi_reduction <add>, %40, %cst_41 [0] : vector<256x8xf32> to vector<8xf32>
    %42 = vector.shape_cast %41 : vector<8xf32> to vector<1x8xf32>
    %cst_42 = arith.constant 2.560000e+02 : f32
    %43 = vector.broadcast %cst_42 : f32 to vector<1x8xf32>
    %44 = arith.divf %42, %43 : vector<1x8xf32>
    %45 = vector.broadcast %37 : vector<1x8xf32> to vector<256x8xf32>
    %46 = arith.subf %32, %45 : vector<256x8xf32>
    %cst_43 = arith.constant 9.99999974E-6 : f32
    %47 = vector.broadcast %cst_43 : f32 to vector<1x8xf32>
    %48 = arith.addf %44, %47 : vector<1x8xf32>
    %49 = math.rsqrt %48 : vector<1x8xf32>
    %50 = vector.broadcast %49 : vector<1x8xf32> to vector<256x8xf32>
    %51 = arith.mulf %46, %50 : vector<256x8xf32>
    %c0_44 = arith.constant 0 : index
    %c0_45 = arith.constant 0 : index
    %52 = vector.load %arg4[%c0_44, %c0_45] : memref<1x8xf32, #tpu.memory_space<vmem>>, vector<1x8xf32>
    %53 = vector.broadcast %52 : vector<1x8xf32> to vector<256x8xf32>
    %54 = arith.mulf %51, %53 : vector<256x8xf32>
    %c0_46 = arith.constant 0 : index
    %c0_47 = arith.constant 0 : index
    %55 = vector.load %arg5[%c0_46, %c0_47] : memref<1x8xf32, #tpu.memory_space<vmem>>, vector<1x8xf32>
    %56 = vector.broadcast %55 : vector<1x8xf32> to vector<256x8xf32>
    %57 = arith.addf %54, %56 : vector<256x8xf32>
    %58 = tpu.concatenate %57, %33 in 1 : vector<256x8xf32>, vector<256x8xf32> -> vector<256x16xf32>
    %cst_48 = arith.constant 0.000000e+00 : f32
    %59 = vector.broadcast %cst_48 : f32 to vector<256x16xf32>
    %60 = arith.cmpf oge, %58, %59 : vector<256x16xf32>
    %cst_49 = arith.constant 1.000000e-01 : f32
    %61 = vector.broadcast %cst_49 : f32 to vector<256x16xf32>
    %62 = arith.mulf %58, %61 : vector<256x16xf32>
    %63 = arith.select %60, %58, %62 : vector<256x16xi1>, vector<256x16xf32>
    %64 = vector.shape_cast %63 : vector<256x16xf32> to vector<16x16x16xf32>
    %c1_50 = arith.constant 1 : index
    %c1_51 = arith.constant 1 : index
    %c0_52 = arith.constant 0 : index
    %65 = vector.load %arg23[%c1_50, %c1_51, %c0_52] : memref<18x18x16xf32, #tpu.memory_space<vmem>>, vector<16x16x16xf32>
    tpu.vector_store %arg23[%c1_50, %c1_51, %c0_52], %64 {strides = array<i32>} : memref<18x18x16xf32, #tpu.memory_space<vmem>>, vector<16x16x16xf32>,
    %c0_53 = arith.constant 0 : index
    %c0_54 = arith.constant 0 : index
    %c0_55 = arith.constant 0 : index
    %66 = vector.load %arg23[%c0_53, %c0_54, %c0_55] : memref<18x18x16xf32, #tpu.memory_space<vmem>>, vector<16x16x16xf32>
    %67 = vector.shape_cast %66 : vector<16x16x16xf32> to vector<256x16xf32>
    %c0_56 = arith.constant 0 : index
    %c1_57 = arith.constant 1 : index
    %c0_58 = arith.constant 0 : index
    %68 = vector.load %arg23[%c0_56, %c1_57, %c0_58] : memref<18x18x16xf32, #tpu.memory_space<vmem>>, vector<16x16x16xf32>
    %69 = vector.shape_cast %68 : vector<16x16x16xf32> to vector<256x16xf32>
    %c0_59 = arith.constant 0 : index
    %c2_60 = arith.constant 2 : index
    %c0_61 = arith.constant 0 : index
    %70 = vector.load %arg23[%c0_59, %c2_60, %c0_61] : memref<18x18x16xf32, #tpu.memory_space<vmem>>, vector<16x16x16xf32>
    %71 = vector.shape_cast %70 : vector<16x16x16xf32> to vector<256x16xf32>
    %c1_62 = arith.constant 1 : index
    %c0_63 = arith.constant 0 : index
    %c0_64 = arith.constant 0 : index
    %72 = vector.load %arg23[%c1_62, %c0_63, %c0_64] : memref<18x18x16xf32, #tpu.memory_space<vmem>>, vector<16x16x16xf32>
    %73 = vector.shape_cast %72 : vector<16x16x16xf32> to vector<256x16xf32>
    %c1_65 = arith.constant 1 : index
    %c1_66 = arith.constant 1 : index
    %c0_67 = arith.constant 0 : index
    %74 = vector.load %arg23[%c1_65, %c1_66, %c0_67] : memref<18x18x16xf32, #tpu.memory_space<vmem>>, vector<16x16x16xf32>
    %75 = vector.shape_cast %74 : vector<16x16x16xf32> to vector<256x16xf32>
    %c1_68 = arith.constant 1 : index
    %c2_69 = arith.constant 2 : index
    %c0_70 = arith.constant 0 : index
    %76 = vector.load %arg23[%c1_68, %c2_69, %c0_70] : memref<18x18x16xf32, #tpu.memory_space<vmem>>, vector<16x16x16xf32>
    %77 = vector.shape_cast %76 : vector<16x16x16xf32> to vector<256x16xf32>
    %c2_71 = arith.constant 2 : index
    %c0_72 = arith.constant 0 : index
    %c0_73 = arith.constant 0 : index
    %78 = vector.load %arg23[%c2_71, %c0_72, %c0_73] : memref<18x18x16xf32, #tpu.memory_space<vmem>>, vector<16x16x16xf32>
    %79 = vector.shape_cast %78 : vector<16x16x16xf32> to vector<256x16xf32>
    %c2_74 = arith.constant 2 : index
    %c1_75 = arith.constant 1 : index
    %c0_76 = arith.constant 0 : index
    %80 = vector.load %arg23[%c2_74, %c1_75, %c0_76] : memref<18x18x16xf32, #tpu.memory_space<vmem>>, vector<16x16x16xf32>
    %81 = vector.shape_cast %80 : vector<16x16x16xf32> to vector<256x16xf32>
    %c2_77 = arith.constant 2 : index
    %c2_78 = arith.constant 2 : index
    %c0_79 = arith.constant 0 : index
    %82 = vector.load %arg23[%c2_77, %c2_78, %c0_79] : memref<18x18x16xf32, #tpu.memory_space<vmem>>, vector<16x16x16xf32>
    %83 = vector.shape_cast %82 : vector<16x16x16xf32> to vector<256x16xf32>
    %84 = tpu.concatenate %67, %69, %71, %73, %75, %77, %79, %81, %83 in 1 : vector<256x16xf32>, vector<256x16xf32>, vector<256x16xf32>, vector<256x16xf32>, vector<256x16xf32>, vector<256x16xf32>, vector<256x16xf32>, vector<256x16xf32>, vector<256x16xf32> -> vector<256x144xf32>
    %85 = arith.truncf %84 : vector<256x144xf32> to vector<256x144xbf16>
    %c0_80 = arith.constant 0 : index
    %c0_81 = arith.constant 0 : index
    %86 = vector.load %arg6[%c0_80, %c0_81] : memref<144x16xbf16, #tpu.memory_space<vmem>>, vector<144x16xbf16>
    %cst_82 = arith.constant dense<0.000000e+00> : vector<256x16xf32>
    %87 = tpu.matmul %85, %86, %cst_82 {dimension_numbers = #tpu.dot_dimension_numbers<[1], [0], [0], [1], [0, 0, 1, 1], [], []>} : vector<256x144xbf16>, vector<144x16xbf16>, vector<256x16xf32> -> vector<256x16xf32>
    %c0_83 = arith.constant 0 : index
    %c0_84 = arith.constant 0 : index
    %88 = vector.load %arg7[%c0_83, %c0_84] : memref<1x16xf32, #tpu.memory_space<vmem>>, vector<1x16xf32>
    %89 = vector.broadcast %88 : vector<1x16xf32> to vector<256x16xf32>
    %90 = arith.addf %87, %89 : vector<256x16xf32>
    %cst_85 = arith.constant 0.000000e+00 : f32
    %91 = vector.broadcast %cst_85 : f32 to vector<256x16xf32>
    %92 = arith.cmpf oge, %90, %91 : vector<256x16xf32>
    %cst_86 = arith.constant 1.000000e-01 : f32
    %93 = vector.broadcast %cst_86 : f32 to vector<256x16xf32>
    %94 = arith.mulf %90, %93 : vector<256x16xf32>
    %95 = arith.select %92, %90, %94 : vector<256x16xi1>, vector<256x16xf32>
    %c0_87 = arith.constant 0 : index
    %c0_88 = arith.constant 0 : index
    %96 = vector.load %arg8[%c0_87, %c0_88] : memref<4x16xbf16, #tpu.memory_space<vmem>>, vector<4x16xbf16>
    %cst_89 = arith.constant dense<0.000000e+00> : vector<256x16xf32>
    %97 = tpu.matmul %5, %96, %cst_89 {dimension_numbers = #tpu.dot_dimension_numbers<[1], [0], [0], [1], [0, 0, 1, 1], [], []>} : vector<256x4xbf16>, vector<4x16xbf16>, vector<256x16xf32> -> vector<256x16xf32>
    %c0_90 = arith.constant 0 : index
    %c0_91 = arith.constant 0 : index
    %98 = vector.load %arg9[%c0_90, %c0_91] : memref<1x16xf32, #tpu.memory_space<vmem>>, vector<1x16xf32>
    %99 = vector.broadcast %98 : vector<1x16xf32> to vector<256x16xf32>
    %100 = arith.addf %97, %99 : vector<256x16xf32>
    %101 = arith.addf %95, %100 : vector<256x16xf32>
    %cst_92 = arith.constant 0.000000e+00 : f32
    %102 = vector.broadcast %cst_92 : f32 to vector<256x16xf32>
    %103 = arith.cmpf oge, %101, %102 : vector<256x16xf32>
    %cst_93 = arith.constant 2.000000e-01 : f32
    %104 = vector.broadcast %cst_93 : f32 to vector<256x16xf32>
    %105 = arith.mulf %101, %104 : vector<256x16xf32>
    %106 = arith.select %103, %101, %105 : vector<256x16xi1>, vector<256x16xf32>
    %107 = vector.shape_cast %106 : vector<256x16xf32> to vector<16x16x16xf32>
    %108 = arith.truncf %106 : vector<256x16xf32> to vector<256x16xbf16>
    %c1_94 = arith.constant 1 : index
    %c1_95 = arith.constant 1 : index
    %c0_96 = arith.constant 0 : index
    %109 = vector.load %arg23[%c1_94, %c1_95, %c0_96] : memref<18x18x16xf32, #tpu.memory_space<vmem>>, vector<16x16x16xf32>
    tpu.vector_store %arg23[%c1_94, %c1_95, %c0_96], %107 {strides = array<i32>} : memref<18x18x16xf32, #tpu.memory_space<vmem>>, vector<16x16x16xf32>,
    %c0_97 = arith.constant 0 : index
    %c0_98 = arith.constant 0 : index
    %c0_99 = arith.constant 0 : index
    %110 = vector.load %arg23[%c0_97, %c0_98, %c0_99] : memref<18x18x16xf32, #tpu.memory_space<vmem>>, vector<16x16x16xf32>
    %111 = vector.shape_cast %110 : vector<16x16x16xf32> to vector<256x16xf32>
    %c0_100 = arith.constant 0 : index
    %c1_101 = arith.constant 1 : index
    %c0_102 = arith.constant 0 : index
    %112 = vector.load %arg23[%c0_100, %c1_101, %c0_102] : memref<18x18x16xf32, #tpu.memory_space<vmem>>, vector<16x16x16xf32>
    %113 = vector.shape_cast %112 : vector<16x16x16xf32> to vector<256x16xf32>
    %c0_103 = arith.constant 0 : index
    %c2_104 = arith.constant 2 : index
    %c0_105 = arith.constant 0 : index
    %114 = vector.load %arg23[%c0_103, %c2_104, %c0_105] : memref<18x18x16xf32, #tpu.memory_space<vmem>>, vector<16x16x16xf32>
    %115 = vector.shape_cast %114 : vector<16x16x16xf32> to vector<256x16xf32>
    %c1_106 = arith.constant 1 : index
    %c0_107 = arith.constant 0 : index
    %c0_108 = arith.constant 0 : index
    %116 = vector.load %arg23[%c1_106, %c0_107, %c0_108] : memref<18x18x16xf32, #tpu.memory_space<vmem>>, vector<16x16x16xf32>
    %117 = vector.shape_cast %116 : vector<16x16x16xf32> to vector<256x16xf32>
    %c1_109 = arith.constant 1 : index
    %c1_110 = arith.constant 1 : index
    %c0_111 = arith.constant 0 : index
    %118 = vector.load %arg23[%c1_109, %c1_110, %c0_111] : memref<18x18x16xf32, #tpu.memory_space<vmem>>, vector<16x16x16xf32>
    %119 = vector.shape_cast %118 : vector<16x16x16xf32> to vector<256x16xf32>
    %c1_112 = arith.constant 1 : index
    %c2_113 = arith.constant 2 : index
    %c0_114 = arith.constant 0 : index
    %120 = vector.load %arg23[%c1_112, %c2_113, %c0_114] : memref<18x18x16xf32, #tpu.memory_space<vmem>>, vector<16x16x16xf32>
    %121 = vector.shape_cast %120 : vector<16x16x16xf32> to vector<256x16xf32>
    %c2_115 = arith.constant 2 : index
    %c0_116 = arith.constant 0 : index
    %c0_117 = arith.constant 0 : index
    %122 = vector.load %arg23[%c2_115, %c0_116, %c0_117] : memref<18x18x16xf32, #tpu.memory_space<vmem>>, vector<16x16x16xf32>
    %123 = vector.shape_cast %122 : vector<16x16x16xf32> to vector<256x16xf32>
    %c2_118 = arith.constant 2 : index
    %c1_119 = arith.constant 1 : index
    %c0_120 = arith.constant 0 : index
    %124 = vector.load %arg23[%c2_118, %c1_119, %c0_120] : memref<18x18x16xf32, #tpu.memory_space<vmem>>, vector<16x16x16xf32>
    %125 = vector.shape_cast %124 : vector<16x16x16xf32> to vector<256x16xf32>
    %c2_121 = arith.constant 2 : index
    %c2_122 = arith.constant 2 : index
    %c0_123 = arith.constant 0 : index
    %126 = vector.load %arg23[%c2_121, %c2_122, %c0_123] : memref<18x18x16xf32, #tpu.memory_space<vmem>>, vector<16x16x16xf32>
    %127 = vector.shape_cast %126 : vector<16x16x16xf32> to vector<256x16xf32>
    %128 = tpu.concatenate %111, %113, %115, %117, %119, %121, %123, %125, %127 in 1 : vector<256x16xf32>, vector<256x16xf32>, vector<256x16xf32>, vector<256x16xf32>, vector<256x16xf32>, vector<256x16xf32>, vector<256x16xf32>, vector<256x16xf32>, vector<256x16xf32> -> vector<256x144xf32>
    %129 = arith.truncf %128 : vector<256x144xf32> to vector<256x144xbf16>
    %c0_124 = arith.constant 0 : index
    %c0_125 = arith.constant 0 : index
    %130 = vector.load %arg10[%c0_124, %c0_125] : memref<144x16xbf16, #tpu.memory_space<vmem>>, vector<144x16xbf16>
    %cst_126 = arith.constant dense<0.000000e+00> : vector<256x16xf32>
    %131 = tpu.matmul %129, %130, %cst_126 {dimension_numbers = #tpu.dot_dimension_numbers<[1], [0], [0], [1], [0, 0, 1, 1], [], []>} : vector<256x144xbf16>, vector<144x16xbf16>, vector<256x16xf32> -> vector<256x16xf32>
    %c0_127 = arith.constant 0 : index
    %c0_128 = arith.constant 0 : index
    %132 = vector.load %arg11[%c0_127, %c0_128] : memref<1x16xf32, #tpu.memory_space<vmem>>, vector<1x16xf32>
    %133 = vector.broadcast %132 : vector<1x16xf32> to vector<256x16xf32>
    %134 = arith.addf %131, %133 : vector<256x16xf32>
    %135 = vector.extract_strided_slice %134 {offsets = [0, 0], sizes = [256, 8], strides = [1, 1]} : vector<256x16xf32> to vector<256x8xf32>
    %136 = vector.extract_strided_slice %134 {offsets = [0, 8], sizes = [256, 8], strides = [1, 1]} : vector<256x16xf32> to vector<256x8xf32>
    %cst_129 = arith.constant dense<0.000000e+00> : vector<8xf32>
    %137 = vector.multi_reduction <add>, %135, %cst_129 [0] : vector<256x8xf32> to vector<8xf32>
    %138 = vector.shape_cast %137 : vector<8xf32> to vector<1x8xf32>
    %cst_130 = arith.constant 2.560000e+02 : f32
    %139 = vector.broadcast %cst_130 : f32 to vector<1x8xf32>
    %140 = arith.divf %138, %139 : vector<1x8xf32>
    %141 = vector.broadcast %140 : vector<1x8xf32> to vector<256x8xf32>
    %142 = arith.subf %135, %141 : vector<256x8xf32>
    %143 = arith.mulf %142, %142 : vector<256x8xf32>
    %cst_131 = arith.constant dense<0.000000e+00> : vector<8xf32>
    %144 = vector.multi_reduction <add>, %143, %cst_131 [0] : vector<256x8xf32> to vector<8xf32>
    %145 = vector.shape_cast %144 : vector<8xf32> to vector<1x8xf32>
    %cst_132 = arith.constant 2.560000e+02 : f32
    %146 = vector.broadcast %cst_132 : f32 to vector<1x8xf32>
    %147 = arith.divf %145, %146 : vector<1x8xf32>
    %148 = vector.broadcast %140 : vector<1x8xf32> to vector<256x8xf32>
    %149 = arith.subf %135, %148 : vector<256x8xf32>
    %cst_133 = arith.constant 9.99999974E-6 : f32
    %150 = vector.broadcast %cst_133 : f32 to vector<1x8xf32>
    %151 = arith.addf %147, %150 : vector<1x8xf32>
    %152 = math.rsqrt %151 : vector<1x8xf32>
    %153 = vector.broadcast %152 : vector<1x8xf32> to vector<256x8xf32>
    %154 = arith.mulf %149, %153 : vector<256x8xf32>
    %c0_134 = arith.constant 0 : index
    %c0_135 = arith.constant 0 : index
    %155 = vector.load %arg12[%c0_134, %c0_135] : memref<1x8xf32, #tpu.memory_space<vmem>>, vector<1x8xf32>
    %156 = vector.broadcast %155 : vector<1x8xf32> to vector<256x8xf32>
    %157 = arith.mulf %154, %156 : vector<256x8xf32>
    %c0_136 = arith.constant 0 : index
    %c0_137 = arith.constant 0 : index
    %158 = vector.load %arg13[%c0_136, %c0_137] : memref<1x8xf32, #tpu.memory_space<vmem>>, vector<1x8xf32>
    %159 = vector.broadcast %158 : vector<1x8xf32> to vector<256x8xf32>
    %160 = arith.addf %157, %159 : vector<256x8xf32>
    %161 = tpu.concatenate %160, %136 in 1 : vector<256x8xf32>, vector<256x8xf32> -> vector<256x16xf32>
    %cst_138 = arith.constant 0.000000e+00 : f32
    %162 = vector.broadcast %cst_138 : f32 to vector<256x16xf32>
    %163 = arith.cmpf oge, %161, %162 : vector<256x16xf32>
    %cst_139 = arith.constant 1.000000e-01 : f32
    %164 = vector.broadcast %cst_139 : f32 to vector<256x16xf32>
    %165 = arith.mulf %161, %164 : vector<256x16xf32>
    %166 = arith.select %163, %161, %165 : vector<256x16xi1>, vector<256x16xf32>
    %167 = vector.shape_cast %166 : vector<256x16xf32> to vector<16x16x16xf32>
    %c1_140 = arith.constant 1 : index
    %c1_141 = arith.constant 1 : index
    %c0_142 = arith.constant 0 : index
    %168 = vector.load %arg23[%c1_140, %c1_141, %c0_142] : memref<18x18x16xf32, #tpu.memory_space<vmem>>, vector<16x16x16xf32>
    tpu.vector_store %arg23[%c1_140, %c1_141, %c0_142], %167 {strides = array<i32>} : memref<18x18x16xf32, #tpu.memory_space<vmem>>, vector<16x16x16xf32>,
    %c0_143 = arith.constant 0 : index
    %c0_144 = arith.constant 0 : index
    %c0_145 = arith.constant 0 : index
    %169 = vector.load %arg23[%c0_143, %c0_144, %c0_145] : memref<18x18x16xf32, #tpu.memory_space<vmem>>, vector<16x16x16xf32>
    %170 = vector.shape_cast %169 : vector<16x16x16xf32> to vector<256x16xf32>
    %c0_146 = arith.constant 0 : index
    %c1_147 = arith.constant 1 : index
    %c0_148 = arith.constant 0 : index
    %171 = vector.load %arg23[%c0_146, %c1_147, %c0_148] : memref<18x18x16xf32, #tpu.memory_space<vmem>>, vector<16x16x16xf32>
    %172 = vector.shape_cast %171 : vector<16x16x16xf32> to vector<256x16xf32>
    %c0_149 = arith.constant 0 : index
    %c2_150 = arith.constant 2 : index
    %c0_151 = arith.constant 0 : index
    %173 = vector.load %arg23[%c0_149, %c2_150, %c0_151] : memref<18x18x16xf32, #tpu.memory_space<vmem>>, vector<16x16x16xf32>
    %174 = vector.shape_cast %173 : vector<16x16x16xf32> to vector<256x16xf32>
    %c1_152 = arith.constant 1 : index
    %c0_153 = arith.constant 0 : index
    %c0_154 = arith.constant 0 : index
    %175 = vector.load %arg23[%c1_152, %c0_153, %c0_154] : memref<18x18x16xf32, #tpu.memory_space<vmem>>, vector<16x16x16xf32>
    %176 = vector.shape_cast %175 : vector<16x16x16xf32> to vector<256x16xf32>
    %c1_155 = arith.constant 1 : index
    %c1_156 = arith.constant 1 : index
    %c0_157 = arith.constant 0 : index
    %177 = vector.load %arg23[%c1_155, %c1_156, %c0_157] : memref<18x18x16xf32, #tpu.memory_space<vmem>>, vector<16x16x16xf32>
    %178 = vector.shape_cast %177 : vector<16x16x16xf32> to vector<256x16xf32>
    %c1_158 = arith.constant 1 : index
    %c2_159 = arith.constant 2 : index
    %c0_160 = arith.constant 0 : index
    %179 = vector.load %arg23[%c1_158, %c2_159, %c0_160] : memref<18x18x16xf32, #tpu.memory_space<vmem>>, vector<16x16x16xf32>
    %180 = vector.shape_cast %179 : vector<16x16x16xf32> to vector<256x16xf32>
    %c2_161 = arith.constant 2 : index
    %c0_162 = arith.constant 0 : index
    %c0_163 = arith.constant 0 : index
    %181 = vector.load %arg23[%c2_161, %c0_162, %c0_163] : memref<18x18x16xf32, #tpu.memory_space<vmem>>, vector<16x16x16xf32>
    %182 = vector.shape_cast %181 : vector<16x16x16xf32> to vector<256x16xf32>
    %c2_164 = arith.constant 2 : index
    %c1_165 = arith.constant 1 : index
    %c0_166 = arith.constant 0 : index
    %183 = vector.load %arg23[%c2_164, %c1_165, %c0_166] : memref<18x18x16xf32, #tpu.memory_space<vmem>>, vector<16x16x16xf32>
    %184 = vector.shape_cast %183 : vector<16x16x16xf32> to vector<256x16xf32>
    %c2_167 = arith.constant 2 : index
    %c2_168 = arith.constant 2 : index
    %c0_169 = arith.constant 0 : index
    %185 = vector.load %arg23[%c2_167, %c2_168, %c0_169] : memref<18x18x16xf32, #tpu.memory_space<vmem>>, vector<16x16x16xf32>
    %186 = vector.shape_cast %185 : vector<16x16x16xf32> to vector<256x16xf32>
    %187 = tpu.concatenate %170, %172, %174, %176, %178, %180, %182, %184, %186 in 1 : vector<256x16xf32>, vector<256x16xf32>, vector<256x16xf32>, vector<256x16xf32>, vector<256x16xf32>, vector<256x16xf32>, vector<256x16xf32>, vector<256x16xf32>, vector<256x16xf32> -> vector<256x144xf32>
    %188 = arith.truncf %187 : vector<256x144xf32> to vector<256x144xbf16>
    %c0_170 = arith.constant 0 : index
    %c0_171 = arith.constant 0 : index
    %189 = vector.load %arg14[%c0_170, %c0_171] : memref<144x16xbf16, #tpu.memory_space<vmem>>, vector<144x16xbf16>
    %cst_172 = arith.constant dense<0.000000e+00> : vector<256x16xf32>
    %190 = tpu.matmul %188, %189, %cst_172 {dimension_numbers = #tpu.dot_dimension_numbers<[1], [0], [0], [1], [0, 0, 1, 1], [], []>} : vector<256x144xbf16>, vector<144x16xbf16>, vector<256x16xf32> -> vector<256x16xf32>
    %c0_173 = arith.constant 0 : index
    %c0_174 = arith.constant 0 : index
    %191 = vector.load %arg15[%c0_173, %c0_174] : memref<1x16xf32, #tpu.memory_space<vmem>>, vector<1x16xf32>
    %192 = vector.broadcast %191 : vector<1x16xf32> to vector<256x16xf32>
    %193 = arith.addf %190, %192 : vector<256x16xf32>
    %cst_175 = arith.constant 0.000000e+00 : f32
    %194 = vector.broadcast %cst_175 : f32 to vector<256x16xf32>
    %195 = arith.cmpf oge, %193, %194 : vector<256x16xf32>
    %cst_176 = arith.constant 1.000000e-01 : f32
    %196 = vector.broadcast %cst_176 : f32 to vector<256x16xf32>
    %197 = arith.mulf %193, %196 : vector<256x16xf32>
    %198 = arith.select %195, %193, %197 : vector<256x16xi1>, vector<256x16xf32>
    %c0_177 = arith.constant 0 : index
    %c0_178 = arith.constant 0 : index
    %199 = vector.load %arg16[%c0_177, %c0_178] : memref<16x16xbf16, #tpu.memory_space<vmem>>, vector<16x16xbf16>
    %cst_179 = arith.constant dense<0.000000e+00> : vector<256x16xf32>
    %200 = tpu.matmul %108, %199, %cst_179 {dimension_numbers = #tpu.dot_dimension_numbers<[1], [0], [0], [1], [0, 0, 1, 1], [], []>} : vector<256x16xbf16>, vector<16x16xbf16>, vector<256x16xf32> -> vector<256x16xf32>
    %c0_180 = arith.constant 0 : index
    %c0_181 = arith.constant 0 : index
    %201 = vector.load %arg17[%c0_180, %c0_181] : memref<1x16xf32, #tpu.memory_space<vmem>>, vector<1x16xf32>
    %202 = vector.broadcast %201 : vector<1x16xf32> to vector<256x16xf32>
    %203 = arith.addf %200, %202 : vector<256x16xf32>
    %204 = arith.addf %198, %203 : vector<256x16xf32>
    %cst_182 = arith.constant 0.000000e+00 : f32
    %205 = vector.broadcast %cst_182 : f32 to vector<256x16xf32>
    %206 = arith.cmpf oge, %204, %205 : vector<256x16xf32>
    %cst_183 = arith.constant 2.000000e-01 : f32
    %207 = vector.broadcast %cst_183 : f32 to vector<256x16xf32>
    %208 = arith.mulf %204, %207 : vector<256x16xf32>
    %209 = arith.select %206, %204, %208 : vector<256x16xi1>, vector<256x16xf32>
    %210 = vector.shape_cast %209 : vector<256x16xf32> to vector<16x16x16xf32>
    %c1_184 = arith.constant 1 : index
    %c1_185 = arith.constant 1 : index
    %c0_186 = arith.constant 0 : index
    %211 = vector.load %arg23[%c1_184, %c1_185, %c0_186] : memref<18x18x16xf32, #tpu.memory_space<vmem>>, vector<16x16x16xf32>
    tpu.vector_store %arg23[%c1_184, %c1_185, %c0_186], %210 {strides = array<i32>} : memref<18x18x16xf32, #tpu.memory_space<vmem>>, vector<16x16x16xf32>,
    %c0_187 = arith.constant 0 : index
    %c0_188 = arith.constant 0 : index
    %c0_189 = arith.constant 0 : index
    %212 = vector.load %arg23[%c0_187, %c0_188, %c0_189] : memref<18x18x16xf32, #tpu.memory_space<vmem>>, vector<16x16x16xf32>
    %213 = vector.shape_cast %212 : vector<16x16x16xf32> to vector<256x16xf32>
    %c0_190 = arith.constant 0 : index
    %c1_191 = arith.constant 1 : index
    %c0_192 = arith.constant 0 : index
    %214 = vector.load %arg23[%c0_190, %c1_191, %c0_192] : memref<18x18x16xf32, #tpu.memory_space<vmem>>, vector<16x16x16xf32>
    %215 = vector.shape_cast %214 : vector<16x16x16xf32> to vector<256x16xf32>
    %c0_193 = arith.constant 0 : index
    %c2_194 = arith.constant 2 : index
    %c0_195 = arith.constant 0 : index
    %216 = vector.load %arg23[%c0_193, %c2_194, %c0_195] : memref<18x18x16xf32, #tpu.memory_space<vmem>>, vector<16x16x16xf32>
    %217 = vector.shape_cast %216 : vector<16x16x16xf32> to vector<256x16xf32>
    %c1_196 = arith.constant 1 : index
    %c0_197 = arith.constant 0 : index
    %c0_198 = arith.constant 0 : index
    %218 = vector.load %arg23[%c1_196, %c0_197, %c0_198] : memref<18x18x16xf32, #tpu.memory_space<vmem>>, vector<16x16x16xf32>
    %219 = vector.shape_cast %218 : vector<16x16x16xf32> to vector<256x16xf32>
    %c1_199 = arith.constant 1 : index
    %c1_200 = arith.constant 1 : index
    %c0_201 = arith.constant 0 : index
    %220 = vector.load %arg23[%c1_199, %c1_200, %c0_201] : memref<18x18x16xf32, #tpu.memory_space<vmem>>, vector<16x16x16xf32>
    %221 = vector.shape_cast %220 : vector<16x16x16xf32> to vector<256x16xf32>
    %c1_202 = arith.constant 1 : index
    %c2_203 = arith.constant 2 : index
    %c0_204 = arith.constant 0 : index
    %222 = vector.load %arg23[%c1_202, %c2_203, %c0_204] : memref<18x18x16xf32, #tpu.memory_space<vmem>>, vector<16x16x16xf32>
    %223 = vector.shape_cast %222 : vector<16x16x16xf32> to vector<256x16xf32>
    %c2_205 = arith.constant 2 : index
    %c0_206 = arith.constant 0 : index
    %c0_207 = arith.constant 0 : index
    %224 = vector.load %arg23[%c2_205, %c0_206, %c0_207] : memref<18x18x16xf32, #tpu.memory_space<vmem>>, vector<16x16x16xf32>
    %225 = vector.shape_cast %224 : vector<16x16x16xf32> to vector<256x16xf32>
    %c2_208 = arith.constant 2 : index
    %c1_209 = arith.constant 1 : index
    %c0_210 = arith.constant 0 : index
    %226 = vector.load %arg23[%c2_208, %c1_209, %c0_210] : memref<18x18x16xf32, #tpu.memory_space<vmem>>, vector<16x16x16xf32>
    %227 = vector.shape_cast %226 : vector<16x16x16xf32> to vector<256x16xf32>
    %c2_211 = arith.constant 2 : index
    %c2_212 = arith.constant 2 : index
    %c0_213 = arith.constant 0 : index
    %228 = vector.load %arg23[%c2_211, %c2_212, %c0_213] : memref<18x18x16xf32, #tpu.memory_space<vmem>>, vector<16x16x16xf32>
    %229 = vector.shape_cast %228 : vector<16x16x16xf32> to vector<256x16xf32>
    %230 = tpu.concatenate %213, %215, %217, %219, %221, %223, %225, %227, %229 in 1 : vector<256x16xf32>, vector<256x16xf32>, vector<256x16xf32>, vector<256x16xf32>, vector<256x16xf32>, vector<256x16xf32>, vector<256x16xf32>, vector<256x16xf32>, vector<256x16xf32> -> vector<256x144xf32>
    %231 = arith.truncf %230 : vector<256x144xf32> to vector<256x144xbf16>
    %c0_214 = arith.constant 0 : index
    %c0_215 = arith.constant 0 : index
    %232 = vector.load %arg18[%c0_214, %c0_215] : memref<36x4xbf16, #tpu.memory_space<vmem>>, vector<36x4xbf16>
    %cst_216 = arith.constant dense<0.000000e+00> : vector<256x4xf32>
    %233 = tpu.matmul %26, %232, %cst_216 {dimension_numbers = #tpu.dot_dimension_numbers<[1], [0], [0], [1], [0, 0, 1, 1], [], []>} : vector<256x36xbf16>, vector<36x4xbf16>, vector<256x4xf32> -> vector<256x4xf32>
    %c0_217 = arith.constant 0 : index
    %c0_218 = arith.constant 0 : index
    %234 = vector.load %arg19[%c0_217, %c0_218] : memref<144x4xbf16, #tpu.memory_space<vmem>>, vector<144x4xbf16>
    %cst_219 = arith.constant dense<0.000000e+00> : vector<256x4xf32>
    %235 = tpu.matmul %129, %234, %cst_219 {dimension_numbers = #tpu.dot_dimension_numbers<[1], [0], [0], [1], [0, 0, 1, 1], [], []>} : vector<256x144xbf16>, vector<144x4xbf16>, vector<256x4xf32> -> vector<256x4xf32>
    %236 = arith.addf %233, %235 : vector<256x4xf32>
    %c0_220 = arith.constant 0 : index
    %c0_221 = arith.constant 0 : index
    %237 = vector.load %arg20[%c0_220, %c0_221] : memref<144x4xbf16, #tpu.memory_space<vmem>>, vector<144x4xbf16>
    %cst_222 = arith.constant dense<0.000000e+00> : vector<256x4xf32>
    %238 = tpu.matmul %231, %237, %cst_222 {dimension_numbers = #tpu.dot_dimension_numbers<[1], [0], [0], [1], [0, 0, 1, 1], [], []>} : vector<256x144xbf16>, vector<144x4xbf16>, vector<256x4xf32> -> vector<256x4xf32>
    %239 = arith.addf %236, %238 : vector<256x4xf32>
    %c0_223 = arith.constant 0 : index
    %c0_224 = arith.constant 0 : index
    %240 = vector.load %arg21[%c0_223, %c0_224] : memref<1x4xf32, #tpu.memory_space<vmem>>, vector<1x4xf32>
    %241 = vector.broadcast %240 : vector<1x4xf32> to vector<256x4xf32>
    %242 = arith.addf %239, %241 : vector<256x4xf32>
    %cst_225 = arith.constant 0.000000e+00 : f32
    %243 = vector.broadcast %cst_225 : f32 to vector<256x4xf32>
    %244 = arith.cmpf oge, %242, %243 : vector<256x4xf32>
    %cst_226 = arith.constant 2.000000e-01 : f32
    %245 = vector.broadcast %cst_226 : f32 to vector<256x4xf32>
    %246 = arith.mulf %242, %245 : vector<256x4xf32>
    %247 = arith.select %244, %242, %246 : vector<256x4xi1>, vector<256x4xf32>
    %248 = vector.shape_cast %247 : vector<256x4xf32> to vector<16x16x4xf32>
    %c0_227 = arith.constant 0 : index
    %c0_228 = arith.constant 0 : index
    %c0_229 = arith.constant 0 : index
    %c0_230 = arith.constant 0 : index
    %249 = vector.load %arg22[%c0_227, %c0_228, %c0_229, %c0_230] : memref<1x16x16x4xf32, #tpu.memory_space<vmem>>, vector<1x16x16x4xf32>
    %250 = vector.shape_cast %249 : vector<1x16x16x4xf32> to vector<16x16x4xf32>
    %251 = vector.shape_cast %248 : vector<16x16x4xf32> to vector<1x16x16x4xf32>
    tpu.vector_store %arg22[%c0_227, %c0_228, %c0_229, %c0_230], %251 {strides = array<i32>} : memref<1x16x16x4xf32, #tpu.memory_space<vmem>>, vector<1x16x16x4xf32>,
    return
  }
  func.func @transform_0(%arg0: i32) -> (i32, i32, i32, i32) {
    %c0_i32 = arith.constant 0 : i32
    %c0_i32_0 = arith.constant 0 : i32
    %c0_i32_1 = arith.constant 0 : i32
    %c0_i32_2 = arith.constant 0 : i32
    return %arg0, %c0_i32, %c0_i32_0, %c0_i32_1 : i32, i32, i32, i32
  }
  func.func @transform_1(%arg0: i32) -> (i32, i32) {
    %c0_i32 = arith.constant 0 : i32
    %c0_i32_0 = arith.constant 0 : i32
    %c0_i32_1 = arith.constant 0 : i32
    return %c0_i32, %c0_i32_0 : i32, i32
  }
  func.func @transform_2(%arg0: i32) -> (i32, i32) {
    %c0_i32 = arith.constant 0 : i32
    %c0_i32_0 = arith.constant 0 : i32
    %c0_i32_1 = arith.constant 0 : i32
    return %c0_i32, %c0_i32_0 : i32, i32
  }
  func.func @transform_3(%arg0: i32) -> (i32, i32) {
    %c0_i32 = arith.constant 0 : i32
    %c0_i32_0 = arith.constant 0 : i32
    %c0_i32_1 = arith.constant 0 : i32
    return %c0_i32, %c0_i32_0 : i32, i32
  }
  func.func @transform_4(%arg0: i32) -> (i32, i32) {
    %c0_i32 = arith.constant 0 : i32
    %c0_i32_0 = arith.constant 0 : i32
    %c0_i32_1 = arith.constant 0 : i32
    return %c0_i32, %c0_i32_0 : i32, i32
  }
  func.func @transform_5(%arg0: i32) -> (i32, i32) {
    %c0_i32 = arith.constant 0 : i32
    %c0_i32_0 = arith.constant 0 : i32
    %c0_i32_1 = arith.constant 0 : i32
    return %c0_i32, %c0_i32_0 : i32, i32
  }
  func.func @transform_6(%arg0: i32) -> (i32, i32) {
    %c0_i32 = arith.constant 0 : i32
    %c0_i32_0 = arith.constant 0 : i32
    %c0_i32_1 = arith.constant 0 : i32
    return %c0_i32, %c0_i32_0 : i32, i32
  }
  func.func @transform_7(%arg0: i32) -> (i32, i32) {
    %c0_i32 = arith.constant 0 : i32
    %c0_i32_0 = arith.constant 0 : i32
    %c0_i32_1 = arith.constant 0 : i32
    return %c0_i32, %c0_i32_0 : i32, i32
  }
  func.func @transform_8(%arg0: i32) -> (i32, i32) {
    %c0_i32 = arith.constant 0 : i32
    %c0_i32_0 = arith.constant 0 : i32
    %c0_i32_1 = arith.constant 0 : i32
    return %c0_i32, %c0_i32_0 : i32, i32
  }
  func.func @transform_9(%arg0: i32) -> (i32, i32) {
    %c0_i32 = arith.constant 0 : i32
    %c0_i32_0 = arith.constant 0 : i32
    %c0_i32_1 = arith.constant 0 : i32
    return %c0_i32, %c0_i32_0 : i32, i32
  }
  func.func @transform_10(%arg0: i32) -> (i32, i32) {
    %c0_i32 = arith.constant 0 : i32
    %c0_i32_0 = arith.constant 0 : i32
    %c0_i32_1 = arith.constant 0 : i32
    return %c0_i32, %c0_i32_0 : i32, i32
  }
  func.func @transform_11(%arg0: i32) -> (i32, i32) {
    %c0_i32 = arith.constant 0 : i32
    %c0_i32_0 = arith.constant 0 : i32
    %c0_i32_1 = arith.constant 0 : i32
    return %c0_i32, %c0_i32_0 : i32, i32
  }
  func.func @transform_12(%arg0: i32) -> (i32, i32) {
    %c0_i32 = arith.constant 0 : i32
    %c0_i32_0 = arith.constant 0 : i32
    %c0_i32_1 = arith.constant 0 : i32
    return %c0_i32, %c0_i32_0 : i32, i32
  }
  func.func @transform_13(%arg0: i32) -> (i32, i32) {
    %c0_i32 = arith.constant 0 : i32
    %c0_i32_0 = arith.constant 0 : i32
    %c0_i32_1 = arith.constant 0 : i32
    return %c0_i32, %c0_i32_0 : i32, i32
  }
  func.func @transform_14(%arg0: i32) -> (i32, i32) {
    %c0_i32 = arith.constant 0 : i32
    %c0_i32_0 = arith.constant 0 : i32
    %c0_i32_1 = arith.constant 0 : i32
    return %c0_i32, %c0_i32_0 : i32, i32
  }
  func.func @transform_15(%arg0: i32) -> (i32, i32) {
    %c0_i32 = arith.constant 0 : i32
    %c0_i32_0 = arith.constant 0 : i32
    %c0_i32_1 = arith.constant 0 : i32
    return %c0_i32, %c0_i32_0 : i32, i32
  }
  func.func @transform_16(%arg0: i32) -> (i32, i32) {
    %c0_i32 = arith.constant 0 : i32
    %c0_i32_0 = arith.constant 0 : i32
    %c0_i32_1 = arith.constant 0 : i32
    return %c0_i32, %c0_i32_0 : i32, i32
  }
  func.func @transform_17(%arg0: i32) -> (i32, i32) {
    %c0_i32 = arith.constant 0 : i32
    %c0_i32_0 = arith.constant 0 : i32
    %c0_i32_1 = arith.constant 0 : i32
    return %c0_i32, %c0_i32_0 : i32, i32
  }
  func.func @transform_18(%arg0: i32) -> (i32, i32) {
    %c0_i32 = arith.constant 0 : i32
    %c0_i32_0 = arith.constant 0 : i32
    %c0_i32_1 = arith.constant 0 : i32
    return %c0_i32, %c0_i32_0 : i32, i32
  }
  func.func @transform_19(%arg0: i32) -> (i32, i32) {
    %c0_i32 = arith.constant 0 : i32
    %c0_i32_0 = arith.constant 0 : i32
    %c0_i32_1 = arith.constant 0 : i32
    return %c0_i32, %c0_i32_0 : i32, i32
  }
  func.func @transform_20(%arg0: i32) -> (i32, i32) {
    %c0_i32 = arith.constant 0 : i32
    %c0_i32_0 = arith.constant 0 : i32
    %c0_i32_1 = arith.constant 0 : i32
    return %c0_i32, %c0_i32_0 : i32, i32
  }
  func.func @transform_21(%arg0: i32) -> (i32, i32, i32, i32) {
    %c0_i32 = arith.constant 0 : i32
    %c0_i32_0 = arith.constant 0 : i32
    %c0_i32_1 = arith.constant 0 : i32
    %c0_i32_2 = arith.constant 0 : i32
    return %arg0, %c0_i32, %c0_i32_0, %c0_i32_1 : i32, i32, i32, i32
  }
}

</mosaic_0001>

<llo_original>
// kernel: dense_block.1
$region0: #{dense_block.1}
  #allocation0 [shape = 'u32[]', space=smem, size = 0x4, offset = 0x4, fixed_abs, tag = 'smem constant byte address 0x4 - core index']
  #allocation1 [shape = 'u32[144,128]{1,0:T(1,128)}', space=vmem, size = 0x12000, scoped, tag = 'internal scratch']
  #allocation2 [shape = 'f32[18,18,16]{2,1,0:T(8,128)}', space=vmem, size = 0x36000, scoped, tag = 'scratch operand']
  %s0 = inlined_call_operand.vmem [shape: f32[2,16,16,4], index: 0, kind: input, shape index: {}]
  %s1 = inlined_call_operand.vmem [shape: bf16[36,16], index: 1, kind: input, shape index: {}]
  %s2 = inlined_call_operand.vmem [shape: f32[1,16], index: 2, kind: input, shape index: {}]
  %s3 = inlined_call_operand.vmem [shape: f32[1,8], index: 3, kind: input, shape index: {}]
  %s4 = inlined_call_operand.vmem [shape: f32[1,8], index: 4, kind: input, shape index: {}]
  %s5 = inlined_call_operand.vmem [shape: bf16[144,16], index: 5, kind: input, shape index: {}]
  %s6 = inlined_call_operand.vmem [shape: f32[1,16], index: 6, kind: input, shape index: {}]
  %s7 = inlined_call_operand.vmem [shape: bf16[4,16], index: 7, kind: input, shape index: {}]
  %s8 = inlined_call_operand.vmem [shape: f32[1,16], index: 8, kind: input, shape index: {}]
  %s9 = inlined_call_operand.vmem [shape: bf16[144,16], index: 9, kind: input, shape index: {}]
  %s10 = inlined_call_operand.vmem [shape: f32[1,16], index: 10, kind: input, shape index: {}]
  %s11 = inlined_call_operand.vmem [shape: f32[1,8], index: 11, kind: input, shape index: {}]
  %s12 = inlined_call_operand.vmem [shape: f32[1,8], index: 12, kind: input, shape index: {}]
  %s13 = inlined_call_operand.vmem [shape: bf16[144,16], index: 13, kind: input, shape index: {}]
  %s14 = inlined_call_operand.vmem [shape: f32[1,16], index: 14, kind: input, shape index: {}]
  %s15 = inlined_call_operand.vmem [shape: bf16[16,16], index: 15, kind: input, shape index: {}]
  %s16 = inlined_call_operand.vmem [shape: f32[1,16], index: 16, kind: input, shape index: {}]
  %s17 = inlined_call_operand.vmem [shape: bf16[36,4], index: 17, kind: input, shape index: {}]
  %s18 = inlined_call_operand.vmem [shape: bf16[144,4], index: 18, kind: input, shape index: {}]
  %s19 = inlined_call_operand.vmem [shape: bf16[144,4], index: 19, kind: input, shape index: {}]
  %s20 = inlined_call_operand.vmem [shape: f32[1,4], index: 20, kind: input, shape index: {}]
  %s21 = inlined_call_operand.vmem [shape: f32[2,16,16,4], index: 21, kind: output, shape index: {}]
  %s22 = sld [smem:[#allocation0]]
  $region117: #{dense_block.1} parent=0
    _
  %s24 = ssub.s32 1, %s22
  %s25 = scalar_select 0, %s24, %s22
  loop: start=0, step=1, limit=4
  $region2: #{dense_block.1} parent=0 // loop_pre_header
    _
  $region3: #{dense_block.1} parent=0 // loop_header
    %s27 = sphi 0, %s31
    %p28 = scmp.ge.s32.totalorder %s27, 4
    %s37 = sphi 0, %s39
    %s40 = sphi 0, %s37
    %s41 = sphi 0, %s40
    %s57 = sphi 0, %s41
    %s61 = sphi 0, %s61
    %s63 = sphi 0, %s61
    %s64 = sphi 0, %s63
    %s78 = sphi 0, %s64
    %s82 = sphi 0, %s82
    %s84 = sphi 0, %s82
    %s85 = sphi 0, %s84
    %s99 = sphi 0, %s85
    %s103 = sphi 0, %s103
    %s105 = sphi 0, %s103
    %s106 = sphi 0, %s105
    %s120 = sphi 0, %s106
    %s124 = sphi 0, %s124
    %s126 = sphi 0, %s124
    %s127 = sphi 0, %s126
    %s141 = sphi 0, %s127
    %s145 = sphi 0, %s145
    %s147 = sphi 0, %s145
    %s148 = sphi 0, %s147
    %s162 = sphi 0, %s148
    %s166 = sphi 0, %s166
    %s168 = sphi 0, %s166
    %s169 = sphi 0, %s168
    %s183 = sphi 0, %s169
    %s187 = sphi 0, %s187
    %s189 = sphi 0, %s187
    %s190 = sphi 0, %s189
    %s204 = sphi 0, %s190
    %s208 = sphi 0, %s208
    %s210 = sphi 0, %s208
    %s211 = sphi 0, %s210
    %s225 = sphi 0, %s211
    %s229 = sphi 0, %s229
    %s231 = sphi 0, %s229
    %s232 = sphi 0, %s231
    %s246 = sphi 0, %s232
    %s250 = sphi 0, %s250
    %s252 = sphi 0, %s250
    %s253 = sphi 0, %s252
    %s267 = sphi 0, %s253
    %s271 = sphi 0, %s271
    %s273 = sphi 0, %s271
    %s274 = sphi 0, %s273
    %s288 = sphi 0, %s274
    %s292 = sphi 0, %s292
    %s294 = sphi 0, %s292
    %s295 = sphi 0, %s294
    %s309 = sphi 0, %s295
    %s313 = sphi 0, %s313
    %s315 = sphi 0, %s313
    %s316 = sphi 0, %s315
    %s330 = sphi 0, %s316
    %s334 = sphi 0, %s334
    %s336 = sphi 0, %s334
    %s337 = sphi 0, %s336
    %s351 = sphi 0, %s337
    %s355 = sphi 0, %s355
    %s357 = sphi 0, %s355
    %s358 = sphi 0, %s357
    %s372 = sphi 0, %s358
    %s376 = sphi 0, %s376
    %s378 = sphi 0, %s376
    %s379 = sphi 0, %s378
    %s393 = sphi 0, %s379
    %s397 = sphi 0, %s397
    %s399 = sphi 0, %s397
    %s400 = sphi 0, %s399
    %s414 = sphi 0, %s400
    %s418 = sphi 0, %s418
    %s420 = sphi 0, %s418
    %s421 = sphi 0, %s420
    %s435 = sphi 0, %s421
    %s439 = sphi 0, %s439
    %s441 = sphi 0, %s439
    %s442 = sphi 0, %s441
    %s456 = sphi 0, %s442
    %s460 = sphi 0, %s460
    %s462 = sphi 0, %s460
    %s463 = sphi 0, %s462
    %s477 = sphi 0, %s463
    %s483 = sphi 0, %s485
    %s486 = sphi 0, %s483
    %s487 = sphi 0, %s486
    %s503 = sphi 0, %s487
  $region4: #{dense_block.1} parent=0 // loop_header_branch
    %30 = sbr.rel (%p28) target = $region8
  $region5: #{dense_block.1} parent=0 // loop_body
    %s32 = ssub.s32 %s27, 1
    %s33 = ssub.s32 %s27, 2
    %s34 = sadd.s32 %s27, 1
    %s35 = ssub.s32 %s27, %s34
    %p36 = scmp.eq.s32.totalorder %s35, 0
    %s38 = sadd.s32 %s37, 1
    %s39 = scalar_select %p36, %s37, %s38
    %p42 = pneg %p36
    %p43 = scmp.eq.s32.totalorder %s27, 1
    %p44 = por %p42, %p43
    %p45 = scmp.ne.s32.totalorder %s37, %s40
    %p46 = scmp.eq.s32.totalorder %s27, 0
    %p47 = por %p45, %p46
    %p48 = scmp.ne.s32.totalorder %s37, %s40
    %p49 = scmp.eq.s32.totalorder %s32, 1
    %p50 = por %p48, %p49
    %p51 = scmp.ne.s32.totalorder %s40, %s41
    %p52 = scmp.eq.s32.totalorder %s32, 0
    %p53 = por %p51, %p52
    %p54 = scmp.ne.s32.totalorder %s40, %s41
    %p55 = scmp.eq.s32.totalorder %s33, 1
    %p56 = por %p54, %p55
    %p58 = scmp.ne.s32.totalorder %s41, %s57
    %p59 = scmp.eq.s32.totalorder %s33, 0
    %p60 = por %p58, %p59
    %s62 = sadd.s32 %s61, 1
    %p65 = scmp.eq.s32.totalorder %s27, 1
    %p66 = scmp.ne.s32.totalorder %s61, %s63
    %p67 = scmp.eq.s32.totalorder %s27, 0
    %p68 = por %p66, %p67
    %p69 = scmp.ne.s32.totalorder %s61, %s63
    %p70 = scmp.eq.s32.totalorder %s32, 1
    %p71 = por %p69, %p70
    %p72 = scmp.ne.s32.totalorder %s63, %s64
    %p73 = scmp.eq.s32.totalorder %s32, 0
    %p74 = por %p72, %p73
    %p75 = scmp.ne.s32.totalorder %s63, %s64
    %p76 = scmp.eq.s32.totalorder %s33, 1
    %p77 = por %p75, %p76
    %p79 = scmp.ne.s32.totalorder %s64, %s78
    %p80 = scmp.eq.s32.totalorder %s33, 0
    %p81 = por %p79, %p80
    %s83 = sadd.s32 %s82, 1
    %p86 = scmp.eq.s32.totalorder %s27, 1
    %p87 = scmp.ne.s32.totalorder %s82, %s84
    %p88 = scmp.eq.s32.totalorder %s27, 0
    %p89 = por %p87, %p88
    %p90 = scmp.ne.s32.totalorder %s82, %s84
    %p91 = scmp.eq.s32.totalorder %s32, 1
    %p92 = por %p90, %p91
    %p93 = scmp.ne.s32.totalorder %s84, %s85
    %p94 = scmp.eq.s32.totalorder %s32, 0
    %p95 = por %p93, %p94
    %p96 = scmp.ne.s32.totalorder %s84, %s85
    %p97 = scmp.eq.s32.totalorder %s33, 1
    %p98 = por %p96, %p97
    %p100 = scmp.ne.s32.totalorder %s85, %s99
    %p101 = scmp.eq.s32.totalorder %s33, 0
    %p102 = por %p100, %p101
    %s104 = sadd.s32 %s103, 1
    %p107 = scmp.eq.s32.totalorder %s27, 1
    %p108 = scmp.ne.s32.totalorder %s103, %s105
    %p109 = scmp.eq.s32.totalorder %s27, 0
    %p110 = por %p108, %p109
    %p111 = scmp.ne.s32.totalorder %s103, %s105
    %p112 = scmp.eq.s32.totalorder %s32, 1
    %p113 = por %p111, %p112
    %p114 = scmp.ne.s32.totalorder %s105, %s106
    %p115 = scmp.eq.s32.totalorder %s32, 0
    %p116 = por %p114, %p115
    %p117 = scmp.ne.s32.totalorder %s105, %s106
    %p118 = scmp.eq.s32.totalorder %s33, 1
    %p119 = por %p117, %p118
    %p121 = scmp.ne.s32.totalorder %s106, %s120
    %p122 = scmp.eq.s32.totalorder %s33, 0
    %p123 = por %p121, %p122
    %s125 = sadd.s32 %s124, 1
    %p128 = scmp.eq.s32.totalorder %s27, 1
    %p129 = scmp.ne.s32.totalorder %s124, %s126
    %p130 = scmp.eq.s32.totalorder %s27, 0
    %p131 = por %p129, %p130
    %p132 = scmp.ne.s32.totalorder %s124, %s126
    %p133 = scmp.eq.s32.totalorder %s32, 1
    %p134 = por %p132, %p133
    %p135 = scmp.ne.s32.totalorder %s126, %s127
    %p136 = scmp.eq.s32.totalorder %s32, 0
    %p137 = por %p135, %p136
    %p138 = scmp.ne.s32.totalorder %s126, %s127
    %p139 = scmp.eq.s32.totalorder %s33, 1
    %p140 = por %p138, %p139
    %p142 = scmp.ne.s32.totalorder %s127, %s141
    %p143 = scmp.eq.s32.totalorder %s33, 0
    %p144 = por %p142, %p143
    %s146 = sadd.s32 %s145, 1
    %p149 = scmp.eq.s32.totalorder %s27, 1
    %p150 = scmp.ne.s32.totalorder %s145, %s147
    %p151 = scmp.eq.s32.totalorder %s27, 0
    %p152 = por %p150, %p151
    %p153 = scmp.ne.s32.totalorder %s145, %s147
    %p154 = scmp.eq.s32.totalorder %s32, 1
    %p155 = por %p153, %p154
    %p156 = scmp.ne.s32.totalorder %s147, %s148
    %p157 = scmp.eq.s32.totalorder %s32, 0
    %p158 = por %p156, %p157
    %p159 = scmp.ne.s32.totalorder %s147, %s148
    %p160 = scmp.eq.s32.totalorder %s33, 1
    %p161 = por %p159, %p160
    %p163 = scmp.ne.s32.totalorder %s148, %s162
    %p164 = scmp.eq.s32.totalorder %s33, 0
    %p165 = por %p163, %p164
    %s167 = sadd.s32 %s166, 1
    %p170 = scmp.eq.s32.totalorder %s27, 1
    %p171 = scmp.ne.s32.totalorder %s166, %s168
    %p172 = scmp.eq.s32.totalorder %s27, 0
    %p173 = por %p171, %p172
    %p174 = scmp.ne.s32.totalorder %s166, %s168
    %p175 = scmp.eq.s32.totalorder %s32, 1
    %p176 = por %p174, %p175
    %p177 = scmp.ne.s32.totalorder %s168, %s169
    %p178 = scmp.eq.s32.totalorder %s32, 0
    %p179 = por %p177, %p178
    %p180 = scmp.ne.s32.totalorder %s168, %s169
    %p181 = scmp.eq.s32.totalorder %s33, 1
    %p182 = por %p180, %p181
    %p184 = scmp.ne.s32.totalorder %s169, %s183
    %p185 = scmp.eq.s32.totalorder %s33, 0
    %p186 = por %p184, %p185
    %s188 = sadd.s32 %s187, 1
    %p191 = scmp.eq.s32.totalorder %s27, 1
    %p192 = scmp.ne.s32.totalorder %s187, %s189
    %p193 = scmp.eq.s32.totalorder %s27, 0
    %p194 = por %p192, %p193
    %p195 = scmp.ne.s32.totalorder %s187, %s189
    %p196 = scmp.eq.s32.totalorder %s32, 1
    %p197 = por %p195, %p196
    %p198 = scmp.ne.s32.totalorder %s189, %s190
    %p199 = scmp.eq.s32.totalorder %s32, 0
    %p200 = por %p198, %p199
    %p201 = scmp.ne.s32.totalorder %s189, %s190
    %p202 = scmp.eq.s32.totalorder %s33, 1
    %p203 = por %p201, %p202
    %p205 = scmp.ne.s32.totalorder %s190, %s204
    %p206 = scmp.eq.s32.totalorder %s33, 0
    %p207 = por %p205, %p206
    %s209 = sadd.s32 %s208, 1
    %p212 = scmp.eq.s32.totalorder %s27, 1
    %p213 = scmp.ne.s32.totalorder %s208, %s210
    %p214 = scmp.eq.s32.totalorder %s27, 0
    %p215 = por %p213, %p214
    %p216 = scmp.ne.s32.totalorder %s208, %s210
    %p217 = scmp.eq.s32.totalorder %s32, 1
    %p218 = por %p216, %p217
    %p219 = scmp.ne.s32.totalorder %s210, %s211
    %p220 = scmp.eq.s32.totalorder %s32, 0
    %p221 = por %p219, %p220
    %p222 = scmp.ne.s32.totalorder %s210, %s211
    %p223 = scmp.eq.s32.totalorder %s33, 1
    %p224 = por %p222, %p223
    %p226 = scmp.ne.s32.totalorder %s211, %s225
    %p227 = scmp.eq.s32.totalorder %s33, 0
    %p228 = por %p226, %p227
    %s230 = sadd.s32 %s229, 1
    %p233 = scmp.eq.s32.totalorder %s27, 1
    %p234 = scmp.ne.s32.totalorder %s229, %s231
    %p235 = scmp.eq.s32.totalorder %s27, 0
    %p236 = por %p234, %p235
    %p237 = scmp.ne.s32.totalorder %s229, %s231
    %p238 = scmp.eq.s32.totalorder %s32, 1
    %p239 = por %p237, %p238
    %p240 = scmp.ne.s32.totalorder %s231, %s232
    %p241 = scmp.eq.s32.totalorder %s32, 0
    %p242 = por %p240, %p241
    %p243 = scmp.ne.s32.totalorder %s231, %s232
    %p244 = scmp.eq.s32.totalorder %s33, 1
    %p245 = por %p243, %p244
    %p247 = scmp.ne.s32.totalorder %s232, %s246
    %p248 = scmp.eq.s32.totalorder %s33, 0
    %p249 = por %p247, %p248
    %s251 = sadd.s32 %s250, 1
    %p254 = scmp.eq.s32.totalorder %s27, 1
    %p255 = scmp.ne.s32.totalorder %s250, %s252
    %p256 = scmp.eq.s32.totalorder %s27, 0
    %p257 = por %p255, %p256
    %p258 = scmp.ne.s32.totalorder %s250, %s252
    %p259 = scmp.eq.s32.totalorder %s32, 1
    %p260 = por %p258, %p259
    %p261 = scmp.ne.s32.totalorder %s252, %s253
    %p262 = scmp.eq.s32.totalorder %s32, 0
    %p263 = por %p261, %p262
    %p264 = scmp.ne.s32.totalorder %s252, %s253
    %p265 = scmp.eq.s32.totalorder %s33, 1
    %p266 = por %p264, %p265
    %p268 = scmp.ne.s32.totalorder %s253, %s267
    %p269 = scmp.eq.s32.totalorder %s33, 0
    %p270 = por %p268, %p269
    %s272 = sadd.s32 %s271, 1
    %p275 = scmp.eq.s32.totalorder %s27, 1
    %p276 = scmp.ne.s32.totalorder %s271, %s273
    %p277 = scmp.eq.s32.totalorder %s27, 0
    %p278 = por %p276, %p277
    %p279 = scmp.ne.s32.totalorder %s271, %s273
    %p280 = scmp.eq.s32.totalorder %s32, 1
    %p281 = por %p279, %p280
    %p282 = scmp.ne.s32.totalorder %s273, %s274
    %p283 = scmp.eq.s32.totalorder %s32, 0
    %p284 = por %p282, %p283
    %p285 = scmp.ne.s32.totalorder %s273, %s274
    %p286 = scmp.eq.s32.totalorder %s33, 1
    %p287 = por %p285, %p286
    %p289 = scmp.ne.s32.totalorder %s274, %s288
    %p290 = scmp.eq.s32.totalorder %s33, 0
    %p291 = por %p289, %p290
    %s293 = sadd.s32 %s292, 1
    %p296 = scmp.eq.s32.totalorder %s27, 1
    %p297 = scmp.ne.s32.totalorder %s292, %s294
    %p298 = scmp.eq.s32.totalorder %s27, 0
    %p299 = por %p297, %p298
    %p300 = scmp.ne.s32.totalorder %s292, %s294
    %p301 = scmp.eq.s32.totalorder %s32, 1
    %p302 = por %p300, %p301
    %p303 = scmp.ne.s32.totalorder %s294, %s295
    %p304 = scmp.eq.s32.totalorder %s32, 0
    %p305 = por %p303, %p304
    %p306 = scmp.ne.s32.totalorder %s294, %s295
    %p307 = scmp.eq.s32.totalorder %s33, 1
    %p308 = por %p306, %p307
    %p310 = scmp.ne.s32.totalorder %s295, %s309
    %p311 = scmp.eq.s32.totalorder %s33, 0
    %p312 = por %p310, %p311
    %s314 = sadd.s32 %s313, 1
    %p317 = scmp.eq.s32.totalorder %s27, 1
    %p318 = scmp.ne.s32.totalorder %s313, %s315
    %p319 = scmp.eq.s32.totalorder %s27, 0
    %p320 = por %p318, %p319
    %p321 = scmp.ne.s32.totalorder %s313, %s315
    %p322 = scmp.eq.s32.totalorder %s32, 1
    %p323 = por %p321, %p322
    %p324 = scmp.ne.s32.totalorder %s315, %s316
    %p325 = scmp.eq.s32.totalorder %s32, 0
    %p326 = por %p324, %p325
    %p327 = scmp.ne.s32.totalorder %s315, %s316
    %p328 = scmp.eq.s32.totalorder %s33, 1
    %p329 = por %p327, %p328
    %p331 = scmp.ne.s32.totalorder %s316, %s330
    %p332 = scmp.eq.s32.totalorder %s33, 0
    %p333 = por %p331, %p332
    %s335 = sadd.s32 %s334, 1
    %p338 = scmp.eq.s32.totalorder %s27, 1
    %p339 = scmp.ne.s32.totalorder %s334, %s336
    %p340 = scmp.eq.s32.totalorder %s27, 0
    %p341 = por %p339, %p340
    %p342 = scmp.ne.s32.totalorder %s334, %s336
    %p343 = scmp.eq.s32.totalorder %s32, 1
    %p344 = por %p342, %p343
    %p345 = scmp.ne.s32.totalorder %s336, %s337
    %p346 = scmp.eq.s32.totalorder %s32, 0
    %p347 = por %p345, %p346
    %p348 = scmp.ne.s32.totalorder %s336, %s337
    %p349 = scmp.eq.s32.totalorder %s33, 1
    %p350 = por %p348, %p349
    %p352 = scmp.ne.s32.totalorder %s337, %s351
    %p353 = scmp.eq.s32.totalorder %s33, 0
    %p354 = por %p352, %p353
    %s356 = sadd.s32 %s355, 1
    %p359 = scmp.eq.s32.totalorder %s27, 1
    %p360 = scmp.ne.s32.totalorder %s355, %s357
    %p361 = scmp.eq.s32.totalorder %s27, 0
    %p362 = por %p360, %p361
    %p363 = scmp.ne.s32.totalorder %s355, %s357
    %p364 = scmp.eq.s32.totalorder %s32, 1
    %p365 = por %p363, %p364
    %p366 = scmp.ne.s32.totalorder %s357, %s358
    %p367 = scmp.eq.s32.totalorder %s32, 0
    %p368 = por %p366, %p367
    %p369 = scmp.ne.s32.totalorder %s357, %s358
    %p370 = scmp.eq.s32.totalorder %s33, 1
    %p371 = por %p369, %p370
    %p373 = scmp.ne.s32.totalorder %s358, %s372
    %p374 = scmp.eq.s32.totalorder %s33, 0
    %p375 = por %p373, %p374
    %s377 = sadd.s32 %s376, 1
    %p380 = scmp.eq.s32.totalorder %s27, 1
    %p381 = scmp.ne.s32.totalorder %s376, %s378
    %p382 = scmp.eq.s32.totalorder %s27, 0
    %p383 = por %p381, %p382
    %p384 = scmp.ne.s32.totalorder %s376, %s378
    %p385 = scmp.eq.s32.totalorder %s32, 1
    %p386 = por %p384, %p385
    %p387 = scmp.ne.s32.totalorder %s378, %s379
    %p388 = scmp.eq.s32.totalorder %s32, 0
    %p389 = por %p387, %p388
    %p390 = scmp.ne.s32.totalorder %s378, %s379
    %p391 = scmp.eq.s32.totalorder %s33, 1
    %p392 = por %p390, %p391
    %p394 = scmp.ne.s32.totalorder %s379, %s393
    %p395 = scmp.eq.s32.totalorder %s33, 0
    %p396 = por %p394, %p395
    %s398 = sadd.s32 %s397, 1
    %p401 = scmp.eq.s32.totalorder %s27, 1
    %p402 = scmp.ne.s32.totalorder %s397, %s399
    %p403 = scmp.eq.s32.totalorder %s27, 0
    %p404 = por %p402, %p403
    %p405 = scmp.ne.s32.totalorder %s397, %s399
    %p406 = scmp.eq.s32.totalorder %s32, 1
    %p407 = por %p405, %p406
    %p408 = scmp.ne.s32.totalorder %s399, %s400
    %p409 = scmp.eq.s32.totalorder %s32, 0
    %p410 = por %p408, %p409
    %p411 = scmp.ne.s32.totalorder %s399, %s400
    %p412 = scmp.eq.s32.totalorder %s33, 1
    %p413 = por %p411, %p412
    %p415 = scmp.ne.s32.totalorder %s400, %s414
    %p416 = scmp.eq.s32.totalorder %s33, 0
    %p417 = por %p415, %p416
    %s419 = sadd.s32 %s418, 1
    %p422 = scmp.eq.s32.totalorder %s27, 1
    %p423 = scmp.ne.s32.totalorder %s418, %s420
    %p424 = scmp.eq.s32.totalorder %s27, 0
    %p425 = por %p423, %p424
    %p426 = scmp.ne.s32.totalorder %s418, %s420
    %p427 = scmp.eq.s32.totalorder %s32, 1
    %p428 = por %p426, %p427
    %p429 = scmp.ne.s32.totalorder %s420, %s421
    %p430 = scmp.eq.s32.totalorder %s32, 0
    %p431 = por %p429, %p430
    %p432 = scmp.ne.s32.totalorder %s420, %s421
    %p433 = scmp.eq.s32.totalorder %s33, 1
    %p434 = por %p432, %p433
    %p436 = scmp.ne.s32.totalorder %s421, %s435
    %p437 = scmp.eq.s32.totalorder %s33, 0
    %p438 = por %p436, %p437
    %s440 = sadd.s32 %s439, 1
    %p443 = scmp.eq.s32.totalorder %s27, 1
    %p444 = scmp.ne.s32.totalorder %s439, %s441
    %p445 = scmp.eq.s32.totalorder %s27, 0
    %p446 = por %p444, %p445
    %p447 = scmp.ne.s32.totalorder %s439, %s441
    %p448 = scmp.eq.s32.totalorder %s32, 1
    %p449 = por %p447, %p448
    %p450 = scmp.ne.s32.totalorder %s441, %s442
    %p451 = scmp.eq.s32.totalorder %s32, 0
    %p452 = por %p450, %p451
    %p453 = scmp.ne.s32.totalorder %s441, %s442
    %p454 = scmp.eq.s32.totalorder %s33, 1
    %p455 = por %p453, %p454
    %p457 = scmp.ne.s32.totalorder %s442, %s456
    %p458 = scmp.eq.s32.totalorder %s33, 0
    %p459 = por %p457, %p458
    %s461 = sadd.s32 %s460, 1
    %p464 = scmp.eq.s32.totalorder %s27, 1
    %p465 = scmp.ne.s32.totalorder %s460, %s462
    %p466 = scmp.eq.s32.totalorder %s27, 0
    %p467 = por %p465, %p466
    %p468 = scmp.ne.s32.totalorder %s460, %s462
    %p469 = scmp.eq.s32.totalorder %s32, 1
    %p470 = por %p468, %p469
    %p471 = scmp.ne.s32.totalorder %s462, %s463
    %p472 = scmp.eq.s32.totalorder %s32, 0
    %p473 = por %p471, %p472
    %p474 = scmp.ne.s32.totalorder %s462, %s463
    %p475 = scmp.eq.s32.totalorder %s33, 1
    %p476 = por %p474, %p475
    %p478 = scmp.ne.s32.totalorder %s463, %s477
    %p479 = scmp.eq.s32.totalorder %s33, 0
    %p480 = por %p478, %p479
    %s481 = ssub.s32 %s27, %s34
    %p482 = scmp.eq.s32.totalorder %s481, 0
    %s484 = sadd.s32 %s483, 1
    %s485 = scalar_select %p482, %s483, %s484
    %p488 = pneg %p482
    %p489 = scmp.eq.s32.totalorder %s27, 1
    %p490 = por %p488, %p489
    %p491 = scmp.ne.s32.totalorder %s483, %s486
    %p492 = scmp.eq.s32.totalorder %s27, 0
    %p493 = por %p491, %p492
    %p494 = scmp.ne.s32.totalorder %s483, %s486
    %p495 = scmp.eq.s32.totalorder %s32, 1
    %p496 = por %p494, %p495
    %p497 = scmp.ne.s32.totalorder %s486, %s487
    %p498 = scmp.eq.s32.totalorder %s32, 0
    %p499 = por %p497, %p498
    %p500 = scmp.ne.s32.totalorder %s486, %s487
    %p501 = scmp.eq.s32.totalorder %s33, 1
    %p502 = por %p500, %p501
    %p504 = scmp.ne.s32.totalorder %s487, %s503
    %p505 = scmp.eq.s32.totalorder %s33, 0
    %p506 = por %p504, %p505
    %p507 = scmp.le.s32.totalorder 1, %s27
    %p508 = scmp.lt.s32.totalorder %s27, 3
    %p509 = pnand %p507, %p508
    %p510 = pneg %p509
    // Predicated region
    $region9: #{dense_block.1} parent=5 // pred_check
      _
    $region10: #{dense_block.1} parent=5 // pred_check_branch
      %512 = sbr.rel (%p509) target = $region12
    $region11: #{dense_block.1} parent=5 // pred_region
      %s513 = ssub.s32 %s27, 1
      // Predicated region
      $region13: #{dense_block.1} parent=11 // pred_check
        %p514 = pneg %p74
      $region14: #{dense_block.1} parent=11 // pred_check_branch
        %516 = sbr.rel (%p514) target = $region16
      $region15: #{dense_block.1} parent=11 // pred_region
        _
      $region16: #{dense_block.1} parent=11 // pred_fallthru
        _
      // Predicated region
      $region17: #{dense_block.1} parent=11 // pred_check
        %p517 = pneg %p95
      $region18: #{dense_block.1} parent=11 // pred_check_branch
        %519 = sbr.rel (%p517) target = $region20
      $region19: #{dense_block.1} parent=11 // pred_region
        _
      $region20: #{dense_block.1} parent=11 // pred_fallthru
        _
      // Predicated region
      $region21: #{dense_block.1} parent=11 // pred_check
        %p520 = pneg %p116
      $region22: #{dense_block.1} parent=11 // pred_check_branch
        %522 = sbr.rel (%p520) target = $region24
      $region23: #{dense_block.1} parent=11 // pred_region
        _
      $region24: #{dense_block.1} parent=11 // pred_fallthru
        _
      // Predicated region
      $region25: #{dense_block.1} parent=11 // pred_check
        %p523 = pneg %p137
      $region26: #{dense_block.1} parent=11 // pred_check_branch
        %525 = sbr.rel (%p523) target = $region28
      $region27: #{dense_block.1} parent=11 // pred_region
        _
      $region28: #{dense_block.1} parent=11 // pred_fallthru
        _
      // Predicated region
      $region29: #{dense_block.1} parent=11 // pred_check
        %p526 = pneg %p158
      $region30: #{dense_block.1} parent=11 // pred_check_branch
        %528 = sbr.rel (%p526) target = $region32
      $region31: #{dense_block.1} parent=11 // pred_region
        _
      $region32: #{dense_block.1} parent=11 // pred_fallthru
        _
      // Predicated region
      $region33: #{dense_block.1} parent=11 // pred_check
        %p529 = pneg %p179
      $region34: #{dense_block.1} parent=11 // pred_check_branch
        %531 = sbr.rel (%p529) target = $region36
      $region35: #{dense_block.1} parent=11 // pred_region
        _
      $region36: #{dense_block.1} parent=11 // pred_fallthru
        _
      // Predicated region
      $region37: #{dense_block.1} parent=11 // pred_check
        %p532 = pneg %p200
      $region38: #{dense_block.1} parent=11 // pred_check_branch
        %534 = sbr.rel (%p532) target = $region40
      $region39: #{dense_block.1} parent=11 // pred_region
        _
      $region40: #{dense_block.1} parent=11 // pred_fallthru
        _
      // Predicated region
      $region41: #{dense_block.1} parent=11 // pred_check
        %p535 = pneg %p221
      $region42: #{dense_block.1} parent=11 // pred_check_branch
        %537 = sbr.rel (%p535) target = $region44
      $region43: #{dense_block.1} parent=11 // pred_region
        _
      $region44: #{dense_block.1} parent=11 // pred_fallthru
        _
      // Predicated region
      $region45: #{dense_block.1} parent=11 // pred_check
        %p538 = pneg %p242
      $region46: #{dense_block.1} parent=11 // pred_check_branch
        %540 = sbr.rel (%p538) target = $region48
      $region47: #{dense_block.1} parent=11 // pred_region
        _
      $region48: #{dense_block.1} parent=11 // pred_fallthru
        _
      // Predicated region
      $region49: #{dense_block.1} parent=11 // pred_check
        %p541 = pneg %p263
      $region50: #{dense_block.1} parent=11 // pred_check_branch
        %543 = sbr.rel (%p541) target = $region52
      $region51: #{dense_block.1} parent=11 // pred_region
        _
      $region52: #{dense_block.1} parent=11 // pred_fallthru
        _
      // Predicated region
      $region53: #{dense_block.1} parent=11 // pred_check
        %p544 = pneg %p284
      $region54: #{dense_block.1} parent=11 // pred_check_branch
        %546 = sbr.rel (%p544) target = $region56
      $region55: #{dense_block.1} parent=11 // pred_region
        _
      $region56: #{dense_block.1} parent=11 // pred_fallthru
        _
      // Predicated region
      $region57: #{dense_block.1} parent=11 // pred_check
        %p547 = pneg %p305
      $region58: #{dense_block.1} parent=11 // pred_check_branch
        %549 = sbr.rel (%p547) target = $region60
      $region59: #{dense_block.1} parent=11 // pred_region
        _
      $region60: #{dense_block.1} parent=11 // pred_fallthru
        _
      // Predicated region
      $region61: #{dense_block.1} parent=11 // pred_check
        %p550 = pneg %p326
      $region62: #{dense_block.1} parent=11 // pred_check_branch
        %552 = sbr.rel (%p550) target = $region64
      $region63: #{dense_block.1} parent=11 // pred_region
        _
      $region64: #{dense_block.1} parent=11 // pred_fallthru
        _
      // Predicated region
      $region65: #{dense_block.1} parent=11 // pred_check
        %p553 = pneg %p347
      $region66: #{dense_block.1} parent=11 // pred_check_branch
        %555 = sbr.rel (%p553) target = $region68
      $region67: #{dense_block.1} parent=11 // pred_region
        _
      $region68: #{dense_block.1} parent=11 // pred_fallthru
        _
      // Predicated region
      $region69: #{dense_block.1} parent=11 // pred_check
        %p556 = pneg %p368
      $region70: #{dense_block.1} parent=11 // pred_check_branch
        %558 = sbr.rel (%p556) target = $region72
      $region71: #{dense_block.1} parent=11 // pred_region
        _
      $region72: #{dense_block.1} parent=11 // pred_fallthru
        _
      // Predicated region
      $region73: #{dense_block.1} parent=11 // pred_check
        %p559 = pneg %p389
      $region74: #{dense_block.1} parent=11 // pred_check_branch
        %561 = sbr.rel (%p559) target = $region76
      $region75: #{dense_block.1} parent=11 // pred_region
        _
      $region76: #{dense_block.1} parent=11 // pred_fallthru
        _
      // Predicated region
      $region77: #{dense_block.1} parent=11 // pred_check
        %p562 = pneg %p410
      $region78: #{dense_block.1} parent=11 // pred_check_branch
        %564 = sbr.rel (%p562) target = $region80
      $region79: #{dense_block.1} parent=11 // pred_region
        _
      $region80: #{dense_block.1} parent=11 // pred_fallthru
        _
      // Predicated region
      $region81: #{dense_block.1} parent=11 // pred_check
        %p565 = pneg %p431
      $region82: #{dense_block.1} parent=11 // pred_check_branch
        %567 = sbr.rel (%p565) target = $region84
      $region83: #{dense_block.1} parent=11 // pred_region
        _
      $region84: #{dense_block.1} parent=11 // pred_fallthru
        _
      // Predicated region
      $region85: #{dense_block.1} parent=11 // pred_check
        %p568 = pneg %p452
      $region86: #{dense_block.1} parent=11 // pred_check_branch
        %570 = sbr.rel (%p568) target = $region88
      $region87: #{dense_block.1} parent=11 // pred_region
        _
      $region88: #{dense_block.1} parent=11 // pred_fallthru
        _
      // Predicated region
      $region89: #{dense_block.1} parent=11 // pred_check
        %p571 = pneg %p473
      $region90: #{dense_block.1} parent=11 // pred_check_branch
        %573 = sbr.rel (%p571) target = $region92
      $region91: #{dense_block.1} parent=11 // pred_region
        _
      $region92: #{dense_block.1} parent=11 // pred_fallthru
        _
    $region12: #{dense_block.1} parent=5 // pred_fallthru
      _
    %p574 = scmp.lt.s32.totalorder %s27, 2
    // Predicated region
    $region93: #{dense_block.1} parent=5 // pred_check
      %p575 = pneg %p574
    $region94: #{dense_block.1} parent=5 // pred_check_branch
      %577 = sbr.rel (%p575) target = $region96
    $region95: #{dense_block.1} parent=5 // pred_region
      // Predicated region
      $region97: #{dense_block.1} parent=95 // pred_check
        %p578 = pneg %p47
      $region98: #{dense_block.1} parent=95 // pred_check_branch
        %580 = sbr.rel (%p578) target = $region100
      $region99: #{dense_block.1} parent=95 // pred_region
        %p581 = scmp.lt.s32.totalorder %s27, 1
        %s582 = scalar_select %p581, %s27, 1
        %s583 = smul.addr %s582, 32
        %s584 = smul.addr %s583, 8
        %s585 = scalar_lea.vmem %s0, %s584
      $region100: #{dense_block.1} parent=95 // pred_fallthru
        _
    $region96: #{dense_block.1} parent=5 // pred_fallthru
      _
    %p586 = scmp.le.s32.totalorder 1, %s27
    %p587 = scmp.lt.s32.totalorder %s27, 3
    %p588 = pnand %p586, %p587
    %p589 = pneg %p588
    // Predicated region
    $region101: #{dense_block.1} parent=5 // pred_check
      _
    $region102: #{dense_block.1} parent=5 // pred_check_branch
      %591 = sbr.rel (%p588) target = $region104
    $region103: #{dense_block.1} parent=5 // pred_region
      %s592 = ssub.s32 %s27, 1
      %p593 = scmp.lt.s32.totalorder %s32, 1
      %s594 = scalar_select %p593, %s32, 1
      %s595 = smul.addr %s594, 32
      %s596 = smul.addr %s595, 8
      %s597 = scalar_lea.vmem %s0, %s596
      %p598 = pneg %p53
      %p599 = pneg %p50
      %p600 = pneg %p74
      %p601 = pneg %p71
      %p602 = pneg %p95
      %p603 = pneg %p92
      %p604 = pneg %p116
      %p605 = pneg %p113
      %p606 = pneg %p137
      %p607 = pneg %p134
      %p608 = pneg %p158
      %p609 = pneg %p155
      %p610 = pneg %p179
      %p611 = pneg %p176
      %p612 = pneg %p200
      %p613 = pneg %p197
      %p614 = pneg %p221
      %p615 = pneg %p218
      %p616 = pneg %p242
      %p617 = pneg %p239
      %p618 = pneg %p263
      %p619 = pneg %p260
      %p620 = pneg %p284
      %p621 = pneg %p281
      %p622 = pneg %p305
      %p623 = pneg %p302
      %p624 = pneg %p326
      %p625 = pneg %p323
      %p626 = pneg %p347
      %p627 = pneg %p344
      %p628 = pneg %p368
      %p629 = pneg %p365
      %p630 = pneg %p389
      %p631 = pneg %p386
      %p632 = pneg %p410
      %p633 = pneg %p407
      %p634 = pneg %p431
      %p635 = pneg %p428
      %p636 = pneg %p452
      %p637 = pneg %p449
      %p638 = pneg %p473
      %p639 = pneg %p470
      %p640 = pneg %p499
      %p641 = pneg %p496
      %p642 = scmp.lt.s32.totalorder %s32, 1
      %s643 = scalar_select %p642, %s32, 1
      %s644 = smul.addr %s643, 32
      %s645 = smul.addr %s644, 8
      %s646 = scalar_lea.vmem %s21, %s645
      %p647 = scmp.lt.s32.totalorder %s32, 1
      %s648 = scalar_select %p647, %s32, 1
      %s649 = smul.addr %s648, 32
      %s650 = smul.addr %s649, 8
      %s651 = scalar_lea.vmem %s0, %s650
      %p652 = scmp.lt.s32.totalorder %s32, 1
      %s653 = scalar_select %p652, %s32, 1
      %s654 = smul.addr %s653, 32
      %s655 = smul.addr %s654, 8
      %s656 = scalar_lea.vmem %s21, %s655
      %vm658 = vcmask 130048
      %659 = vst.msk [vmem:[#allocation2] sm:$0xff] %vm658, 0.0
      %660 = vst.msk [vmem:[#allocation2 + $0x8] sm:$0xff] %vm658, 0.0
      %vm661 = vcmask 123904
      %662 = vst.msk [vmem:[#allocation2 + $0x10] sm:$0x3] %vm661, 0.0
      %663 = vst.msk [vmem:[#allocation2 + $0x18] sm:$0xff] %vm658, 0.0
      %664 = vst.msk [vmem:[#allocation2 + $0x20] sm:$0xff] %vm658, 0.0
      %665 = vst.msk [vmem:[#allocation2 + $0x28] sm:$0x3] %vm661, 0.0
      %666 = vst.msk [vmem:[#allocation2 + $0x30] sm:$0xff] %vm658, 0.0
      %667 = vst.msk [vmem:[#allocation2 + $0x38] sm:$0xff] %vm658, 0.0
      %668 = vst.msk [vmem:[#allocation2 + $0x40] sm:$0x3] %vm661, 0.0
      %669 = vst.msk [vmem:[#allocation2 + $0x48] sm:$0xff] %vm658, 0.0
      %670 = vst.msk [vmem:[#allocation2 + $0x50] sm:$0xff] %vm658, 0.0
      %671 = vst.msk [vmem:[#allocation2 + $0x58] sm:$0x3] %vm661, 0.0
      %672 = vst.msk [vmem:[#allocation2 + $0x60] sm:$0xff] %vm658, 0.0
      %673 = vst.msk [vmem:[#allocation2 + $0x68] sm:$0xff] %vm658, 0.0
      %674 = vst.msk [vmem:[#allocation2 + $0x70] sm:$0x3] %vm661, 0.0
      %675 = vst.msk [vmem:[#allocation2 + $0x78] sm:$0xff] %vm658, 0.0
      %676 = vst.msk [vmem:[#allocation2 + $0x80] sm:$0xff] %vm658, 0.0
      %677 = vst.msk [vmem:[#allocation2 + $0x88] sm:$0x3] %vm661, 0.0
      %678 = vst.msk [vmem:[#allocation2 + $0x90] sm:$0xff] %vm658, 0.0
      %679 = vst.msk [vmem:[#allocation2 + $0x98] sm:$0xff] %vm658, 0.0
      %680 = vst.msk [vmem:[#allocation2 + $0xa0] sm:$0x3] %vm661, 0.0
      %681 = vst.msk [vmem:[#allocation2 + $0xa8] sm:$0xff] %vm658, 0.0
      %682 = vst.msk [vmem:[#allocation2 + $0xb0] sm:$0xff] %vm658, 0.0
      %683 = vst.msk [vmem:[#allocation2 + $0xb8] sm:$0x3] %vm661, 0.0
      %684 = vst.msk [vmem:[#allocation2 + $0xc0] sm:$0xff] %vm658, 0.0
      %685 = vst.msk [vmem:[#allocation2 + $0xc8] sm:$0xff] %vm658, 0.0
      %686 = vst.msk [vmem:[#allocation2 + $0xd0] sm:$0x3] %vm661, 0.0
      %687 = vst.msk [vmem:[#allocation2 + $0xd8] sm:$0xff] %vm658, 0.0
      %688 = vst.msk [vmem:[#allocation2 + $0xe0] sm:$0xff] %vm658, 0.0
      %689 = vst.msk [vmem:[#allocation2 + $0xe8] sm:$0x3] %vm661, 0.0
      %690 = vst.msk [vmem:[#allocation2 + $0xf0] sm:$0xff] %vm658, 0.0
      %691 = vst.msk [vmem:[#allocation2 + $0xf8] sm:$0xff] %vm658, 0.0
      %692 = vst.msk [vmem:[#allocation2 + $0x100] sm:$0x3] %vm661, 0.0
      %693 = vst.msk [vmem:[#allocation2 + $0x108] sm:$0xff] %vm658, 0.0
      %694 = vst.msk [vmem:[#allocation2 + $0x110] sm:$0xff] %vm658, 0.0
      %695 = vst.msk [vmem:[#allocation2 + $0x118] sm:$0x3] %vm661, 0.0
      %696 = vst.msk [vmem:[#allocation2 + $0x120] sm:$0xff] %vm658, 0.0
      %697 = vst.msk [vmem:[#allocation2 + $0x128] sm:$0xff] %vm658, 0.0
      %698 = vst.msk [vmem:[#allocation2 + $0x130] sm:$0x3] %vm661, 0.0
      %699 = vst.msk [vmem:[#allocation2 + $0x138] sm:$0xff] %vm658, 0.0
      %700 = vst.msk [vmem:[#allocation2 + $0x140] sm:$0xff] %vm658, 0.0
      %701 = vst.msk [vmem:[#allocation2 + $0x148] sm:$0x3] %vm661, 0.0
      %702 = vst.msk [vmem:[#allocation2 + $0x150] sm:$0xff] %vm658, 0.0
      %703 = vst.msk [vmem:[#allocation2 + $0x158] sm:$0xff] %vm658, 0.0
      %704 = vst.msk [vmem:[#allocation2 + $0x160] sm:$0x3] %vm661, 0.0
      %705 = vst.msk [vmem:[#allocation2 + $0x168] sm:$0xff] %vm658, 0.0
      %706 = vst.msk [vmem:[#allocation2 + $0x170] sm:$0xff] %vm658, 0.0
      %707 = vst.msk [vmem:[#allocation2 + $0x178] sm:$0x3] %vm661, 0.0
      %708 = vst.msk [vmem:[#allocation2 + $0x180] sm:$0xff] %vm658, 0.0
      %709 = vst.msk [vmem:[#allocation2 + $0x188] sm:$0xff] %vm658, 0.0
      %710 = vst.msk [vmem:[#allocation2 + $0x190] sm:$0x3] %vm661, 0.0
      %711 = vst.msk [vmem:[#allocation2 + $0x198] sm:$0xff] %vm658, 0.0
      %712 = vst.msk [vmem:[#allocation2 + $0x1a0] sm:$0xff] %vm658, 0.0
      %713 = vst.msk [vmem:[#allocation2 + $0x1a8] sm:$0x3] %vm661, 0.0
      %v714 = vld [vmem:[%s651] sm:$0xff]
      %v715 = vld [vmem:[%s651 + $0x8] sm:$0xff]
      %v716 = vld [vmem:[%s651 + $0x10] sm:$0xff]
      %v717 = vld [vmem:[%s651 + $0x18] sm:$0xff]
      %v718 = vld [vmem:[%s651 + $0x20] sm:$0xff]
      %v719 = vld [vmem:[%s651 + $0x28] sm:$0xff]
      %v720 = vld [vmem:[%s651 + $0x30] sm:$0xff]
      %v721 = vld [vmem:[%s651 + $0x38] sm:$0xff]
      %v722 = vld [vmem:[%s651 + $0x40] sm:$0xff]
      %v723 = vld [vmem:[%s651 + $0x48] sm:$0xff]
      %v724 = vld [vmem:[%s651 + $0x50] sm:$0xff]
      %v725 = vld [vmem:[%s651 + $0x58] sm:$0xff]
      %v726 = vld [vmem:[%s651 + $0x60] sm:$0xff]
      %v727 = vld [vmem:[%s651 + $0x68] sm:$0xff]
      %v728 = vld [vmem:[%s651 + $0x70] sm:$0xff]
      %v729 = vld [vmem:[%s651 + $0x78] sm:$0xff]
      %v730 = vld [vmem:[%s651 + $0x80] sm:$0xff]
      %v731 = vld [vmem:[%s651 + $0x88] sm:$0xff]
      %v732 = vld [vmem:[%s651 + $0x90] sm:$0xff]
      %v733 = vld [vmem:[%s651 + $0x98] sm:$0xff]
      %v734 = vld [vmem:[%s651 + $0xa0] sm:$0xff]
      %v735 = vld [vmem:[%s651 + $0xa8] sm:$0xff]
      %v736 = vld [vmem:[%s651 + $0xb0] sm:$0xff]
      %v737 = vld [vmem:[%s651 + $0xb8] sm:$0xff]
      %v738 = vld [vmem:[%s651 + $0xc0] sm:$0xff]
      %v739 = vld [vmem:[%s651 + $0xc8] sm:$0xff]
      %v740 = vld [vmem:[%s651 + $0xd0] sm:$0xff]
      %v741 = vld [vmem:[%s651 + $0xd8] sm:$0xff]
      %v742 = vld [vmem:[%s651 + $0xe0] sm:$0xff]
      %v743 = vld [vmem:[%s651 + $0xe8] sm:$0xff]
      %v744 = vld [vmem:[%s651 + $0xf0] sm:$0xff]
      %v745 = vld [vmem:[%s651 + $0xf8] sm:$0xff]
      %v746 = vpack.c.bf16 %v715, %v714
      %v747 = vpack.c.bf16 %v717, %v716
      %v748 = vpack.c.bf16 %v719, %v718
      %v749 = vpack.c.bf16 %v721, %v720
      %v750 = vpack.c.bf16 %v723, %v722
      %v751 = vpack.c.bf16 %v725, %v724
      %v752 = vpack.c.bf16 %v727, %v726
      %v753 = vpack.c.bf16 %v729, %v728
      %v754 = vpack.c.bf16 %v731, %v730
      %v755 = vpack.c.bf16 %v733, %v732
      %v756 = vpack.c.bf16 %v735, %v734
      %v757 = vpack.c.bf16 %v737, %v736
      %v758 = vpack.c.bf16 %v739, %v738
      %v759 = vpack.c.bf16 %v741, %v740
      %v760 = vpack.c.bf16 %v743, %v742
      %v761 = vpack.c.bf16 %v745, %v744
      %s762 = scalar_lea.vmem [#allocation2], 24
      %vm763 = vcmask 31744
      %764 = vst.msk [vmem:[%s762 + $0x1] sm:$0xff] %vm763, %v714
      %765 = vst.msk [vmem:[%s762 + $0x9] sm:$0xff] %vm763, %v715
      %766 = vst.msk [vmem:[%s762 + $0x19] sm:$0xff] %vm763, %v716
      %767 = vst.msk [vmem:[%s762 + $0x21] sm:$0xff] %vm763, %v717
      %768 = vst.msk [vmem:[%s762 + $0x31] sm:$0xff] %vm763, %v718
      %769 = vst.msk [vmem:[%s762 + $0x39] sm:$0xff] %vm763, %v719
      %770 = vst.msk [vmem:[%s762 + $0x49] sm:$0xff] %vm763, %v720
      %771 = vst.msk [vmem:[%s762 + $0x51] sm:$0xff] %vm763, %v721
      %772 = vst.msk [vmem:[%s762 + $0x61] sm:$0xff] %vm763, %v722
      %773 = vst.msk [vmem:[%s762 + $0x69] sm:$0xff] %vm763, %v723
      %774 = vst.msk [vmem:[%s762 + $0x79] sm:$0xff] %vm763, %v724
      %775 = vst.msk [vmem:[%s762 + $0x81] sm:$0xff] %vm763, %v725
      %776 = vst.msk [vmem:[%s762 + $0x91] sm:$0xff] %vm763, %v726
      %777 = vst.msk [vmem:[%s762 + $0x99] sm:$0xff] %vm763, %v727
      %778 = vst.msk [vmem:[%s762 + $0xa9] sm:$0xff] %vm763, %v728
      %779 = vst.msk [vmem:[%s762 + $0xb1] sm:$0xff] %vm763, %v729
      %780 = vst.msk [vmem:[%s762 + $0xc1] sm:$0xff] %vm763, %v730
      %781 = vst.msk [vmem:[%s762 + $0xc9] sm:$0xff] %vm763, %v731
      %782 = vst.msk [vmem:[%s762 + $0xd9] sm:$0xff] %vm763, %v732
      %783 = vst.msk [vmem:[%s762 + $0xe1] sm:$0xff] %vm763, %v733
      %784 = vst.msk [vmem:[%s762 + $0xf1] sm:$0xff] %vm763, %v734
      %785 = vst.msk [vmem:[%s762 + $0xf9] sm:$0xff] %vm763, %v735
      %786 = vst.msk [vmem:[%s762 + $0x109] sm:$0xff] %vm763, %v736
      %787 = vst.msk [vmem:[%s762 + $0x111] sm:$0xff] %vm763, %v737
      %788 = vst.msk [vmem:[%s762 + $0x121] sm:$0xff] %vm763, %v738
      %789 = vst.msk [vmem:[%s762 + $0x129] sm:$0xff] %vm763, %v739
      %790 = vst.msk [vmem:[%s762 + $0x139] sm:$0xff] %vm763, %v740
      %791 = vst.msk [vmem:[%s762 + $0x141] sm:$0xff] %vm763, %v741
      %792 = vst.msk [vmem:[%s762 + $0x151] sm:$0xff] %vm763, %v742
      %793 = vst.msk [vmem:[%s762 + $0x159] sm:$0xff] %vm763, %v743
      %794 = vst.msk [vmem:[%s762 + $0x169] sm:$0xff] %vm763, %v744
      %795 = vst.msk [vmem:[%s762 + $0x171] sm:$0xff] %vm763, %v745
      %v796 = vld [vmem:[#allocation2] sm:$0xff]
      %v797 = vld [vmem:[#allocation2 + $0x8] sm:$0xff]
      %v798 = vld [vmem:[#allocation2 + $0x18] sm:$0xff]
      %v799 = vld [vmem:[#allocation2 + $0x20] sm:$0xff]
      %v800 = vld [vmem:[#allocation2 + $0x30] sm:$0xff]
      %v801 = vld [vmem:[#allocation2 + $0x38] sm:$0xff]
      %v802 = vld [vmem:[#allocation2 + $0x48] sm:$0xff]
      %v803 = vld [vmem:[#allocation2 + $0x50] sm:$0xff]
      %v804 = vld [vmem:[#allocation2 + $0x60] sm:$0xff]
      %v805 = vld [vmem:[#allocation2 + $0x68] sm:$0xff]
      %v806 = vld [vmem:[#allocation2 + $0x78] sm:$0xff]
      %v807 = vld [vmem:[#allocation2 + $0x80] sm:$0xff]
      %v808 = vld [vmem:[#allocation2 + $0x90] sm:$0xff]
      %v809 = vld [vmem:[#allocation2 + $0x98] sm:$0xff]
      %v810 = vld [vmem:[#allocation2 + $0xa8] sm:$0xff]
      %v811 = vld [vmem:[#allocation2 + $0xb0] sm:$0xff]
      %v812 = vld [vmem:[#allocation2 + $0xc0] sm:$0xff]
      %v813 = vld [vmem:[#allocation2 + $0xc8] sm:$0xff]
      %v814 = vld [vmem:[#allocation2 + $0xd8] sm:$0xff]
      %v815 = vld [vmem:[#allocation2 + $0xe0] sm:$0xff]
      %v816 = vld [vmem:[#allocation2 + $0xf0] sm:$0xff]
      %v817 = vld [vmem:[#allocation2 + $0xf8] sm:$0xff]
      %v818 = vld [vmem:[#allocation2 + $0x108] sm:$0xff]
      %v819 = vld [vmem:[#allocation2 + $0x110] sm:$0xff]
      %v820 = vld [vmem:[#allocation2 + $0x120] sm:$0xff]
      %v821 = vld [vmem:[#allocation2 + $0x128] sm:$0xff]
      %v822 = vld [vmem:[#allocation2 + $0x138] sm:$0xff]
      %v823 = vld [vmem:[#allocation2 + $0x140] sm:$0xff]
      %v824 = vld [vmem:[#allocation2 + $0x150] sm:$0xff]
      %v825 = vld [vmem:[#allocation2 + $0x158] sm:$0xff]
      %v826 = vld [vmem:[#allocation2 + $0x168] sm:$0xff]
      %v827 = vld [vmem:[#allocation2 + $0x170] sm:$0xff]
      %v828 = vld [vmem:[#allocation2 + $0x1] sm:$0xff]
      %v829 = vld [vmem:[#allocation2 + $0x9] sm:$0xff]
      %v830 = vld [vmem:[#allocation2 + $0x19] sm:$0xff]
      %v831 = vld [vmem:[#allocation2 + $0x21] sm:$0xff]
      %v832 = vld [vmem:[#allocation2 + $0x31] sm:$0xff]
      %v833 = vld [vmem:[#allocation2 + $0x39] sm:$0xff]
      %v834 = vld [vmem:[#allocation2 + $0x49] sm:$0xff]
      %v835 = vld [vmem:[#allocation2 + $0x51] sm:$0xff]
      %v836 = vld [vmem:[#allocation2 + $0x61] sm:$0xff]
      %v837 = vld [vmem:[#allocation2 + $0x69] sm:$0xff]
      %v838 = vld [vmem:[#allocation2 + $0x79] sm:$0xff]
      %v839 = vld [vmem:[#allocation2 + $0x81] sm:$0xff]
      %v840 = vld [vmem:[#allocation2 + $0x91] sm:$0xff]
      %v841 = vld [vmem:[#allocation2 + $0x99] sm:$0xff]
      %v842 = vld [vmem:[#allocation2 + $0xa9] sm:$0xff]
      %v843 = vld [vmem:[#allocation2 + $0xb1] sm:$0xff]
      %v844 = vld [vmem:[#allocation2 + $0xc1] sm:$0xff]
      %v845 = vld [vmem:[#allocation2 + $0xc9] sm:$0xff]
      %v846 = vld [vmem:[#allocation2 + $0xd9] sm:$0xff]
      %v847 = vld [vmem:[#allocation2 + $0xe1] sm:$0xff]
      %v848 = vld [vmem:[#allocation2 + $0xf1] sm:$0xff]
      %v849 = vld [vmem:[#allocation2 + $0xf9] sm:$0xff]
      %v850 = vld [vmem:[#allocation2 + $0x109] sm:$0xff]
      %v851 = vld [vmem:[#allocation2 + $0x111] sm:$0xff]
      %v852 = vld [vmem:[#allocation2 + $0x121] sm:$0xff]
      %v853 = vld [vmem:[#allocation2 + $0x129] sm:$0xff]
      %v854 = vld [vmem:[#allocation2 + $0x139] sm:$0xff]
      %v855 = vld [vmem:[#allocation2 + $0x141] sm:$0xff]
      %v856 = vld [vmem:[#allocation2 + $0x151] sm:$0xff]
      %v857 = vld [vmem:[#allocation2 + $0x159] sm:$0xff]
      %v858 = vld [vmem:[#allocation2 + $0x169] sm:$0xff]
      %v859 = vld [vmem:[#allocation2 + $0x171] sm:$0xff]
      %v860 = vld [vmem:[#allocation2 + $0x2] sm:$0xff]
      %v861 = vld [vmem:[#allocation2 + $0xa] sm:$0xff]
      %v862 = vld [vmem:[#allocation2 + $0x1a] sm:$0xff]
      %v863 = vld [vmem:[#allocation2 + $0x22] sm:$0xff]
      %v864 = vld [vmem:[#allocation2 + $0x32] sm:$0xff]
      %v865 = vld [vmem:[#allocation2 + $0x3a] sm:$0xff]
      %v866 = vld [vmem:[#allocation2 + $0x4a] sm:$0xff]
      %v867 = vld [vmem:[#allocation2 + $0x52] sm:$0xff]
      %v868 = vld [vmem:[#allocation2 + $0x62] sm:$0xff]
      %v869 = vld [vmem:[#allocation2 + $0x6a] sm:$0xff]
      %v870 = vld [vmem:[#allocation2 + $0x7a] sm:$0xff]
      %v871 = vld [vmem:[#allocation2 + $0x82] sm:$0xff]
      %v872 = vld [vmem:[#allocation2 + $0x92] sm:$0xff]
      %v873 = vld [vmem:[#allocation2 + $0x9a] sm:$0xff]
      %v874 = vld [vmem:[#allocation2 + $0xaa] sm:$0xff]
      %v875 = vld [vmem:[#allocation2 + $0xb2] sm:$0xff]
      %v876 = vld [vmem:[#allocation2 + $0xc2] sm:$0xff]
      %v877 = vld [vmem:[#allocation2 + $0xca] sm:$0xff]
      %v878 = vld [vmem:[#allocation2 + $0xda] sm:$0xff]
      %v879 = vld [vmem:[#allocation2 + $0xe2] sm:$0xff]
      %v880 = vld [vmem:[#allocation2 + $0xf2] sm:$0xff]
      %v881 = vld [vmem:[#allocation2 + $0xfa] sm:$0xff]
      %v882 = vld [vmem:[#allocation2 + $0x10a] sm:$0xff]
      %v883 = vld [vmem:[#allocation2 + $0x112] sm:$0xff]
      %v884 = vld [vmem:[#allocation2 + $0x122] sm:$0xff]
      %v885 = vld [vmem:[#allocation2 + $0x12a] sm:$0xff]
      %v886 = vld [vmem:[#allocation2 + $0x13a] sm:$0xff]
      %v887 = vld [vmem:[#allocation2 + $0x142] sm:$0xff]
      %v888 = vld [vmem:[#allocation2 + $0x152] sm:$0xff]
      %v889 = vld [vmem:[#allocation2 + $0x15a] sm:$0xff]
      %v890 = vld [vmem:[#allocation2 + $0x16a] sm:$0xff]
      %v891 = vld [vmem:[#allocation2 + $0x172] sm:$0xff]
      %v892 = vld [vmem:[%s762] sm:$0xff]
      %v893 = vld [vmem:[%s762 + $0x8] sm:$0xff]
      %v894 = vld [vmem:[%s762 + $0x18] sm:$0xff]
      %v895 = vld [vmem:[%s762 + $0x20] sm:$0xff]
      %v896 = vld [vmem:[%s762 + $0x30] sm:$0xff]
      %v897 = vld [vmem:[%s762 + $0x38] sm:$0xff]
      %v898 = vld [vmem:[%s762 + $0x48] sm:$0xff]
      %v899 = vld [vmem:[%s762 + $0x50] sm:$0xff]
      %v900 = vld [vmem:[%s762 + $0x60] sm:$0xff]
      %v901 = vld [vmem:[%s762 + $0x68] sm:$0xff]
      %v902 = vld [vmem:[%s762 + $0x78] sm:$0xff]
      %v903 = vld [vmem:[%s762 + $0x80] sm:$0xff]
      %v904 = vld [vmem:[%s762 + $0x90] sm:$0xff]
      %v905 = vld [vmem:[%s762 + $0x98] sm:$0xff]
      %v906 = vld [vmem:[%s762 + $0xa8] sm:$0xff]
      %v907 = vld [vmem:[%s762 + $0xb0] sm:$0xff]
      %v908 = vld [vmem:[%s762 + $0xc0] sm:$0xff]
      %v909 = vld [vmem:[%s762 + $0xc8] sm:$0xff]
      %v910 = vld [vmem:[%s762 + $0xd8] sm:$0xff]
      %v911 = vld [vmem:[%s762 + $0xe0] sm:$0xff]
      %v912 = vld [vmem:[%s762 + $0xf0] sm:$0xff]
      %v913 = vld [vmem:[%s762 + $0xf8] sm:$0xff]
      %v914 = vld [vmem:[%s762 + $0x108] sm:$0xff]
      %v915 = vld [vmem:[%s762 + $0x110] sm:$0xff]
      %v916 = vld [vmem:[%s762 + $0x120] sm:$0xff]
      %v917 = vld [vmem:[%s762 + $0x128] sm:$0xff]
      %v918 = vld [vmem:[%s762 + $0x138] sm:$0xff]
      %v919 = vld [vmem:[%s762 + $0x140] sm:$0xff]
      %v920 = vld [vmem:[%s762 + $0x150] sm:$0xff]
      %v921 = vld [vmem:[%s762 + $0x158] sm:$0xff]
      %v922 = vld [vmem:[%s762 + $0x168] sm:$0xff]
      %v923 = vld [vmem:[%s762 + $0x170] sm:$0xff]
      %v924 = vld [vmem:[%s762 + $0x1] sm:$0xff]
      %v925 = vld [vmem:[%s762 + $0x9] sm:$0xff]
      %v926 = vld [vmem:[%s762 + $0x19] sm:$0xff]
      %v927 = vld [vmem:[%s762 + $0x21] sm:$0xff]
      %v928 = vld [vmem:[%s762 + $0x31] sm:$0xff]
      %v929 = vld [vmem:[%s762 + $0x39] sm:$0xff]
      %v930 = vld [vmem:[%s762 + $0x49] sm:$0xff]
      %v931 = vld [vmem:[%s762 + $0x51] sm:$0xff]
      %v932 = vld [vmem:[%s762 + $0x61] sm:$0xff]
      %v933 = vld [vmem:[%s762 + $0x69] sm:$0xff]
      %v934 = vld [vmem:[%s762 + $0x79] sm:$0xff]
      %v935 = vld [vmem:[%s762 + $0x81] sm:$0xff]
      %v936 = vld [vmem:[%s762 + $0x91] sm:$0xff]
      %v937 = vld [vmem:[%s762 + $0x99] sm:$0xff]
      %v938 = vld [vmem:[%s762 + $0xa9] sm:$0xff]
      %v939 = vld [vmem:[%s762 + $0xb1] sm:$0xff]
      %v940 = vld [vmem:[%s762 + $0xc1] sm:$0xff]
      %v941 = vld [vmem:[%s762 + $0xc9] sm:$0xff]
      %v942 = vld [vmem:[%s762 + $0xd9] sm:$0xff]
      %v943 = vld [vmem:[%s762 + $0xe1] sm:$0xff]
      %v944 = vld [vmem:[%s762 + $0xf1] sm:$0xff]
      %v945 = vld [vmem:[%s762 + $0xf9] sm:$0xff]
      %v946 = vld [vmem:[%s762 + $0x109] sm:$0xff]
      %v947 = vld [vmem:[%s762 + $0x111] sm:$0xff]
      %v948 = vld [vmem:[%s762 + $0x121] sm:$0xff]
      %v949 = vld [vmem:[%s762 + $0x129] sm:$0xff]
      %v950 = vld [vmem:[%s762 + $0x139] sm:$0xff]
      %v951 = vld [vmem:[%s762 + $0x141] sm:$0xff]
      %v952 = vld [vmem:[%s762 + $0x151] sm:$0xff]
      %v953 = vld [vmem:[%s762 + $0x159] sm:$0xff]
      %v954 = vld [vmem:[%s762 + $0x169] sm:$0xff]
      %v955 = vld [vmem:[%s762 + $0x171] sm:$0xff]
      %v956 = vld [vmem:[%s762 + $0x2] sm:$0xff]
      %v957 = vld [vmem:[%s762 + $0xa] sm:$0xff]
      %v958 = vld [vmem:[%s762 + $0x1a] sm:$0xff]
      %v959 = vld [vmem:[%s762 + $0x22] sm:$0xff]
      %v960 = vld [vmem:[%s762 + $0x32] sm:$0xff]
      %v961 = vld [vmem:[%s762 + $0x3a] sm:$0xff]
      %v962 = vld [vmem:[%s762 + $0x4a] sm:$0xff]
      %v963 = vld [vmem:[%s762 + $0x52] sm:$0xff]
      %v964 = vld [vmem:[%s762 + $0x62] sm:$0xff]
      %v965 = vld [vmem:[%s762 + $0x6a] sm:$0xff]
      %v966 = vld [vmem:[%s762 + $0x7a] sm:$0xff]
      %v967 = vld [vmem:[%s762 + $0x82] sm:$0xff]
      %v968 = vld [vmem:[%s762 + $0x92] sm:$0xff]
      %v969 = vld [vmem:[%s762 + $0x9a] sm:$0xff]
      %v970 = vld [vmem:[%s762 + $0xaa] sm:$0xff]
      %v971 = vld [vmem:[%s762 + $0xb2] sm:$0xff]
      %v972 = vld [vmem:[%s762 + $0xc2] sm:$0xff]
      %v973 = vld [vmem:[%s762 + $0xca] sm:$0xff]
      %v974 = vld [vmem:[%s762 + $0xda] sm:$0xff]
      %v975 = vld [vmem:[%s762 + $0xe2] sm:$0xff]
      %v976 = vld [vmem:[%s762 + $0xf2] sm:$0xff]
      %v977 = vld [vmem:[%s762 + $0xfa] sm:$0xff]
      %v978 = vld [vmem:[%s762 + $0x10a] sm:$0xff]
      %v979 = vld [vmem:[%s762 + $0x112] sm:$0xff]
      %v980 = vld [vmem:[%s762 + $0x122] sm:$0xff]
      %v981 = vld [vmem:[%s762 + $0x12a] sm:$0xff]
      %v982 = vld [vmem:[%s762 + $0x13a] sm:$0xff]
      %v983 = vld [vmem:[%s762 + $0x142] sm:$0xff]
      %v984 = vld [vmem:[%s762 + $0x152] sm:$0xff]
      %v985 = vld [vmem:[%s762 + $0x15a] sm:$0xff]
      %v986 = vld [vmem:[%s762 + $0x16a] sm:$0xff]
      %v987 = vld [vmem:[%s762 + $0x172] sm:$0xff]
      %s988 = scalar_lea.vmem [#allocation2], 48
      %v989 = vld [vmem:[%s988] sm:$0xff]
      %v990 = vld [vmem:[%s988 + $0x8] sm:$0xff]
      %v991 = vld [vmem:[%s988 + $0x18] sm:$0xff]
      %v992 = vld [vmem:[%s988 + $0x20] sm:$0xff]
      %v993 = vld [vmem:[%s988 + $0x30] sm:$0xff]
      %v994 = vld [vmem:[%s988 + $0x38] sm:$0xff]
      %v995 = vld [vmem:[%s988 + $0x48] sm:$0xff]
      %v996 = vld [vmem:[%s988 + $0x50] sm:$0xff]
      %v997 = vld [vmem:[%s988 + $0x60] sm:$0xff]
      %v998 = vld [vmem:[%s988 + $0x68] sm:$0xff]
      %v999 = vld [vmem:[%s988 + $0x78] sm:$0xff]
      %v1000 = vld [vmem:[%s988 + $0x80] sm:$0xff]
      %v1001 = vld [vmem:[%s988 + $0x90] sm:$0xff]
      %v1002 = vld [vmem:[%s988 + $0x98] sm:$0xff]
      %v1003 = vld [vmem:[%s988 + $0xa8] sm:$0xff]
      %v1004 = vld [vmem:[%s988 + $0xb0] sm:$0xff]
      %v1005 = vld [vmem:[%s988 + $0xc0] sm:$0xff]
      %v1006 = vld [vmem:[%s988 + $0xc8] sm:$0xff]
      %v1007 = vld [vmem:[%s988 + $0xd8] sm:$0xff]
      %v1008 = vld [vmem:[%s988 + $0xe0] sm:$0xff]
      %v1009 = vld [vmem:[%s988 + $0xf0] sm:$0xff]
      %v1010 = vld [vmem:[%s988 + $0xf8] sm:$0xff]
      %v1011 = vld [vmem:[%s988 + $0x108] sm:$0xff]
      %v1012 = vld [vmem:[%s988 + $0x110] sm:$0xff]
      %v1013 = vld [vmem:[%s988 + $0x120] sm:$0xff]
      %v1014 = vld [vmem:[%s988 + $0x128] sm:$0xff]
      %v1015 = vld [vmem:[%s988 + $0x138] sm:$0xff]
      %v1016 = vld [vmem:[%s988 + $0x140] sm:$0xff]
      %v1017 = vld [vmem:[%s988 + $0x150] sm:$0xff]
      %v1018 = vld [vmem:[%s988 + $0x158] sm:$0xff]
      %v1019 = vld [vmem:[%s988 + $0x168] sm:$0xff]
      %v1020 = vld [vmem:[%s988 + $0x170] sm:$0xff]
      %v1021 = vld [vmem:[%s988 + $0x1] sm:$0xff]
      %v1022 = vld [vmem:[%s988 + $0x9] sm:$0xff]
      %v1023 = vld [vmem:[%s988 + $0x19] sm:$0xff]
      %v1024 = vld [vmem:[%s988 + $0x21] sm:$0xff]
      %v1025 = vld [vmem:[%s988 + $0x31] sm:$0xff]
      %v1026 = vld [vmem:[%s988 + $0x39] sm:$0xff]
      %v1027 = vld [vmem:[%s988 + $0x49] sm:$0xff]
      %v1028 = vld [vmem:[%s988 + $0x51] sm:$0xff]
      %v1029 = vld [vmem:[%s988 + $0x61] sm:$0xff]
      %v1030 = vld [vmem:[%s988 + $0x69] sm:$0xff]
      %v1031 = vld [vmem:[%s988 + $0x79] sm:$0xff]
      %v1032 = vld [vmem:[%s988 + $0x81] sm:$0xff]
      %v1033 = vld [vmem:[%s988 + $0x91] sm:$0xff]
      %v1034 = vld [vmem:[%s988 + $0x99] sm:$0xff]
      %v1035 = vld [vmem:[%s988 + $0xa9] sm:$0xff]
      %v1036 = vld [vmem:[%s988 + $0xb1] sm:$0xff]
      %v1037 = vld [vmem:[%s988 + $0xc1] sm:$0xff]
      %v1038 = vld [vmem:[%s988 + $0xc9] sm:$0xff]
      %v1039 = vld [vmem:[%s988 + $0xd9] sm:$0xff]
      %v1040 = vld [vmem:[%s988 + $0xe1] sm:$0xff]
      %v1041 = vld [vmem:[%s988 + $0xf1] sm:$0xff]
      %v1042 = vld [vmem:[%s988 + $0xf9] sm:$0xff]
      %v1043 = vld [vmem:[%s988 + $0x109] sm:$0xff]
      %v1044 = vld [vmem:[%s988 + $0x111] sm:$0xff]
      %v1045 = vld [vmem:[%s988 + $0x121] sm:$0xff]
      %v1046 = vld [vmem:[%s988 + $0x129] sm:$0xff]
      %v1047 = vld [vmem:[%s988 + $0x139] sm:$0xff]
      %v1048 = vld [vmem:[%s988 + $0x141] sm:$0xff]
      %v1049 = vld [vmem:[%s988 + $0x151] sm:$0xff]
      %v1050 = vld [vmem:[%s988 + $0x159] sm:$0xff]
      %v1051 = vld [vmem:[%s988 + $0x169] sm:$0xff]
      %v1052 = vld [vmem:[%s988 + $0x171] sm:$0xff]
      %v1053 = vld [vmem:[%s988 + $0x2] sm:$0xff]
      %v1054 = vld [vmem:[%s988 + $0xa] sm:$0xff]
      %v1055 = vld [vmem:[%s988 + $0x1a] sm:$0xff]
      %v1056 = vld [vmem:[%s988 + $0x22] sm:$0xff]
      %v1057 = vld [vmem:[%s988 + $0x32] sm:$0xff]
      %v1058 = vld [vmem:[%s988 + $0x3a] sm:$0xff]
      %v1059 = vld [vmem:[%s988 + $0x4a] sm:$0xff]
      %v1060 = vld [vmem:[%s988 + $0x52] sm:$0xff]
      %v1061 = vld [vmem:[%s988 + $0x62] sm:$0xff]
      %v1062 = vld [vmem:[%s988 + $0x6a] sm:$0xff]
      %v1063 = vld [vmem:[%s988 + $0x7a] sm:$0xff]
      %v1064 = vld [vmem:[%s988 + $0x82] sm:$0xff]
      %v1065 = vld [vmem:[%s988 + $0x92] sm:$0xff]
      %v1066 = vld [vmem:[%s988 + $0x9a] sm:$0xff]
      %v1067 = vld [vmem:[%s988 + $0xaa] sm:$0xff]
      %v1068 = vld [vmem:[%s988 + $0xb2] sm:$0xff]
      %v1069 = vld [vmem:[%s988 + $0xc2] sm:$0xff]
      %v1070 = vld [vmem:[%s988 + $0xca] sm:$0xff]
      %v1071 = vld [vmem:[%s988 + $0xda] sm:$0xff]
      %v1072 = vld [vmem:[%s988 + $0xe2] sm:$0xff]
      %v1073 = vld [vmem:[%s988 + $0xf2] sm:$0xff]
      %v1074 = vld [vmem:[%s988 + $0xfa] sm:$0xff]
      %v1075 = vld [vmem:[%s988 + $0x10a] sm:$0xff]
      %v1076 = vld [vmem:[%s988 + $0x112] sm:$0xff]
      %v1077 = vld [vmem:[%s988 + $0x122] sm:$0xff]
      %v1078 = vld [vmem:[%s988 + $0x12a] sm:$0xff]
      %v1079 = vld [vmem:[%s988 + $0x13a] sm:$0xff]
      %v1080 = vld [vmem:[%s988 + $0x142] sm:$0xff]
      %v1081 = vld [vmem:[%s988 + $0x152] sm:$0xff]
      %v1082 = vld [vmem:[%s988 + $0x15a] sm:$0xff]
      %v1083 = vld [vmem:[%s988 + $0x16a] sm:$0xff]
      %v1084 = vld [vmem:[%s988 + $0x172] sm:$0xff]
      %1117 = vrot.lane.b32.xlu0 %v828, 4
      %v1118 = vpop.permute.xlu0 %1117
      %1119 = vrot.lane.b32.xlu0 %v829, 4
      %v1120 = vpop.permute.xlu0 %1119
      %1121 = vrot.lane.b32.xlu0 %v830, 4
      %v1122 = vpop.permute.xlu0 %1121
      %1123 = vrot.lane.b32.xlu0 %v831, 4
      %v1124 = vpop.permute.xlu0 %1123
      %1125 = vrot.lane.b32.xlu0 %v832, 4
      %v1126 = vpop.permute.xlu0 %1125
      %1127 = vrot.lane.b32.xlu0 %v833, 4
      %v1128 = vpop.permute.xlu0 %1127
      %1129 = vrot.lane.b32.xlu0 %v834, 4
      %v1130 = vpop.permute.xlu0 %1129
      %1131 = vrot.lane.b32.xlu0 %v835, 4
      %v1132 = vpop.permute.xlu0 %1131
      %1133 = vrot.lane.b32.xlu0 %v836, 4
      %v1134 = vpop.permute.xlu0 %1133
      %1135 = vrot.lane.b32.xlu0 %v837, 4
      %v1136 = vpop.permute.xlu0 %1135
      %1137 = vrot.lane.b32.xlu0 %v838, 4
      %v1138 = vpop.permute.xlu0 %1137
      %1139 = vrot.lane.b32.xlu0 %v839, 4
      %v1140 = vpop.permute.xlu0 %1139
      %1141 = vrot.lane.b32.xlu0 %v840, 4
      %v1142 = vpop.permute.xlu0 %1141
      %1143 = vrot.lane.b32.xlu0 %v841, 4
      %v1144 = vpop.permute.xlu0 %1143
      %1145 = vrot.lane.b32.xlu0 %v842, 4
      %v1146 = vpop.permute.xlu0 %1145
      %1147 = vrot.lane.b32.xlu0 %v843, 4
      %v1148 = vpop.permute.xlu0 %1147
      %1149 = vrot.lane.b32.xlu0 %v844, 4
      %v1150 = vpop.permute.xlu0 %1149
      %1151 = vrot.lane.b32.xlu0 %v845, 4
      %v1152 = vpop.permute.xlu0 %1151
      %1153 = vrot.lane.b32.xlu0 %v846, 4
      %v1154 = vpop.permute.xlu0 %1153
      %1155 = vrot.lane.b32.xlu0 %v847, 4
      %v1156 = vpop.permute.xlu0 %1155
      %1157 = vrot.lane.b32.xlu0 %v848, 4
      %v1158 = vpop.permute.xlu0 %1157
      %1159 = vrot.lane.b32.xlu0 %v849, 4
      %v1160 = vpop.permute.xlu0 %1159
      %1161 = vrot.lane.b32.xlu0 %v850, 4
      %v1162 = vpop.permute.xlu0 %1161
      %1163 = vrot.lane.b32.xlu0 %v851, 4
      %v1164 = vpop.permute.xlu0 %1163
      %1165 = vrot.lane.b32.xlu0 %v852, 4
      %v1166 = vpop.permute.xlu0 %1165
      %1167 = vrot.lane.b32.xlu0 %v853, 4
      %v1168 = vpop.permute.xlu0 %1167
      %1169 = vrot.lane.b32.xlu0 %v854, 4
      %v1170 = vpop.permute.xlu0 %1169
      %1171 = vrot.lane.b32.xlu0 %v855, 4
      %v1172 = vpop.permute.xlu0 %1171
      %1173 = vrot.lane.b32.xlu0 %v856, 4
      %v1174 = vpop.permute.xlu0 %1173
      %1175 = vrot.lane.b32.xlu0 %v857, 4
      %v1176 = vpop.permute.xlu0 %1175
      %1177 = vrot.lane.b32.xlu0 %v858, 4
      %v1178 = vpop.permute.xlu0 %1177
      %1179 = vrot.lane.b32.xlu0 %v859, 4
      %v1180 = vpop.permute.xlu0 %1179
      %1245 = vrot.lane.b32.xlu0 %v860, 8
      %v1246 = vpop.permute.xlu0 %1245
      %1247 = vrot.lane.b32.xlu0 %v861, 8
      %v1248 = vpop.permute.xlu0 %1247
      %1249 = vrot.lane.b32.xlu0 %v862, 8
      %v1250 = vpop.permute.xlu0 %1249
      %1251 = vrot.lane.b32.xlu0 %v863, 8
      %v1252 = vpop.permute.xlu0 %1251
      %1253 = vrot.lane.b32.xlu0 %v864, 8
      %v1254 = vpop.permute.xlu0 %1253
      %1255 = vrot.lane.b32.xlu0 %v865, 8
      %v1256 = vpop.permute.xlu0 %1255
      %1257 = vrot.lane.b32.xlu0 %v866, 8
      %v1258 = vpop.permute.xlu0 %1257
      %1259 = vrot.lane.b32.xlu0 %v867, 8
      %v1260 = vpop.permute.xlu0 %1259
      %1261 = vrot.lane.b32.xlu0 %v868, 8
      %v1262 = vpop.permute.xlu0 %1261
      %1263 = vrot.lane.b32.xlu0 %v869, 8
      %v1264 = vpop.permute.xlu0 %1263
      %1265 = vrot.lane.b32.xlu0 %v870, 8
      %v1266 = vpop.permute.xlu0 %1265
      %1267 = vrot.lane.b32.xlu0 %v871, 8
      %v1268 = vpop.permute.xlu0 %1267
      %1269 = vrot.lane.b32.xlu0 %v872, 8
      %v1270 = vpop.permute.xlu0 %1269
      %1271 = vrot.lane.b32.xlu0 %v873, 8
      %v1272 = vpop.permute.xlu0 %1271
      %1273 = vrot.lane.b32.xlu0 %v874, 8
      %v1274 = vpop.permute.xlu0 %1273
      %1275 = vrot.lane.b32.xlu0 %v875, 8
      %v1276 = vpop.permute.xlu0 %1275
      %1277 = vrot.lane.b32.xlu0 %v876, 8
      %v1278 = vpop.permute.xlu0 %1277
      %1279 = vrot.lane.b32.xlu0 %v877, 8
      %v1280 = vpop.permute.xlu0 %1279
      %1281 = vrot.lane.b32.xlu0 %v878, 8
      %v1282 = vpop.permute.xlu0 %1281
      %1283 = vrot.lane.b32.xlu0 %v879, 8
      %v1284 = vpop.permute.xlu0 %1283
      %1285 = vrot.lane.b32.xlu0 %v880, 8
      %v1286 = vpop.permute.xlu0 %1285
      %1287 = vrot.lane.b32.xlu0 %v881, 8
      %v1288 = vpop.permute.xlu0 %1287
      %1289 = vrot.lane.b32.xlu0 %v882, 8
      %v1290 = vpop.permute.xlu0 %1289
      %1291 = vrot.lane.b32.xlu0 %v883, 8
      %v1292 = vpop.permute.xlu0 %1291
      %1293 = vrot.lane.b32.xlu0 %v884, 8
      %v1294 = vpop.permute.xlu0 %1293
      %1295 = vrot.lane.b32.xlu0 %v885, 8
      %v1296 = vpop.permute.xlu0 %1295
      %1297 = vrot.lane.b32.xlu0 %v886, 8
      %v1298 = vpop.permute.xlu0 %1297
      %1299 = vrot.lane.b32.xlu0 %v887, 8
      %v1300 = vpop.permute.xlu0 %1299
      %1301 = vrot.lane.b32.xlu0 %v888, 8
      %v1302 = vpop.permute.xlu0 %1301
      %1303 = vrot.lane.b32.xlu0 %v889, 8
      %v1304 = vpop.permute.xlu0 %1303
      %1305 = vrot.lane.b32.xlu0 %v890, 8
      %v1306 = vpop.permute.xlu0 %1305
      %1307 = vrot.lane.b32.xlu0 %v891, 8
      %v1308 = vpop.permute.xlu0 %1307
      %1373 = vrot.lane.b32.xlu0 %v892, 12
      %v1374 = vpop.permute.xlu0 %1373
      %1375 = vrot.lane.b32.xlu0 %v893, 12
      %v1376 = vpop.permute.xlu0 %1375
      %1377 = vrot.lane.b32.xlu0 %v894, 12
      %v1378 = vpop.permute.xlu0 %1377
      %1379 = vrot.lane.b32.xlu0 %v895, 12
      %v1380 = vpop.permute.xlu0 %1379
      %1381 = vrot.lane.b32.xlu0 %v896, 12
      %v1382 = vpop.permute.xlu0 %1381
      %1383 = vrot.lane.b32.xlu0 %v897, 12
      %v1384 = vpop.permute.xlu0 %1383
      %1385 = vrot.lane.b32.xlu0 %v898, 12
      %v1386 = vpop.permute.xlu0 %1385
      %1387 = vrot.lane.b32.xlu0 %v899, 12
      %v1388 = vpop.permute.xlu0 %1387
      %1389 = vrot.lane.b32.xlu0 %v900, 12
      %v1390 = vpop.permute.xlu0 %1389
      %1391 = vrot.lane.b32.xlu0 %v901, 12
      %v1392 = vpop.permute.xlu0 %1391
      %1393 = vrot.lane.b32.xlu0 %v902, 12
      %v1394 = vpop.permute.xlu0 %1393
      %1395 = vrot.lane.b32.xlu0 %v903, 12
      %v1396 = vpop.permute.xlu0 %1395
      %1397 = vrot.lane.b32.xlu0 %v904, 12
      %v1398 = vpop.permute.xlu0 %1397
      %1399 = vrot.lane.b32.xlu0 %v905, 12
      %v1400 = vpop.permute.xlu0 %1399
      %1401 = vrot.lane.b32.xlu0 %v906, 12
      %v1402 = vpop.permute.xlu0 %1401
      %1403 = vrot.lane.b32.xlu0 %v907, 12
      %v1404 = vpop.permute.xlu0 %1403
      %1405 = vrot.lane.b32.xlu0 %v908, 12
      %v1406 = vpop.permute.xlu0 %1405
      %1407 = vrot.lane.b32.xlu0 %v909, 12
      %v1408 = vpop.permute.xlu0 %1407
      %1409 = vrot.lane.b32.xlu0 %v910, 12
      %v1410 = vpop.permute.xlu0 %1409
      %1411 = vrot.lane.b32.xlu0 %v911, 12
      %v1412 = vpop.permute.xlu0 %1411
      %1413 = vrot.lane.b32.xlu0 %v912, 12
      %v1414 = vpop.permute.xlu0 %1413
      %1415 = vrot.lane.b32.xlu0 %v913, 12
      %v1416 = vpop.permute.xlu0 %1415
      %1417 = vrot.lane.b32.xlu0 %v914, 12
      %v1418 = vpop.permute.xlu0 %1417
      %1419 = vrot.lane.b32.xlu0 %v915, 12
      %v1420 = vpop.permute.xlu0 %1419
      %1421 = vrot.lane.b32.xlu0 %v916, 12
      %v1422 = vpop.permute.xlu0 %1421
      %1423 = vrot.lane.b32.xlu0 %v917, 12
      %v1424 = vpop.permute.xlu0 %1423
      %1425 = vrot.lane.b32.xlu0 %v918, 12
      %v1426 = vpop.permute.xlu0 %1425
      %1427 = vrot.lane.b32.xlu0 %v919, 12
      %v1428 = vpop.permute.xlu0 %1427
      %1429 = vrot.lane.b32.xlu0 %v920, 12
      %v1430 = vpop.permute.xlu0 %1429
      %1431 = vrot.lane.b32.xlu0 %v921, 12
      %v1432 = vpop.permute.xlu0 %1431
      %1433 = vrot.lane.b32.xlu0 %v922, 12
      %v1434 = vpop.permute.xlu0 %1433
      %1435 = vrot.lane.b32.xlu0 %v923, 12
      %v1436 = vpop.permute.xlu0 %1435
      %1501 = vrot.lane.b32.xlu0 %v924, 16
      %v1502 = vpop.permute.xlu0 %1501
      %1503 = vrot.lane.b32.xlu0 %v925, 16
      %v1504 = vpop.permute.xlu0 %1503
      %1505 = vrot.lane.b32.xlu0 %v926, 16
      %v1506 = vpop.permute.xlu0 %1505
      %1507 = vrot.lane.b32.xlu0 %v927, 16
      %v1508 = vpop.permute.xlu0 %1507
      %1509 = vrot.lane.b32.xlu0 %v928, 16
      %v1510 = vpop.permute.xlu0 %1509
      %1511 = vrot.lane.b32.xlu0 %v929, 16
      %v1512 = vpop.permute.xlu0 %1511
      %1513 = vrot.lane.b32.xlu0 %v930, 16
      %v1514 = vpop.permute.xlu0 %1513
      %1515 = vrot.lane.b32.xlu0 %v931, 16
      %v1516 = vpop.permute.xlu0 %1515
      %1517 = vrot.lane.b32.xlu0 %v932, 16
      %v1518 = vpop.permute.xlu0 %1517
      %1519 = vrot.lane.b32.xlu0 %v933, 16
      %v1520 = vpop.permute.xlu0 %1519
      %1521 = vrot.lane.b32.xlu0 %v934, 16
      %v1522 = vpop.permute.xlu0 %1521
      %1523 = vrot.lane.b32.xlu0 %v935, 16
      %v1524 = vpop.permute.xlu0 %1523
      %1525 = vrot.lane.b32.xlu0 %v936, 16
      %v1526 = vpop.permute.xlu0 %1525
      %1527 = vrot.lane.b32.xlu0 %v937, 16
      %v1528 = vpop.permute.xlu0 %1527
      %1529 = vrot.lane.b32.xlu0 %v938, 16
      %v1530 = vpop.permute.xlu0 %1529
      %1531 = vrot.lane.b32.xlu0 %v939, 16
      %v1532 = vpop.permute.xlu0 %1531
      %1533 = vrot.lane.b32.xlu0 %v940, 16
      %v1534 = vpop.permute.xlu0 %1533
      %1535 = vrot.lane.b32.xlu0 %v941, 16
      %v1536 = vpop.permute.xlu0 %1535
      %1537 = vrot.lane.b32.xlu0 %v942, 16
      %v1538 = vpop.permute.xlu0 %1537
      %1539 = vrot.lane.b32.xlu0 %v943, 16
      %v1540 = vpop.permute.xlu0 %1539
      %1541 = vrot.lane.b32.xlu0 %v944, 16
      %v1542 = vpop.permute.xlu0 %1541
      %1543 = vrot.lane.b32.xlu0 %v945, 16
      %v1544 = vpop.permute.xlu0 %1543
      %1545 = vrot.lane.b32.xlu0 %v946, 16
      %v1546 = vpop.permute.xlu0 %1545
      %1547 = vrot.lane.b32.xlu0 %v947, 16
      %v1548 = vpop.permute.xlu0 %1547
      %1549 = vrot.lane.b32.xlu0 %v948, 16
      %v1550 = vpop.permute.xlu0 %1549
      %1551 = vrot.lane.b32.xlu0 %v949, 16
      %v1552 = vpop.permute.xlu0 %1551
      %1553 = vrot.lane.b32.xlu0 %v950, 16
      %v1554 = vpop.permute.xlu0 %1553
      %1555 = vrot.lane.b32.xlu0 %v951, 16
      %v1556 = vpop.permute.xlu0 %1555
      %1557 = vrot.lane.b32.xlu0 %v952, 16
      %v1558 = vpop.permute.xlu0 %1557
      %1559 = vrot.lane.b32.xlu0 %v953, 16
      %v1560 = vpop.permute.xlu0 %1559
      %1561 = vrot.lane.b32.xlu0 %v954, 16
      %v1562 = vpop.permute.xlu0 %1561
      %1563 = vrot.lane.b32.xlu0 %v955, 16
      %v1564 = vpop.permute.xlu0 %1563
      %1629 = vrot.lane.b32.xlu0 %v956, 20
      %v1630 = vpop.permute.xlu0 %1629
      %1631 = vrot.lane.b32.xlu0 %v957, 20
      %v1632 = vpop.permute.xlu0 %1631
      %1633 = vrot.lane.b32.xlu0 %v958, 20
      %v1634 = vpop.permute.xlu0 %1633
      %1635 = vrot.lane.b32.xlu0 %v959, 20
      %v1636 = vpop.permute.xlu0 %1635
      %1637 = vrot.lane.b32.xlu0 %v960, 20
      %v1638 = vpop.permute.xlu0 %1637
      %1639 = vrot.lane.b32.xlu0 %v961, 20
      %v1640 = vpop.permute.xlu0 %1639
      %1641 = vrot.lane.b32.xlu0 %v962, 20
      %v1642 = vpop.permute.xlu0 %1641
      %1643 = vrot.lane.b32.xlu0 %v963, 20
      %v1644 = vpop.permute.xlu0 %1643
      %1645 = vrot.lane.b32.xlu0 %v964, 20
      %v1646 = vpop.permute.xlu0 %1645
      %1647 = vrot.lane.b32.xlu0 %v965, 20
      %v1648 = vpop.permute.xlu0 %1647
      %1649 = vrot.lane.b32.xlu0 %v966, 20
      %v1650 = vpop.permute.xlu0 %1649
      %1651 = vrot.lane.b32.xlu0 %v967, 20
      %v1652 = vpop.permute.xlu0 %1651
      %1653 = vrot.lane.b32.xlu0 %v968, 20
      %v1654 = vpop.permute.xlu0 %1653
      %1655 = vrot.lane.b32.xlu0 %v969, 20
      %v1656 = vpop.permute.xlu0 %1655
      %1657 = vrot.lane.b32.xlu0 %v970, 20
      %v1658 = vpop.permute.xlu0 %1657
      %1659 = vrot.lane.b32.xlu0 %v971, 20
      %v1660 = vpop.permute.xlu0 %1659
      %1661 = vrot.lane.b32.xlu0 %v972, 20
      %v1662 = vpop.permute.xlu0 %1661
      %1663 = vrot.lane.b32.xlu0 %v973, 20
      %v1664 = vpop.permute.xlu0 %1663
      %1665 = vrot.lane.b32.xlu0 %v974, 20
      %v1666 = vpop.permute.xlu0 %1665
      %1667 = vrot.lane.b32.xlu0 %v975, 20
      %v1668 = vpop.permute.xlu0 %1667
      %1669 = vrot.lane.b32.xlu0 %v976, 20
      %v1670 = vpop.permute.xlu0 %1669
      %1671 = vrot.lane.b32.xlu0 %v977, 20
      %v1672 = vpop.permute.xlu0 %1671
      %1673 = vrot.lane.b32.xlu0 %v978, 20
      %v1674 = vpop.permute.xlu0 %1673
      %1675 = vrot.lane.b32.xlu0 %v979, 20
      %v1676 = vpop.permute.xlu0 %1675
      %1677 = vrot.lane.b32.xlu0 %v980, 20
      %v1678 = vpop.permute.xlu0 %1677
      %1679 = vrot.lane.b32.xlu0 %v981, 20
      %v1680 = vpop.permute.xlu0 %1679
      %1681 = vrot.lane.b32.xlu0 %v982, 20
      %v1682 = vpop.permute.xlu0 %1681
      %1683 = vrot.lane.b32.xlu0 %v983, 20
      %v1684 = vpop.permute.xlu0 %1683
      %1685 = vrot.lane.b32.xlu0 %v984, 20
      %v1686 = vpop.permute.xlu0 %1685
      %1687 = vrot.lane.b32.xlu0 %v985, 20
      %v1688 = vpop.permute.xlu0 %1687
      %1689 = vrot.lane.b32.xlu0 %v986, 20
      %v1690 = vpop.permute.xlu0 %1689
      %1691 = vrot.lane.b32.xlu0 %v987, 20
      %v1692 = vpop.permute.xlu0 %1691
      %1757 = vrot.lane.b32.xlu0 %v989, 24
      %v1758 = vpop.permute.xlu0 %1757
      %1759 = vrot.lane.b32.xlu0 %v990, 24
      %v1760 = vpop.permute.xlu0 %1759
      %1761 = vrot.lane.b32.xlu0 %v991, 24
      %v1762 = vpop.permute.xlu0 %1761
      %1763 = vrot.lane.b32.xlu0 %v992, 24
      %v1764 = vpop.permute.xlu0 %1763
      %1765 = vrot.lane.b32.xlu0 %v993, 24
      %v1766 = vpop.permute.xlu0 %1765
      %1767 = vrot.lane.b32.xlu0 %v994, 24
      %v1768 = vpop.permute.xlu0 %1767
      %1769 = vrot.lane.b32.xlu0 %v995, 24
      %v1770 = vpop.permute.xlu0 %1769
      %1771 = vrot.lane.b32.xlu0 %v996, 24
      %v1772 = vpop.permute.xlu0 %1771
      %1773 = vrot.lane.b32.xlu0 %v997, 24
      %v1774 = vpop.permute.xlu0 %1773
      %1775 = vrot.lane.b32.xlu0 %v998, 24
      %v1776 = vpop.permute.xlu0 %1775
      %1777 = vrot.lane.b32.xlu0 %v999, 24
      %v1778 = vpop.permute.xlu0 %1777
      %1779 = vrot.lane.b32.xlu0 %v1000, 24
      %v1780 = vpop.permute.xlu0 %1779
      %1781 = vrot.lane.b32.xlu0 %v1001, 24
      %v1782 = vpop.permute.xlu0 %1781
      %1783 = vrot.lane.b32.xlu0 %v1002, 24
      %v1784 = vpop.permute.xlu0 %1783
      %1785 = vrot.lane.b32.xlu0 %v1003, 24
      %v1786 = vpop.permute.xlu0 %1785
      %1787 = vrot.lane.b32.xlu0 %v1004, 24
      %v1788 = vpop.permute.xlu0 %1787
      %1789 = vrot.lane.b32.xlu0 %v1005, 24
      %v1790 = vpop.permute.xlu0 %1789
      %1791 = vrot.lane.b32.xlu0 %v1006, 24
      %v1792 = vpop.permute.xlu0 %1791
      %1793 = vrot.lane.b32.xlu0 %v1007, 24
      %v1794 = vpop.permute.xlu0 %1793
      %1795 = vrot.lane.b32.xlu0 %v1008, 24
      %v1796 = vpop.permute.xlu0 %1795
      %1797 = vrot.lane.b32.xlu0 %v1009, 24
      %v1798 = vpop.permute.xlu0 %1797
      %1799 = vrot.lane.b32.xlu0 %v1010, 24
      %v1800 = vpop.permute.xlu0 %1799
      %1801 = vrot.lane.b32.xlu0 %v1011, 24
      %v1802 = vpop.permute.xlu0 %1801
      %1803 = vrot.lane.b32.xlu0 %v1012, 24
      %v1804 = vpop.permute.xlu0 %1803
      %1805 = vrot.lane.b32.xlu0 %v1013, 24
      %v1806 = vpop.permute.xlu0 %1805
      %1807 = vrot.lane.b32.xlu0 %v1014, 24
      %v1808 = vpop.permute.xlu0 %1807
      %1809 = vrot.lane.b32.xlu0 %v1015, 24
      %v1810 = vpop.permute.xlu0 %1809
      %1811 = vrot.lane.b32.xlu0 %v1016, 24
      %v1812 = vpop.permute.xlu0 %1811
      %1813 = vrot.lane.b32.xlu0 %v1017, 24
      %v1814 = vpop.permute.xlu0 %1813
      %1815 = vrot.lane.b32.xlu0 %v1018, 24
      %v1816 = vpop.permute.xlu0 %1815
      %1817 = vrot.lane.b32.xlu0 %v1019, 24
      %v1818 = vpop.permute.xlu0 %1817
      %1819 = vrot.lane.b32.xlu0 %v1020, 24
      %v1820 = vpop.permute.xlu0 %1819
      %1885 = vrot.lane.b32.xlu0 %v1021, 28
      %v1886 = vpop.permute.xlu0 %1885
      %1887 = vrot.lane.b32.xlu0 %v1022, 28
      %v1888 = vpop.permute.xlu0 %1887
      %1889 = vrot.lane.b32.xlu0 %v1023, 28
      %v1890 = vpop.permute.xlu0 %1889
      %1891 = vrot.lane.b32.xlu0 %v1024, 28
      %v1892 = vpop.permute.xlu0 %1891
      %1893 = vrot.lane.b32.xlu0 %v1025, 28
      %v1894 = vpop.permute.xlu0 %1893
      %1895 = vrot.lane.b32.xlu0 %v1026, 28
      %v1896 = vpop.permute.xlu0 %1895
      %1897 = vrot.lane.b32.xlu0 %v1027, 28
      %v1898 = vpop.permute.xlu0 %1897
      %1899 = vrot.lane.b32.xlu0 %v1028, 28
      %v1900 = vpop.permute.xlu0 %1899
      %1901 = vrot.lane.b32.xlu0 %v1029, 28
      %v1902 = vpop.permute.xlu0 %1901
      %1903 = vrot.lane.b32.xlu0 %v1030, 28
      %v1904 = vpop.permute.xlu0 %1903
      %1905 = vrot.lane.b32.xlu0 %v1031, 28
      %v1906 = vpop.permute.xlu0 %1905
      %1907 = vrot.lane.b32.xlu0 %v1032, 28
      %v1908 = vpop.permute.xlu0 %1907
      %1909 = vrot.lane.b32.xlu0 %v1033, 28
      %v1910 = vpop.permute.xlu0 %1909
      %1911 = vrot.lane.b32.xlu0 %v1034, 28
      %v1912 = vpop.permute.xlu0 %1911
      %1913 = vrot.lane.b32.xlu0 %v1035, 28
      %v1914 = vpop.permute.xlu0 %1913
      %1915 = vrot.lane.b32.xlu0 %v1036, 28
      %v1916 = vpop.permute.xlu0 %1915
      %1917 = vrot.lane.b32.xlu0 %v1037, 28
      %v1918 = vpop.permute.xlu0 %1917
      %1919 = vrot.lane.b32.xlu0 %v1038, 28
      %v1920 = vpop.permute.xlu0 %1919
      %1921 = vrot.lane.b32.xlu0 %v1039, 28
      %v1922 = vpop.permute.xlu0 %1921
      %1923 = vrot.lane.b32.xlu0 %v1040, 28
      %v1924 = vpop.permute.xlu0 %1923
      %1925 = vrot.lane.b32.xlu0 %v1041, 28
      %v1926 = vpop.permute.xlu0 %1925
      %1927 = vrot.lane.b32.xlu0 %v1042, 28
      %v1928 = vpop.permute.xlu0 %1927
      %1929 = vrot.lane.b32.xlu0 %v1043, 28
      %v1930 = vpop.permute.xlu0 %1929
      %1931 = vrot.lane.b32.xlu0 %v1044, 28
      %v1932 = vpop.permute.xlu0 %1931
      %1933 = vrot.lane.b32.xlu0 %v1045, 28
      %v1934 = vpop.permute.xlu0 %1933
      %1935 = vrot.lane.b32.xlu0 %v1046, 28
      %v1936 = vpop.permute.xlu0 %1935
      %1937 = vrot.lane.b32.xlu0 %v1047, 28
      %v1938 = vpop.permute.xlu0 %1937
      %1939 = vrot.lane.b32.xlu0 %v1048, 28
      %v1940 = vpop.permute.xlu0 %1939
      %1941 = vrot.lane.b32.xlu0 %v1049, 28
      %v1942 = vpop.permute.xlu0 %1941
      %1943 = vrot.lane.b32.xlu0 %v1050, 28
      %v1944 = vpop.permute.xlu0 %1943
      %1945 = vrot.lane.b32.xlu0 %v1051, 28
      %v1946 = vpop.permute.xlu0 %1945
      %1947 = vrot.lane.b32.xlu0 %v1052, 28
      %v1948 = vpop.permute.xlu0 %1947
      %2013 = vrot.lane.b32.xlu0 %v1053, 32
      %v2014 = vpop.permute.xlu0 %2013
      %2015 = vrot.lane.b32.xlu0 %v1054, 32
      %v2016 = vpop.permute.xlu0 %2015
      %2017 = vrot.lane.b32.xlu0 %v1055, 32
      %v2018 = vpop.permute.xlu0 %2017
      %2019 = vrot.lane.b32.xlu0 %v1056, 32
      %v2020 = vpop.permute.xlu0 %2019
      %2021 = vrot.lane.b32.xlu0 %v1057, 32
      %v2022 = vpop.permute.xlu0 %2021
      %2023 = vrot.lane.b32.xlu0 %v1058, 32
      %v2024 = vpop.permute.xlu0 %2023
      %2025 = vrot.lane.b32.xlu0 %v1059, 32
      %v2026 = vpop.permute.xlu0 %2025
      %2027 = vrot.lane.b32.xlu0 %v1060, 32
      %v2028 = vpop.permute.xlu0 %2027
      %2029 = vrot.lane.b32.xlu0 %v1061, 32
      %v2030 = vpop.permute.xlu0 %2029
      %2031 = vrot.lane.b32.xlu0 %v1062, 32
      %v2032 = vpop.permute.xlu0 %2031
      %2033 = vrot.lane.b32.xlu0 %v1063, 32
      %v2034 = vpop.permute.xlu0 %2033
      %2035 = vrot.lane.b32.xlu0 %v1064, 32
      %v2036 = vpop.permute.xlu0 %2035
      %2037 = vrot.lane.b32.xlu0 %v1065, 32
      %v2038 = vpop.permute.xlu0 %2037
      %2039 = vrot.lane.b32.xlu0 %v1066, 32
      %v2040 = vpop.permute.xlu0 %2039
      %2041 = vrot.lane.b32.xlu0 %v1067, 32
      %v2042 = vpop.permute.xlu0 %2041
      %2043 = vrot.lane.b32.xlu0 %v1068, 32
      %v2044 = vpop.permute.xlu0 %2043
      %2045 = vrot.lane.b32.xlu0 %v1069, 32
      %v2046 = vpop.permute.xlu0 %2045
      %2047 = vrot.lane.b32.xlu0 %v1070, 32
      %v2048 = vpop.permute.xlu0 %2047
      %2049 = vrot.lane.b32.xlu0 %v1071, 32
      %v2050 = vpop.permute.xlu0 %2049
      %2051 = vrot.lane.b32.xlu0 %v1072, 32
      %v2052 = vpop.permute.xlu0 %2051
      %2053 = vrot.lane.b32.xlu0 %v1073, 32
      %v2054 = vpop.permute.xlu0 %2053
      %2055 = vrot.lane.b32.xlu0 %v1074, 32
      %v2056 = vpop.permute.xlu0 %2055
      %2057 = vrot.lane.b32.xlu0 %v1075, 32
      %v2058 = vpop.permute.xlu0 %2057
      %2059 = vrot.lane.b32.xlu0 %v1076, 32
      %v2060 = vpop.permute.xlu0 %2059
      %2061 = vrot.lane.b32.xlu0 %v1077, 32
      %v2062 = vpop.permute.xlu0 %2061
      %2063 = vrot.lane.b32.xlu0 %v1078, 32
      %v2064 = vpop.permute.xlu0 %2063
      %2065 = vrot.lane.b32.xlu0 %v1079, 32
      %v2066 = vpop.permute.xlu0 %2065
      %2067 = vrot.lane.b32.xlu0 %v1080, 32
      %v2068 = vpop.permute.xlu0 %2067
      %2069 = vrot.lane.b32.xlu0 %v1081, 32
      %v2070 = vpop.permute.xlu0 %2069
      %2071 = vrot.lane.b32.xlu0 %v1082, 32
      %v2072 = vpop.permute.xlu0 %2071
      %2073 = vrot.lane.b32.xlu0 %v1083, 32
      %v2074 = vpop.permute.xlu0 %2073
      %2075 = vrot.lane.b32.xlu0 %v1084, 32
      %v2076 = vpop.permute.xlu0 %2075
      %v2109 = vsel %vm763, %v796, %v1118
      %v2110 = vsel %vm763, %v797, %v1120
      %v2111 = vsel %vm763, %v798, %v1122
      %v2112 = vsel %vm763, %v799, %v1124
      %v2113 = vsel %vm763, %v800, %v1126
      %v2114 = vsel %vm763, %v801, %v1128
      %v2115 = vsel %vm763, %v802, %v1130
      %v2116 = vsel %vm763, %v803, %v1132
      %v2117 = vsel %vm763, %v804, %v1134
      %v2118 = vsel %vm763, %v805, %v1136
      %v2119 = vsel %vm763, %v806, %v1138
      %v2120 = vsel %vm763, %v807, %v1140
      %v2121 = vsel %vm763, %v808, %v1142
      %v2122 = vsel %vm763, %v809, %v1144
      %v2123 = vsel %vm763, %v810, %v1146
      %v2124 = vsel %vm763, %v811, %v1148
      %v2125 = vsel %vm763, %v812, %v1150
      %v2126 = vsel %vm763, %v813, %v1152
      %v2127 = vsel %vm763, %v814, %v1154
      %v2128 = vsel %vm763, %v815, %v1156
      %v2129 = vsel %vm763, %v816, %v1158
      %v2130 = vsel %vm763, %v817, %v1160
      %v2131 = vsel %vm763, %v818, %v1162
      %v2132 = vsel %vm763, %v819, %v1164
      %v2133 = vsel %vm763, %v820, %v1166
      %v2134 = vsel %vm763, %v821, %v1168
      %v2135 = vsel %vm763, %v822, %v1170
      %v2136 = vsel %vm763, %v823, %v1172
      %v2137 = vsel %vm763, %v824, %v1174
      %v2138 = vsel %vm763, %v825, %v1176
      %v2139 = vsel %vm763, %v826, %v1178
      %v2140 = vsel %vm763, %v827, %v1180
      %vm2141 = vcmask 64512
      %v2142 = vsel %vm2141, %v2109, %v1246
      %v2143 = vsel %vm2141, %v2110, %v1248
      %v2144 = vsel %vm2141, %v2111, %v1250
      %v2145 = vsel %vm2141, %v2112, %v1252
      %v2146 = vsel %vm2141, %v2113, %v1254
      %v2147 = vsel %vm2141, %v2114, %v1256
      %v2148 = vsel %vm2141, %v2115, %v1258
      %v2149 = vsel %vm2141, %v2116, %v1260
      %v2150 = vsel %vm2141, %v2117, %v1262
      %v2151 = vsel %vm2141, %v2118, %v1264
      %v2152 = vsel %vm2141, %v2119, %v1266
      %v2153 = vsel %vm2141, %v2120, %v1268
      %v2154 = vsel %vm2141, %v2121, %v1270
      %v2155 = vsel %vm2141, %v2122, %v1272
      %v2156 = vsel %vm2141, %v2123, %v1274
      %v2157 = vsel %vm2141, %v2124, %v1276
      %v2158 = vsel %vm2141, %v2125, %v1278
      %v2159 = vsel %vm2141, %v2126, %v1280
      %v2160 = vsel %vm2141, %v2127, %v1282
      %v2161 = vsel %vm2141, %v2128, %v1284
      %v2162 = vsel %vm2141, %v2129, %v1286
      %v2163 = vsel %vm2141, %v2130, %v1288
      %v2164 = vsel %vm2141, %v2131, %v1290
      %v2165 = vsel %vm2141, %v2132, %v1292
      %v2166 = vsel %vm2141, %v2133, %v1294
      %v2167 = vsel %vm2141, %v2134, %v1296
      %v2168 = vsel %vm2141, %v2135, %v1298
      %v2169 = vsel %vm2141, %v2136, %v1300
      %v2170 = vsel %vm2141, %v2137, %v1302
      %v2171 = vsel %vm2141, %v2138, %v1304
      %v2172 = vsel %vm2141, %v2139, %v1306
      %v2173 = vsel %vm2141, %v2140, %v1308
      %vm2174 = vcmask 97280
      %v2175 = vsel %vm2174, %v2142, %v1374
      %v2176 = vsel %vm2174, %v2143, %v1376
      %v2177 = vsel %vm2174, %v2144, %v1378
      %v2178 = vsel %vm2174, %v2145, %v1380
      %v2179 = vsel %vm2174, %v2146, %v1382
      %v2180 = vsel %vm2174, %v2147, %v1384
      %v2181 = vsel %vm2174, %v2148, %v1386
      %v2182 = vsel %vm2174, %v2149, %v1388
      %v2183 = vsel %vm2174, %v2150, %v1390
      %v2184 = vsel %vm2174, %v2151, %v1392
      %v2185 = vsel %vm2174, %v2152, %v1394
      %v2186 = vsel %vm2174, %v2153, %v1396
      %v2187 = vsel %vm2174, %v2154, %v1398
      %v2188 = vsel %vm2174, %v2155, %v1400
      %v2189 = vsel %vm2174, %v2156, %v1402
      %v2190 = vsel %vm2174, %v2157, %v1404
      %v2191 = vsel %vm2174, %v2158, %v1406
      %v2192 = vsel %vm2174, %v2159, %v1408
      %v2193 = vsel %vm2174, %v2160, %v1410
      %v2194 = vsel %vm2174, %v2161, %v1412
      %v2195 = vsel %vm2174, %v2162, %v1414
      %v2196 = vsel %vm2174, %v2163, %v1416
      %v2197 = vsel %vm2174, %v2164, %v1418
      %v2198 = vsel %vm2174, %v2165, %v1420
      %v2199 = vsel %vm2174, %v2166, %v1422
      %v2200 = vsel %vm2174, %v2167, %v1424
      %v2201 = vsel %vm2174, %v2168, %v1426
      %v2202 = vsel %vm2174, %v2169, %v1428
      %v2203 = vsel %vm2174, %v2170, %v1430
      %v2204 = vsel %vm2174, %v2171, %v1432
      %v2205 = vsel %vm2174, %v2172, %v1434
      %v2206 = vsel %vm2174, %v2173, %v1436
      %v2207 = vsel %vm658, %v2175, %v1502
      %v2208 = vsel %vm658, %v2176, %v1504
      %v2209 = vsel %vm658, %v2177, %v1506
      %v2210 = vsel %vm658, %v2178, %v1508
      %v2211 = vsel %vm658, %v2179, %v1510
      %v2212 = vsel %vm658, %v2180, %v1512
      %v2213 = vsel %vm658, %v2181, %v1514
      %v2214 = vsel %vm658, %v2182, %v1516
      %v2215 = vsel %vm658, %v2183, %v1518
      %v2216 = vsel %vm658, %v2184, %v1520
      %v2217 = vsel %vm658, %v2185, %v1522
      %v2218 = vsel %vm658, %v2186, %v1524
      %v2219 = vsel %vm658, %v2187, %v1526
      %v2220 = vsel %vm658, %v2188, %v1528
      %v2221 = vsel %vm658, %v2189, %v1530
      %v2222 = vsel %vm658, %v2190, %v1532
      %v2223 = vsel %vm658, %v2191, %v1534
      %v2224 = vsel %vm658, %v2192, %v1536
      %v2225 = vsel %vm658, %v2193, %v1538
      %v2226 = vsel %vm658, %v2194, %v1540
      %v2227 = vsel %vm658, %v2195, %v1542
      %v2228 = vsel %vm658, %v2196, %v1544
      %v2229 = vsel %vm658, %v2197, %v1546
      %v2230 = vsel %vm658, %v2198, %v1548
      %v2231 = vsel %vm658, %v2199, %v1550
      %v2232 = vsel %vm658, %v2200, %v1552
      %v2233 = vsel %vm658, %v2201, %v1554
      %v2234 = vsel %vm658, %v2202, %v1556
      %v2235 = vsel %vm658, %v2203, %v1558
      %v2236 = vsel %vm658, %v2204, %v1560
      %v2237 = vsel %vm658, %v2205, %v1562
      %v2238 = vsel %vm658, %v2206, %v1564
      %vm2239 = vcmask 162816
      %v2240 = vsel %vm2239, %v2207, %v1630
      %v2241 = vsel %vm2239, %v2208, %v1632
      %v2242 = vsel %vm2239, %v2209, %v1634
      %v2243 = vsel %vm2239, %v2210, %v1636
      %v2244 = vsel %vm2239, %v2211, %v1638
      %v2245 = vsel %vm2239, %v2212, %v1640
      %v2246 = vsel %vm2239, %v2213, %v1642
      %v2247 = vsel %vm2239, %v2214, %v1644
      %v2248 = vsel %vm2239, %v2215, %v1646
      %v2249 = vsel %vm2239, %v2216, %v1648
      %v2250 = vsel %vm2239, %v2217, %v1650
      %v2251 = vsel %vm2239, %v2218, %v1652
      %v2252 = vsel %vm2239, %v2219, %v1654
      %v2253 = vsel %vm2239, %v2220, %v1656
      %v2254 = vsel %vm2239, %v2221, %v1658
      %v2255 = vsel %vm2239, %v2222, %v1660
      %v2256 = vsel %vm2239, %v2223, %v1662
      %v2257 = vsel %vm2239, %v2224, %v1664
      %v2258 = vsel %vm2239, %v2225, %v1666
      %v2259 = vsel %vm2239, %v2226, %v1668
      %v2260 = vsel %vm2239, %v2227, %v1670
      %v2261 = vsel %vm2239, %v2228, %v1672
      %v2262 = vsel %vm2239, %v2229, %v1674
      %v2263 = vsel %vm2239, %v2230, %v1676
      %v2264 = vsel %vm2239, %v2231, %v1678
      %v2265 = vsel %vm2239, %v2232, %v1680
      %v2266 = vsel %vm2239, %v2233, %v1682
      %v2267 = vsel %vm2239, %v2234, %v1684
      %v2268 = vsel %vm2239, %v2235, %v1686
      %v2269 = vsel %vm2239, %v2236, %v1688
      %v2270 = vsel %vm2239, %v2237, %v1690
      %v2271 = vsel %vm2239, %v2238, %v1692
      %vm2272 = vcmask 195584
      %v2273 = vsel %vm2272, %v2240, %v1758
      %v2274 = vsel %vm2272, %v2241, %v1760
      %v2275 = vsel %vm2272, %v2242, %v1762
      %v2276 = vsel %vm2272, %v2243, %v1764
      %v2277 = vsel %vm2272, %v2244, %v1766
      %v2278 = vsel %vm2272, %v2245, %v1768
      %v2279 = vsel %vm2272, %v2246, %v1770
      %v2280 = vsel %vm2272, %v2247, %v1772
      %v2281 = vsel %vm2272, %v2248, %v1774
      %v2282 = vsel %vm2272, %v2249, %v1776
      %v2283 = vsel %vm2272, %v2250, %v1778
      %v2284 = vsel %vm2272, %v2251, %v1780
      %v2285 = vsel %vm2272, %v2252, %v1782
      %v2286 = vsel %vm2272, %v2253, %v1784
      %v2287 = vsel %vm2272, %v2254, %v1786
      %v2288 = vsel %vm2272, %v2255, %v1788
      %v2289 = vsel %vm2272, %v2256, %v1790
      %v2290 = vsel %vm2272, %v2257, %v1792
      %v2291 = vsel %vm2272, %v2258, %v1794
      %v2292 = vsel %vm2272, %v2259, %v1796
      %v2293 = vsel %vm2272, %v2260, %v1798
      %v2294 = vsel %vm2272, %v2261, %v1800
      %v2295 = vsel %vm2272, %v2262, %v1802
      %v2296 = vsel %vm2272, %v2263, %v1804
      %v2297 = vsel %vm2272, %v2264, %v1806
      %v2298 = vsel %vm2272, %v2265, %v1808
      %v2299 = vsel %vm2272, %v2266, %v1810
      %v2300 = vsel %vm2272, %v2267, %v1812
      %v2301 = vsel %vm2272, %v2268, %v1814
      %v2302 = vsel %vm2272, %v2269, %v1816
      %v2303 = vsel %vm2272, %v2270, %v1818
      %v2304 = vsel %vm2272, %v2271, %v1820
      %vm2305 = vcmask 228352
      %v2306 = vsel %vm2305, %v2273, %v1886
      %v2307 = vsel %vm2305, %v2274, %v1888
      %v2308 = vsel %vm2305, %v2275, %v1890
      %v2309 = vsel %vm2305, %v2276, %v1892
      %v2310 = vsel %vm2305, %v2277, %v1894
      %v2311 = vsel %vm2305, %v2278, %v1896
      %v2312 = vsel %vm2305, %v2279, %v1898
      %v2313 = vsel %vm2305, %v2280, %v1900
      %v2314 = vsel %vm2305, %v2281, %v1902
      %v2315 = vsel %vm2305, %v2282, %v1904
      %v2316 = vsel %vm2305, %v2283, %v1906
      %v2317 = vsel %vm2305, %v2284, %v1908
      %v2318 = vsel %vm2305, %v2285, %v1910
      %v2319 = vsel %vm2305, %v2286, %v1912
      %v2320 = vsel %vm2305, %v2287, %v1914
      %v2321 = vsel %vm2305, %v2288, %v1916
      %v2322 = vsel %vm2305, %v2289, %v1918
      %v2323 = vsel %vm2305, %v2290, %v1920
      %v2324 = vsel %vm2305, %v2291, %v1922
      %v2325 = vsel %vm2305, %v2292, %v1924
      %v2326 = vsel %vm2305, %v2293, %v1926
      %v2327 = vsel %vm2305, %v2294, %v1928
      %v2328 = vsel %vm2305, %v2295, %v1930
      %v2329 = vsel %vm2305, %v2296, %v1932
      %v2330 = vsel %vm2305, %v2297, %v1934
      %v2331 = vsel %vm2305, %v2298, %v1936
      %v2332 = vsel %vm2305, %v2299, %v1938
      %v2333 = vsel %vm2305, %v2300, %v1940
      %v2334 = vsel %vm2305, %v2301, %v1942
      %v2335 = vsel %vm2305, %v2302, %v1944
      %v2336 = vsel %vm2305, %v2303, %v1946
      %v2337 = vsel %vm2305, %v2304, %v1948
      %vm2338 = vcmask 261120
      %v2339 = vsel %vm2338, %v2306, %v2014
      %v2340 = vsel %vm2338, %v2307, %v2016
      %v2341 = vsel %vm2338, %v2308, %v2018
      %v2342 = vsel %vm2338, %v2309, %v2020
      %v2343 = vsel %vm2338, %v2310, %v2022
      %v2344 = vsel %vm2338, %v2311, %v2024
      %v2345 = vsel %vm2338, %v2312, %v2026
      %v2346 = vsel %vm2338, %v2313, %v2028
      %v2347 = vsel %vm2338, %v2314, %v2030
      %v2348 = vsel %vm2338, %v2315, %v2032
      %v2349 = vsel %vm2338, %v2316, %v2034
      %v2350 = vsel %vm2338, %v2317, %v2036
      %v2351 = vsel %vm2338, %v2318, %v2038
      %v2352 = vsel %vm2338, %v2319, %v2040
      %v2353 = vsel %vm2338, %v2320, %v2042
      %v2354 = vsel %vm2338, %v2321, %v2044
      %v2355 = vsel %vm2338, %v2322, %v2046
      %v2356 = vsel %vm2338, %v2323, %v2048
      %v2357 = vsel %vm2338, %v2324, %v2050
      %v2358 = vsel %vm2338, %v2325, %v2052
      %v2359 = vsel %vm2338, %v2326, %v2054
      %v2360 = vsel %vm2338, %v2327, %v2056
      %v2361 = vsel %vm2338, %v2328, %v2058
      %v2362 = vsel %vm2338, %v2329, %v2060
      %v2363 = vsel %vm2338, %v2330, %v2062
      %v2364 = vsel %vm2338, %v2331, %v2064
      %v2365 = vsel %vm2338, %v2332, %v2066
      %v2366 = vsel %vm2338, %v2333, %v2068
      %v2367 = vsel %vm2338, %v2334, %v2070
      %v2368 = vsel %vm2338, %v2335, %v2072
      %v2369 = vsel %vm2338, %v2336, %v2074
      %v2370 = vsel %vm2338, %v2337, %v2076
      %v2371 = vpack.c.bf16 %v2340, %v2339
      %v2372 = vpack.c.bf16 %v2342, %v2341
      %v2373 = vpack.c.bf16 %v2344, %v2343
      %v2374 = vpack.c.bf16 %v2346, %v2345
      %v2375 = vpack.c.bf16 %v2348, %v2347
      %v2376 = vpack.c.bf16 %v2350, %v2349
      %v2377 = vpack.c.bf16 %v2352, %v2351
      %v2378 = vpack.c.bf16 %v2354, %v2353
      %v2379 = vpack.c.bf16 %v2356, %v2355
      %v2380 = vpack.c.bf16 %v2358, %v2357
      %v2381 = vpack.c.bf16 %v2360, %v2359
      %v2382 = vpack.c.bf16 %v2362, %v2361
      %v2383 = vpack.c.bf16 %v2364, %v2363
      %v2384 = vpack.c.bf16 %v2366, %v2365
      %v2385 = vpack.c.bf16 %v2368, %v2367
      %v2386 = vpack.c.bf16 %v2370, %v2369
      %v2387 = vld [vmem:[%s1] sm:$0xf]
      %v2388 = vld [vmem:[%s1 + $0x4] sm:$0xf]
      %v2389 = vld [vmem:[%s1 + $0x8] sm:$0xf]
      %v2390 = vld [vmem:[%s1 + $0xc] sm:$0xf]
      %v2391 = vld [vmem:[%s1 + $0x10] sm:$0x3]
      %v2392 = vld [vmem:[%s2] sm:$0x1]
      %v2394 = vlaneseq
      %v2395 = vshrl.u32 %v2394, 7
      %v2396 = vsub.s32 0, %v2395
      %v2397 = vrot.slane %v2392, %v2396
      %v2404 = vunpack.c.l.b16 %v2387
      %v2405 = vunpack.c.l.b16 %v2388
      %v2406 = vunpack.c.l.b16 %v2389
      %v2407 = vunpack.c.l.b16 %v2390
      %v2408 = vunpack.c.l.b16 %v2391
      %v2409 = vpack.c.b16 %v2405, %v2404
      %v2410 = vpack.c.b16 %v2407, %v2406
      %v2411 = vpack.c.b16 %v2408, %v2408
      %vm2414 = vcmask 293888
      %v2416 = vsel %vm2414, %v2371, 0
      %v2419 = vsel %vm2414, %v2372, 0
      %v2422 = vsel %vm2414, %v2373, 0
      %v2425 = vsel %vm2414, %v2374, 0
      %v2428 = vsel %vm2414, %v2375, 0
      %v2431 = vsel %vm2414, %v2376, 0
      %v2434 = vsel %vm2414, %v2377, 0
      %v2437 = vsel %vm2414, %v2378, 0
      %v2440 = vsel %vm2414, %v2379, 0
      %v2443 = vsel %vm2414, %v2380, 0
      %v2446 = vsel %vm2414, %v2381, 0
      %v2449 = vsel %vm2414, %v2382, 0
      %v2452 = vsel %vm2414, %v2383, 0
      %v2455 = vsel %vm2414, %v2384, 0
      %v2458 = vsel %vm2414, %v2385, 0
      %v2461 = vsel %vm2414, %v2386, 0
      %vm2463 = vcmask 1041408
      %v2465 = vsel %vm2463, %v2411, 0
      %2467 = vmatprep.subr.bf16.mxu0 0
      %2468 = vmatpush1.bf16.msra.mxu0 0
      %2469 = vmatprep.subr.bf16.mxu0 0
      %2470 = vmatpush1.bf16.msra.mxu0 0
      %2471 = vmatprep.subr.bf16.mxu0 0
      %2472 = vmatpush1.bf16.msra.mxu0 0
      %2473 = vmatprep.subr.bf16.mxu0 0
      %2474 = vmatpush1.bf16.msra.mxu0 0
      %2475 = vmatprep.subr.bf16.mxu0 0
      %2476 = vmatpush1.bf16.msra.mxu0 0
      %2477 = vmatprep.subr.bf16.mxu0 0
      %2478 = vmatpush1.bf16.msra.mxu0 %v2465
      %2479 = vmatprep.subr.bf16.mxu0 0
      %2480 = vmatpush1.bf16.msra.mxu0 %v2410
      %2481 = vmatprep.subr.bf16.mxu0 0
      %2482 = vmatpush1.bf16.msra.mxu0 %v2409
      %2483 = vmatprep.subr.bf16.mxu0 0
      %2484 = vmatpush2.bf16.msra.mxu0 0
      %2485 = vmatprep.subr.bf16.mxu0 0
      %2486 = vmatpush2.bf16.msra.mxu0 0
      %2487 = vmatprep.subr.bf16.mxu0 0
      %2488 = vmatpush2.bf16.msra.mxu0 0
      %2489 = vmatprep.subr.bf16.mxu0 0
      %2490 = vmatpush2.bf16.msra.mxu0 0
      %2491 = vmatprep.subr.bf16.mxu0 0
      %2492 = vmatpush2.bf16.msra.mxu0 0
      %2493 = vmatprep.subr.bf16.mxu0 0
      %2494 = vmatpush2.bf16.msra.mxu0 0
      %2495 = vmatprep.subr.bf16.mxu0 0
      %2496 = vmatpush2.bf16.msra.mxu0 0
      %2497 = vmatprep.subr.bf16.mxu0 0
      %2498 = vmatpush2.bf16.msra.mxu0 0
      %2499 = vmatprep.mubr.bf16.mxu0 0
      %2500 = vmatmul.mubr.bf16.gmra.mxu0 %v2416
      %v2501 = vpop.f32.mrf.mxu0
      %v2502 = vadd.f32 %v2397, %v2501
      %v2503 = vpop.f32.mrf.mxu0
      %v2504 = vpop.f32.mrf.mxu0
      %v2505 = vadd.f32 %v2397, %v2504
      %v2506 = vpop.f32.mrf.mxu0
      %2507 = vmatprep.mubr.bf16.mxu0 0
      %2508 = vmatmul.mubr.bf16.gmra.mxu0 %v2419
      %v2509 = vpop.f32.mrf.mxu0
      %v2510 = vadd.f32 %v2397, %v2509
      %v2511 = vpop.f32.mrf.mxu0
      %v2512 = vpop.f32.mrf.mxu0
      %v2513 = vadd.f32 %v2397, %v2512
      %v2514 = vpop.f32.mrf.mxu0
      %2515 = vmatprep.mubr.bf16.mxu0 0
      %2516 = vmatmul.mubr.bf16.gmra.mxu0 %v2422
      %v2517 = vpop.f32.mrf.mxu0
      %v2518 = vadd.f32 %v2397, %v2517
      %v2519 = vpop.f32.mrf.mxu0
      %v2520 = vpop.f32.mrf.mxu0
      %v2521 = vadd.f32 %v2397, %v2520
      %v2522 = vpop.f32.mrf.mxu0
      %2523 = vmatprep.mubr.bf16.mxu0 0
      %2524 = vmatmul.mubr.bf16.gmra.mxu0 %v2425
      %v2525 = vpop.f32.mrf.mxu0
      %v2526 = vadd.f32 %v2397, %v2525
      %v2527 = vpop.f32.mrf.mxu0
      %v2528 = vpop.f32.mrf.mxu0
      %v2529 = vadd.f32 %v2397, %v2528
      %v2530 = vpop.f32.mrf.mxu0
      %2531 = vmatprep.mubr.bf16.mxu0 0
      %2532 = vmatmul.mubr.bf16.gmra.mxu0 %v2428
      %v2533 = vpop.f32.mrf.mxu0
      %v2534 = vadd.f32 %v2397, %v2533
      %v2535 = vpop.f32.mrf.mxu0
      %v2536 = vpop.f32.mrf.mxu0
      %v2537 = vadd.f32 %v2397, %v2536
      %v2538 = vpop.f32.mrf.mxu0
      %2539 = vmatprep.mubr.bf16.mxu0 0
      %2540 = vmatmul.mubr.bf16.gmra.mxu0 %v2431
      %v2541 = vpop.f32.mrf.mxu0
      %v2542 = vadd.f32 %v2397, %v2541
      %v2543 = vpop.f32.mrf.mxu0
      %v2544 = vpop.f32.mrf.mxu0
      %v2545 = vadd.f32 %v2397, %v2544
      %v2546 = vpop.f32.mrf.mxu0
      %2547 = vmatprep.mubr.bf16.mxu0 0
      %2548 = vmatmul.mubr.bf16.gmra.mxu0 %v2434
      %v2549 = vpop.f32.mrf.mxu0
      %v2550 = vadd.f32 %v2397, %v2549
      %v2551 = vpop.f32.mrf.mxu0
      %v2552 = vpop.f32.mrf.mxu0
      %v2553 = vadd.f32 %v2397, %v2552
      %v2554 = vpop.f32.mrf.mxu0
      %2555 = vmatprep.mubr.bf16.mxu0 0
      %2556 = vmatmul.mubr.bf16.gmra.mxu0 %v2437
      %v2557 = vpop.f32.mrf.mxu0
      %v2558 = vadd.f32 %v2397, %v2557
      %v2559 = vpop.f32.mrf.mxu0
      %v2560 = vpop.f32.mrf.mxu0
      %v2561 = vadd.f32 %v2397, %v2560
      %v2562 = vpop.f32.mrf.mxu0
      %2563 = vmatprep.mubr.bf16.mxu0 0
      %2564 = vmatmul.mubr.bf16.gmra.mxu0 %v2440
      %v2565 = vpop.f32.mrf.mxu0
      %v2566 = vadd.f32 %v2397, %v2565
      %v2567 = vpop.f32.mrf.mxu0
      %v2568 = vpop.f32.mrf.mxu0
      %v2569 = vadd.f32 %v2397, %v2568
      %v2570 = vpop.f32.mrf.mxu0
      %2571 = vmatprep.mubr.bf16.mxu0 0
      %2572 = vmatmul.mubr.bf16.gmra.mxu0 %v2443
      %v2573 = vpop.f32.mrf.mxu0
      %v2574 = vadd.f32 %v2397, %v2573
      %v2575 = vpop.f32.mrf.mxu0
      %v2576 = vpop.f32.mrf.mxu0
      %v2577 = vadd.f32 %v2397, %v2576
      %v2578 = vpop.f32.mrf.mxu0
      %2579 = vmatprep.mubr.bf16.mxu0 0
      %2580 = vmatmul.mubr.bf16.gmra.mxu0 %v2446
      %v2581 = vpop.f32.mrf.mxu0
      %v2582 = vadd.f32 %v2397, %v2581
      %v2583 = vpop.f32.mrf.mxu0
      %v2584 = vpop.f32.mrf.mxu0
      %v2585 = vadd.f32 %v2397, %v2584
      %v2586 = vpop.f32.mrf.mxu0
      %2587 = vmatprep.mubr.bf16.mxu0 0
      %2588 = vmatmul.mubr.bf16.gmra.mxu0 %v2449
      %v2589 = vpop.f32.mrf.mxu0
      %v2590 = vadd.f32 %v2397, %v2589
      %v2591 = vpop.f32.mrf.mxu0
      %v2592 = vpop.f32.mrf.mxu0
      %v2593 = vadd.f32 %v2397, %v2592
      %v2594 = vpop.f32.mrf.mxu0
      %2595 = vmatprep.mubr.bf16.mxu0 0
      %2596 = vmatmul.mubr.bf16.gmra.mxu0 %v2452
      %v2597 = vpop.f32.mrf.mxu0
      %v2598 = vadd.f32 %v2397, %v2597
      %v2599 = vpop.f32.mrf.mxu0
      %v2600 = vpop.f32.mrf.mxu0
      %v2601 = vadd.f32 %v2397, %v2600
      %v2602 = vpop.f32.mrf.mxu0
      %2603 = vmatprep.mubr.bf16.mxu0 0
      %2604 = vmatmul.mubr.bf16.gmra.mxu0 %v2455
      %v2605 = vpop.f32.mrf.mxu0
      %v2606 = vadd.f32 %v2397, %v2605
      %v2607 = vpop.f32.mrf.mxu0
      %v2608 = vpop.f32.mrf.mxu0
      %v2609 = vadd.f32 %v2397, %v2608
      %v2610 = vpop.f32.mrf.mxu0
      %2611 = vmatprep.mubr.bf16.mxu0 0
      %2612 = vmatmul.mubr.bf16.gmra.mxu0 %v2458
      %v2613 = vpop.f32.mrf.mxu0
      %v2614 = vadd.f32 %v2397, %v2613
      %v2615 = vpop.f32.mrf.mxu0
      %v2616 = vpop.f32.mrf.mxu0
      %v2617 = vadd.f32 %v2397, %v2616
      %v2618 = vpop.f32.mrf.mxu0
      %2619 = vmatprep.mubr.bf16.mxu0 0
      %2620 = vmatmul.mubr.bf16.gmra.mxu0 %v2461
      %v2621 = vpop.f32.mrf.mxu0
      %v2622 = vadd.f32 %v2397, %v2621
      %v2623 = vpop.f32.mrf.mxu0
      %v2624 = vpop.f32.mrf.mxu0
      %v2625 = vadd.f32 %v2397, %v2624
      %v2626 = vpop.f32.mrf.mxu0
      %2627 = vdwg.mxu0
      %v2628 = vsel %vm2141, %v2502, 0.0
      %v2629 = vsel %vm2141, %v2505, 0.0
      %v2630 = vadd.f32 %v2628, %v2629
      %v2631 = vsel %vm2141, %v2510, 0.0
      %v2632 = vadd.f32 %v2630, %v2631
      %v2633 = vsel %vm2141, %v2513, 0.0
      %v2634 = vadd.f32 %v2632, %v2633
      %v2635 = vsel %vm2141, %v2518, 0.0
      %v2636 = vadd.f32 %v2634, %v2635
      %v2637 = vsel %vm2141, %v2521, 0.0
      %v2638 = vadd.f32 %v2636, %v2637
      %v2639 = vsel %vm2141, %v2526, 0.0
      %v2640 = vadd.f32 %v2638, %v2639
      %v2641 = vsel %vm2141, %v2529, 0.0
      %v2642 = vadd.f32 %v2640, %v2641
      %v2643 = vsel %vm2141, %v2534, 0.0
      %v2644 = vadd.f32 %v2642, %v2643
      %v2645 = vsel %vm2141, %v2537, 0.0
      %v2646 = vadd.f32 %v2644, %v2645
      %v2647 = vsel %vm2141, %v2542, 0.0
      %v2648 = vadd.f32 %v2646, %v2647
      %v2649 = vsel %vm2141, %v2545, 0.0
      %v2650 = vadd.f32 %v2648, %v2649
      %v2651 = vsel %vm2141, %v2550, 0.0
      %v2652 = vadd.f32 %v2650, %v2651
      %v2653 = vsel %vm2141, %v2553, 0.0
      %v2654 = vadd.f32 %v2652, %v2653
      %v2655 = vsel %vm2141, %v2558, 0.0
      %v2656 = vadd.f32 %v2654, %v2655
      %v2657 = vsel %vm2141, %v2561, 0.0
      %v2658 = vadd.f32 %v2656, %v2657
      %v2659 = vsel %vm2141, %v2566, 0.0
      %v2660 = vadd.f32 %v2658, %v2659
      %v2661 = vsel %vm2141, %v2569, 0.0
      %v2662 = vadd.f32 %v2660, %v2661
      %v2663 = vsel %vm2141, %v2574, 0.0
      %v2664 = vadd.f32 %v2662, %v2663
      %v2665 = vsel %vm2141, %v2577, 0.0
      %v2666 = vadd.f32 %v2664, %v2665
      %v2667 = vsel %vm2141, %v2582, 0.0
      %v2668 = vadd.f32 %v2666, %v2667
      %v2669 = vsel %vm2141, %v2585, 0.0
      %v2670 = vadd.f32 %v2668, %v2669
      %v2671 = vsel %vm2141, %v2590, 0.0
      %v2672 = vadd.f32 %v2670, %v2671
      %v2673 = vsel %vm2141, %v2593, 0.0
      %v2674 = vadd.f32 %v2672, %v2673
      %v2675 = vsel %vm2141, %v2598, 0.0
      %v2676 = vadd.f32 %v2674, %v2675
      %v2677 = vsel %vm2141, %v2601, 0.0
      %v2678 = vadd.f32 %v2676, %v2677
      %v2679 = vsel %vm2141, %v2606, 0.0
      %v2680 = vadd.f32 %v2678, %v2679
      %v2681 = vsel %vm2141, %v2609, 0.0
      %v2682 = vadd.f32 %v2680, %v2681
      %v2683 = vsel %vm2141, %v2614, 0.0
      %v2684 = vadd.f32 %v2682, %v2683
      %v2685 = vsel %vm2141, %v2617, 0.0
      %v2686 = vadd.f32 %v2684, %v2685
      %v2687 = vsel %vm2141, %v2622, 0.0
      %v2688 = vadd.f32 %v2686, %v2687
      %v2689 = vsel %vm2141, %v2625, 0.0
      %v2690 = vadd.f32 %v2688, %v2689
      %v2691 = vrot.slane %v2690, 4
      %v2692 = vadd.f32 %v2690, %v2691
      %v2693 = vrot.slane %v2692, 2
      %v2694 = vadd.f32 %v2692, %v2693
      %v2695 = vrot.slane %v2694, 1
      %v2696 = vadd.f32 %v2694, %v2695
      %v2697 = vrcp.pop 256.0
      %v2698 = vmul.f32 %v2696, %v2697
      %v2699 = vsub.f32 %v2502, %v2698
      %v2700 = vsub.f32 %v2505, %v2698
      %v2701 = vsub.f32 %v2510, %v2698
      %v2702 = vsub.f32 %v2513, %v2698
      %v2703 = vsub.f32 %v2518, %v2698
      %v2704 = vsub.f32 %v2521, %v2698
      %v2705 = vsub.f32 %v2526, %v2698
      %v2706 = vsub.f32 %v2529, %v2698
      %v2707 = vsub.f32 %v2534, %v2698
      %v2708 = vsub.f32 %v2537, %v2698
      %v2709 = vsub.f32 %v2542, %v2698
      %v2710 = vsub.f32 %v2545, %v2698
      %v2711 = vsub.f32 %v2550, %v2698
      %v2712 = vsub.f32 %v2553, %v2698
      %v2713 = vsub.f32 %v2558, %v2698
      %v2714 = vsub.f32 %v2561, %v2698
      %v2715 = vsub.f32 %v2566, %v2698
      %v2716 = vsub.f32 %v2569, %v2698
      %v2717 = vsub.f32 %v2574, %v2698
      %v2718 = vsub.f32 %v2577, %v2698
      %v2719 = vsub.f32 %v2582, %v2698
      %v2720 = vsub.f32 %v2585, %v2698
      %v2721 = vsub.f32 %v2590, %v2698
      %v2722 = vsub.f32 %v2593, %v2698
      %v2723 = vsub.f32 %v2598, %v2698
      %v2724 = vsub.f32 %v2601, %v2698
      %v2725 = vsub.f32 %v2606, %v2698
      %v2726 = vsub.f32 %v2609, %v2698
      %v2727 = vsub.f32 %v2614, %v2698
      %v2728 = vsub.f32 %v2617, %v2698
      %v2729 = vsub.f32 %v2622, %v2698
      %v2730 = vsub.f32 %v2625, %v2698
      %v2731 = vmul.f32 %v2699, %v2699
      %v2732 = vmul.f32 %v2700, %v2700
      %v2733 = vmul.f32 %v2701, %v2701
      %v2734 = vmul.f32 %v2702, %v2702
      %v2735 = vmul.f32 %v2703, %v2703
      %v2736 = vmul.f32 %v2704, %v2704
      %v2737 = vmul.f32 %v2705, %v2705
      %v2738 = vmul.f32 %v2706, %v2706
      %v2739 = vmul.f32 %v2707, %v2707
      %v2740 = vmul.f32 %v2708, %v2708
      %v2741 = vmul.f32 %v2709, %v2709
      %v2742 = vmul.f32 %v2710, %v2710
      %v2743 = vmul.f32 %v2711, %v2711
      %v2744 = vmul.f32 %v2712, %v2712
      %v2745 = vmul.f32 %v2713, %v2713
      %v2746 = vmul.f32 %v2714, %v2714
      %v2747 = vmul.f32 %v2715, %v2715
      %v2748 = vmul.f32 %v2716, %v2716
      %v2749 = vmul.f32 %v2717, %v2717
      %v2750 = vmul.f32 %v2718, %v2718
      %v2751 = vmul.f32 %v2719, %v2719
      %v2752 = vmul.f32 %v2720, %v2720
      %v2753 = vmul.f32 %v2721, %v2721
      %v2754 = vmul.f32 %v2722, %v2722
      %v2755 = vmul.f32 %v2723, %v2723
      %v2756 = vmul.f32 %v2724, %v2724
      %v2757 = vmul.f32 %v2725, %v2725
      %v2758 = vmul.f32 %v2726, %v2726
      %v2759 = vmul.f32 %v2727, %v2727
      %v2760 = vmul.f32 %v2728, %v2728
      %v2761 = vmul.f32 %v2729, %v2729
      %v2762 = vmul.f32 %v2730, %v2730
      %v2763 = vsel %vm2141, %v2731, 0.0
      %v2764 = vsel %vm2141, %v2732, 0.0
      %v2765 = vadd.f32 %v2763, %v2764
      %v2766 = vsel %vm2141, %v2733, 0.0
      %v2767 = vadd.f32 %v2765, %v2766
      %v2768 = vsel %vm2141, %v2734, 0.0
      %v2769 = vadd.f32 %v2767, %v2768
      %v2770 = vsel %vm2141, %v2735, 0.0
      %v2771 = vadd.f32 %v2769, %v2770
      %v2772 = vsel %vm2141, %v2736, 0.0
      %v2773 = vadd.f32 %v2771, %v2772
      %v2774 = vsel %vm2141, %v2737, 0.0
      %v2775 = vadd.f32 %v2773, %v2774
      %v2776 = vsel %vm2141, %v2738, 0.0
      %v2777 = vadd.f32 %v2775, %v2776
      %v2778 = vsel %vm2141, %v2739, 0.0
      %v2779 = vadd.f32 %v2777, %v2778
      %v2780 = vsel %vm2141, %v2740, 0.0
      %v2781 = vadd.f32 %v2779, %v2780
      %v2782 = vsel %vm2141, %v2741, 0.0
      %v2783 = vadd.f32 %v2781, %v2782
      %v2784 = vsel %vm2141, %v2742, 0.0
      %v2785 = vadd.f32 %v2783, %v2784
      %v2786 = vsel %vm2141, %v2743, 0.0
      %v2787 = vadd.f32 %v2785, %v2786
      %v2788 = vsel %vm2141, %v2744, 0.0
      %v2789 = vadd.f32 %v2787, %v2788
      %v2790 = vsel %vm2141, %v2745, 0.0
      %v2791 = vadd.f32 %v2789, %v2790
      %v2792 = vsel %vm2141, %v2746, 0.0
      %v2793 = vadd.f32 %v2791, %v2792
      %v2794 = vsel %vm2141, %v2747, 0.0
      %v2795 = vadd.f32 %v2793, %v2794
      %v2796 = vsel %vm2141, %v2748, 0.0
      %v2797 = vadd.f32 %v2795, %v2796
      %v2798 = vsel %vm2141, %v2749, 0.0
      %v2799 = vadd.f32 %v2797, %v2798
      %v2800 = vsel %vm2141, %v2750, 0.0
      %v2801 = vadd.f32 %v2799, %v2800
      %v2802 = vsel %vm2141, %v2751, 0.0
      %v2803 = vadd.f32 %v2801, %v2802
      %v2804 = vsel %vm2141, %v2752, 0.0
      %v2805 = vadd.f32 %v2803, %v2804
      %v2806 = vsel %vm2141, %v2753, 0.0
      %v2807 = vadd.f32 %v2805, %v2806
      %v2808 = vsel %vm2141, %v2754, 0.0
      %v2809 = vadd.f32 %v2807, %v2808
      %v2810 = vsel %vm2141, %v2755, 0.0
      %v2811 = vadd.f32 %v2809, %v2810
      %v2812 = vsel %vm2141, %v2756, 0.0
      %v2813 = vadd.f32 %v2811, %v2812
      %v2814 = vsel %vm2141, %v2757, 0.0
      %v2815 = vadd.f32 %v2813, %v2814
      %v2816 = vsel %vm2141, %v2758, 0.0
      %v2817 = vadd.f32 %v2815, %v2816
      %v2818 = vsel %vm2141, %v2759, 0.0
      %v2819 = vadd.f32 %v2817, %v2818
      %v2820 = vsel %vm2141, %v2760, 0.0
      %v2821 = vadd.f32 %v2819, %v2820
      %v2822 = vsel %vm2141, %v2761, 0.0
      %v2823 = vadd.f32 %v2821, %v2822
      %v2824 = vsel %vm2141, %v2762, 0.0
      %v2825 = vadd.f32 %v2823, %v2824
      %v2826 = vrot.slane %v2825, 4
      %v2827 = vadd.f32 %v2825, %v2826
      %v2828 = vrot.slane %v2827, 2
      %v2829 = vadd.f32 %v2827, %v2828
      %v2830 = vrot.slane %v2829, 1
      %v2831 = vadd.f32 %v2829, %v2830
      %v2832 = vmul.f32 %v2831, %v2697
      %v2833 = vadd.f32 %v2832, 1e-05
      %v2834 = vrsqrt.pop %v2833
      %v2835 = vmul.f32 %v2699, %v2834
      %v2836 = vmul.f32 %v2700, %v2834
      %v2837 = vmul.f32 %v2701, %v2834
      %v2838 = vmul.f32 %v2702, %v2834
      %v2839 = vmul.f32 %v2703, %v2834
      %v2840 = vmul.f32 %v2704, %v2834
      %v2841 = vmul.f32 %v2705, %v2834
      %v2842 = vmul.f32 %v2706, %v2834
      %v2843 = vmul.f32 %v2707, %v2834
      %v2844 = vmul.f32 %v2708, %v2834
      %v2845 = vmul.f32 %v2709, %v2834
      %v2846 = vmul.f32 %v2710, %v2834
      %v2847 = vmul.f32 %v2711, %v2834
      %v2848 = vmul.f32 %v2712, %v2834
      %v2849 = vmul.f32 %v2713, %v2834
      %v2850 = vmul.f32 %v2714, %v2834
      %v2851 = vmul.f32 %v2715, %v2834
      %v2852 = vmul.f32 %v2716, %v2834
      %v2853 = vmul.f32 %v2717, %v2834
      %v2854 = vmul.f32 %v2718, %v2834
      %v2855 = vmul.f32 %v2719, %v2834
      %v2856 = vmul.f32 %v2720, %v2834
      %v2857 = vmul.f32 %v2721, %v2834
      %v2858 = vmul.f32 %v2722, %v2834
      %v2859 = vmul.f32 %v2723, %v2834
      %v2860 = vmul.f32 %v2724, %v2834
      %v2861 = vmul.f32 %v2725, %v2834
      %v2862 = vmul.f32 %v2726, %v2834
      %v2863 = vmul.f32 %v2727, %v2834
      %v2864 = vmul.f32 %v2728, %v2834
      %v2865 = vmul.f32 %v2729, %v2834
      %v2866 = vmul.f32 %v2730, %v2834
      %v2867 = vld [vmem:[%s3] sm:$0x1]
      %v2869 = vlaneseq
      %v2870 = vshrl.u32 %v2869, 7
      %v2871 = vsub.s32 0, %v2870
      %v2872 = vrot.slane %v2867, %v2871
      %v2874 = vmul.f32 %v2835, %v2872
      %v2875 = vmul.f32 %v2836, %v2872
      %v2876 = vmul.f32 %v2837, %v2872
      %v2877 = vmul.f32 %v2838, %v2872
      %v2878 = vmul.f32 %v2839, %v2872
      %v2879 = vmul.f32 %v2840, %v2872
      %v2880 = vmul.f32 %v2841, %v2872
      %v2881 = vmul.f32 %v2842, %v2872
      %v2882 = vmul.f32 %v2843, %v2872
      %v2883 = vmul.f32 %v2844, %v2872
      %v2884 = vmul.f32 %v2845, %v2872
      %v2885 = vmul.f32 %v2846, %v2872
      %v2886 = vmul.f32 %v2847, %v2872
      %v2887 = vmul.f32 %v2848, %v2872
      %v2888 = vmul.f32 %v2849, %v2872
      %v2889 = vmul.f32 %v2850, %v2872
      %v2890 = vmul.f32 %v2851, %v2872
      %v2891 = vmul.f32 %v2852, %v2872
      %v2892 = vmul.f32 %v2853, %v2872
      %v2893 = vmul.f32 %v2854, %v2872
      %v2894 = vmul.f32 %v2855, %v2872
      %v2895 = vmul.f32 %v2856, %v2872
      %v2896 = vmul.f32 %v2857, %v2872
      %v2897 = vmul.f32 %v2858, %v2872
      %v2898 = vmul.f32 %v2859, %v2872
      %v2899 = vmul.f32 %v2860, %v2872
      %v2900 = vmul.f32 %v2861, %v2872
      %v2901 = vmul.f32 %v2862, %v2872
      %v2902 = vmul.f32 %v2863, %v2872
      %v2903 = vmul.f32 %v2864, %v2872
      %v2904 = vmul.f32 %v2865, %v2872
      %v2905 = vmul.f32 %v2866, %v2872
      %v2906 = vld [vmem:[%s4] sm:$0x1]
      %v2908 = vlaneseq
      %v2909 = vshrl.u32 %v2908, 7
      %v2910 = vsub.s32 0, %v2909
      %v2911 = vrot.slane %v2906, %v2910
      %v2913 = vadd.f32 %v2874, %v2911
      %v2914 = vadd.f32 %v2875, %v2911
      %v2915 = vadd.f32 %v2876, %v2911
      %v2916 = vadd.f32 %v2877, %v2911
      %v2917 = vadd.f32 %v2878, %v2911
      %v2918 = vadd.f32 %v2879, %v2911
      %v2919 = vadd.f32 %v2880, %v2911
      %v2920 = vadd.f32 %v2881, %v2911
      %v2921 = vadd.f32 %v2882, %v2911
      %v2922 = vadd.f32 %v2883, %v2911
      %v2923 = vadd.f32 %v2884, %v2911
      %v2924 = vadd.f32 %v2885, %v2911
      %v2925 = vadd.f32 %v2886, %v2911
      %v2926 = vadd.f32 %v2887, %v2911
      %v2927 = vadd.f32 %v2888, %v2911
      %v2928 = vadd.f32 %v2889, %v2911
      %v2929 = vadd.f32 %v2890, %v2911
      %v2930 = vadd.f32 %v2891, %v2911
      %v2931 = vadd.f32 %v2892, %v2911
      %v2932 = vadd.f32 %v2893, %v2911
      %v2933 = vadd.f32 %v2894, %v2911
      %v2934 = vadd.f32 %v2895, %v2911
      %v2935 = vadd.f32 %v2896, %v2911
      %v2936 = vadd.f32 %v2897, %v2911
      %v2937 = vadd.f32 %v2898, %v2911
      %v2938 = vadd.f32 %v2899, %v2911
      %v2939 = vadd.f32 %v2900, %v2911
      %v2940 = vadd.f32 %v2901, %v2911
      %v2941 = vadd.f32 %v2902, %v2911
      %v2942 = vadd.f32 %v2903, %v2911
      %v2943 = vadd.f32 %v2904, %v2911
      %v2944 = vadd.f32 %v2905, %v2911
      %v2945 = vsel %vm2141, %v2913, %v2502
      %v2946 = vsel %vm2141, %v2914, %v2505
      %v2947 = vsel %vm2141, %v2915, %v2510
      %v2948 = vsel %vm2141, %v2916, %v2513
      %v2949 = vsel %vm2141, %v2917, %v2518
      %v2950 = vsel %vm2141, %v2918, %v2521
      %v2951 = vsel %vm2141, %v2919, %v2526
      %v2952 = vsel %vm2141, %v2920, %v2529
      %v2953 = vsel %vm2141, %v2921, %v2534
      %v2954 = vsel %vm2141, %v2922, %v2537
      %v2955 = vsel %vm2141, %v2923, %v2542
      %v2956 = vsel %vm2141, %v2924, %v2545
      %v2957 = vsel %vm2141, %v2925, %v2550
      %v2958 = vsel %vm2141, %v2926, %v2553
      %v2959 = vsel %vm2141, %v2927, %v2558
      %v2960 = vsel %vm2141, %v2928, %v2561
      %v2961 = vsel %vm2141, %v2929, %v2566
      %v2962 = vsel %vm2141, %v2930, %v2569
      %v2963 = vsel %vm2141, %v2931, %v2574
      %v2964 = vsel %vm2141, %v2932, %v2577
      %v2965 = vsel %vm2141, %v2933, %v2582
      %v2966 = vsel %vm2141, %v2934, %v2585
      %v2967 = vsel %vm2141, %v2935, %v2590
      %v2968 = vsel %vm2141, %v2936, %v2593
      %v2969 = vsel %vm2141, %v2937, %v2598
      %v2970 = vsel %vm2141, %v2938, %v2601
      %v2971 = vsel %vm2141, %v2939, %v2606
      %v2972 = vsel %vm2141, %v2940, %v2609
      %v2973 = vsel %vm2141, %v2941, %v2614
      %v2974 = vsel %vm2141, %v2942, %v2617
      %v2975 = vsel %vm2141, %v2943, %v2622
      %v2976 = vsel %vm2141, %v2944, %v2625
      %vm2977 = vcmp.ge.f32.partialorder %v2945, 0.0
      %vm2978 = vcmp.ge.f32.partialorder %v2946, 0.0
      %vm2979 = vcmp.ge.f32.partialorder %v2947, 0.0
      %vm2980 = vcmp.ge.f32.partialorder %v2948, 0.0
      %vm2981 = vcmp.ge.f32.partialorder %v2949, 0.0
      %vm2982 = vcmp.ge.f32.partialorder %v2950, 0.0
      %vm2983 = vcmp.ge.f32.partialorder %v2951, 0.0
      %vm2984 = vcmp.ge.f32.partialorder %v2952, 0.0
      %vm2985 = vcmp.ge.f32.partialorder %v2953, 0.0
      %vm2986 = vcmp.ge.f32.partialorder %v2954, 0.0
      %vm2987 = vcmp.ge.f32.partialorder %v2955, 0.0
      %vm2988 = vcmp.ge.f32.partialorder %v2956, 0.0
      %vm2989 = vcmp.ge.f32.partialorder %v2957, 0.0
      %vm2990 = vcmp.ge.f32.partialorder %v2958, 0.0
      %vm2991 = vcmp.ge.f32.partialorder %v2959, 0.0
      %vm2992 = vcmp.ge.f32.partialorder %v2960, 0.0
      %vm2993 = vcmp.ge.f32.partialorder %v2961, 0.0
      %vm2994 = vcmp.ge.f32.partialorder %v2962, 0.0
      %vm2995 = vcmp.ge.f32.partialorder %v2963, 0.0
      %vm2996 = vcmp.ge.f32.partialorder %v2964, 0.0
      %vm2997 = vcmp.ge.f32.partialorder %v2965, 0.0
      %vm2998 = vcmp.ge.f32.partialorder %v2966, 0.0
      %vm2999 = vcmp.ge.f32.partialorder %v2967, 0.0
      %vm3000 = vcmp.ge.f32.partialorder %v2968, 0.0
      %vm3001 = vcmp.ge.f32.partialorder %v2969, 0.0
      %vm3002 = vcmp.ge.f32.partialorder %v2970, 0.0
      %vm3003 = vcmp.ge.f32.partialorder %v2971, 0.0
      %vm3004 = vcmp.ge.f32.partialorder %v2972, 0.0
      %vm3005 = vcmp.ge.f32.partialorder %v2973, 0.0
      %vm3006 = vcmp.ge.f32.partialorder %v2974, 0.0
      %vm3007 = vcmp.ge.f32.partialorder %v2975, 0.0
      %vm3008 = vcmp.ge.f32.partialorder %v2976, 0.0
      %v3009 = vmul.f32 %v2945, 0.1
      %v3010 = vmul.f32 %v2946, 0.1
      %v3011 = vmul.f32 %v2947, 0.1
      %v3012 = vmul.f32 %v2948, 0.1
      %v3013 = vmul.f32 %v2949, 0.1
      %v3014 = vmul.f32 %v2950, 0.1
      %v3015 = vmul.f32 %v2951, 0.1
      %v3016 = vmul.f32 %v2952, 0.1
      %v3017 = vmul.f32 %v2953, 0.1
      %v3018 = vmul.f32 %v2954, 0.1
      %v3019 = vmul.f32 %v2955, 0.1
      %v3020 = vmul.f32 %v2956, 0.1
      %v3021 = vmul.f32 %v2957, 0.1
      %v3022 = vmul.f32 %v2958, 0.1
      %v3023 = vmul.f32 %v2959, 0.1
      %v3024 = vmul.f32 %v2960, 0.1
      %v3025 = vmul.f32 %v2961, 0.1
      %v3026 = vmul.f32 %v2962, 0.1
      %v3027 = vmul.f32 %v2963, 0.1
      %v3028 = vmul.f32 %v2964, 0.1
      %v3029 = vmul.f32 %v2965, 0.1
      %v3030 = vmul.f32 %v2966, 0.1
      %v3031 = vmul.f32 %v2967, 0.1
      %v3032 = vmul.f32 %v2968, 0.1
      %v3033 = vmul.f32 %v2969, 0.1
      %v3034 = vmul.f32 %v2970, 0.1
      %v3035 = vmul.f32 %v2971, 0.1
      %v3036 = vmul.f32 %v2972, 0.1
      %v3037 = vmul.f32 %v2973, 0.1
      %v3038 = vmul.f32 %v2974, 0.1
      %v3039 = vmul.f32 %v2975, 0.1
      %v3040 = vmul.f32 %v2976, 0.1
      %v3041 = vsel %vm2977, %v2945, %v3009
      %v3042 = vsel %vm2978, %v2946, %v3010
      %v3043 = vsel %vm2979, %v2947, %v3011
      %v3044 = vsel %vm2980, %v2948, %v3012
      %v3045 = vsel %vm2981, %v2949, %v3013
      %v3046 = vsel %vm2982, %v2950, %v3014
      %v3047 = vsel %vm2983, %v2951, %v3015
      %v3048 = vsel %vm2984, %v2952, %v3016
      %v3049 = vsel %vm2985, %v2953, %v3017
      %v3050 = vsel %vm2986, %v2954, %v3018
      %v3051 = vsel %vm2987, %v2955, %v3019
      %v3052 = vsel %vm2988, %v2956, %v3020
      %v3053 = vsel %vm2989, %v2957, %v3021
      %v3054 = vsel %vm2990, %v2958, %v3022
      %v3055 = vsel %vm2991, %v2959, %v3023
      %v3056 = vsel %vm2992, %v2960, %v3024
      %v3057 = vsel %vm2993, %v2961, %v3025
      %v3058 = vsel %vm2994, %v2962, %v3026
      %v3059 = vsel %vm2995, %v2963, %v3027
      %v3060 = vsel %vm2996, %v2964, %v3028
      %v3061 = vsel %vm2997, %v2965, %v3029
      %v3062 = vsel %vm2998, %v2966, %v3030
      %v3063 = vsel %vm2999, %v2967, %v3031
      %v3064 = vsel %vm3000, %v2968, %v3032
      %v3065 = vsel %vm3001, %v2969, %v3033
      %v3066 = vsel %vm3002, %v2970, %v3034
      %v3067 = vsel %vm3003, %v2971, %v3035
      %v3068 = vsel %vm3004, %v2972, %v3036
      %v3069 = vsel %vm3005, %v2973, %v3037
      %v3070 = vsel %vm3006, %v2974, %v3038
      %v3071 = vsel %vm3007, %v2975, %v3039
      %v3072 = vsel %vm3008, %v2976, %v3040
      %3073 = vst.msk [vmem:[%s762 + $0x1] sm:$0xff] %vm658, %v3041
      %3074 = vst.msk [vmem:[%s762 + $0x9] sm:$0xff] %vm658, %v3042
      %3075 = vst.msk [vmem:[%s762 + $0x19] sm:$0xff] %vm658, %v3043
      %3076 = vst.msk [vmem:[%s762 + $0x21] sm:$0xff] %vm658, %v3044
      %3077 = vst.msk [vmem:[%s762 + $0x31] sm:$0xff] %vm658, %v3045
      %3078 = vst.msk [vmem:[%s762 + $0x39] sm:$0xff] %vm658, %v3046
      %3079 = vst.msk [vmem:[%s762 + $0x49] sm:$0xff] %vm658, %v3047
      %3080 = vst.msk [vmem:[%s762 + $0x51] sm:$0xff] %vm658, %v3048
      %3081 = vst.msk [vmem:[%s762 + $0x61] sm:$0xff] %vm658, %v3049
      %3082 = vst.msk [vmem:[%s762 + $0x69] sm:$0xff] %vm658, %v3050
      %3083 = vst.msk [vmem:[%s762 + $0x79] sm:$0xff] %vm658, %v3051
      %3084 = vst.msk [vmem:[%s762 + $0x81] sm:$0xff] %vm658, %v3052
      %3085 = vst.msk [vmem:[%s762 + $0x91] sm:$0xff] %vm658, %v3053
      %3086 = vst.msk [vmem:[%s762 + $0x99] sm:$0xff] %vm658, %v3054
      %3087 = vst.msk [vmem:[%s762 + $0xa9] sm:$0xff] %vm658, %v3055
      %3088 = vst.msk [vmem:[%s762 + $0xb1] sm:$0xff] %vm658, %v3056
      %3089 = vst.msk [vmem:[%s762 + $0xc1] sm:$0xff] %vm658, %v3057
      %3090 = vst.msk [vmem:[%s762 + $0xc9] sm:$0xff] %vm658, %v3058
      %3091 = vst.msk [vmem:[%s762 + $0xd9] sm:$0xff] %vm658, %v3059
      %3092 = vst.msk [vmem:[%s762 + $0xe1] sm:$0xff] %vm658, %v3060
      %3093 = vst.msk [vmem:[%s762 + $0xf1] sm:$0xff] %vm658, %v3061
      %3094 = vst.msk [vmem:[%s762 + $0xf9] sm:$0xff] %vm658, %v3062
      %3095 = vst.msk [vmem:[%s762 + $0x109] sm:$0xff] %vm658, %v3063
      %3096 = vst.msk [vmem:[%s762 + $0x111] sm:$0xff] %vm658, %v3064
      %3097 = vst.msk [vmem:[%s762 + $0x121] sm:$0xff] %vm658, %v3065
      %3098 = vst.msk [vmem:[%s762 + $0x129] sm:$0xff] %vm658, %v3066
      %3099 = vst.msk [vmem:[%s762 + $0x139] sm:$0xff] %vm658, %v3067
      %3100 = vst.msk [vmem:[%s762 + $0x141] sm:$0xff] %vm658, %v3068
      %3101 = vst.msk [vmem:[%s762 + $0x151] sm:$0xff] %vm658, %v3069
      %3102 = vst.msk [vmem:[%s762 + $0x159] sm:$0xff] %vm658, %v3070
      %3103 = vst.msk [vmem:[%s762 + $0x169] sm:$0xff] %vm658, %v3071
      %3104 = vst.msk [vmem:[%s762 + $0x171] sm:$0xff] %vm658, %v3072
      %v3105 = vld [vmem:[#allocation2] sm:$0xff]
      %v3106 = vld [vmem:[#allocation2 + $0x8] sm:$0xff]
      %v3107 = vld [vmem:[#allocation2 + $0x18] sm:$0xff]
      %v3108 = vld [vmem:[#allocation2 + $0x20] sm:$0xff]
      %v3109 = vld [vmem:[#allocation2 + $0x30] sm:$0xff]
      %v3110 = vld [vmem:[#allocation2 + $0x38] sm:$0xff]
      %v3111 = vld [vmem:[#allocation2 + $0x48] sm:$0xff]
      %v3112 = vld [vmem:[#allocation2 + $0x50] sm:$0xff]
      %v3113 = vld [vmem:[#allocation2 + $0x60] sm:$0xff]
      %v3114 = vld [vmem:[#allocation2 + $0x68] sm:$0xff]
      %v3115 = vld [vmem:[#allocation2 + $0x78] sm:$0xff]
      %v3116 = vld [vmem:[#allocation2 + $0x80] sm:$0xff]
      %v3117 = vld [vmem:[#allocation2 + $0x90] sm:$0xff]
      %v3118 = vld [vmem:[#allocation2 + $0x98] sm:$0xff]
      %v3119 = vld [vmem:[#allocation2 + $0xa8] sm:$0xff]
      %v3120 = vld [vmem:[#allocation2 + $0xb0] sm:$0xff]
      %v3121 = vld [vmem:[#allocation2 + $0xc0] sm:$0xff]
      %v3122 = vld [vmem:[#allocation2 + $0xc8] sm:$0xff]
      %v3123 = vld [vmem:[#allocation2 + $0xd8] sm:$0xff]
      %v3124 = vld [vmem:[#allocation2 + $0xe0] sm:$0xff]
      %v3125 = vld [vmem:[#allocation2 + $0xf0] sm:$0xff]
      %v3126 = vld [vmem:[#allocation2 + $0xf8] sm:$0xff]
      %v3127 = vld [vmem:[#allocation2 + $0x108] sm:$0xff]
      %v3128 = vld [vmem:[#allocation2 + $0x110] sm:$0xff]
      %v3129 = vld [vmem:[#allocation2 + $0x120] sm:$0xff]
      %v3130 = vld [vmem:[#allocation2 + $0x128] sm:$0xff]
      %v3131 = vld [vmem:[#allocation2 + $0x138] sm:$0xff]
      %v3132 = vld [vmem:[#allocation2 + $0x140] sm:$0xff]
      %v3133 = vld [vmem:[#allocation2 + $0x150] sm:$0xff]
      %v3134 = vld [vmem:[#allocation2 + $0x158] sm:$0xff]
      %v3135 = vld [vmem:[#allocation2 + $0x168] sm:$0xff]
      %v3136 = vld [vmem:[#allocation2 + $0x170] sm:$0xff]
      %v3137 = vld [vmem:[#allocation2 + $0x1] sm:$0xff]
      %v3138 = vld [vmem:[#allocation2 + $0x9] sm:$0xff]
      %v3139 = vld [vmem:[#allocation2 + $0x19] sm:$0xff]
      %v3140 = vld [vmem:[#allocation2 + $0x21] sm:$0xff]
      %v3141 = vld [vmem:[#allocation2 + $0x31] sm:$0xff]
      %v3142 = vld [vmem:[#allocation2 + $0x39] sm:$0xff]
      %v3143 = vld [vmem:[#allocation2 + $0x49] sm:$0xff]
      %v3144 = vld [vmem:[#allocation2 + $0x51] sm:$0xff]
      %v3145 = vld [vmem:[#allocation2 + $0x61] sm:$0xff]
      %v3146 = vld [vmem:[#allocation2 + $0x69] sm:$0xff]
      %v3147 = vld [vmem:[#allocation2 + $0x79] sm:$0xff]
      %v3148 = vld [vmem:[#allocation2 + $0x81] sm:$0xff]
      %v3149 = vld [vmem:[#allocation2 + $0x91] sm:$0xff]
      %v3150 = vld [vmem:[#allocation2 + $0x99] sm:$0xff]
      %v3151 = vld [vmem:[#allocation2 + $0xa9] sm:$0xff]
      %v3152 = vld [vmem:[#allocation2 + $0xb1] sm:$0xff]
      %v3153 = vld [vmem:[#allocation2 + $0xc1] sm:$0xff]
      %v3154 = vld [vmem:[#allocation2 + $0xc9] sm:$0xff]
      %v3155 = vld [vmem:[#allocation2 + $0xd9] sm:$0xff]
      %v3156 = vld [vmem:[#allocation2 + $0xe1] sm:$0xff]
      %v3157 = vld [vmem:[#allocation2 + $0xf1] sm:$0xff]
      %v3158 = vld [vmem:[#allocation2 + $0xf9] sm:$0xff]
      %v3159 = vld [vmem:[#allocation2 + $0x109] sm:$0xff]
      %v3160 = vld [vmem:[#allocation2 + $0x111] sm:$0xff]
      %v3161 = vld [vmem:[#allocation2 + $0x121] sm:$0xff]
      %v3162 = vld [vmem:[#allocation2 + $0x129] sm:$0xff]
      %v3163 = vld [vmem:[#allocation2 + $0x139] sm:$0xff]
      %v3164 = vld [vmem:[#allocation2 + $0x141] sm:$0xff]
      %v3165 = vld [vmem:[#allocation2 + $0x151] sm:$0xff]
      %v3166 = vld [vmem:[#allocation2 + $0x159] sm:$0xff]
      %v3167 = vld [vmem:[#allocation2 + $0x169] sm:$0xff]
      %v3168 = vld [vmem:[#allocation2 + $0x171] sm:$0xff]
      %v3169 = vld [vmem:[#allocation2 + $0x2] sm:$0xff]
      %v3170 = vld [vmem:[#allocation2 + $0xa] sm:$0xff]
      %v3171 = vld [vmem:[#allocation2 + $0x1a] sm:$0xff]
      %v3172 = vld [vmem:[#allocation2 + $0x22] sm:$0xff]
      %v3173 = vld [vmem:[#allocation2 + $0x32] sm:$0xff]
      %v3174 = vld [vmem:[#allocation2 + $0x3a] sm:$0xff]
      %v3175 = vld [vmem:[#allocation2 + $0x4a] sm:$0xff]
      %v3176 = vld [vmem:[#allocation2 + $0x52] sm:$0xff]
      %v3177 = vld [vmem:[#allocation2 + $0x62] sm:$0xff]
      %v3178 = vld [vmem:[#allocation2 + $0x6a] sm:$0xff]
      %v3179 = vld [vmem:[#allocation2 + $0x7a] sm:$0xff]
      %v3180 = vld [vmem:[#allocation2 + $0x82] sm:$0xff]
      %v3181 = vld [vmem:[#allocation2 + $0x92] sm:$0xff]
      %v3182 = vld [vmem:[#allocation2 + $0x9a] sm:$0xff]
      %v3183 = vld [vmem:[#allocation2 + $0xaa] sm:$0xff]
      %v3184 = vld [vmem:[#allocation2 + $0xb2] sm:$0xff]
      %v3185 = vld [vmem:[#allocation2 + $0xc2] sm:$0xff]
      %v3186 = vld [vmem:[#allocation2 + $0xca] sm:$0xff]
      %v3187 = vld [vmem:[#allocation2 + $0xda] sm:$0xff]
      %v3188 = vld [vmem:[#allocation2 + $0xe2] sm:$0xff]
      %v3189 = vld [vmem:[#allocation2 + $0xf2] sm:$0xff]
      %v3190 = vld [vmem:[#allocation2 + $0xfa] sm:$0xff]
      %v3191 = vld [vmem:[#allocation2 + $0x10a] sm:$0xff]
      %v3192 = vld [vmem:[#allocation2 + $0x112] sm:$0xff]
      %v3193 = vld [vmem:[#allocation2 + $0x122] sm:$0xff]
      %v3194 = vld [vmem:[#allocation2 + $0x12a] sm:$0xff]
      %v3195 = vld [vmem:[#allocation2 + $0x13a] sm:$0xff]
      %v3196 = vld [vmem:[#allocation2 + $0x142] sm:$0xff]
      %v3197 = vld [vmem:[#allocation2 + $0x152] sm:$0xff]
      %v3198 = vld [vmem:[#allocation2 + $0x15a] sm:$0xff]
      %v3199 = vld [vmem:[#allocation2 + $0x16a] sm:$0xff]
      %v3200 = vld [vmem:[#allocation2 + $0x172] sm:$0xff]
      %v3201 = vld [vmem:[%s762] sm:$0xff]
      %v3202 = vld [vmem:[%s762 + $0x8] sm:$0xff]
      %v3203 = vld [vmem:[%s762 + $0x18] sm:$0xff]
      %v3204 = vld [vmem:[%s762 + $0x20] sm:$0xff]
      %v3205 = vld [vmem:[%s762 + $0x30] sm:$0xff]
      %v3206 = vld [vmem:[%s762 + $0x38] sm:$0xff]
      %v3207 = vld [vmem:[%s762 + $0x48] sm:$0xff]
      %v3208 = vld [vmem:[%s762 + $0x50] sm:$0xff]
      %v3209 = vld [vmem:[%s762 + $0x60] sm:$0xff]
      %v3210 = vld [vmem:[%s762 + $0x68] sm:$0xff]
      %v3211 = vld [vmem:[%s762 + $0x78] sm:$0xff]
      %v3212 = vld [vmem:[%s762 + $0x80] sm:$0xff]
      %v3213 = vld [vmem:[%s762 + $0x90] sm:$0xff]
      %v3214 = vld [vmem:[%s762 + $0x98] sm:$0xff]
      %v3215 = vld [vmem:[%s762 + $0xa8] sm:$0xff]
      %v3216 = vld [vmem:[%s762 + $0xb0] sm:$0xff]
      %v3217 = vld [vmem:[%s762 + $0xc0] sm:$0xff]
      %v3218 = vld [vmem:[%s762 + $0xc8] sm:$0xff]
      %v3219 = vld [vmem:[%s762 + $0xd8] sm:$0xff]
      %v3220 = vld [vmem:[%s762 + $0xe0] sm:$0xff]
      %v3221 = vld [vmem:[%s762 + $0xf0] sm:$0xff]
      %v3222 = vld [vmem:[%s762 + $0xf8] sm:$0xff]
      %v3223 = vld [vmem:[%s762 + $0x108] sm:$0xff]
      %v3224 = vld [vmem:[%s762 + $0x110] sm:$0xff]
      %v3225 = vld [vmem:[%s762 + $0x120] sm:$0xff]
      %v3226 = vld [vmem:[%s762 + $0x128] sm:$0xff]
      %v3227 = vld [vmem:[%s762 + $0x138] sm:$0xff]
      %v3228 = vld [vmem:[%s762 + $0x140] sm:$0xff]
      %v3229 = vld [vmem:[%s762 + $0x150] sm:$0xff]
      %v3230 = vld [vmem:[%s762 + $0x158] sm:$0xff]
      %v3231 = vld [vmem:[%s762 + $0x168] sm:$0xff]
      %v3232 = vld [vmem:[%s762 + $0x170] sm:$0xff]
      %v3233 = vld [vmem:[%s762 + $0x1] sm:$0xff]
      %v3234 = vld [vmem:[%s762 + $0x9] sm:$0xff]
      %v3235 = vld [vmem:[%s762 + $0x19] sm:$0xff]
      %v3236 = vld [vmem:[%s762 + $0x21] sm:$0xff]
      %v3237 = vld [vmem:[%s762 + $0x31] sm:$0xff]
      %v3238 = vld [vmem:[%s762 + $0x39] sm:$0xff]
      %v3239 = vld [vmem:[%s762 + $0x49] sm:$0xff]
      %v3240 = vld [vmem:[%s762 + $0x51] sm:$0xff]
      %v3241 = vld [vmem:[%s762 + $0x61] sm:$0xff]
      %v3242 = vld [vmem:[%s762 + $0x69] sm:$0xff]
      %v3243 = vld [vmem:[%s762 + $0x79] sm:$0xff]
      %v3244 = vld [vmem:[%s762 + $0x81] sm:$0xff]
      %v3245 = vld [vmem:[%s762 + $0x91] sm:$0xff]
      %v3246 = vld [vmem:[%s762 + $0x99] sm:$0xff]
      %v3247 = vld [vmem:[%s762 + $0xa9] sm:$0xff]
      %v3248 = vld [vmem:[%s762 + $0xb1] sm:$0xff]
      %v3249 = vld [vmem:[%s762 + $0xc1] sm:$0xff]
      %v3250 = vld [vmem:[%s762 + $0xc9] sm:$0xff]
      %v3251 = vld [vmem:[%s762 + $0xd9] sm:$0xff]
      %v3252 = vld [vmem:[%s762 + $0xe1] sm:$0xff]
      %v3253 = vld [vmem:[%s762 + $0xf1] sm:$0xff]
      %v3254 = vld [vmem:[%s762 + $0xf9] sm:$0xff]
      %v3255 = vld [vmem:[%s762 + $0x109] sm:$0xff]
      %v3256 = vld [vmem:[%s762 + $0x111] sm:$0xff]
      %v3257 = vld [vmem:[%s762 + $0x121] sm:$0xff]
      %v3258 = vld [vmem:[%s762 + $0x129] sm:$0xff]
      %v3259 = vld [vmem:[%s762 + $0x139] sm:$0xff]
      %v3260 = vld [vmem:[%s762 + $0x141] sm:$0xff]
      %v3261 = vld [vmem:[%s762 + $0x151] sm:$0xff]
      %v3262 = vld [vmem:[%s762 + $0x159] sm:$0xff]
      %v3263 = vld [vmem:[%s762 + $0x169] sm:$0xff]
      %v3264 = vld [vmem:[%s762 + $0x171] sm:$0xff]
      %v3265 = vld [vmem:[%s762 + $0x2] sm:$0xff]
      %v3266 = vld [vmem:[%s762 + $0xa] sm:$0xff]
      %v3267 = vld [vmem:[%s762 + $0x1a] sm:$0xff]
      %v3268 = vld [vmem:[%s762 + $0x22] sm:$0xff]
      %v3269 = vld [vmem:[%s762 + $0x32] sm:$0xff]
      %v3270 = vld [vmem:[%s762 + $0x3a] sm:$0xff]
      %v3271 = vld [vmem:[%s762 + $0x4a] sm:$0xff]
      %v3272 = vld [vmem:[%s762 + $0x52] sm:$0xff]
      %v3273 = vld [vmem:[%s762 + $0x62] sm:$0xff]
      %v3274 = vld [vmem:[%s762 + $0x6a] sm:$0xff]
      %v3275 = vld [vmem:[%s762 + $0x7a] sm:$0xff]
      %v3276 = vld [vmem:[%s762 + $0x82] sm:$0xff]
      %v3277 = vld [vmem:[%s762 + $0x92] sm:$0xff]
      %v3278 = vld [vmem:[%s762 + $0x9a] sm:$0xff]
      %v3279 = vld [vmem:[%s762 + $0xaa] sm:$0xff]
      %v3280 = vld [vmem:[%s762 + $0xb2] sm:$0xff]
      %v3281 = vld [vmem:[%s762 + $0xc2] sm:$0xff]
      %v3282 = vld [vmem:[%s762 + $0xca] sm:$0xff]
      %v3283 = vld [vmem:[%s762 + $0xda] sm:$0xff]
      %v3284 = vld [vmem:[%s762 + $0xe2] sm:$0xff]
      %v3285 = vld [vmem:[%s762 + $0xf2] sm:$0xff]
      %v3286 = vld [vmem:[%s762 + $0xfa] sm:$0xff]
      %v3287 = vld [vmem:[%s762 + $0x10a] sm:$0xff]
      %v3288 = vld [vmem:[%s762 + $0x112] sm:$0xff]
      %v3289 = vld [vmem:[%s762 + $0x122] sm:$0xff]
      %v3290 = vld [vmem:[%s762 + $0x12a] sm:$0xff]
      %v3291 = vld [vmem:[%s762 + $0x13a] sm:$0xff]
      %v3292 = vld [vmem:[%s762 + $0x142] sm:$0xff]
      %v3293 = vld [vmem:[%s762 + $0x152] sm:$0xff]
      %v3294 = vld [vmem:[%s762 + $0x15a] sm:$0xff]
      %v3295 = vld [vmem:[%s762 + $0x16a] sm:$0xff]
      %v3296 = vld [vmem:[%s762 + $0x172] sm:$0xff]
      %v3297 = vld [vmem:[%s988] sm:$0xff]
      %v3298 = vld [vmem:[%s988 + $0x8] sm:$0xff]
      %v3299 = vld [vmem:[%s988 + $0x18] sm:$0xff]
      %v3300 = vld [vmem:[%s988 + $0x20] sm:$0xff]
      %v3301 = vld [vmem:[%s988 + $0x30] sm:$0xff]
      %v3302 = vld [vmem:[%s988 + $0x38] sm:$0xff]
      %v3303 = vld [vmem:[%s988 + $0x48] sm:$0xff]
      %v3304 = vld [vmem:[%s988 + $0x50] sm:$0xff]
      %v3305 = vld [vmem:[%s988 + $0x60] sm:$0xff]
      %v3306 = vld [vmem:[%s988 + $0x68] sm:$0xff]
      %v3307 = vld [vmem:[%s988 + $0x78] sm:$0xff]
      %v3308 = vld [vmem:[%s988 + $0x80] sm:$0xff]
      %v3309 = vld [vmem:[%s988 + $0x90] sm:$0xff]
      %v3310 = vld [vmem:[%s988 + $0x98] sm:$0xff]
      %v3311 = vld [vmem:[%s988 + $0xa8] sm:$0xff]
      %v3312 = vld [vmem:[%s988 + $0xb0] sm:$0xff]
      %v3313 = vld [vmem:[%s988 + $0xc0] sm:$0xff]
      %v3314 = vld [vmem:[%s988 + $0xc8] sm:$0xff]
      %v3315 = vld [vmem:[%s988 + $0xd8] sm:$0xff]
      %v3316 = vld [vmem:[%s988 + $0xe0] sm:$0xff]
      %v3317 = vld [vmem:[%s988 + $0xf0] sm:$0xff]
      %v3318 = vld [vmem:[%s988 + $0xf8] sm:$0xff]
      %v3319 = vld [vmem:[%s988 + $0x108] sm:$0xff]
      %v3320 = vld [vmem:[%s988 + $0x110] sm:$0xff]
      %v3321 = vld [vmem:[%s988 + $0x120] sm:$0xff]
      %v3322 = vld [vmem:[%s988 + $0x128] sm:$0xff]
      %v3323 = vld [vmem:[%s988 + $0x138] sm:$0xff]
      %v3324 = vld [vmem:[%s988 + $0x140] sm:$0xff]
      %v3325 = vld [vmem:[%s988 + $0x150] sm:$0xff]
      %v3326 = vld [vmem:[%s988 + $0x158] sm:$0xff]
      %v3327 = vld [vmem:[%s988 + $0x168] sm:$0xff]
      %v3328 = vld [vmem:[%s988 + $0x170] sm:$0xff]
      %v3329 = vld [vmem:[%s988 + $0x1] sm:$0xff]
      %v3330 = vld [vmem:[%s988 + $0x9] sm:$0xff]
      %v3331 = vld [vmem:[%s988 + $0x19] sm:$0xff]
      %v3332 = vld [vmem:[%s988 + $0x21] sm:$0xff]
      %v3333 = vld [vmem:[%s988 + $0x31] sm:$0xff]
      %v3334 = vld [vmem:[%s988 + $0x39] sm:$0xff]
      %v3335 = vld [vmem:[%s988 + $0x49] sm:$0xff]
      %v3336 = vld [vmem:[%s988 + $0x51] sm:$0xff]
      %v3337 = vld [vmem:[%s988 + $0x61] sm:$0xff]
      %v3338 = vld [vmem:[%s988 + $0x69] sm:$0xff]
      %v3339 = vld [vmem:[%s988 + $0x79] sm:$0xff]
      %v3340 = vld [vmem:[%s988 + $0x81] sm:$0xff]
      %v3341 = vld [vmem:[%s988 + $0x91] sm:$0xff]
      %v3342 = vld [vmem:[%s988 + $0x99] sm:$0xff]
      %v3343 = vld [vmem:[%s988 + $0xa9] sm:$0xff]
      %v3344 = vld [vmem:[%s988 + $0xb1] sm:$0xff]
      %v3345 = vld [vmem:[%s988 + $0xc1] sm:$0xff]
      %v3346 = vld [vmem:[%s988 + $0xc9] sm:$0xff]
      %v3347 = vld [vmem:[%s988 + $0xd9] sm:$0xff]
      %v3348 = vld [vmem:[%s988 + $0xe1] sm:$0xff]
      %v3349 = vld [vmem:[%s988 + $0xf1] sm:$0xff]
      %v3350 = vld [vmem:[%s988 + $0xf9] sm:$0xff]
      %v3351 = vld [vmem:[%s988 + $0x109] sm:$0xff]
      %v3352 = vld [vmem:[%s988 + $0x111] sm:$0xff]
      %v3353 = vld [vmem:[%s988 + $0x121] sm:$0xff]
      %v3354 = vld [vmem:[%s988 + $0x129] sm:$0xff]
      %v3355 = vld [vmem:[%s988 + $0x139] sm:$0xff]
      %v3356 = vld [vmem:[%s988 + $0x141] sm:$0xff]
      %v3357 = vld [vmem:[%s988 + $0x151] sm:$0xff]
      %v3358 = vld [vmem:[%s988 + $0x159] sm:$0xff]
      %v3359 = vld [vmem:[%s988 + $0x169] sm:$0xff]
      %v3360 = vld [vmem:[%s988 + $0x171] sm:$0xff]
      %v3361 = vld [vmem:[%s988 + $0x2] sm:$0xff]
      %v3362 = vld [vmem:[%s988 + $0xa] sm:$0xff]
      %v3363 = vld [vmem:[%s988 + $0x1a] sm:$0xff]
      %v3364 = vld [vmem:[%s988 + $0x22] sm:$0xff]
      %v3365 = vld [vmem:[%s988 + $0x32] sm:$0xff]
      %v3366 = vld [vmem:[%s988 + $0x3a] sm:$0xff]
      %v3367 = vld [vmem:[%s988 + $0x4a] sm:$0xff]
      %v3368 = vld [vmem:[%s988 + $0x52] sm:$0xff]
      %v3369 = vld [vmem:[%s988 + $0x62] sm:$0xff]
      %v3370 = vld [vmem:[%s988 + $0x6a] sm:$0xff]
      %v3371 = vld [vmem:[%s988 + $0x7a] sm:$0xff]
      %v3372 = vld [vmem:[%s988 + $0x82] sm:$0xff]
      %v3373 = vld [vmem:[%s988 + $0x92] sm:$0xff]
      %v3374 = vld [vmem:[%s988 + $0x9a] sm:$0xff]
      %v3375 = vld [vmem:[%s988 + $0xaa] sm:$0xff]
      %v3376 = vld [vmem:[%s988 + $0xb2] sm:$0xff]
      %v3377 = vld [vmem:[%s988 + $0xc2] sm:$0xff]
      %v3378 = vld [vmem:[%s988 + $0xca] sm:$0xff]
      %v3379 = vld [vmem:[%s988 + $0xda] sm:$0xff]
      %v3380 = vld [vmem:[%s988 + $0xe2] sm:$0xff]
      %v3381 = vld [vmem:[%s988 + $0xf2] sm:$0xff]
      %v3382 = vld [vmem:[%s988 + $0xfa] sm:$0xff]
      %v3383 = vld [vmem:[%s988 + $0x10a] sm:$0xff]
      %v3384 = vld [vmem:[%s988 + $0x112] sm:$0xff]
      %v3385 = vld [vmem:[%s988 + $0x122] sm:$0xff]
      %v3386 = vld [vmem:[%s988 + $0x12a] sm:$0xff]
      %v3387 = vld [vmem:[%s988 + $0x13a] sm:$0xff]
      %v3388 = vld [vmem:[%s988 + $0x142] sm:$0xff]
      %v3389 = vld [vmem:[%s988 + $0x152] sm:$0xff]
      %v3390 = vld [vmem:[%s988 + $0x15a] sm:$0xff]
      %v3391 = vld [vmem:[%s988 + $0x16a] sm:$0xff]
      %v3392 = vld [vmem:[%s988 + $0x172] sm:$0xff]
      %3425 = vrot.lane.b32.xlu0 %v3137, 16
      %v3426 = vpop.permute.xlu0 %3425
      %3427 = vrot.lane.b32.xlu0 %v3138, 16
      %v3428 = vpop.permute.xlu0 %3427
      %3429 = vrot.lane.b32.xlu0 %v3139, 16
      %v3430 = vpop.permute.xlu0 %3429
      %3431 = vrot.lane.b32.xlu0 %v3140, 16
      %v3432 = vpop.permute.xlu0 %3431
      %3433 = vrot.lane.b32.xlu0 %v3141, 16
      %v3434 = vpop.permute.xlu0 %3433
      %3435 = vrot.lane.b32.xlu0 %v3142, 16
      %v3436 = vpop.permute.xlu0 %3435
      %3437 = vrot.lane.b32.xlu0 %v3143, 16
      %v3438 = vpop.permute.xlu0 %3437
      %3439 = vrot.lane.b32.xlu0 %v3144, 16
      %v3440 = vpop.permute.xlu0 %3439
      %3441 = vrot.lane.b32.xlu0 %v3145, 16
      %v3442 = vpop.permute.xlu0 %3441
      %3443 = vrot.lane.b32.xlu0 %v3146, 16
      %v3444 = vpop.permute.xlu0 %3443
      %3445 = vrot.lane.b32.xlu0 %v3147, 16
      %v3446 = vpop.permute.xlu0 %3445
      %3447 = vrot.lane.b32.xlu0 %v3148, 16
      %v3448 = vpop.permute.xlu0 %3447
      %3449 = vrot.lane.b32.xlu0 %v3149, 16
      %v3450 = vpop.permute.xlu0 %3449
      %3451 = vrot.lane.b32.xlu0 %v3150, 16
      %v3452 = vpop.permute.xlu0 %3451
      %3453 = vrot.lane.b32.xlu0 %v3151, 16
      %v3454 = vpop.permute.xlu0 %3453
      %3455 = vrot.lane.b32.xlu0 %v3152, 16
      %v3456 = vpop.permute.xlu0 %3455
      %3457 = vrot.lane.b32.xlu0 %v3153, 16
      %v3458 = vpop.permute.xlu0 %3457
      %3459 = vrot.lane.b32.xlu0 %v3154, 16
      %v3460 = vpop.permute.xlu0 %3459
      %3461 = vrot.lane.b32.xlu0 %v3155, 16
      %v3462 = vpop.permute.xlu0 %3461
      %3463 = vrot.lane.b32.xlu0 %v3156, 16
      %v3464 = vpop.permute.xlu0 %3463
      %3465 = vrot.lane.b32.xlu0 %v3157, 16
      %v3466 = vpop.permute.xlu0 %3465
      %3467 = vrot.lane.b32.xlu0 %v3158, 16
      %v3468 = vpop.permute.xlu0 %3467
      %3469 = vrot.lane.b32.xlu0 %v3159, 16
      %v3470 = vpop.permute.xlu0 %3469
      %3471 = vrot.lane.b32.xlu0 %v3160, 16
      %v3472 = vpop.permute.xlu0 %3471
      %3473 = vrot.lane.b32.xlu0 %v3161, 16
      %v3474 = vpop.permute.xlu0 %3473
      %3475 = vrot.lane.b32.xlu0 %v3162, 16
      %v3476 = vpop.permute.xlu0 %3475
      %3477 = vrot.lane.b32.xlu0 %v3163, 16
      %v3478 = vpop.permute.xlu0 %3477
      %3479 = vrot.lane.b32.xlu0 %v3164, 16
      %v3480 = vpop.permute.xlu0 %3479
      %3481 = vrot.lane.b32.xlu0 %v3165, 16
      %v3482 = vpop.permute.xlu0 %3481
      %3483 = vrot.lane.b32.xlu0 %v3166, 16
      %v3484 = vpop.permute.xlu0 %3483
      %3485 = vrot.lane.b32.xlu0 %v3167, 16
      %v3486 = vpop.permute.xlu0 %3485
      %3487 = vrot.lane.b32.xlu0 %v3168, 16
      %v3488 = vpop.permute.xlu0 %3487
      %3553 = vrot.lane.b32.xlu0 %v3169, 32
      %v3554 = vpop.permute.xlu0 %3553
      %3555 = vrot.lane.b32.xlu0 %v3170, 32
      %v3556 = vpop.permute.xlu0 %3555
      %3557 = vrot.lane.b32.xlu0 %v3171, 32
      %v3558 = vpop.permute.xlu0 %3557
      %3559 = vrot.lane.b32.xlu0 %v3172, 32
      %v3560 = vpop.permute.xlu0 %3559
      %3561 = vrot.lane.b32.xlu0 %v3173, 32
      %v3562 = vpop.permute.xlu0 %3561
      %3563 = vrot.lane.b32.xlu0 %v3174, 32
      %v3564 = vpop.permute.xlu0 %3563
      %3565 = vrot.lane.b32.xlu0 %v3175, 32
      %v3566 = vpop.permute.xlu0 %3565
      %3567 = vrot.lane.b32.xlu0 %v3176, 32
      %v3568 = vpop.permute.xlu0 %3567
      %3569 = vrot.lane.b32.xlu0 %v3177, 32
      %v3570 = vpop.permute.xlu0 %3569
      %3571 = vrot.lane.b32.xlu0 %v3178, 32
      %v3572 = vpop.permute.xlu0 %3571
      %3573 = vrot.lane.b32.xlu0 %v3179, 32
      %v3574 = vpop.permute.xlu0 %3573
      %3575 = vrot.lane.b32.xlu0 %v3180, 32
      %v3576 = vpop.permute.xlu0 %3575
      %3577 = vrot.lane.b32.xlu0 %v3181, 32
      %v3578 = vpop.permute.xlu0 %3577
      %3579 = vrot.lane.b32.xlu0 %v3182, 32
      %v3580 = vpop.permute.xlu0 %3579
      %3581 = vrot.lane.b32.xlu0 %v3183, 32
      %v3582 = vpop.permute.xlu0 %3581
      %3583 = vrot.lane.b32.xlu0 %v3184, 32
      %v3584 = vpop.permute.xlu0 %3583
      %3585 = vrot.lane.b32.xlu0 %v3185, 32
      %v3586 = vpop.permute.xlu0 %3585
      %3587 = vrot.lane.b32.xlu0 %v3186, 32
      %v3588 = vpop.permute.xlu0 %3587
      %3589 = vrot.lane.b32.xlu0 %v3187, 32
      %v3590 = vpop.permute.xlu0 %3589
      %3591 = vrot.lane.b32.xlu0 %v3188, 32
      %v3592 = vpop.permute.xlu0 %3591
      %3593 = vrot.lane.b32.xlu0 %v3189, 32
      %v3594 = vpop.permute.xlu0 %3593
      %3595 = vrot.lane.b32.xlu0 %v3190, 32
      %v3596 = vpop.permute.xlu0 %3595
      %3597 = vrot.lane.b32.xlu0 %v3191, 32
      %v3598 = vpop.permute.xlu0 %3597
      %3599 = vrot.lane.b32.xlu0 %v3192, 32
      %v3600 = vpop.permute.xlu0 %3599
      %3601 = vrot.lane.b32.xlu0 %v3193, 32
      %v3602 = vpop.permute.xlu0 %3601
      %3603 = vrot.lane.b32.xlu0 %v3194, 32
      %v3604 = vpop.permute.xlu0 %3603
      %3605 = vrot.lane.b32.xlu0 %v3195, 32
      %v3606 = vpop.permute.xlu0 %3605
      %3607 = vrot.lane.b32.xlu0 %v3196, 32
      %v3608 = vpop.permute.xlu0 %3607
      %3609 = vrot.lane.b32.xlu0 %v3197, 32
      %v3610 = vpop.permute.xlu0 %3609
      %3611 = vrot.lane.b32.xlu0 %v3198, 32
      %v3612 = vpop.permute.xlu0 %3611
      %3613 = vrot.lane.b32.xlu0 %v3199, 32
      %v3614 = vpop.permute.xlu0 %3613
      %3615 = vrot.lane.b32.xlu0 %v3200, 32
      %v3616 = vpop.permute.xlu0 %3615
      %3681 = vrot.lane.b32.xlu0 %v3201, 48
      %v3682 = vpop.permute.xlu0 %3681
      %3683 = vrot.lane.b32.xlu0 %v3202, 48
      %v3684 = vpop.permute.xlu0 %3683
      %3685 = vrot.lane.b32.xlu0 %v3203, 48
      %v3686 = vpop.permute.xlu0 %3685
      %3687 = vrot.lane.b32.xlu0 %v3204, 48
      %v3688 = vpop.permute.xlu0 %3687
      %3689 = vrot.lane.b32.xlu0 %v3205, 48
      %v3690 = vpop.permute.xlu0 %3689
      %3691 = vrot.lane.b32.xlu0 %v3206, 48
      %v3692 = vpop.permute.xlu0 %3691
      %3693 = vrot.lane.b32.xlu0 %v3207, 48
      %v3694 = vpop.permute.xlu0 %3693
      %3695 = vrot.lane.b32.xlu0 %v3208, 48
      %v3696 = vpop.permute.xlu0 %3695
      %3697 = vrot.lane.b32.xlu0 %v3209, 48
      %v3698 = vpop.permute.xlu0 %3697
      %3699 = vrot.lane.b32.xlu0 %v3210, 48
      %v3700 = vpop.permute.xlu0 %3699
      %3701 = vrot.lane.b32.xlu0 %v3211, 48
      %v3702 = vpop.permute.xlu0 %3701
      %3703 = vrot.lane.b32.xlu0 %v3212, 48
      %v3704 = vpop.permute.xlu0 %3703
      %3705 = vrot.lane.b32.xlu0 %v3213, 48
      %v3706 = vpop.permute.xlu0 %3705
      %3707 = vrot.lane.b32.xlu0 %v3214, 48
      %v3708 = vpop.permute.xlu0 %3707
      %3709 = vrot.lane.b32.xlu0 %v3215, 48
      %v3710 = vpop.permute.xlu0 %3709
      %3711 = vrot.lane.b32.xlu0 %v3216, 48
      %v3712 = vpop.permute.xlu0 %3711
      %3713 = vrot.lane.b32.xlu0 %v3217, 48
      %v3714 = vpop.permute.xlu0 %3713
      %3715 = vrot.lane.b32.xlu0 %v3218, 48
      %v3716 = vpop.permute.xlu0 %3715
      %3717 = vrot.lane.b32.xlu0 %v3219, 48
      %v3718 = vpop.permute.xlu0 %3717
      %3719 = vrot.lane.b32.xlu0 %v3220, 48
      %v3720 = vpop.permute.xlu0 %3719
      %3721 = vrot.lane.b32.xlu0 %v3221, 48
      %v3722 = vpop.permute.xlu0 %3721
      %3723 = vrot.lane.b32.xlu0 %v3222, 48
      %v3724 = vpop.permute.xlu0 %3723
      %3725 = vrot.lane.b32.xlu0 %v3223, 48
      %v3726 = vpop.permute.xlu0 %3725
      %3727 = vrot.lane.b32.xlu0 %v3224, 48
      %v3728 = vpop.permute.xlu0 %3727
      %3729 = vrot.lane.b32.xlu0 %v3225, 48
      %v3730 = vpop.permute.xlu0 %3729
      %3731 = vrot.lane.b32.xlu0 %v3226, 48
      %v3732 = vpop.permute.xlu0 %3731
      %3733 = vrot.lane.b32.xlu0 %v3227, 48
      %v3734 = vpop.permute.xlu0 %3733
      %3735 = vrot.lane.b32.xlu0 %v3228, 48
      %v3736 = vpop.permute.xlu0 %3735
      %3737 = vrot.lane.b32.xlu0 %v3229, 48
      %v3738 = vpop.permute.xlu0 %3737
      %3739 = vrot.lane.b32.xlu0 %v3230, 48
      %v3740 = vpop.permute.xlu0 %3739
      %3741 = vrot.lane.b32.xlu0 %v3231, 48
      %v3742 = vpop.permute.xlu0 %3741
      %3743 = vrot.lane.b32.xlu0 %v3232, 48
      %v3744 = vpop.permute.xlu0 %3743
      %3809 = vrot.lane.b32.xlu0 %v3233, 64
      %v3810 = vpop.permute.xlu0 %3809
      %3811 = vrot.lane.b32.xlu0 %v3234, 64
      %v3812 = vpop.permute.xlu0 %3811
      %3813 = vrot.lane.b32.xlu0 %v3235, 64
      %v3814 = vpop.permute.xlu0 %3813
      %3815 = vrot.lane.b32.xlu0 %v3236, 64
      %v3816 = vpop.permute.xlu0 %3815
      %3817 = vrot.lane.b32.xlu0 %v3237, 64
      %v3818 = vpop.permute.xlu0 %3817
      %3819 = vrot.lane.b32.xlu0 %v3238, 64
      %v3820 = vpop.permute.xlu0 %3819
      %3821 = vrot.lane.b32.xlu0 %v3239, 64
      %v3822 = vpop.permute.xlu0 %3821
      %3823 = vrot.lane.b32.xlu0 %v3240, 64
      %v3824 = vpop.permute.xlu0 %3823
      %3825 = vrot.lane.b32.xlu0 %v3241, 64
      %v3826 = vpop.permute.xlu0 %3825
      %3827 = vrot.lane.b32.xlu0 %v3242, 64
      %v3828 = vpop.permute.xlu0 %3827
      %3829 = vrot.lane.b32.xlu0 %v3243, 64
      %v3830 = vpop.permute.xlu0 %3829
      %3831 = vrot.lane.b32.xlu0 %v3244, 64
      %v3832 = vpop.permute.xlu0 %3831
      %3833 = vrot.lane.b32.xlu0 %v3245, 64
      %v3834 = vpop.permute.xlu0 %3833
      %3835 = vrot.lane.b32.xlu0 %v3246, 64
      %v3836 = vpop.permute.xlu0 %3835
      %3837 = vrot.lane.b32.xlu0 %v3247, 64
      %v3838 = vpop.permute.xlu0 %3837
      %3839 = vrot.lane.b32.xlu0 %v3248, 64
      %v3840 = vpop.permute.xlu0 %3839
      %3841 = vrot.lane.b32.xlu0 %v3249, 64
      %v3842 = vpop.permute.xlu0 %3841
      %3843 = vrot.lane.b32.xlu0 %v3250, 64
      %v3844 = vpop.permute.xlu0 %3843
      %3845 = vrot.lane.b32.xlu0 %v3251, 64
      %v3846 = vpop.permute.xlu0 %3845
      %3847 = vrot.lane.b32.xlu0 %v3252, 64
      %v3848 = vpop.permute.xlu0 %3847
      %3849 = vrot.lane.b32.xlu0 %v3253, 64
      %v3850 = vpop.permute.xlu0 %3849
      %3851 = vrot.lane.b32.xlu0 %v3254, 64
      %v3852 = vpop.permute.xlu0 %3851
      %3853 = vrot.lane.b32.xlu0 %v3255, 64
      %v3854 = vpop.permute.xlu0 %3853
      %3855 = vrot.lane.b32.xlu0 %v3256, 64
      %v3856 = vpop.permute.xlu0 %3855
      %3857 = vrot.lane.b32.xlu0 %v3257, 64
      %v3858 = vpop.permute.xlu0 %3857
      %3859 = vrot.lane.b32.xlu0 %v3258, 64
      %v3860 = vpop.permute.xlu0 %3859
      %3861 = vrot.lane.b32.xlu0 %v3259, 64
      %v3862 = vpop.permute.xlu0 %3861
      %3863 = vrot.lane.b32.xlu0 %v3260, 64
      %v3864 = vpop.permute.xlu0 %3863
      %3865 = vrot.lane.b32.xlu0 %v3261, 64
      %v3866 = vpop.permute.xlu0 %3865
      %3867 = vrot.lane.b32.xlu0 %v3262, 64
      %v3868 = vpop.permute.xlu0 %3867
      %3869 = vrot.lane.b32.xlu0 %v3263, 64
      %v3870 = vpop.permute.xlu0 %3869
      %3871 = vrot.lane.b32.xlu0 %v3264, 64
      %v3872 = vpop.permute.xlu0 %3871
      %3937 = vrot.lane.b32.xlu0 %v3265, 80
      %v3938 = vpop.permute.xlu0 %3937
      %3939 = vrot.lane.b32.xlu0 %v3266, 80
      %v3940 = vpop.permute.xlu0 %3939
      %3941 = vrot.lane.b32.xlu0 %v3267, 80
      %v3942 = vpop.permute.xlu0 %3941
      %3943 = vrot.lane.b32.xlu0 %v3268, 80
      %v3944 = vpop.permute.xlu0 %3943
      %3945 = vrot.lane.b32.xlu0 %v3269, 80
      %v3946 = vpop.permute.xlu0 %3945
      %3947 = vrot.lane.b32.xlu0 %v3270, 80
      %v3948 = vpop.permute.xlu0 %3947
      %3949 = vrot.lane.b32.xlu0 %v3271, 80
      %v3950 = vpop.permute.xlu0 %3949
      %3951 = vrot.lane.b32.xlu0 %v3272, 80
      %v3952 = vpop.permute.xlu0 %3951
      %3953 = vrot.lane.b32.xlu0 %v3273, 80
      %v3954 = vpop.permute.xlu0 %3953
      %3955 = vrot.lane.b32.xlu0 %v3274, 80
      %v3956 = vpop.permute.xlu0 %3955
      %3957 = vrot.lane.b32.xlu0 %v3275, 80
      %v3958 = vpop.permute.xlu0 %3957
      %3959 = vrot.lane.b32.xlu0 %v3276, 80
      %v3960 = vpop.permute.xlu0 %3959
      %3961 = vrot.lane.b32.xlu0 %v3277, 80
      %v3962 = vpop.permute.xlu0 %3961
      %3963 = vrot.lane.b32.xlu0 %v3278, 80
      %v3964 = vpop.permute.xlu0 %3963
      %3965 = vrot.lane.b32.xlu0 %v3279, 80
      %v3966 = vpop.permute.xlu0 %3965
      %3967 = vrot.lane.b32.xlu0 %v3280, 80
      %v3968 = vpop.permute.xlu0 %3967
      %3969 = vrot.lane.b32.xlu0 %v3281, 80
      %v3970 = vpop.permute.xlu0 %3969
      %3971 = vrot.lane.b32.xlu0 %v3282, 80
      %v3972 = vpop.permute.xlu0 %3971
      %3973 = vrot.lane.b32.xlu0 %v3283, 80
      %v3974 = vpop.permute.xlu0 %3973
      %3975 = vrot.lane.b32.xlu0 %v3284, 80
      %v3976 = vpop.permute.xlu0 %3975
      %3977 = vrot.lane.b32.xlu0 %v3285, 80
      %v3978 = vpop.permute.xlu0 %3977
      %3979 = vrot.lane.b32.xlu0 %v3286, 80
      %v3980 = vpop.permute.xlu0 %3979
      %3981 = vrot.lane.b32.xlu0 %v3287, 80
      %v3982 = vpop.permute.xlu0 %3981
      %3983 = vrot.lane.b32.xlu0 %v3288, 80
      %v3984 = vpop.permute.xlu0 %3983
      %3985 = vrot.lane.b32.xlu0 %v3289, 80
      %v3986 = vpop.permute.xlu0 %3985
      %3987 = vrot.lane.b32.xlu0 %v3290, 80
      %v3988 = vpop.permute.xlu0 %3987
      %3989 = vrot.lane.b32.xlu0 %v3291, 80
      %v3990 = vpop.permute.xlu0 %3989
      %3991 = vrot.lane.b32.xlu0 %v3292, 80
      %v3992 = vpop.permute.xlu0 %3991
      %3993 = vrot.lane.b32.xlu0 %v3293, 80
      %v3994 = vpop.permute.xlu0 %3993
      %3995 = vrot.lane.b32.xlu0 %v3294, 80
      %v3996 = vpop.permute.xlu0 %3995
      %3997 = vrot.lane.b32.xlu0 %v3295, 80
      %v3998 = vpop.permute.xlu0 %3997
      %3999 = vrot.lane.b32.xlu0 %v3296, 80
      %v4000 = vpop.permute.xlu0 %3999
      %4065 = vrot.lane.b32.xlu0 %v3297, 96
      %v4066 = vpop.permute.xlu0 %4065
      %4067 = vrot.lane.b32.xlu0 %v3298, 96
      %v4068 = vpop.permute.xlu0 %4067
      %4069 = vrot.lane.b32.xlu0 %v3299, 96
      %v4070 = vpop.permute.xlu0 %4069
      %4071 = vrot.lane.b32.xlu0 %v3300, 96
      %v4072 = vpop.permute.xlu0 %4071
      %4073 = vrot.lane.b32.xlu0 %v3301, 96
      %v4074 = vpop.permute.xlu0 %4073
      %4075 = vrot.lane.b32.xlu0 %v3302, 96
      %v4076 = vpop.permute.xlu0 %4075
      %4077 = vrot.lane.b32.xlu0 %v3303, 96
      %v4078 = vpop.permute.xlu0 %4077
      %4079 = vrot.lane.b32.xlu0 %v3304, 96
      %v4080 = vpop.permute.xlu0 %4079
      %4081 = vrot.lane.b32.xlu0 %v3305, 96
      %v4082 = vpop.permute.xlu0 %4081
      %4083 = vrot.lane.b32.xlu0 %v3306, 96
      %v4084 = vpop.permute.xlu0 %4083
      %4085 = vrot.lane.b32.xlu0 %v3307, 96
      %v4086 = vpop.permute.xlu0 %4085
      %4087 = vrot.lane.b32.xlu0 %v3308, 96
      %v4088 = vpop.permute.xlu0 %4087
      %4089 = vrot.lane.b32.xlu0 %v3309, 96
      %v4090 = vpop.permute.xlu0 %4089
      %4091 = vrot.lane.b32.xlu0 %v3310, 96
      %v4092 = vpop.permute.xlu0 %4091
      %4093 = vrot.lane.b32.xlu0 %v3311, 96
      %v4094 = vpop.permute.xlu0 %4093
      %4095 = vrot.lane.b32.xlu0 %v3312, 96
      %v4096 = vpop.permute.xlu0 %4095
      %4097 = vrot.lane.b32.xlu0 %v3313, 96
      %v4098 = vpop.permute.xlu0 %4097
      %4099 = vrot.lane.b32.xlu0 %v3314, 96
      %v4100 = vpop.permute.xlu0 %4099
      %4101 = vrot.lane.b32.xlu0 %v3315, 96
      %v4102 = vpop.permute.xlu0 %4101
      %4103 = vrot.lane.b32.xlu0 %v3316, 96
      %v4104 = vpop.permute.xlu0 %4103
      %4105 = vrot.lane.b32.xlu0 %v3317, 96
      %v4106 = vpop.permute.xlu0 %4105
      %4107 = vrot.lane.b32.xlu0 %v3318, 96
      %v4108 = vpop.permute.xlu0 %4107
      %4109 = vrot.lane.b32.xlu0 %v3319, 96
      %v4110 = vpop.permute.xlu0 %4109
      %4111 = vrot.lane.b32.xlu0 %v3320, 96
      %v4112 = vpop.permute.xlu0 %4111
      %4113 = vrot.lane.b32.xlu0 %v3321, 96
      %v4114 = vpop.permute.xlu0 %4113
      %4115 = vrot.lane.b32.xlu0 %v3322, 96
      %v4116 = vpop.permute.xlu0 %4115
      %4117 = vrot.lane.b32.xlu0 %v3323, 96
      %v4118 = vpop.permute.xlu0 %4117
      %4119 = vrot.lane.b32.xlu0 %v3324, 96
      %v4120 = vpop.permute.xlu0 %4119
      %4121 = vrot.lane.b32.xlu0 %v3325, 96
      %v4122 = vpop.permute.xlu0 %4121
      %4123 = vrot.lane.b32.xlu0 %v3326, 96
      %v4124 = vpop.permute.xlu0 %4123
      %4125 = vrot.lane.b32.xlu0 %v3327, 96
      %v4126 = vpop.permute.xlu0 %4125
      %4127 = vrot.lane.b32.xlu0 %v3328, 96
      %v4128 = vpop.permute.xlu0 %4127
      %4193 = vrot.lane.b32.xlu0 %v3329, 112
      %v4194 = vpop.permute.xlu0 %4193
      %4195 = vrot.lane.b32.xlu0 %v3330, 112
      %v4196 = vpop.permute.xlu0 %4195
      %4197 = vrot.lane.b32.xlu0 %v3331, 112
      %v4198 = vpop.permute.xlu0 %4197
      %4199 = vrot.lane.b32.xlu0 %v3332, 112
      %v4200 = vpop.permute.xlu0 %4199
      %4201 = vrot.lane.b32.xlu0 %v3333, 112
      %v4202 = vpop.permute.xlu0 %4201
      %4203 = vrot.lane.b32.xlu0 %v3334, 112
      %v4204 = vpop.permute.xlu0 %4203
      %4205 = vrot.lane.b32.xlu0 %v3335, 112
      %v4206 = vpop.permute.xlu0 %4205
      %4207 = vrot.lane.b32.xlu0 %v3336, 112
      %v4208 = vpop.permute.xlu0 %4207
      %4209 = vrot.lane.b32.xlu0 %v3337, 112
      %v4210 = vpop.permute.xlu0 %4209
      %4211 = vrot.lane.b32.xlu0 %v3338, 112
      %v4212 = vpop.permute.xlu0 %4211
      %4213 = vrot.lane.b32.xlu0 %v3339, 112
      %v4214 = vpop.permute.xlu0 %4213
      %4215 = vrot.lane.b32.xlu0 %v3340, 112
      %v4216 = vpop.permute.xlu0 %4215
      %4217 = vrot.lane.b32.xlu0 %v3341, 112
      %v4218 = vpop.permute.xlu0 %4217
      %4219 = vrot.lane.b32.xlu0 %v3342, 112
      %v4220 = vpop.permute.xlu0 %4219
      %4221 = vrot.lane.b32.xlu0 %v3343, 112
      %v4222 = vpop.permute.xlu0 %4221
      %4223 = vrot.lane.b32.xlu0 %v3344, 112
      %v4224 = vpop.permute.xlu0 %4223
      %4225 = vrot.lane.b32.xlu0 %v3345, 112
      %v4226 = vpop.permute.xlu0 %4225
      %4227 = vrot.lane.b32.xlu0 %v3346, 112
      %v4228 = vpop.permute.xlu0 %4227
      %4229 = vrot.lane.b32.xlu0 %v3347, 112
      %v4230 = vpop.permute.xlu0 %4229
      %4231 = vrot.lane.b32.xlu0 %v3348, 112
      %v4232 = vpop.permute.xlu0 %4231
      %4233 = vrot.lane.b32.xlu0 %v3349, 112
      %v4234 = vpop.permute.xlu0 %4233
      %4235 = vrot.lane.b32.xlu0 %v3350, 112
      %v4236 = vpop.permute.xlu0 %4235
      %4237 = vrot.lane.b32.xlu0 %v3351, 112
      %v4238 = vpop.permute.xlu0 %4237
      %4239 = vrot.lane.b32.xlu0 %v3352, 112
      %v4240 = vpop.permute.xlu0 %4239
      %4241 = vrot.lane.b32.xlu0 %v3353, 112
      %v4242 = vpop.permute.xlu0 %4241
      %4243 = vrot.lane.b32.xlu0 %v3354, 112
      %v4244 = vpop.permute.xlu0 %4243
      %4245 = vrot.lane.b32.xlu0 %v3355, 112
      %v4246 = vpop.permute.xlu0 %4245
      %4247 = vrot.lane.b32.xlu0 %v3356, 112
      %v4248 = vpop.permute.xlu0 %4247
      %4249 = vrot.lane.b32.xlu0 %v3357, 112
      %v4250 = vpop.permute.xlu0 %4249
      %4251 = vrot.lane.b32.xlu0 %v3358, 112
      %v4252 = vpop.permute.xlu0 %4251
      %4253 = vrot.lane.b32.xlu0 %v3359, 112
      %v4254 = vpop.permute.xlu0 %4253
      %4255 = vrot.lane.b32.xlu0 %v3360, 112
      %v4256 = vpop.permute.xlu0 %4255
      %v4289 = vsel %vm658, %v3105, %v3426
      %v4290 = vsel %vm658, %v3106, %v3428
      %v4291 = vsel %vm658, %v3107, %v3430
      %v4292 = vsel %vm658, %v3108, %v3432
      %v4293 = vsel %vm658, %v3109, %v3434
      %v4294 = vsel %vm658, %v3110, %v3436
      %v4295 = vsel %vm658, %v3111, %v3438
      %v4296 = vsel %vm658, %v3112, %v3440
      %v4297 = vsel %vm658, %v3113, %v3442
      %v4298 = vsel %vm658, %v3114, %v3444
      %v4299 = vsel %vm658, %v3115, %v3446
      %v4300 = vsel %vm658, %v3116, %v3448
      %v4301 = vsel %vm658, %v3117, %v3450
      %v4302 = vsel %vm658, %v3118, %v3452
      %v4303 = vsel %vm658, %v3119, %v3454
      %v4304 = vsel %vm658, %v3120, %v3456
      %v4305 = vsel %vm658, %v3121, %v3458
      %v4306 = vsel %vm658, %v3122, %v3460
      %v4307 = vsel %vm658, %v3123, %v3462
      %v4308 = vsel %vm658, %v3124, %v3464
      %v4309 = vsel %vm658, %v3125, %v3466
      %v4310 = vsel %vm658, %v3126, %v3468
      %v4311 = vsel %vm658, %v3127, %v3470
      %v4312 = vsel %vm658, %v3128, %v3472
      %v4313 = vsel %vm658, %v3129, %v3474
      %v4314 = vsel %vm658, %v3130, %v3476
      %v4315 = vsel %vm658, %v3131, %v3478
      %v4316 = vsel %vm658, %v3132, %v3480
      %v4317 = vsel %vm658, %v3133, %v3482
      %v4318 = vsel %vm658, %v3134, %v3484
      %v4319 = vsel %vm658, %v3135, %v3486
      %v4320 = vsel %vm658, %v3136, %v3488
      %v4321 = vsel %vm2338, %v4289, %v3554
      %v4322 = vsel %vm2338, %v4290, %v3556
      %v4323 = vsel %vm2338, %v4291, %v3558
      %v4324 = vsel %vm2338, %v4292, %v3560
      %v4325 = vsel %vm2338, %v4293, %v3562
      %v4326 = vsel %vm2338, %v4294, %v3564
      %v4327 = vsel %vm2338, %v4295, %v3566
      %v4328 = vsel %vm2338, %v4296, %v3568
      %v4329 = vsel %vm2338, %v4297, %v3570
      %v4330 = vsel %vm2338, %v4298, %v3572
      %v4331 = vsel %vm2338, %v4299, %v3574
      %v4332 = vsel %vm2338, %v4300, %v3576
      %v4333 = vsel %vm2338, %v4301, %v3578
      %v4334 = vsel %vm2338, %v4302, %v3580
      %v4335 = vsel %vm2338, %v4303, %v3582
      %v4336 = vsel %vm2338, %v4304, %v3584
      %v4337 = vsel %vm2338, %v4305, %v3586
      %v4338 = vsel %vm2338, %v4306, %v3588
      %v4339 = vsel %vm2338, %v4307, %v3590
      %v4340 = vsel %vm2338, %v4308, %v3592
      %v4341 = vsel %vm2338, %v4309, %v3594
      %v4342 = vsel %vm2338, %v4310, %v3596
      %v4343 = vsel %vm2338, %v4311, %v3598
      %v4344 = vsel %vm2338, %v4312, %v3600
      %v4345 = vsel %vm2338, %v4313, %v3602
      %v4346 = vsel %vm2338, %v4314, %v3604
      %v4347 = vsel %vm2338, %v4315, %v3606
      %v4348 = vsel %vm2338, %v4316, %v3608
      %v4349 = vsel %vm2338, %v4317, %v3610
      %v4350 = vsel %vm2338, %v4318, %v3612
      %v4351 = vsel %vm2338, %v4319, %v3614
      %v4352 = vsel %vm2338, %v4320, %v3616
      %vm4353 = vcmask 392192
      %v4354 = vsel %vm4353, %v4321, %v3682
      %v4355 = vsel %vm4353, %v4322, %v3684
      %v4356 = vsel %vm4353, %v4323, %v3686
      %v4357 = vsel %vm4353, %v4324, %v3688
      %v4358 = vsel %vm4353, %v4325, %v3690
      %v4359 = vsel %vm4353, %v4326, %v3692
      %v4360 = vsel %vm4353, %v4327, %v3694
      %v4361 = vsel %vm4353, %v4328, %v3696
      %v4362 = vsel %vm4353, %v4329, %v3698
      %v4363 = vsel %vm4353, %v4330, %v3700
      %v4364 = vsel %vm4353, %v4331, %v3702
      %v4365 = vsel %vm4353, %v4332, %v3704
      %v4366 = vsel %vm4353, %v4333, %v3706
      %v4367 = vsel %vm4353, %v4334, %v3708
      %v4368 = vsel %vm4353, %v4335, %v3710
      %v4369 = vsel %vm4353, %v4336, %v3712
      %v4370 = vsel %vm4353, %v4337, %v3714
      %v4371 = vsel %vm4353, %v4338, %v3716
      %v4372 = vsel %vm4353, %v4339, %v3718
      %v4373 = vsel %vm4353, %v4340, %v3720
      %v4374 = vsel %vm4353, %v4341, %v3722
      %v4375 = vsel %vm4353, %v4342, %v3724
      %v4376 = vsel %vm4353, %v4343, %v3726
      %v4377 = vsel %vm4353, %v4344, %v3728
      %v4378 = vsel %vm4353, %v4345, %v3730
      %v4379 = vsel %vm4353, %v4346, %v3732
      %v4380 = vsel %vm4353, %v4347, %v3734
      %v4381 = vsel %vm4353, %v4348, %v3736
      %v4382 = vsel %vm4353, %v4349, %v3738
      %v4383 = vsel %vm4353, %v4350, %v3740
      %v4384 = vsel %vm4353, %v4351, %v3742
      %v4385 = vsel %vm4353, %v4352, %v3744
      %vm4386 = vcmask 523264
      %v4387 = vsel %vm4386, %v4354, %v3810
      %v4388 = vsel %vm4386, %v4355, %v3812
      %v4389 = vsel %vm4386, %v4356, %v3814
      %v4390 = vsel %vm4386, %v4357, %v3816
      %v4391 = vsel %vm4386, %v4358, %v3818
      %v4392 = vsel %vm4386, %v4359, %v3820
      %v4393 = vsel %vm4386, %v4360, %v3822
      %v4394 = vsel %vm4386, %v4361, %v3824
      %v4395 = vsel %vm4386, %v4362, %v3826
      %v4396 = vsel %vm4386, %v4363, %v3828
      %v4397 = vsel %vm4386, %v4364, %v3830
      %v4398 = vsel %vm4386, %v4365, %v3832
      %v4399 = vsel %vm4386, %v4366, %v3834
      %v4400 = vsel %vm4386, %v4367, %v3836
      %v4401 = vsel %vm4386, %v4368, %v3838
      %v4402 = vsel %vm4386, %v4369, %v3840
      %v4403 = vsel %vm4386, %v4370, %v3842
      %v4404 = vsel %vm4386, %v4371, %v3844
      %v4405 = vsel %vm4386, %v4372, %v3846
      %v4406 = vsel %vm4386, %v4373, %v3848
      %v4407 = vsel %vm4386, %v4374, %v3850
      %v4408 = vsel %vm4386, %v4375, %v3852
      %v4409 = vsel %vm4386, %v4376, %v3854
      %v4410 = vsel %vm4386, %v4377, %v3856
      %v4411 = vsel %vm4386, %v4378, %v3858
      %v4412 = vsel %vm4386, %v4379, %v3860
      %v4413 = vsel %vm4386, %v4380, %v3862
      %v4414 = vsel %vm4386, %v4381, %v3864
      %v4415 = vsel %vm4386, %v4382, %v3866
      %v4416 = vsel %vm4386, %v4383, %v3868
      %v4417 = vsel %vm4386, %v4384, %v3870
      %v4418 = vsel %vm4386, %v4385, %v3872
      %vm4419 = vcmask 654336
      %v4420 = vsel %vm4419, %v4387, %v3938
      %v4421 = vsel %vm4419, %v4388, %v3940
      %v4422 = vsel %vm4419, %v4389, %v3942
      %v4423 = vsel %vm4419, %v4390, %v3944
      %v4424 = vsel %vm4419, %v4391, %v3946
      %v4425 = vsel %vm4419, %v4392, %v3948
      %v4426 = vsel %vm4419, %v4393, %v3950
      %v4427 = vsel %vm4419, %v4394, %v3952
      %v4428 = vsel %vm4419, %v4395, %v3954
      %v4429 = vsel %vm4419, %v4396, %v3956
      %v4430 = vsel %vm4419, %v4397, %v3958
      %v4431 = vsel %vm4419, %v4398, %v3960
      %v4432 = vsel %vm4419, %v4399, %v3962
      %v4433 = vsel %vm4419, %v4400, %v3964
      %v4434 = vsel %vm4419, %v4401, %v3966
      %v4435 = vsel %vm4419, %v4402, %v3968
      %v4436 = vsel %vm4419, %v4403, %v3970
      %v4437 = vsel %vm4419, %v4404, %v3972
      %v4438 = vsel %vm4419, %v4405, %v3974
      %v4439 = vsel %vm4419, %v4406, %v3976
      %v4440 = vsel %vm4419, %v4407, %v3978
      %v4441 = vsel %vm4419, %v4408, %v3980
      %v4442 = vsel %vm4419, %v4409, %v3982
      %v4443 = vsel %vm4419, %v4410, %v3984
      %v4444 = vsel %vm4419, %v4411, %v3986
      %v4445 = vsel %vm4419, %v4412, %v3988
      %v4446 = vsel %vm4419, %v4413, %v3990
      %v4447 = vsel %vm4419, %v4414, %v3992
      %v4448 = vsel %vm4419, %v4415, %v3994
      %v4449 = vsel %vm4419, %v4416, %v3996
      %v4450 = vsel %vm4419, %v4417, %v3998
      %v4451 = vsel %vm4419, %v4418, %v4000
      %vm4452 = vcmask 785408
      %v4453 = vsel %vm4452, %v4420, %v4066
      %v4454 = vsel %vm4452, %v4421, %v4068
      %v4455 = vsel %vm4452, %v4422, %v4070
      %v4456 = vsel %vm4452, %v4423, %v4072
      %v4457 = vsel %vm4452, %v4424, %v4074
      %v4458 = vsel %vm4452, %v4425, %v4076
      %v4459 = vsel %vm4452, %v4426, %v4078
      %v4460 = vsel %vm4452, %v4427, %v4080
      %v4461 = vsel %vm4452, %v4428, %v4082
      %v4462 = vsel %vm4452, %v4429, %v4084
      %v4463 = vsel %vm4452, %v4430, %v4086
      %v4464 = vsel %vm4452, %v4431, %v4088
      %v4465 = vsel %vm4452, %v4432, %v4090
      %v4466 = vsel %vm4452, %v4433, %v4092
      %v4467 = vsel %vm4452, %v4434, %v4094
      %v4468 = vsel %vm4452, %v4435, %v4096
      %v4469 = vsel %vm4452, %v4436, %v4098
      %v4470 = vsel %vm4452, %v4437, %v4100
      %v4471 = vsel %vm4452, %v4438, %v4102
      %v4472 = vsel %vm4452, %v4439, %v4104
      %v4473 = vsel %vm4452, %v4440, %v4106
      %v4474 = vsel %vm4452, %v4441, %v4108
      %v4475 = vsel %vm4452, %v4442, %v4110
      %v4476 = vsel %vm4452, %v4443, %v4112
      %v4477 = vsel %vm4452, %v4444, %v4114
      %v4478 = vsel %vm4452, %v4445, %v4116
      %v4479 = vsel %vm4452, %v4446, %v4118
      %v4480 = vsel %vm4452, %v4447, %v4120
      %v4481 = vsel %vm4452, %v4448, %v4122
      %v4482 = vsel %vm4452, %v4449, %v4124
      %v4483 = vsel %vm4452, %v4450, %v4126
      %v4484 = vsel %vm4452, %v4451, %v4128
      %vm4485 = vcmask 916480
      %v4486 = vsel %vm4485, %v4453, %v4194
      %v4487 = vsel %vm4485, %v4454, %v4196
      %v4488 = vsel %vm4485, %v4455, %v4198
      %v4489 = vsel %vm4485, %v4456, %v4200
      %v4490 = vsel %vm4485, %v4457, %v4202
      %v4491 = vsel %vm4485, %v4458, %v4204
      %v4492 = vsel %vm4485, %v4459, %v4206
      %v4493 = vsel %vm4485, %v4460, %v4208
      %v4494 = vsel %vm4485, %v4461, %v4210
      %v4495 = vsel %vm4485, %v4462, %v4212
      %v4496 = vsel %vm4485, %v4463, %v4214
      %v4497 = vsel %vm4485, %v4464, %v4216
      %v4498 = vsel %vm4485, %v4465, %v4218
      %v4499 = vsel %vm4485, %v4466, %v4220
      %v4500 = vsel %vm4485, %v4467, %v4222
      %v4501 = vsel %vm4485, %v4468, %v4224
      %v4502 = vsel %vm4485, %v4469, %v4226
      %v4503 = vsel %vm4485, %v4470, %v4228
      %v4504 = vsel %vm4485, %v4471, %v4230
      %v4505 = vsel %vm4485, %v4472, %v4232
      %v4506 = vsel %vm4485, %v4473, %v4234
      %v4507 = vsel %vm4485, %v4474, %v4236
      %v4508 = vsel %vm4485, %v4475, %v4238
      %v4509 = vsel %vm4485, %v4476, %v4240
      %v4510 = vsel %vm4485, %v4477, %v4242
      %v4511 = vsel %vm4485, %v4478, %v4244
      %v4512 = vsel %vm4485, %v4479, %v4246
      %v4513 = vsel %vm4485, %v4480, %v4248
      %v4514 = vsel %vm4485, %v4481, %v4250
      %v4515 = vsel %vm4485, %v4482, %v4252
      %v4516 = vsel %vm4485, %v4483, %v4254
      %v4517 = vsel %vm4485, %v4484, %v4256
      %v4518 = vpack.c.bf16 %v4487, %v4486
      %v4519 = vpack.c.bf16 %v3362, %v3361
      %v4520 = vpack.c.bf16 %v4489, %v4488
      %v4521 = vpack.c.bf16 %v3364, %v3363
      %v4522 = vpack.c.bf16 %v4491, %v4490
      %v4523 = vpack.c.bf16 %v3366, %v3365
      %v4524 = vpack.c.bf16 %v4493, %v4492
      %v4525 = vpack.c.bf16 %v3368, %v3367
      %v4526 = vpack.c.bf16 %v4495, %v4494
      %v4527 = vpack.c.bf16 %v3370, %v3369
      %v4528 = vpack.c.bf16 %v4497, %v4496
      %v4529 = vpack.c.bf16 %v3372, %v3371
      %v4530 = vpack.c.bf16 %v4499, %v4498
      %v4531 = vpack.c.bf16 %v3374, %v3373
      %v4532 = vpack.c.bf16 %v4501, %v4500
      %v4533 = vpack.c.bf16 %v3376, %v3375
      %v4534 = vpack.c.bf16 %v4503, %v4502
      %v4535 = vpack.c.bf16 %v3378, %v3377
      %v4536 = vpack.c.bf16 %v4505, %v4504
      %v4537 = vpack.c.bf16 %v3380, %v3379
      %v4538 = vpack.c.bf16 %v4507, %v4506
      %v4539 = vpack.c.bf16 %v3382, %v3381
      %v4540 = vpack.c.bf16 %v4509, %v4508
      %v4541 = vpack.c.bf16 %v3384, %v3383
      %v4542 = vpack.c.bf16 %v4511, %v4510
      %v4543 = vpack.c.bf16 %v3386, %v3385
      %v4544 = vpack.c.bf16 %v4513, %v4512
      %v4545 = vpack.c.bf16 %v3388, %v3387
      %v4546 = vpack.c.bf16 %v4515, %v4514
      %v4547 = vpack.c.bf16 %v3390, %v3389
      %v4548 = vpack.c.bf16 %v4517, %v4516
      %v4549 = vpack.c.bf16 %v3392, %v3391
      %v4550 = vld [vmem:[%s5] sm:$0xf]
      %v4551 = vld [vmem:[%s5 + $0x4] sm:$0xf]
      %v4552 = vld [vmem:[%s5 + $0x8] sm:$0xf]
      %v4553 = vld [vmem:[%s5 + $0xc] sm:$0xf]
      %v4554 = vld [vmem:[%s5 + $0x10] sm:$0xf]
      %v4555 = vld [vmem:[%s5 + $0x14] sm:$0xf]
      %v4556 = vld [vmem:[%s5 + $0x18] sm:$0xf]
      %v4557 = vld [vmem:[%s5 + $0x1c] sm:$0xf]
      %v4558 = vld [vmem:[%s5 + $0x20] sm:$0xf]
      %v4559 = vld [vmem:[%s5 + $0x24] sm:$0xf]
      %v4560 = vld [vmem:[%s5 + $0x28] sm:$0xf]
      %v4561 = vld [vmem:[%s5 + $0x2c] sm:$0xf]
      %v4562 = vld [vmem:[%s5 + $0x30] sm:$0xf]
      %v4563 = vld [vmem:[%s5 + $0x34] sm:$0xf]
      %v4564 = vld [vmem:[%s5 + $0x38] sm:$0xf]
      %v4565 = vld [vmem:[%s5 + $0x3c] sm:$0xf]
      %v4566 = vld [vmem:[%s5 + $0x40] sm:$0xf]
      %v4567 = vld [vmem:[%s5 + $0x44] sm:$0xf]
      %v4568 = vld [vmem:[%s6] sm:$0x1]
      %v4570 = vlaneseq
      %v4571 = vshrl.u32 %v4570, 7
      %v4572 = vsub.s32 0, %v4571
      %v4573 = vrot.slane %v4568, %v4572
      %v4593 = vunpack.c.l.b16 %v4550
      %v4594 = vunpack.c.l.b16 %v4551
      %v4595 = vunpack.c.l.b16 %v4552
      %v4596 = vunpack.c.l.b16 %v4553
      %v4597 = vunpack.c.l.b16 %v4554
      %v4598 = vunpack.c.l.b16 %v4555
      %v4599 = vunpack.c.l.b16 %v4556
      %v4600 = vunpack.c.l.b16 %v4557
      %v4601 = vunpack.c.l.b16 %v4558
      %v4602 = vunpack.c.l.b16 %v4559
      %v4603 = vunpack.c.l.b16 %v4560
      %v4604 = vunpack.c.l.b16 %v4561
      %v4605 = vunpack.c.l.b16 %v4562
      %v4606 = vunpack.c.l.b16 %v4563
      %v4607 = vunpack.c.l.b16 %v4564
      %v4608 = vunpack.c.l.b16 %v4565
      %v4609 = vunpack.c.l.b16 %v4566
      %v4610 = vunpack.c.l.b16 %v4567
      %v4611 = vpack.c.b16 %v4594, %v4593
      %v4612 = vpack.c.b16 %v4596, %v4595
      %v4613 = vpack.c.b16 %v4598, %v4597
      %v4614 = vpack.c.b16 %v4600, %v4599
      %v4615 = vpack.c.b16 %v4602, %v4601
      %v4616 = vpack.c.b16 %v4604, %v4603
      %v4617 = vpack.c.b16 %v4606, %v4605
      %v4618 = vpack.c.b16 %v4608, %v4607
      %v4619 = vpack.c.b16 %v4610, %v4609
      %v4630 = vsel %vm658, %v4519, 0
      %v4633 = vsel %vm658, %v4521, 0
      %v4636 = vsel %vm658, %v4523, 0
      %v4639 = vsel %vm658, %v4525, 0
      %v4642 = vsel %vm658, %v4527, 0
      %v4645 = vsel %vm658, %v4529, 0
      %v4648 = vsel %vm658, %v4531, 0
      %v4651 = vsel %vm658, %v4533, 0
      %v4654 = vsel %vm658, %v4535, 0
      %v4657 = vsel %vm658, %v4537, 0
      %v4660 = vsel %vm658, %v4539, 0
      %v4663 = vsel %vm658, %v4541, 0
      %v4666 = vsel %vm658, %v4543, 0
      %v4669 = vsel %vm658, %v4545, 0
      %v4672 = vsel %vm658, %v4547, 0
      %v4675 = vsel %vm658, %v4549, 0
      %4677 = vmatprep.subr.bf16.mxu0 0
      %4678 = vmatpush1.bf16.msra.mxu0 %v4618
      %4679 = vmatprep.subr.bf16.mxu0 0
      %4680 = vmatpush1.bf16.msra.mxu0 %v4617
      %4681 = vmatprep.subr.bf16.mxu0 0
      %4682 = vmatpush1.bf16.msra.mxu0 %v4616
      %4683 = vmatprep.subr.bf16.mxu0 0
      %4684 = vmatpush1.bf16.msra.mxu0 %v4615
      %4685 = vmatprep.subr.bf16.mxu0 0
      %4686 = vmatpush1.bf16.msra.mxu0 %v4614
      %4687 = vmatprep.subr.bf16.mxu0 0
      %4688 = vmatpush1.bf16.msra.mxu0 %v4613
      %4689 = vmatprep.subr.bf16.mxu0 0
      %4690 = vmatpush1.bf16.msra.mxu0 %v4612
      %4691 = vmatprep.subr.bf16.mxu0 0
      %4692 = vmatpush1.bf16.msra.mxu0 %v4611
      %4693 = vmatprep.subr.bf16.mxu0 0
      %4694 = vmatpush2.bf16.msra.mxu0 0
      %4695 = vmatprep.subr.bf16.mxu0 0
      %4696 = vmatpush2.bf16.msra.mxu0 0
      %4697 = vmatprep.subr.bf16.mxu0 0
      %4698 = vmatpush2.bf16.msra.mxu0 0
      %4699 = vmatprep.subr.bf16.mxu0 0
      %4700 = vmatpush2.bf16.msra.mxu0 0
      %4701 = vmatprep.subr.bf16.mxu0 0
      %4702 = vmatpush2.bf16.msra.mxu0 0
      %4703 = vmatprep.subr.bf16.mxu0 0
      %4704 = vmatpush2.bf16.msra.mxu0 0
      %4705 = vmatprep.subr.bf16.mxu0 0
      %4706 = vmatpush2.bf16.msra.mxu0 0
      %4707 = vmatprep.subr.bf16.mxu0 0
      %4708 = vmatpush2.bf16.msra.mxu0 %v4619
      %4709 = vmatprep.mubr.bf16.mxu0 %v4630
      %4710 = vmatmul.mubr.bf16.gmra.mxu0 %v4518
      %v4711 = vpop.f32.mrf.mxu0
      %v4712 = vadd.f32 %v4573, %v4711
      %v4713 = vpop.f32.mrf.mxu0
      %v4714 = vpop.f32.mrf.mxu0
      %v4715 = vadd.f32 %v4573, %v4714
      %v4716 = vpop.f32.mrf.mxu0
      %4717 = vmatprep.mubr.bf16.mxu0 %v4633
      %4718 = vmatmul.mubr.bf16.gmra.mxu0 %v4520
      %v4719 = vpop.f32.mrf.mxu0
      %v4720 = vadd.f32 %v4573, %v4719
      %v4721 = vpop.f32.mrf.mxu0
      %v4722 = vpop.f32.mrf.mxu0
      %v4723 = vadd.f32 %v4573, %v4722
      %v4724 = vpop.f32.mrf.mxu0
      %4725 = vmatprep.mubr.bf16.mxu0 %v4636
      %4726 = vmatmul.mubr.bf16.gmra.mxu0 %v4522
      %v4727 = vpop.f32.mrf.mxu0
      %v4728 = vadd.f32 %v4573, %v4727
      %v4729 = vpop.f32.mrf.mxu0
      %v4730 = vpop.f32.mrf.mxu0
      %v4731 = vadd.f32 %v4573, %v4730
      %v4732 = vpop.f32.mrf.mxu0
      %4733 = vmatprep.mubr.bf16.mxu0 %v4639
      %4734 = vmatmul.mubr.bf16.gmra.mxu0 %v4524
      %v4735 = vpop.f32.mrf.mxu0
      %v4736 = vadd.f32 %v4573, %v4735
      %v4737 = vpop.f32.mrf.mxu0
      %v4738 = vpop.f32.mrf.mxu0
      %v4739 = vadd.f32 %v4573, %v4738
      %v4740 = vpop.f32.mrf.mxu0
      %4741 = vmatprep.mubr.bf16.mxu0 %v4642
      %4742 = vmatmul.mubr.bf16.gmra.mxu0 %v4526
      %v4743 = vpop.f32.mrf.mxu0
      %v4744 = vadd.f32 %v4573, %v4743
      %v4745 = vpop.f32.mrf.mxu0
      %v4746 = vpop.f32.mrf.mxu0
      %v4747 = vadd.f32 %v4573, %v4746
      %v4748 = vpop.f32.mrf.mxu0
      %4749 = vmatprep.mubr.bf16.mxu0 %v4645
      %4750 = vmatmul.mubr.bf16.gmra.mxu0 %v4528
      %v4751 = vpop.f32.mrf.mxu0
      %v4752 = vadd.f32 %v4573, %v4751
      %v4753 = vpop.f32.mrf.mxu0
      %v4754 = vpop.f32.mrf.mxu0
      %v4755 = vadd.f32 %v4573, %v4754
      %v4756 = vpop.f32.mrf.mxu0
      %4757 = vmatprep.mubr.bf16.mxu0 %v4648
      %4758 = vmatmul.mubr.bf16.gmra.mxu0 %v4530
      %v4759 = vpop.f32.mrf.mxu0
      %v4760 = vadd.f32 %v4573, %v4759
      %v4761 = vpop.f32.mrf.mxu0
      %v4762 = vpop.f32.mrf.mxu0
      %v4763 = vadd.f32 %v4573, %v4762
      %v4764 = vpop.f32.mrf.mxu0
      %4765 = vmatprep.mubr.bf16.mxu0 %v4651
      %4766 = vmatmul.mubr.bf16.gmra.mxu0 %v4532
      %v4767 = vpop.f32.mrf.mxu0
      %v4768 = vadd.f32 %v4573, %v4767
      %v4769 = vpop.f32.mrf.mxu0
      %v4770 = vpop.f32.mrf.mxu0
      %v4771 = vadd.f32 %v4573, %v4770
      %v4772 = vpop.f32.mrf.mxu0
      %4773 = vmatprep.mubr.bf16.mxu0 %v4654
      %4774 = vmatmul.mubr.bf16.gmra.mxu0 %v4534
      %v4775 = vpop.f32.mrf.mxu0
      %v4776 = vadd.f32 %v4573, %v4775
      %v4777 = vpop.f32.mrf.mxu0
      %v4778 = vpop.f32.mrf.mxu0
      %v4779 = vadd.f32 %v4573, %v4778
      %v4780 = vpop.f32.mrf.mxu0
      %4781 = vmatprep.mubr.bf16.mxu0 %v4657
      %4782 = vmatmul.mubr.bf16.gmra.mxu0 %v4536
      %v4783 = vpop.f32.mrf.mxu0
      %v4784 = vadd.f32 %v4573, %v4783
      %v4785 = vpop.f32.mrf.mxu0
      %v4786 = vpop.f32.mrf.mxu0
      %v4787 = vadd.f32 %v4573, %v4786
      %v4788 = vpop.f32.mrf.mxu0
      %4789 = vmatprep.mubr.bf16.mxu0 %v4660
      %4790 = vmatmul.mubr.bf16.gmra.mxu0 %v4538
      %v4791 = vpop.f32.mrf.mxu0
      %v4792 = vadd.f32 %v4573, %v4791
      %v4793 = vpop.f32.mrf.mxu0
      %v4794 = vpop.f32.mrf.mxu0
      %v4795 = vadd.f32 %v4573, %v4794
      %v4796 = vpop.f32.mrf.mxu0
      %4797 = vmatprep.mubr.bf16.mxu0 %v4663
      %4798 = vmatmul.mubr.bf16.gmra.mxu0 %v4540
      %v4799 = vpop.f32.mrf.mxu0
      %v4800 = vadd.f32 %v4573, %v4799
      %v4801 = vpop.f32.mrf.mxu0
      %v4802 = vpop.f32.mrf.mxu0
      %v4803 = vadd.f32 %v4573, %v4802
      %v4804 = vpop.f32.mrf.mxu0
      %4805 = vmatprep.mubr.bf16.mxu0 %v4666
      %4806 = vmatmul.mubr.bf16.gmra.mxu0 %v4542
      %v4807 = vpop.f32.mrf.mxu0
      %v4808 = vadd.f32 %v4573, %v4807
      %v4809 = vpop.f32.mrf.mxu0
      %v4810 = vpop.f32.mrf.mxu0
      %v4811 = vadd.f32 %v4573, %v4810
      %v4812 = vpop.f32.mrf.mxu0
      %4813 = vmatprep.mubr.bf16.mxu0 %v4669
      %4814 = vmatmul.mubr.bf16.gmra.mxu0 %v4544
      %v4815 = vpop.f32.mrf.mxu0
      %v4816 = vadd.f32 %v4573, %v4815
      %v4817 = vpop.f32.mrf.mxu0
      %v4818 = vpop.f32.mrf.mxu0
      %v4819 = vadd.f32 %v4573, %v4818
      %v4820 = vpop.f32.mrf.mxu0
      %4821 = vmatprep.mubr.bf16.mxu0 %v4672
      %4822 = vmatmul.mubr.bf16.gmra.mxu0 %v4546
      %v4823 = vpop.f32.mrf.mxu0
      %v4824 = vadd.f32 %v4573, %v4823
      %v4825 = vpop.f32.mrf.mxu0
      %v4826 = vpop.f32.mrf.mxu0
      %v4827 = vadd.f32 %v4573, %v4826
      %v4828 = vpop.f32.mrf.mxu0
      %4829 = vmatprep.mubr.bf16.mxu0 %v4675
      %4830 = vmatmul.mubr.bf16.gmra.mxu0 %v4548
      %v4831 = vpop.f32.mrf.mxu0
      %v4832 = vadd.f32 %v4573, %v4831
      %v4833 = vpop.f32.mrf.mxu0
      %v4834 = vpop.f32.mrf.mxu0
      %v4835 = vadd.f32 %v4573, %v4834
      %v4836 = vpop.f32.mrf.mxu0
      %4837 = vdwg.mxu0
      %vm4838 = vcmp.ge.f32.partialorder %v4712, 0.0
      %vm4839 = vcmp.ge.f32.partialorder %v4715, 0.0
      %vm4840 = vcmp.ge.f32.partialorder %v4720, 0.0
      %vm4841 = vcmp.ge.f32.partialorder %v4723, 0.0
      %vm4842 = vcmp.ge.f32.partialorder %v4728, 0.0
      %vm4843 = vcmp.ge.f32.partialorder %v4731, 0.0
      %vm4844 = vcmp.ge.f32.partialorder %v4736, 0.0
      %vm4845 = vcmp.ge.f32.partialorder %v4739, 0.0
      %vm4846 = vcmp.ge.f32.partialorder %v4744, 0.0
      %vm4847 = vcmp.ge.f32.partialorder %v4747, 0.0
      %vm4848 = vcmp.ge.f32.partialorder %v4752, 0.0
      %vm4849 = vcmp.ge.f32.partialorder %v4755, 0.0
      %vm4850 = vcmp.ge.f32.partialorder %v4760, 0.0
      %vm4851 = vcmp.ge.f32.partialorder %v4763, 0.0
      %vm4852 = vcmp.ge.f32.partialorder %v4768, 0.0
      %vm4853 = vcmp.ge.f32.partialorder %v4771, 0.0
      %vm4854 = vcmp.ge.f32.partialorder %v4776, 0.0
      %vm4855 = vcmp.ge.f32.partialorder %v4779, 0.0
      %vm4856 = vcmp.ge.f32.partialorder %v4784, 0.0
      %vm4857 = vcmp.ge.f32.partialorder %v4787, 0.0
      %vm4858 = vcmp.ge.f32.partialorder %v4792, 0.0
      %vm4859 = vcmp.ge.f32.partialorder %v4795, 0.0
      %vm4860 = vcmp.ge.f32.partialorder %v4800, 0.0
      %vm4861 = vcmp.ge.f32.partialorder %v4803, 0.0
      %vm4862 = vcmp.ge.f32.partialorder %v4808, 0.0
      %vm4863 = vcmp.ge.f32.partialorder %v4811, 0.0
      %vm4864 = vcmp.ge.f32.partialorder %v4816, 0.0
      %vm4865 = vcmp.ge.f32.partialorder %v4819, 0.0
      %vm4866 = vcmp.ge.f32.partialorder %v4824, 0.0
      %vm4867 = vcmp.ge.f32.partialorder %v4827, 0.0
      %vm4868 = vcmp.ge.f32.partialorder %v4832, 0.0
      %vm4869 = vcmp.ge.f32.partialorder %v4835, 0.0
      %v4870 = vmul.f32 %v4712, 0.1
      %v4871 = vmul.f32 %v4715, 0.1
      %v4872 = vmul.f32 %v4720, 0.1
      %v4873 = vmul.f32 %v4723, 0.1
      %v4874 = vmul.f32 %v4728, 0.1
      %v4875 = vmul.f32 %v4731, 0.1
      %v4876 = vmul.f32 %v4736, 0.1
      %v4877 = vmul.f32 %v4739, 0.1
      %v4878 = vmul.f32 %v4744, 0.1
      %v4879 = vmul.f32 %v4747, 0.1
      %v4880 = vmul.f32 %v4752, 0.1
      %v4881 = vmul.f32 %v4755, 0.1
      %v4882 = vmul.f32 %v4760, 0.1
      %v4883 = vmul.f32 %v4763, 0.1
      %v4884 = vmul.f32 %v4768, 0.1
      %v4885 = vmul.f32 %v4771, 0.1
      %v4886 = vmul.f32 %v4776, 0.1
      %v4887 = vmul.f32 %v4779, 0.1
      %v4888 = vmul.f32 %v4784, 0.1
      %v4889 = vmul.f32 %v4787, 0.1
      %v4890 = vmul.f32 %v4792, 0.1
      %v4891 = vmul.f32 %v4795, 0.1
      %v4892 = vmul.f32 %v4800, 0.1
      %v4893 = vmul.f32 %v4803, 0.1
      %v4894 = vmul.f32 %v4808, 0.1
      %v4895 = vmul.f32 %v4811, 0.1
      %v4896 = vmul.f32 %v4816, 0.1
      %v4897 = vmul.f32 %v4819, 0.1
      %v4898 = vmul.f32 %v4824, 0.1
      %v4899 = vmul.f32 %v4827, 0.1
      %v4900 = vmul.f32 %v4832, 0.1
      %v4901 = vmul.f32 %v4835, 0.1
      %v4902 = vsel %vm4838, %v4712, %v4870
      %v4903 = vsel %vm4839, %v4715, %v4871
      %v4904 = vsel %vm4840, %v4720, %v4872
      %v4905 = vsel %vm4841, %v4723, %v4873
      %v4906 = vsel %vm4842, %v4728, %v4874
      %v4907 = vsel %vm4843, %v4731, %v4875
      %v4908 = vsel %vm4844, %v4736, %v4876
      %v4909 = vsel %vm4845, %v4739, %v4877
      %v4910 = vsel %vm4846, %v4744, %v4878
      %v4911 = vsel %vm4847, %v4747, %v4879
      %v4912 = vsel %vm4848, %v4752, %v4880
      %v4913 = vsel %vm4849, %v4755, %v4881
      %v4914 = vsel %vm4850, %v4760, %v4882
      %v4915 = vsel %vm4851, %v4763, %v4883
      %v4916 = vsel %vm4852, %v4768, %v4884
      %v4917 = vsel %vm4853, %v4771, %v4885
      %v4918 = vsel %vm4854, %v4776, %v4886
      %v4919 = vsel %vm4855, %v4779, %v4887
      %v4920 = vsel %vm4856, %v4784, %v4888
      %v4921 = vsel %vm4857, %v4787, %v4889
      %v4922 = vsel %vm4858, %v4792, %v4890
      %v4923 = vsel %vm4859, %v4795, %v4891
      %v4924 = vsel %vm4860, %v4800, %v4892
      %v4925 = vsel %vm4861, %v4803, %v4893
      %v4926 = vsel %vm4862, %v4808, %v4894
      %v4927 = vsel %vm4863, %v4811, %v4895
      %v4928 = vsel %vm4864, %v4816, %v4896
      %v4929 = vsel %vm4865, %v4819, %v4897
      %v4930 = vsel %vm4866, %v4824, %v4898
      %v4931 = vsel %vm4867, %v4827, %v4899
      %v4932 = vsel %vm4868, %v4832, %v4900
      %v4933 = vsel %vm4869, %v4835, %v4901
      %v4934 = vld [vmem:[%s7] sm:$0x3]
      %v4935 = vld [vmem:[%s8] sm:$0x1]
      %v4937 = vlaneseq
      %v4938 = vshrl.u32 %v4937, 7
      %v4939 = vsub.s32 0, %v4938
      %v4940 = vrot.slane %v4935, %v4939
      %v4943 = vsel %vm763, %v746, 0
      %v4946 = vsel %vm763, %v747, 0
      %v4949 = vsel %vm763, %v748, 0
      %v4952 = vsel %vm763, %v749, 0
      %v4955 = vsel %vm763, %v750, 0
      %v4958 = vsel %vm763, %v751, 0
      %v4961 = vsel %vm763, %v752, 0
      %v4964 = vsel %vm763, %v753, 0
      %v4967 = vsel %vm763, %v754, 0
      %v4970 = vsel %vm763, %v755, 0
      %v4973 = vsel %vm763, %v756, 0
      %v4976 = vsel %vm763, %v757, 0
      %v4979 = vsel %vm763, %v758, 0
      %v4982 = vsel %vm763, %v759, 0
      %v4985 = vsel %vm763, %v760, 0
      %v4988 = vsel %vm763, %v761, 0
      %v4991 = vsel %vm2463, %v4934, 0
      %4993 = vmatprep.subr.bf16.mxu0 0
      %4994 = vmatpush1.bf16.msra.mxu0 0
      %4995 = vmatprep.subr.bf16.mxu0 0
      %4996 = vmatpush1.bf16.msra.mxu0 0
      %4997 = vmatprep.subr.bf16.mxu0 0
      %4998 = vmatpush1.bf16.msra.mxu0 0
      %4999 = vmatprep.subr.bf16.mxu0 0
      %5000 = vmatpush1.bf16.msra.mxu0 0
      %5001 = vmatprep.subr.bf16.mxu0 0
      %5002 = vmatpush1.bf16.msra.mxu0 0
      %5003 = vmatprep.subr.bf16.mxu0 0
      %5004 = vmatpush1.bf16.msra.mxu0 0
      %5005 = vmatprep.subr.bf16.mxu0 0
      %5006 = vmatpush1.bf16.msra.mxu0 0
      %5007 = vmatprep.subr.bf16.mxu0 0
      %5008 = vmatpush1.bf16.msra.mxu0 %v4991
      %5009 = vmatprep.subr.bf16.mxu0 0
      %5010 = vmatpush2.bf16.msra.mxu0 0
      %5011 = vmatprep.subr.bf16.mxu0 0
      %5012 = vmatpush2.bf16.msra.mxu0 0
      %5013 = vmatprep.subr.bf16.mxu0 0
      %5014 = vmatpush2.bf16.msra.mxu0 0
      %5015 = vmatprep.subr.bf16.mxu0 0
      %5016 = vmatpush2.bf16.msra.mxu0 0
      %5017 = vmatprep.subr.bf16.mxu0 0
      %5018 = vmatpush2.bf16.msra.mxu0 0
      %5019 = vmatprep.subr.bf16.mxu0 0
      %5020 = vmatpush2.bf16.msra.mxu0 0
      %5021 = vmatprep.subr.bf16.mxu0 0
      %5022 = vmatpush2.bf16.msra.mxu0 0
      %5023 = vmatprep.subr.bf16.mxu0 0
      %5024 = vmatpush2.bf16.msra.mxu0 0
      %5025 = vmatprep.mubr.bf16.mxu0 0
      %5026 = vmatmul.mubr.bf16.gmra.mxu0 %v4943
      %v5027 = vpop.f32.mrf.mxu0
      %v5028 = vadd.f32 %v4940, %v5027
      %v5029 = vpop.f32.mrf.mxu0
      %v5030 = vpop.f32.mrf.mxu0
      %v5031 = vadd.f32 %v4940, %v5030
      %v5032 = vpop.f32.mrf.mxu0
      %5033 = vmatprep.mubr.bf16.mxu0 0
      %5034 = vmatmul.mubr.bf16.gmra.mxu0 %v4946
      %v5035 = vpop.f32.mrf.mxu0
      %v5036 = vadd.f32 %v4940, %v5035
      %v5037 = vpop.f32.mrf.mxu0
      %v5038 = vpop.f32.mrf.mxu0
      %v5039 = vadd.f32 %v4940, %v5038
      %v5040 = vpop.f32.mrf.mxu0
      %5041 = vmatprep.mubr.bf16.mxu0 0
      %5042 = vmatmul.mubr.bf16.gmra.mxu0 %v4949
      %v5043 = vpop.f32.mrf.mxu0
      %v5044 = vadd.f32 %v4940, %v5043
      %v5045 = vpop.f32.mrf.mxu0
      %v5046 = vpop.f32.mrf.mxu0
      %v5047 = vadd.f32 %v4940, %v5046
      %v5048 = vpop.f32.mrf.mxu0
      %5049 = vmatprep.mubr.bf16.mxu0 0
      %5050 = vmatmul.mubr.bf16.gmra.mxu0 %v4952
      %v5051 = vpop.f32.mrf.mxu0
      %v5052 = vadd.f32 %v4940, %v5051
      %v5053 = vpop.f32.mrf.mxu0
      %v5054 = vpop.f32.mrf.mxu0
      %v5055 = vadd.f32 %v4940, %v5054
      %v5056 = vpop.f32.mrf.mxu0
      %5057 = vmatprep.mubr.bf16.mxu0 0
      %5058 = vmatmul.mubr.bf16.gmra.mxu0 %v4955
      %v5059 = vpop.f32.mrf.mxu0
      %v5060 = vadd.f32 %v4940, %v5059
      %v5061 = vpop.f32.mrf.mxu0
      %v5062 = vpop.f32.mrf.mxu0
      %v5063 = vadd.f32 %v4940, %v5062
      %v5064 = vpop.f32.mrf.mxu0
      %5065 = vmatprep.mubr.bf16.mxu0 0
      %5066 = vmatmul.mubr.bf16.gmra.mxu0 %v4958
      %v5067 = vpop.f32.mrf.mxu0
      %v5068 = vadd.f32 %v4940, %v5067
      %v5069 = vpop.f32.mrf.mxu0
      %v5070 = vpop.f32.mrf.mxu0
      %v5071 = vadd.f32 %v4940, %v5070
      %v5072 = vpop.f32.mrf.mxu0
      %5073 = vmatprep.mubr.bf16.mxu0 0
      %5074 = vmatmul.mubr.bf16.gmra.mxu0 %v4961
      %v5075 = vpop.f32.mrf.mxu0
      %v5076 = vadd.f32 %v4940, %v5075
      %v5077 = vpop.f32.mrf.mxu0
      %v5078 = vpop.f32.mrf.mxu0
      %v5079 = vadd.f32 %v4940, %v5078
      %v5080 = vpop.f32.mrf.mxu0
      %5081 = vmatprep.mubr.bf16.mxu0 0
      %5082 = vmatmul.mubr.bf16.gmra.mxu0 %v4964
      %v5083 = vpop.f32.mrf.mxu0
      %v5084 = vadd.f32 %v4940, %v5083
      %v5085 = vpop.f32.mrf.mxu0
      %v5086 = vpop.f32.mrf.mxu0
      %v5087 = vadd.f32 %v4940, %v5086
      %v5088 = vpop.f32.mrf.mxu0
      %5089 = vmatprep.mubr.bf16.mxu0 0
      %5090 = vmatmul.mubr.bf16.gmra.mxu0 %v4967
      %v5091 = vpop.f32.mrf.mxu0
      %v5092 = vadd.f32 %v4940, %v5091
      %v5093 = vpop.f32.mrf.mxu0
      %v5094 = vpop.f32.mrf.mxu0
      %v5095 = vadd.f32 %v4940, %v5094
      %v5096 = vpop.f32.mrf.mxu0
      %5097 = vmatprep.mubr.bf16.mxu0 0
      %5098 = vmatmul.mubr.bf16.gmra.mxu0 %v4970
      %v5099 = vpop.f32.mrf.mxu0
      %v5100 = vadd.f32 %v4940, %v5099
      %v5101 = vpop.f32.mrf.mxu0
      %v5102 = vpop.f32.mrf.mxu0
      %v5103 = vadd.f32 %v4940, %v5102
      %v5104 = vpop.f32.mrf.mxu0
      %5105 = vmatprep.mubr.bf16.mxu0 0
      %5106 = vmatmul.mubr.bf16.gmra.mxu0 %v4973
      %v5107 = vpop.f32.mrf.mxu0
      %v5108 = vadd.f32 %v4940, %v5107
      %v5109 = vpop.f32.mrf.mxu0
      %v5110 = vpop.f32.mrf.mxu0
      %v5111 = vadd.f32 %v4940, %v5110
      %v5112 = vpop.f32.mrf.mxu0
      %5113 = vmatprep.mubr.bf16.mxu0 0
      %5114 = vmatmul.mubr.bf16.gmra.mxu0 %v4976
      %v5115 = vpop.f32.mrf.mxu0
      %v5116 = vadd.f32 %v4940, %v5115
      %v5117 = vpop.f32.mrf.mxu0
      %v5118 = vpop.f32.mrf.mxu0
      %v5119 = vadd.f32 %v4940, %v5118
      %v5120 = vpop.f32.mrf.mxu0
      %5121 = vmatprep.mubr.bf16.mxu0 0
      %5122 = vmatmul.mubr.bf16.gmra.mxu0 %v4979
      %v5123 = vpop.f32.mrf.mxu0
      %v5124 = vadd.f32 %v4940, %v5123
      %v5125 = vpop.f32.mrf.mxu0
      %v5126 = vpop.f32.mrf.mxu0
      %v5127 = vadd.f32 %v4940, %v5126
      %v5128 = vpop.f32.mrf.mxu0
      %5129 = vmatprep.mubr.bf16.mxu0 0
      %5130 = vmatmul.mubr.bf16.gmra.mxu0 %v4982
      %v5131 = vpop.f32.mrf.mxu0
      %v5132 = vadd.f32 %v4940, %v5131
      %v5133 = vpop.f32.mrf.mxu0
      %v5134 = vpop.f32.mrf.mxu0
      %v5135 = vadd.f32 %v4940, %v5134
      %v5136 = vpop.f32.mrf.mxu0
      %5137 = vmatprep.mubr.bf16.mxu0 0
      %5138 = vmatmul.mubr.bf16.gmra.mxu0 %v4985
      %v5139 = vpop.f32.mrf.mxu0
      %v5140 = vadd.f32 %v4940, %v5139
      %v5141 = vpop.f32.mrf.mxu0
      %v5142 = vpop.f32.mrf.mxu0
      %v5143 = vadd.f32 %v4940, %v5142
      %v5144 = vpop.f32.mrf.mxu0
      %5145 = vmatprep.mubr.bf16.mxu0 0
      %5146 = vmatmul.mubr.bf16.gmra.mxu0 %v4988
      %v5147 = vpop.f32.mrf.mxu0
      %v5148 = vadd.f32 %v4940, %v5147
      %v5149 = vpop.f32.mrf.mxu0
      %v5150 = vpop.f32.mrf.mxu0
      %v5151 = vadd.f32 %v4940, %v5150
      %v5152 = vpop.f32.mrf.mxu0
      %5153 = vdwg.mxu0
      %v5154 = vadd.f32 %v4902, %v5028
      %v5155 = vadd.f32 %v4903, %v5031
      %v5156 = vadd.f32 %v4904, %v5036
      %v5157 = vadd.f32 %v4905, %v5039
      %v5158 = vadd.f32 %v4906, %v5044
      %v5159 = vadd.f32 %v4907, %v5047
      %v5160 = vadd.f32 %v4908, %v5052
      %v5161 = vadd.f32 %v4909, %v5055
      %v5162 = vadd.f32 %v4910, %v5060
      %v5163 = vadd.f32 %v4911, %v5063
      %v5164 = vadd.f32 %v4912, %v5068
      %v5165 = vadd.f32 %v4913, %v5071
      %v5166 = vadd.f32 %v4914, %v5076
      %v5167 = vadd.f32 %v4915, %v5079
      %v5168 = vadd.f32 %v4916, %v5084
      %v5169 = vadd.f32 %v4917, %v5087
      %v5170 = vadd.f32 %v4918, %v5092
      %v5171 = vadd.f32 %v4919, %v5095
      %v5172 = vadd.f32 %v4920, %v5100
      %v5173 = vadd.f32 %v4921, %v5103
      %v5174 = vadd.f32 %v4922, %v5108
      %v5175 = vadd.f32 %v4923, %v5111
      %v5176 = vadd.f32 %v4924, %v5116
      %v5177 = vadd.f32 %v4925, %v5119
      %v5178 = vadd.f32 %v4926, %v5124
      %v5179 = vadd.f32 %v4927, %v5127
      %v5180 = vadd.f32 %v4928, %v5132
      %v5181 = vadd.f32 %v4929, %v5135
      %v5182 = vadd.f32 %v4930, %v5140
      %v5183 = vadd.f32 %v4931, %v5143
      %v5184 = vadd.f32 %v4932, %v5148
      %v5185 = vadd.f32 %v4933, %v5151
      %vm5186 = vcmp.ge.f32.partialorder %v5154, 0.0
      %vm5187 = vcmp.ge.f32.partialorder %v5155, 0.0
      %vm5188 = vcmp.ge.f32.partialorder %v5156, 0.0
      %vm5189 = vcmp.ge.f32.partialorder %v5157, 0.0
      %vm5190 = vcmp.ge.f32.partialorder %v5158, 0.0
      %vm5191 = vcmp.ge.f32.partialorder %v5159, 0.0
      %vm5192 = vcmp.ge.f32.partialorder %v5160, 0.0
      %vm5193 = vcmp.ge.f32.partialorder %v5161, 0.0
      %vm5194 = vcmp.ge.f32.partialorder %v5162, 0.0
      %vm5195 = vcmp.ge.f32.partialorder %v5163, 0.0
      %vm5196 = vcmp.ge.f32.partialorder %v5164, 0.0
      %vm5197 = vcmp.ge.f32.partialorder %v5165, 0.0
      %vm5198 = vcmp.ge.f32.partialorder %v5166, 0.0
      %vm5199 = vcmp.ge.f32.partialorder %v5167, 0.0
      %vm5200 = vcmp.ge.f32.partialorder %v5168, 0.0
      %vm5201 = vcmp.ge.f32.partialorder %v5169, 0.0
      %vm5202 = vcmp.ge.f32.partialorder %v5170, 0.0
      %vm5203 = vcmp.ge.f32.partialorder %v5171, 0.0
      %vm5204 = vcmp.ge.f32.partialorder %v5172, 0.0
      %vm5205 = vcmp.ge.f32.partialorder %v5173, 0.0
      %vm5206 = vcmp.ge.f32.partialorder %v5174, 0.0
      %vm5207 = vcmp.ge.f32.partialorder %v5175, 0.0
      %vm5208 = vcmp.ge.f32.partialorder %v5176, 0.0
      %vm5209 = vcmp.ge.f32.partialorder %v5177, 0.0
      %vm5210 = vcmp.ge.f32.partialorder %v5178, 0.0
      %vm5211 = vcmp.ge.f32.partialorder %v5179, 0.0
      %vm5212 = vcmp.ge.f32.partialorder %v5180, 0.0
      %vm5213 = vcmp.ge.f32.partialorder %v5181, 0.0
      %vm5214 = vcmp.ge.f32.partialorder %v5182, 0.0
      %vm5215 = vcmp.ge.f32.partialorder %v5183, 0.0
      %vm5216 = vcmp.ge.f32.partialorder %v5184, 0.0
      %vm5217 = vcmp.ge.f32.partialorder %v5185, 0.0
      %v5218 = vmul.f32 %v5154, 0.2
      %v5219 = vmul.f32 %v5155, 0.2
      %v5220 = vmul.f32 %v5156, 0.2
      %v5221 = vmul.f32 %v5157, 0.2
      %v5222 = vmul.f32 %v5158, 0.2
      %v5223 = vmul.f32 %v5159, 0.2
      %v5224 = vmul.f32 %v5160, 0.2
      %v5225 = vmul.f32 %v5161, 0.2
      %v5226 = vmul.f32 %v5162, 0.2
      %v5227 = vmul.f32 %v5163, 0.2
      %v5228 = vmul.f32 %v5164, 0.2
      %v5229 = vmul.f32 %v5165, 0.2
      %v5230 = vmul.f32 %v5166, 0.2
      %v5231 = vmul.f32 %v5167, 0.2
      %v5232 = vmul.f32 %v5168, 0.2
      %v5233 = vmul.f32 %v5169, 0.2
      %v5234 = vmul.f32 %v5170, 0.2
      %v5235 = vmul.f32 %v5171, 0.2
      %v5236 = vmul.f32 %v5172, 0.2
      %v5237 = vmul.f32 %v5173, 0.2
      %v5238 = vmul.f32 %v5174, 0.2
      %v5239 = vmul.f32 %v5175, 0.2
      %v5240 = vmul.f32 %v5176, 0.2
      %v5241 = vmul.f32 %v5177, 0.2
      %v5242 = vmul.f32 %v5178, 0.2
      %v5243 = vmul.f32 %v5179, 0.2
      %v5244 = vmul.f32 %v5180, 0.2
      %v5245 = vmul.f32 %v5181, 0.2
      %v5246 = vmul.f32 %v5182, 0.2
      %v5247 = vmul.f32 %v5183, 0.2
      %v5248 = vmul.f32 %v5184, 0.2
      %v5249 = vmul.f32 %v5185, 0.2
      %v5250 = vsel %vm5186, %v5154, %v5218
      %v5251 = vsel %vm5187, %v5155, %v5219
      %v5252 = vsel %vm5188, %v5156, %v5220
      %v5253 = vsel %vm5189, %v5157, %v5221
      %v5254 = vsel %vm5190, %v5158, %v5222
      %v5255 = vsel %vm5191, %v5159, %v5223
      %v5256 = vsel %vm5192, %v5160, %v5224
      %v5257 = vsel %vm5193, %v5161, %v5225
      %v5258 = vsel %vm5194, %v5162, %v5226
      %v5259 = vsel %vm5195, %v5163, %v5227
      %v5260 = vsel %vm5196, %v5164, %v5228
      %v5261 = vsel %vm5197, %v5165, %v5229
      %v5262 = vsel %vm5198, %v5166, %v5230
      %v5263 = vsel %vm5199, %v5167, %v5231
      %v5264 = vsel %vm5200, %v5168, %v5232
      %v5265 = vsel %vm5201, %v5169, %v5233
      %v5266 = vsel %vm5202, %v5170, %v5234
      %v5267 = vsel %vm5203, %v5171, %v5235
      %v5268 = vsel %vm5204, %v5172, %v5236
      %v5269 = vsel %vm5205, %v5173, %v5237
      %v5270 = vsel %vm5206, %v5174, %v5238
      %v5271 = vsel %vm5207, %v5175, %v5239
      %v5272 = vsel %vm5208, %v5176, %v5240
      %v5273 = vsel %vm5209, %v5177, %v5241
      %v5274 = vsel %vm5210, %v5178, %v5242
      %v5275 = vsel %vm5211, %v5179, %v5243
      %v5276 = vsel %vm5212, %v5180, %v5244
      %v5277 = vsel %vm5213, %v5181, %v5245
      %v5278 = vsel %vm5214, %v5182, %v5246
      %v5279 = vsel %vm5215, %v5183, %v5247
      %v5280 = vsel %vm5216, %v5184, %v5248
      %v5281 = vsel %vm5217, %v5185, %v5249
      %v5282 = vpack.c.bf16 %v5251, %v5250
      %v5283 = vpack.c.bf16 %v5253, %v5252
      %v5284 = vpack.c.bf16 %v5255, %v5254
      %v5285 = vpack.c.bf16 %v5257, %v5256
      %v5286 = vpack.c.bf16 %v5259, %v5258
      %v5287 = vpack.c.bf16 %v5261, %v5260
      %v5288 = vpack.c.bf16 %v5263, %v5262
      %v5289 = vpack.c.bf16 %v5265, %v5264
      %v5290 = vpack.c.bf16 %v5267, %v5266
      %v5291 = vpack.c.bf16 %v5269, %v5268
      %v5292 = vpack.c.bf16 %v5271, %v5270
      %v5293 = vpack.c.bf16 %v5273, %v5272
      %v5294 = vpack.c.bf16 %v5275, %v5274
      %v5295 = vpack.c.bf16 %v5277, %v5276
      %v5296 = vpack.c.bf16 %v5279, %v5278
      %v5297 = vpack.c.bf16 %v5281, %v5280
      %5298 = vst.msk [vmem:[%s762 + $0x1] sm:$0xff] %vm658, %v5250
      %5299 = vst.msk [vmem:[%s762 + $0x9] sm:$0xff] %vm658, %v5251
      %5300 = vst.msk [vmem:[%s762 + $0x19] sm:$0xff] %vm658, %v5252
      %5301 = vst.msk [vmem:[%s762 + $0x21] sm:$0xff] %vm658, %v5253
      %5302 = vst.msk [vmem:[%s762 + $0x31] sm:$0xff] %vm658, %v5254
      %5303 = vst.msk [vmem:[%s762 + $0x39] sm:$0xff] %vm658, %v5255
      %5304 = vst.msk [vmem:[%s762 + $0x49] sm:$0xff] %vm658, %v5256
      %5305 = vst.msk [vmem:[%s762 + $0x51] sm:$0xff] %vm658, %v5257
      %5306 = vst.msk [vmem:[%s762 + $0x61] sm:$0xff] %vm658, %v5258
      %5307 = vst.msk [vmem:[%s762 + $0x69] sm:$0xff] %vm658, %v5259
      %5308 = vst.msk [vmem:[%s762 + $0x79] sm:$0xff] %vm658, %v5260
      %5309 = vst.msk [vmem:[%s762 + $0x81] sm:$0xff] %vm658, %v5261
      %5310 = vst.msk [vmem:[%s762 + $0x91] sm:$0xff] %vm658, %v5262
      %5311 = vst.msk [vmem:[%s762 + $0x99] sm:$0xff] %vm658, %v5263
      %5312 = vst.msk [vmem:[%s762 + $0xa9] sm:$0xff] %vm658, %v5264
      %5313 = vst.msk [vmem:[%s762 + $0xb1] sm:$0xff] %vm658, %v5265
      %5314 = vst.msk [vmem:[%s762 + $0xc1] sm:$0xff] %vm658, %v5266
      %5315 = vst.msk [vmem:[%s762 + $0xc9] sm:$0xff] %vm658, %v5267
      %5316 = vst.msk [vmem:[%s762 + $0xd9] sm:$0xff] %vm658, %v5268
      %5317 = vst.msk [vmem:[%s762 + $0xe1] sm:$0xff] %vm658, %v5269
      %5318 = vst.msk [vmem:[%s762 + $0xf1] sm:$0xff] %vm658, %v5270
      %5319 = vst.msk [vmem:[%s762 + $0xf9] sm:$0xff] %vm658, %v5271
      %5320 = vst.msk [vmem:[%s762 + $0x109] sm:$0xff] %vm658, %v5272
      %5321 = vst.msk [vmem:[%s762 + $0x111] sm:$0xff] %vm658, %v5273
      %5322 = vst.msk [vmem:[%s762 + $0x121] sm:$0xff] %vm658, %v5274
      %5323 = vst.msk [vmem:[%s762 + $0x129] sm:$0xff] %vm658, %v5275
      %5324 = vst.msk [vmem:[%s762 + $0x139] sm:$0xff] %vm658, %v5276
      %5325 = vst.msk [vmem:[%s762 + $0x141] sm:$0xff] %vm658, %v5277
      %5326 = vst.msk [vmem:[%s762 + $0x151] sm:$0xff] %vm658, %v5278
      %5327 = vst.msk [vmem:[%s762 + $0x159] sm:$0xff] %vm658, %v5279
      %5328 = vst.msk [vmem:[%s762 + $0x169] sm:$0xff] %vm658, %v5280
      %5329 = vst.msk [vmem:[%s762 + $0x171] sm:$0xff] %vm658, %v5281
      %v5330 = vld [vmem:[#allocation2] sm:$0xff]
      %v5331 = vld [vmem:[#allocation2 + $0x8] sm:$0xff]
      %v5332 = vld [vmem:[#allocation2 + $0x18] sm:$0xff]
      %v5333 = vld [vmem:[#allocation2 + $0x20] sm:$0xff]
      %v5334 = vld [vmem:[#allocation2 + $0x30] sm:$0xff]
      %v5335 = vld [vmem:[#allocation2 + $0x38] sm:$0xff]
      %v5336 = vld [vmem:[#allocation2 + $0x48] sm:$0xff]
      %v5337 = vld [vmem:[#allocation2 + $0x50] sm:$0xff]
      %v5338 = vld [vmem:[#allocation2 + $0x60] sm:$0xff]
      %v5339 = vld [vmem:[#allocation2 + $0x68] sm:$0xff]
      %v5340 = vld [vmem:[#allocation2 + $0x78] sm:$0xff]
      %v5341 = vld [vmem:[#allocation2 + $0x80] sm:$0xff]
      %v5342 = vld [vmem:[#allocation2 + $0x90] sm:$0xff]
      %v5343 = vld [vmem:[#allocation2 + $0x98] sm:$0xff]
      %v5344 = vld [vmem:[#allocation2 + $0xa8] sm:$0xff]
      %v5345 = vld [vmem:[#allocation2 + $0xb0] sm:$0xff]
      %v5346 = vld [vmem:[#allocation2 + $0xc0] sm:$0xff]
      %v5347 = vld [vmem:[#allocation2 + $0xc8] sm:$0xff]
      %v5348 = vld [vmem:[#allocation2 + $0xd8] sm:$0xff]
      %v5349 = vld [vmem:[#allocation2 + $0xe0] sm:$0xff]
      %v5350 = vld [vmem:[#allocation2 + $0xf0] sm:$0xff]
      %v5351 = vld [vmem:[#allocation2 + $0xf8] sm:$0xff]
      %v5352 = vld [vmem:[#allocation2 + $0x108] sm:$0xff]
      %v5353 = vld [vmem:[#allocation2 + $0x110] sm:$0xff]
      %v5354 = vld [vmem:[#allocation2 + $0x120] sm:$0xff]
      %v5355 = vld [vmem:[#allocation2 + $0x128] sm:$0xff]
      %v5356 = vld [vmem:[#allocation2 + $0x138] sm:$0xff]
      %v5357 = vld [vmem:[#allocation2 + $0x140] sm:$0xff]
      %v5358 = vld [vmem:[#allocation2 + $0x150] sm:$0xff]
      %v5359 = vld [vmem:[#allocation2 + $0x158] sm:$0xff]
      %v5360 = vld [vmem:[#allocation2 + $0x168] sm:$0xff]
      %v5361 = vld [vmem:[#allocation2 + $0x170] sm:$0xff]
      %v5362 = vld [vmem:[#allocation2 + $0x1] sm:$0xff]
      %v5363 = vld [vmem:[#allocation2 + $0x9] sm:$0xff]
      %v5364 = vld [vmem:[#allocation2 + $0x19] sm:$0xff]
      %v5365 = vld [vmem:[#allocation2 + $0x21] sm:$0xff]
      %v5366 = vld [vmem:[#allocation2 + $0x31] sm:$0xff]
      %v5367 = vld [vmem:[#allocation2 + $0x39] sm:$0xff]
      %v5368 = vld [vmem:[#allocation2 + $0x49] sm:$0xff]
      %v5369 = vld [vmem:[#allocation2 + $0x51] sm:$0xff]
      %v5370 = vld [vmem:[#allocation2 + $0x61] sm:$0xff]
      %v5371 = vld [vmem:[#allocation2 + $0x69] sm:$0xff]
      %v5372 = vld [vmem:[#allocation2 + $0x79] sm:$0xff]
      %v5373 = vld [vmem:[#allocation2 + $0x81] sm:$0xff]
      %v5374 = vld [vmem:[#allocation2 + $0x91] sm:$0xff]
      %v5375 = vld [vmem:[#allocation2 + $0x99] sm:$0xff]
      %v5376 = vld [vmem:[#allocation2 + $0xa9] sm:$0xff]
      %v5377 = vld [vmem:[#allocation2 + $0xb1] sm:$0xff]
      %v5378 = vld [vmem:[#allocation2 + $0xc1] sm:$0xff]
      %v5379 = vld [vmem:[#allocation2 + $0xc9] sm:$0xff]
      %v5380 = vld [vmem:[#allocation2 + $0xd9] sm:$0xff]
      %v5381 = vld [vmem:[#allocation2 + $0xe1] sm:$0xff]
      %v5382 = vld [vmem:[#allocation2 + $0xf1] sm:$0xff]
      %v5383 = vld [vmem:[#allocation2 + $0xf9] sm:$0xff]
      %v5384 = vld [vmem:[#allocation2 + $0x109] sm:$0xff]
      %v5385 = vld [vmem:[#allocation2 + $0x111] sm:$0xff]
      %v5386 = vld [vmem:[#allocation2 + $0x121] sm:$0xff]
      %v5387 = vld [vmem:[#allocation2 + $0x129] sm:$0xff]
      %v5388 = vld [vmem:[#allocation2 + $0x139] sm:$0xff]
      %v5389 = vld [vmem:[#allocation2 + $0x141] sm:$0xff]
      %v5390 = vld [vmem:[#allocation2 + $0x151] sm:$0xff]
      %v5391 = vld [vmem:[#allocation2 + $0x159] sm:$0xff]
      %v5392 = vld [vmem:[#allocation2 + $0x169] sm:$0xff]
      %v5393 = vld [vmem:[#allocation2 + $0x171] sm:$0xff]
      %v5394 = vld [vmem:[#allocation2 + $0x2] sm:$0xff]
      %v5395 = vld [vmem:[#allocation2 + $0xa] sm:$0xff]
      %v5396 = vld [vmem:[#allocation2 + $0x1a] sm:$0xff]
      %v5397 = vld [vmem:[#allocation2 + $0x22] sm:$0xff]
      %v5398 = vld [vmem:[#allocation2 + $0x32] sm:$0xff]
      %v5399 = vld [vmem:[#allocation2 + $0x3a] sm:$0xff]
      %v5400 = vld [vmem:[#allocation2 + $0x4a] sm:$0xff]
      %v5401 = vld [vmem:[#allocation2 + $0x52] sm:$0xff]
      %v5402 = vld [vmem:[#allocation2 + $0x62] sm:$0xff]
      %v5403 = vld [vmem:[#allocation2 + $0x6a] sm:$0xff]
      %v5404 = vld [vmem:[#allocation2 + $0x7a] sm:$0xff]
      %v5405 = vld [vmem:[#allocation2 + $0x82] sm:$0xff]
      %v5406 = vld [vmem:[#allocation2 + $0x92] sm:$0xff]
      %v5407 = vld [vmem:[#allocation2 + $0x9a] sm:$0xff]
      %v5408 = vld [vmem:[#allocation2 + $0xaa] sm:$0xff]
      %v5409 = vld [vmem:[#allocation2 + $0xb2] sm:$0xff]
      %v5410 = vld [vmem:[#allocation2 + $0xc2] sm:$0xff]
      %v5411 = vld [vmem:[#allocation2 + $0xca] sm:$0xff]
      %v5412 = vld [vmem:[#allocation2 + $0xda] sm:$0xff]
      %v5413 = vld [vmem:[#allocation2 + $0xe2] sm:$0xff]
      %v5414 = vld [vmem:[#allocation2 + $0xf2] sm:$0xff]
      %v5415 = vld [vmem:[#allocation2 + $0xfa] sm:$0xff]
      %v5416 = vld [vmem:[#allocation2 + $0x10a] sm:$0xff]
      %v5417 = vld [vmem:[#allocation2 + $0x112] sm:$0xff]
      %v5418 = vld [vmem:[#allocation2 + $0x122] sm:$0xff]
      %v5419 = vld [vmem:[#allocation2 + $0x12a] sm:$0xff]
      %v5420 = vld [vmem:[#allocation2 + $0x13a] sm:$0xff]
      %v5421 = vld [vmem:[#allocation2 + $0x142] sm:$0xff]
      %v5422 = vld [vmem:[#allocation2 + $0x152] sm:$0xff]
      %v5423 = vld [vmem:[#allocation2 + $0x15a] sm:$0xff]
      %v5424 = vld [vmem:[#allocation2 + $0x16a] sm:$0xff]
      %v5425 = vld [vmem:[#allocation2 + $0x172] sm:$0xff]
      %v5426 = vld [vmem:[%s762] sm:$0xff]
      %v5427 = vld [vmem:[%s762 + $0x8] sm:$0xff]
      %v5428 = vld [vmem:[%s762 + $0x18] sm:$0xff]
      %v5429 = vld [vmem:[%s762 + $0x20] sm:$0xff]
      %v5430 = vld [vmem:[%s762 + $0x30] sm:$0xff]
      %v5431 = vld [vmem:[%s762 + $0x38] sm:$0xff]
      %v5432 = vld [vmem:[%s762 + $0x48] sm:$0xff]
      %v5433 = vld [vmem:[%s762 + $0x50] sm:$0xff]
      %v5434 = vld [vmem:[%s762 + $0x60] sm:$0xff]
      %v5435 = vld [vmem:[%s762 + $0x68] sm:$0xff]
      %v5436 = vld [vmem:[%s762 + $0x78] sm:$0xff]
      %v5437 = vld [vmem:[%s762 + $0x80] sm:$0xff]
      %v5438 = vld [vmem:[%s762 + $0x90] sm:$0xff]
      %v5439 = vld [vmem:[%s762 + $0x98] sm:$0xff]
      %v5440 = vld [vmem:[%s762 + $0xa8] sm:$0xff]
      %v5441 = vld [vmem:[%s762 + $0xb0] sm:$0xff]
      %v5442 = vld [vmem:[%s762 + $0xc0] sm:$0xff]
      %v5443 = vld [vmem:[%s762 + $0xc8] sm:$0xff]
      %v5444 = vld [vmem:[%s762 + $0xd8] sm:$0xff]
      %v5445 = vld [vmem:[%s762 + $0xe0] sm:$0xff]
      %v5446 = vld [vmem:[%s762 + $0xf0] sm:$0xff]
      %v5447 = vld [vmem:[%s762 + $0xf8] sm:$0xff]
      %v5448 = vld [vmem:[%s762 + $0x108] sm:$0xff]
      %v5449 = vld [vmem:[%s762 + $0x110] sm:$0xff]
      %v5450 = vld [vmem:[%s762 + $0x120] sm:$0xff]
      %v5451 = vld [vmem:[%s762 + $0x128] sm:$0xff]
      %v5452 = vld [vmem:[%s762 + $0x138] sm:$0xff]
      %v5453 = vld [vmem:[%s762 + $0x140] sm:$0xff]
      %v5454 = vld [vmem:[%s762 + $0x150] sm:$0xff]
      %v5455 = vld [vmem:[%s762 + $0x158] sm:$0xff]
      %v5456 = vld [vmem:[%s762 + $0x168] sm:$0xff]
      %v5457 = vld [vmem:[%s762 + $0x170] sm:$0xff]
      %v5458 = vld [vmem:[%s762 + $0x1] sm:$0xff]
      %v5459 = vld [vmem:[%s762 + $0x9] sm:$0xff]
      %v5460 = vld [vmem:[%s762 + $0x19] sm:$0xff]
      %v5461 = vld [vmem:[%s762 + $0x21] sm:$0xff]
      %v5462 = vld [vmem:[%s762 + $0x31] sm:$0xff]
      %v5463 = vld [vmem:[%s762 + $0x39] sm:$0xff]
      %v5464 = vld [vmem:[%s762 + $0x49] sm:$0xff]
      %v5465 = vld [vmem:[%s762 + $0x51] sm:$0xff]
      %v5466 = vld [vmem:[%s762 + $0x61] sm:$0xff]
      %v5467 = vld [vmem:[%s762 + $0x69] sm:$0xff]
      %v5468 = vld [vmem:[%s762 + $0x79] sm:$0xff]
      %v5469 = vld [vmem:[%s762 + $0x81] sm:$0xff]
      %v5470 = vld [vmem:[%s762 + $0x91] sm:$0xff]
      %v5471 = vld [vmem:[%s762 + $0x99] sm:$0xff]
      %v5472 = vld [vmem:[%s762 + $0xa9] sm:$0xff]
      %v5473 = vld [vmem:[%s762 + $0xb1] sm:$0xff]
      %v5474 = vld [vmem:[%s762 + $0xc1] sm:$0xff]
      %v5475 = vld [vmem:[%s762 + $0xc9] sm:$0xff]
      %v5476 = vld [vmem:[%s762 + $0xd9] sm:$0xff]
      %v5477 = vld [vmem:[%s762 + $0xe1] sm:$0xff]
      %v5478 = vld [vmem:[%s762 + $0xf1] sm:$0xff]
      %v5479 = vld [vmem:[%s762 + $0xf9] sm:$0xff]
      %v5480 = vld [vmem:[%s762 + $0x109] sm:$0xff]
      %v5481 = vld [vmem:[%s762 + $0x111] sm:$0xff]
      %v5482 = vld [vmem:[%s762 + $0x121] sm:$0xff]
      %v5483 = vld [vmem:[%s762 + $0x129] sm:$0xff]
      %v5484 = vld [vmem:[%s762 + $0x139] sm:$0xff]
      %v5485 = vld [vmem:[%s762 + $0x141] sm:$0xff]
      %v5486 = vld [vmem:[%s762 + $0x151] sm:$0xff]
      %v5487 = vld [vmem:[%s762 + $0x159] sm:$0xff]
      %v5488 = vld [vmem:[%s762 + $0x169] sm:$0xff]
      %v5489 = vld [vmem:[%s762 + $0x171] sm:$0xff]
      %v5490 = vld [vmem:[%s762 + $0x2] sm:$0xff]
      %v5491 = vld [vmem:[%s762 + $0xa] sm:$0xff]
      %v5492 = vld [vmem:[%s762 + $0x1a] sm:$0xff]
      %v5493 = vld [vmem:[%s762 + $0x22] sm:$0xff]
      %v5494 = vld [vmem:[%s762 + $0x32] sm:$0xff]
      %v5495 = vld [vmem:[%s762 + $0x3a] sm:$0xff]
      %v5496 = vld [vmem:[%s762 + $0x4a] sm:$0xff]
      %v5497 = vld [vmem:[%s762 + $0x52] sm:$0xff]
      %v5498 = vld [vmem:[%s762 + $0x62] sm:$0xff]
      %v5499 = vld [vmem:[%s762 + $0x6a] sm:$0xff]
      %v5500 = vld [vmem:[%s762 + $0x7a] sm:$0xff]
      %v5501 = vld [vmem:[%s762 + $0x82] sm:$0xff]
      %v5502 = vld [vmem:[%s762 + $0x92] sm:$0xff]
      %v5503 = vld [vmem:[%s762 + $0x9a] sm:$0xff]
      %v5504 = vld [vmem:[%s762 + $0xaa] sm:$0xff]
      %v5505 = vld [vmem:[%s762 + $0xb2] sm:$0xff]
      %v5506 = vld [vmem:[%s762 + $0xc2] sm:$0xff]
      %v5507 = vld [vmem:[%s762 + $0xca] sm:$0xff]
      %v5508 = vld [vmem:[%s762 + $0xda] sm:$0xff]
      %v5509 = vld [vmem:[%s762 + $0xe2] sm:$0xff]
      %v5510 = vld [vmem:[%s762 + $0xf2] sm:$0xff]
      %v5511 = vld [vmem:[%s762 + $0xfa] sm:$0xff]
      %v5512 = vld [vmem:[%s762 + $0x10a] sm:$0xff]
      %v5513 = vld [vmem:[%s762 + $0x112] sm:$0xff]
      %v5514 = vld [vmem:[%s762 + $0x122] sm:$0xff]
      %v5515 = vld [vmem:[%s762 + $0x12a] sm:$0xff]
      %v5516 = vld [vmem:[%s762 + $0x13a] sm:$0xff]
      %v5517 = vld [vmem:[%s762 + $0x142] sm:$0xff]
      %v5518 = vld [vmem:[%s762 + $0x152] sm:$0xff]
      %v5519 = vld [vmem:[%s762 + $0x15a] sm:$0xff]
      %v5520 = vld [vmem:[%s762 + $0x16a] sm:$0xff]
      %v5521 = vld [vmem:[%s762 + $0x172] sm:$0xff]
      %v5522 = vld [vmem:[%s988] sm:$0xff]
      %v5523 = vld [vmem:[%s988 + $0x8] sm:$0xff]
      %v5524 = vld [vmem:[%s988 + $0x18] sm:$0xff]
      %v5525 = vld [vmem:[%s988 + $0x20] sm:$0xff]
      %v5526 = vld [vmem:[%s988 + $0x30] sm:$0xff]
      %v5527 = vld [vmem:[%s988 + $0x38] sm:$0xff]
      %v5528 = vld [vmem:[%s988 + $0x48] sm:$0xff]
      %v5529 = vld [vmem:[%s988 + $0x50] sm:$0xff]
      %v5530 = vld [vmem:[%s988 + $0x60] sm:$0xff]
      %v5531 = vld [vmem:[%s988 + $0x68] sm:$0xff]
      %v5532 = vld [vmem:[%s988 + $0x78] sm:$0xff]
      %v5533 = vld [vmem:[%s988 + $0x80] sm:$0xff]
      %v5534 = vld [vmem:[%s988 + $0x90] sm:$0xff]
      %v5535 = vld [vmem:[%s988 + $0x98] sm:$0xff]
      %v5536 = vld [vmem:[%s988 + $0xa8] sm:$0xff]
      %v5537 = vld [vmem:[%s988 + $0xb0] sm:$0xff]
      %v5538 = vld [vmem:[%s988 + $0xc0] sm:$0xff]
      %v5539 = vld [vmem:[%s988 + $0xc8] sm:$0xff]
      %v5540 = vld [vmem:[%s988 + $0xd8] sm:$0xff]
      %v5541 = vld [vmem:[%s988 + $0xe0] sm:$0xff]
      %v5542 = vld [vmem:[%s988 + $0xf0] sm:$0xff]
      %v5543 = vld [vmem:[%s988 + $0xf8] sm:$0xff]
      %v5544 = vld [vmem:[%s988 + $0x108] sm:$0xff]
      %v5545 = vld [vmem:[%s988 + $0x110] sm:$0xff]
      %v5546 = vld [vmem:[%s988 + $0x120] sm:$0xff]
      %v5547 = vld [vmem:[%s988 + $0x128] sm:$0xff]
      %v5548 = vld [vmem:[%s988 + $0x138] sm:$0xff]
      %v5549 = vld [vmem:[%s988 + $0x140] sm:$0xff]
      %v5550 = vld [vmem:[%s988 + $0x150] sm:$0xff]
      %v5551 = vld [vmem:[%s988 + $0x158] sm:$0xff]
      %v5552 = vld [vmem:[%s988 + $0x168] sm:$0xff]
      %v5553 = vld [vmem:[%s988 + $0x170] sm:$0xff]
      %v5554 = vld [vmem:[%s988 + $0x1] sm:$0xff]
      %v5555 = vld [vmem:[%s988 + $0x9] sm:$0xff]
      %v5556 = vld [vmem:[%s988 + $0x19] sm:$0xff]
      %v5557 = vld [vmem:[%s988 + $0x21] sm:$0xff]
      %v5558 = vld [vmem:[%s988 + $0x31] sm:$0xff]
      %v5559 = vld [vmem:[%s988 + $0x39] sm:$0xff]
      %v5560 = vld [vmem:[%s988 + $0x49] sm:$0xff]
      %v5561 = vld [vmem:[%s988 + $0x51] sm:$0xff]
      %v5562 = vld [vmem:[%s988 + $0x61] sm:$0xff]
      %v5563 = vld [vmem:[%s988 + $0x69] sm:$0xff]
      %v5564 = vld [vmem:[%s988 + $0x79] sm:$0xff]
      %v5565 = vld [vmem:[%s988 + $0x81] sm:$0xff]
      %v5566 = vld [vmem:[%s988 + $0x91] sm:$0xff]
      %v5567 = vld [vmem:[%s988 + $0x99] sm:$0xff]
      %v5568 = vld [vmem:[%s988 + $0xa9] sm:$0xff]
      %v5569 = vld [vmem:[%s988 + $0xb1] sm:$0xff]
      %v5570 = vld [vmem:[%s988 + $0xc1] sm:$0xff]
      %v5571 = vld [vmem:[%s988 + $0xc9] sm:$0xff]
      %v5572 = vld [vmem:[%s988 + $0xd9] sm:$0xff]
      %v5573 = vld [vmem:[%s988 + $0xe1] sm:$0xff]
      %v5574 = vld [vmem:[%s988 + $0xf1] sm:$0xff]
      %v5575 = vld [vmem:[%s988 + $0xf9] sm:$0xff]
      %v5576 = vld [vmem:[%s988 + $0x109] sm:$0xff]
      %v5577 = vld [vmem:[%s988 + $0x111] sm:$0xff]
      %v5578 = vld [vmem:[%s988 + $0x121] sm:$0xff]
      %v5579 = vld [vmem:[%s988 + $0x129] sm:$0xff]
      %v5580 = vld [vmem:[%s988 + $0x139] sm:$0xff]
      %v5581 = vld [vmem:[%s988 + $0x141] sm:$0xff]
      %v5582 = vld [vmem:[%s988 + $0x151] sm:$0xff]
      %v5583 = vld [vmem:[%s988 + $0x159] sm:$0xff]
      %v5584 = vld [vmem:[%s988 + $0x169] sm:$0xff]
      %v5585 = vld [vmem:[%s988 + $0x171] sm:$0xff]
      %v5586 = vld [vmem:[%s988 + $0x2] sm:$0xff]
      %v5587 = vld [vmem:[%s988 + $0xa] sm:$0xff]
      %v5588 = vld [vmem:[%s988 + $0x1a] sm:$0xff]
      %v5589 = vld [vmem:[%s988 + $0x22] sm:$0xff]
      %v5590 = vld [vmem:[%s988 + $0x32] sm:$0xff]
      %v5591 = vld [vmem:[%s988 + $0x3a] sm:$0xff]
      %v5592 = vld [vmem:[%s988 + $0x4a] sm:$0xff]
      %v5593 = vld [vmem:[%s988 + $0x52] sm:$0xff]
      %v5594 = vld [vmem:[%s988 + $0x62] sm:$0xff]
      %v5595 = vld [vmem:[%s988 + $0x6a] sm:$0xff]
      %v5596 = vld [vmem:[%s988 + $0x7a] sm:$0xff]
      %v5597 = vld [vmem:[%s988 + $0x82] sm:$0xff]
      %v5598 = vld [vmem:[%s988 + $0x92] sm:$0xff]
      %v5599 = vld [vmem:[%s988 + $0x9a] sm:$0xff]
      %v5600 = vld [vmem:[%s988 + $0xaa] sm:$0xff]
      %v5601 = vld [vmem:[%s988 + $0xb2] sm:$0xff]
      %v5602 = vld [vmem:[%s988 + $0xc2] sm:$0xff]
      %v5603 = vld [vmem:[%s988 + $0xca] sm:$0xff]
      %v5604 = vld [vmem:[%s988 + $0xda] sm:$0xff]
      %v5605 = vld [vmem:[%s988 + $0xe2] sm:$0xff]
      %v5606 = vld [vmem:[%s988 + $0xf2] sm:$0xff]
      %v5607 = vld [vmem:[%s988 + $0xfa] sm:$0xff]
      %v5608 = vld [vmem:[%s988 + $0x10a] sm:$0xff]
      %v5609 = vld [vmem:[%s988 + $0x112] sm:$0xff]
      %v5610 = vld [vmem:[%s988 + $0x122] sm:$0xff]
      %v5611 = vld [vmem:[%s988 + $0x12a] sm:$0xff]
      %v5612 = vld [vmem:[%s988 + $0x13a] sm:$0xff]
      %v5613 = vld [vmem:[%s988 + $0x142] sm:$0xff]
      %v5614 = vld [vmem:[%s988 + $0x152] sm:$0xff]
      %v5615 = vld [vmem:[%s988 + $0x15a] sm:$0xff]
      %v5616 = vld [vmem:[%s988 + $0x16a] sm:$0xff]
      %v5617 = vld [vmem:[%s988 + $0x172] sm:$0xff]
      %5650 = vrot.lane.b32.xlu0 %v5362, 16
      %v5651 = vpop.permute.xlu0 %5650
      %5652 = vrot.lane.b32.xlu0 %v5363, 16
      %v5653 = vpop.permute.xlu0 %5652
      %5654 = vrot.lane.b32.xlu0 %v5364, 16
      %v5655 = vpop.permute.xlu0 %5654
      %5656 = vrot.lane.b32.xlu0 %v5365, 16
      %v5657 = vpop.permute.xlu0 %5656
      %5658 = vrot.lane.b32.xlu0 %v5366, 16
      %v5659 = vpop.permute.xlu0 %5658
      %5660 = vrot.lane.b32.xlu0 %v5367, 16
      %v5661 = vpop.permute.xlu0 %5660
      %5662 = vrot.lane.b32.xlu0 %v5368, 16
      %v5663 = vpop.permute.xlu0 %5662
      %5664 = vrot.lane.b32.xlu0 %v5369, 16
      %v5665 = vpop.permute.xlu0 %5664
      %5666 = vrot.lane.b32.xlu0 %v5370, 16
      %v5667 = vpop.permute.xlu0 %5666
      %5668 = vrot.lane.b32.xlu0 %v5371, 16
      %v5669 = vpop.permute.xlu0 %5668
      %5670 = vrot.lane.b32.xlu0 %v5372, 16
      %v5671 = vpop.permute.xlu0 %5670
      %5672 = vrot.lane.b32.xlu0 %v5373, 16
      %v5673 = vpop.permute.xlu0 %5672
      %5674 = vrot.lane.b32.xlu0 %v5374, 16
      %v5675 = vpop.permute.xlu0 %5674
      %5676 = vrot.lane.b32.xlu0 %v5375, 16
      %v5677 = vpop.permute.xlu0 %5676
      %5678 = vrot.lane.b32.xlu0 %v5376, 16
      %v5679 = vpop.permute.xlu0 %5678
      %5680 = vrot.lane.b32.xlu0 %v5377, 16
      %v5681 = vpop.permute.xlu0 %5680
      %5682 = vrot.lane.b32.xlu0 %v5378, 16
      %v5683 = vpop.permute.xlu0 %5682
      %5684 = vrot.lane.b32.xlu0 %v5379, 16
      %v5685 = vpop.permute.xlu0 %5684
      %5686 = vrot.lane.b32.xlu0 %v5380, 16
      %v5687 = vpop.permute.xlu0 %5686
      %5688 = vrot.lane.b32.xlu0 %v5381, 16
      %v5689 = vpop.permute.xlu0 %5688
      %5690 = vrot.lane.b32.xlu0 %v5382, 16
      %v5691 = vpop.permute.xlu0 %5690
      %5692 = vrot.lane.b32.xlu0 %v5383, 16
      %v5693 = vpop.permute.xlu0 %5692
      %5694 = vrot.lane.b32.xlu0 %v5384, 16
      %v5695 = vpop.permute.xlu0 %5694
      %5696 = vrot.lane.b32.xlu0 %v5385, 16
      %v5697 = vpop.permute.xlu0 %5696
      %5698 = vrot.lane.b32.xlu0 %v5386, 16
      %v5699 = vpop.permute.xlu0 %5698
      %5700 = vrot.lane.b32.xlu0 %v5387, 16
      %v5701 = vpop.permute.xlu0 %5700
      %5702 = vrot.lane.b32.xlu0 %v5388, 16
      %v5703 = vpop.permute.xlu0 %5702
      %5704 = vrot.lane.b32.xlu0 %v5389, 16
      %v5705 = vpop.permute.xlu0 %5704
      %5706 = vrot.lane.b32.xlu0 %v5390, 16
      %v5707 = vpop.permute.xlu0 %5706
      %5708 = vrot.lane.b32.xlu0 %v5391, 16
      %v5709 = vpop.permute.xlu0 %5708
      %5710 = vrot.lane.b32.xlu0 %v5392, 16
      %v5711 = vpop.permute.xlu0 %5710
      %5712 = vrot.lane.b32.xlu0 %v5393, 16
      %v5713 = vpop.permute.xlu0 %5712
      %5778 = vrot.lane.b32.xlu0 %v5394, 32
      %v5779 = vpop.permute.xlu0 %5778
      %5780 = vrot.lane.b32.xlu0 %v5395, 32
      %v5781 = vpop.permute.xlu0 %5780
      %5782 = vrot.lane.b32.xlu0 %v5396, 32
      %v5783 = vpop.permute.xlu0 %5782
      %5784 = vrot.lane.b32.xlu0 %v5397, 32
      %v5785 = vpop.permute.xlu0 %5784
      %5786 = vrot.lane.b32.xlu0 %v5398, 32
      %v5787 = vpop.permute.xlu0 %5786
      %5788 = vrot.lane.b32.xlu0 %v5399, 32
      %v5789 = vpop.permute.xlu0 %5788
      %5790 = vrot.lane.b32.xlu0 %v5400, 32
      %v5791 = vpop.permute.xlu0 %5790
      %5792 = vrot.lane.b32.xlu0 %v5401, 32
      %v5793 = vpop.permute.xlu0 %5792
      %5794 = vrot.lane.b32.xlu0 %v5402, 32
      %v5795 = vpop.permute.xlu0 %5794
      %5796 = vrot.lane.b32.xlu0 %v5403, 32
      %v5797 = vpop.permute.xlu0 %5796
      %5798 = vrot.lane.b32.xlu0 %v5404, 32
      %v5799 = vpop.permute.xlu0 %5798
      %5800 = vrot.lane.b32.xlu0 %v5405, 32
      %v5801 = vpop.permute.xlu0 %5800
      %5802 = vrot.lane.b32.xlu0 %v5406, 32
      %v5803 = vpop.permute.xlu0 %5802
      %5804 = vrot.lane.b32.xlu0 %v5407, 32
      %v5805 = vpop.permute.xlu0 %5804
      %5806 = vrot.lane.b32.xlu0 %v5408, 32
      %v5807 = vpop.permute.xlu0 %5806
      %5808 = vrot.lane.b32.xlu0 %v5409, 32
      %v5809 = vpop.permute.xlu0 %5808
      %5810 = vrot.lane.b32.xlu0 %v5410, 32
      %v5811 = vpop.permute.xlu0 %5810
      %5812 = vrot.lane.b32.xlu0 %v5411, 32
      %v5813 = vpop.permute.xlu0 %5812
      %5814 = vrot.lane.b32.xlu0 %v5412, 32
      %v5815 = vpop.permute.xlu0 %5814
      %5816 = vrot.lane.b32.xlu0 %v5413, 32
      %v5817 = vpop.permute.xlu0 %5816
      %5818 = vrot.lane.b32.xlu0 %v5414, 32
      %v5819 = vpop.permute.xlu0 %5818
      %5820 = vrot.lane.b32.xlu0 %v5415, 32
      %v5821 = vpop.permute.xlu0 %5820
      %5822 = vrot.lane.b32.xlu0 %v5416, 32
      %v5823 = vpop.permute.xlu0 %5822
      %5824 = vrot.lane.b32.xlu0 %v5417, 32
      %v5825 = vpop.permute.xlu0 %5824
      %5826 = vrot.lane.b32.xlu0 %v5418, 32
      %v5827 = vpop.permute.xlu0 %5826
      %5828 = vrot.lane.b32.xlu0 %v5419, 32
      %v5829 = vpop.permute.xlu0 %5828
      %5830 = vrot.lane.b32.xlu0 %v5420, 32
      %v5831 = vpop.permute.xlu0 %5830
      %5832 = vrot.lane.b32.xlu0 %v5421, 32
      %v5833 = vpop.permute.xlu0 %5832
      %5834 = vrot.lane.b32.xlu0 %v5422, 32
      %v5835 = vpop.permute.xlu0 %5834
      %5836 = vrot.lane.b32.xlu0 %v5423, 32
      %v5837 = vpop.permute.xlu0 %5836
      %5838 = vrot.lane.b32.xlu0 %v5424, 32
      %v5839 = vpop.permute.xlu0 %5838
      %5840 = vrot.lane.b32.xlu0 %v5425, 32
      %v5841 = vpop.permute.xlu0 %5840
      %5906 = vrot.lane.b32.xlu0 %v5426, 48
      %v5907 = vpop.permute.xlu0 %5906
      %5908 = vrot.lane.b32.xlu0 %v5427, 48
      %v5909 = vpop.permute.xlu0 %5908
      %5910 = vrot.lane.b32.xlu0 %v5428, 48
      %v5911 = vpop.permute.xlu0 %5910
      %5912 = vrot.lane.b32.xlu0 %v5429, 48
      %v5913 = vpop.permute.xlu0 %5912
      %5914 = vrot.lane.b32.xlu0 %v5430, 48
      %v5915 = vpop.permute.xlu0 %5914
      %5916 = vrot.lane.b32.xlu0 %v5431, 48
      %v5917 = vpop.permute.xlu0 %5916
      %5918 = vrot.lane.b32.xlu0 %v5432, 48
      %v5919 = vpop.permute.xlu0 %5918
      %5920 = vrot.lane.b32.xlu0 %v5433, 48
      %v5921 = vpop.permute.xlu0 %5920
      %5922 = vrot.lane.b32.xlu0 %v5434, 48
      %v5923 = vpop.permute.xlu0 %5922
      %5924 = vrot.lane.b32.xlu0 %v5435, 48
      %v5925 = vpop.permute.xlu0 %5924
      %5926 = vrot.lane.b32.xlu0 %v5436, 48
      %v5927 = vpop.permute.xlu0 %5926
      %5928 = vrot.lane.b32.xlu0 %v5437, 48
      %v5929 = vpop.permute.xlu0 %5928
      %5930 = vrot.lane.b32.xlu0 %v5438, 48
      %v5931 = vpop.permute.xlu0 %5930
      %5932 = vrot.lane.b32.xlu0 %v5439, 48
      %v5933 = vpop.permute.xlu0 %5932
      %5934 = vrot.lane.b32.xlu0 %v5440, 48
      %v5935 = vpop.permute.xlu0 %5934
      %5936 = vrot.lane.b32.xlu0 %v5441, 48
      %v5937 = vpop.permute.xlu0 %5936
      %5938 = vrot.lane.b32.xlu0 %v5442, 48
      %v5939 = vpop.permute.xlu0 %5938
      %5940 = vrot.lane.b32.xlu0 %v5443, 48
      %v5941 = vpop.permute.xlu0 %5940
      %5942 = vrot.lane.b32.xlu0 %v5444, 48
      %v5943 = vpop.permute.xlu0 %5942
      %5944 = vrot.lane.b32.xlu0 %v5445, 48
      %v5945 = vpop.permute.xlu0 %5944
      %5946 = vrot.lane.b32.xlu0 %v5446, 48
      %v5947 = vpop.permute.xlu0 %5946
      %5948 = vrot.lane.b32.xlu0 %v5447, 48
      %v5949 = vpop.permute.xlu0 %5948
      %5950 = vrot.lane.b32.xlu0 %v5448, 48
      %v5951 = vpop.permute.xlu0 %5950
      %5952 = vrot.lane.b32.xlu0 %v5449, 48
      %v5953 = vpop.permute.xlu0 %5952
      %5954 = vrot.lane.b32.xlu0 %v5450, 48
      %v5955 = vpop.permute.xlu0 %5954
      %5956 = vrot.lane.b32.xlu0 %v5451, 48
      %v5957 = vpop.permute.xlu0 %5956
      %5958 = vrot.lane.b32.xlu0 %v5452, 48
      %v5959 = vpop.permute.xlu0 %5958
      %5960 = vrot.lane.b32.xlu0 %v5453, 48
      %v5961 = vpop.permute.xlu0 %5960
      %5962 = vrot.lane.b32.xlu0 %v5454, 48
      %v5963 = vpop.permute.xlu0 %5962
      %5964 = vrot.lane.b32.xlu0 %v5455, 48
      %v5965 = vpop.permute.xlu0 %5964
      %5966 = vrot.lane.b32.xlu0 %v5456, 48
      %v5967 = vpop.permute.xlu0 %5966
      %5968 = vrot.lane.b32.xlu0 %v5457, 48
      %v5969 = vpop.permute.xlu0 %5968
      %6034 = vrot.lane.b32.xlu0 %v5458, 64
      %v6035 = vpop.permute.xlu0 %6034
      %6036 = vrot.lane.b32.xlu0 %v5459, 64
      %v6037 = vpop.permute.xlu0 %6036
      %6038 = vrot.lane.b32.xlu0 %v5460, 64
      %v6039 = vpop.permute.xlu0 %6038
      %6040 = vrot.lane.b32.xlu0 %v5461, 64
      %v6041 = vpop.permute.xlu0 %6040
      %6042 = vrot.lane.b32.xlu0 %v5462, 64
      %v6043 = vpop.permute.xlu0 %6042
      %6044 = vrot.lane.b32.xlu0 %v5463, 64
      %v6045 = vpop.permute.xlu0 %6044
      %6046 = vrot.lane.b32.xlu0 %v5464, 64
      %v6047 = vpop.permute.xlu0 %6046
      %6048 = vrot.lane.b32.xlu0 %v5465, 64
      %v6049 = vpop.permute.xlu0 %6048
      %6050 = vrot.lane.b32.xlu0 %v5466, 64
      %v6051 = vpop.permute.xlu0 %6050
      %6052 = vrot.lane.b32.xlu0 %v5467, 64
      %v6053 = vpop.permute.xlu0 %6052
      %6054 = vrot.lane.b32.xlu0 %v5468, 64
      %v6055 = vpop.permute.xlu0 %6054
      %6056 = vrot.lane.b32.xlu0 %v5469, 64
      %v6057 = vpop.permute.xlu0 %6056
      %6058 = vrot.lane.b32.xlu0 %v5470, 64
      %v6059 = vpop.permute.xlu0 %6058
      %6060 = vrot.lane.b32.xlu0 %v5471, 64
      %v6061 = vpop.permute.xlu0 %6060
      %6062 = vrot.lane.b32.xlu0 %v5472, 64
      %v6063 = vpop.permute.xlu0 %6062
      %6064 = vrot.lane.b32.xlu0 %v5473, 64
      %v6065 = vpop.permute.xlu0 %6064
      %6066 = vrot.lane.b32.xlu0 %v5474, 64
      %v6067 = vpop.permute.xlu0 %6066
      %6068 = vrot.lane.b32.xlu0 %v5475, 64
      %v6069 = vpop.permute.xlu0 %6068
      %6070 = vrot.lane.b32.xlu0 %v5476, 64
      %v6071 = vpop.permute.xlu0 %6070
      %6072 = vrot.lane.b32.xlu0 %v5477, 64
      %v6073 = vpop.permute.xlu0 %6072
      %6074 = vrot.lane.b32.xlu0 %v5478, 64
      %v6075 = vpop.permute.xlu0 %6074
      %6076 = vrot.lane.b32.xlu0 %v5479, 64
      %v6077 = vpop.permute.xlu0 %6076
      %6078 = vrot.lane.b32.xlu0 %v5480, 64
      %v6079 = vpop.permute.xlu0 %6078
      %6080 = vrot.lane.b32.xlu0 %v5481, 64
      %v6081 = vpop.permute.xlu0 %6080
      %6082 = vrot.lane.b32.xlu0 %v5482, 64
      %v6083 = vpop.permute.xlu0 %6082
      %6084 = vrot.lane.b32.xlu0 %v5483, 64
      %v6085 = vpop.permute.xlu0 %6084
      %6086 = vrot.lane.b32.xlu0 %v5484, 64
      %v6087 = vpop.permute.xlu0 %6086
      %6088 = vrot.lane.b32.xlu0 %v5485, 64
      %v6089 = vpop.permute.xlu0 %6088
      %6090 = vrot.lane.b32.xlu0 %v5486, 64
      %v6091 = vpop.permute.xlu0 %6090
      %6092 = vrot.lane.b32.xlu0 %v5487, 64
      %v6093 = vpop.permute.xlu0 %6092
      %6094 = vrot.lane.b32.xlu0 %v5488, 64
      %v6095 = vpop.permute.xlu0 %6094
      %6096 = vrot.lane.b32.xlu0 %v5489, 64
      %v6097 = vpop.permute.xlu0 %6096
      %6162 = vrot.lane.b32.xlu0 %v5490, 80
      %v6163 = vpop.permute.xlu0 %6162
      %6164 = vrot.lane.b32.xlu0 %v5491, 80
      %v6165 = vpop.permute.xlu0 %6164
      %6166 = vrot.lane.b32.xlu0 %v5492, 80
      %v6167 = vpop.permute.xlu0 %6166
      %6168 = vrot.lane.b32.xlu0 %v5493, 80
      %v6169 = vpop.permute.xlu0 %6168
      %6170 = vrot.lane.b32.xlu0 %v5494, 80
      %v6171 = vpop.permute.xlu0 %6170
      %6172 = vrot.lane.b32.xlu0 %v5495, 80
      %v6173 = vpop.permute.xlu0 %6172
      %6174 = vrot.lane.b32.xlu0 %v5496, 80
      %v6175 = vpop.permute.xlu0 %6174
      %6176 = vrot.lane.b32.xlu0 %v5497, 80
      %v6177 = vpop.permute.xlu0 %6176
      %6178 = vrot.lane.b32.xlu0 %v5498, 80
      %v6179 = vpop.permute.xlu0 %6178
      %6180 = vrot.lane.b32.xlu0 %v5499, 80
      %v6181 = vpop.permute.xlu0 %6180
      %6182 = vrot.lane.b32.xlu0 %v5500, 80
      %v6183 = vpop.permute.xlu0 %6182
      %6184 = vrot.lane.b32.xlu0 %v5501, 80
      %v6185 = vpop.permute.xlu0 %6184
      %6186 = vrot.lane.b32.xlu0 %v5502, 80
      %v6187 = vpop.permute.xlu0 %6186
      %6188 = vrot.lane.b32.xlu0 %v5503, 80
      %v6189 = vpop.permute.xlu0 %6188
      %6190 = vrot.lane.b32.xlu0 %v5504, 80
      %v6191 = vpop.permute.xlu0 %6190
      %6192 = vrot.lane.b32.xlu0 %v5505, 80
      %v6193 = vpop.permute.xlu0 %6192
      %6194 = vrot.lane.b32.xlu0 %v5506, 80
      %v6195 = vpop.permute.xlu0 %6194
      %6196 = vrot.lane.b32.xlu0 %v5507, 80
      %v6197 = vpop.permute.xlu0 %6196
      %6198 = vrot.lane.b32.xlu0 %v5508, 80
      %v6199 = vpop.permute.xlu0 %6198
      %6200 = vrot.lane.b32.xlu0 %v5509, 80
      %v6201 = vpop.permute.xlu0 %6200
      %6202 = vrot.lane.b32.xlu0 %v5510, 80
      %v6203 = vpop.permute.xlu0 %6202
      %6204 = vrot.lane.b32.xlu0 %v5511, 80
      %v6205 = vpop.permute.xlu0 %6204
      %6206 = vrot.lane.b32.xlu0 %v5512, 80
      %v6207 = vpop.permute.xlu0 %6206
      %6208 = vrot.lane.b32.xlu0 %v5513, 80
      %v6209 = vpop.permute.xlu0 %6208
      %6210 = vrot.lane.b32.xlu0 %v5514, 80
      %v6211 = vpop.permute.xlu0 %6210
      %6212 = vrot.lane.b32.xlu0 %v5515, 80
      %v6213 = vpop.permute.xlu0 %6212
      %6214 = vrot.lane.b32.xlu0 %v5516, 80
      %v6215 = vpop.permute.xlu0 %6214
      %6216 = vrot.lane.b32.xlu0 %v5517, 80
      %v6217 = vpop.permute.xlu0 %6216
      %6218 = vrot.lane.b32.xlu0 %v5518, 80
      %v6219 = vpop.permute.xlu0 %6218
      %6220 = vrot.lane.b32.xlu0 %v5519, 80
      %v6221 = vpop.permute.xlu0 %6220
      %6222 = vrot.lane.b32.xlu0 %v5520, 80
      %v6223 = vpop.permute.xlu0 %6222
      %6224 = vrot.lane.b32.xlu0 %v5521, 80
      %v6225 = vpop.permute.xlu0 %6224
      %6290 = vrot.lane.b32.xlu0 %v5522, 96
      %v6291 = vpop.permute.xlu0 %6290
      %6292 = vrot.lane.b32.xlu0 %v5523, 96
      %v6293 = vpop.permute.xlu0 %6292
      %6294 = vrot.lane.b32.xlu0 %v5524, 96
      %v6295 = vpop.permute.xlu0 %6294
      %6296 = vrot.lane.b32.xlu0 %v5525, 96
      %v6297 = vpop.permute.xlu0 %6296
      %6298 = vrot.lane.b32.xlu0 %v5526, 96
      %v6299 = vpop.permute.xlu0 %6298
      %6300 = vrot.lane.b32.xlu0 %v5527, 96
      %v6301 = vpop.permute.xlu0 %6300
      %6302 = vrot.lane.b32.xlu0 %v5528, 96
      %v6303 = vpop.permute.xlu0 %6302
      %6304 = vrot.lane.b32.xlu0 %v5529, 96
      %v6305 = vpop.permute.xlu0 %6304
      %6306 = vrot.lane.b32.xlu0 %v5530, 96
      %v6307 = vpop.permute.xlu0 %6306
      %6308 = vrot.lane.b32.xlu0 %v5531, 96
      %v6309 = vpop.permute.xlu0 %6308
      %6310 = vrot.lane.b32.xlu0 %v5532, 96
      %v6311 = vpop.permute.xlu0 %6310
      %6312 = vrot.lane.b32.xlu0 %v5533, 96
      %v6313 = vpop.permute.xlu0 %6312
      %6314 = vrot.lane.b32.xlu0 %v5534, 96
      %v6315 = vpop.permute.xlu0 %6314
      %6316 = vrot.lane.b32.xlu0 %v5535, 96
      %v6317 = vpop.permute.xlu0 %6316
      %6318 = vrot.lane.b32.xlu0 %v5536, 96
      %v6319 = vpop.permute.xlu0 %6318
      %6320 = vrot.lane.b32.xlu0 %v5537, 96
      %v6321 = vpop.permute.xlu0 %6320
      %6322 = vrot.lane.b32.xlu0 %v5538, 96
      %v6323 = vpop.permute.xlu0 %6322
      %6324 = vrot.lane.b32.xlu0 %v5539, 96
      %v6325 = vpop.permute.xlu0 %6324
      %6326 = vrot.lane.b32.xlu0 %v5540, 96
      %v6327 = vpop.permute.xlu0 %6326
      %6328 = vrot.lane.b32.xlu0 %v5541, 96
      %v6329 = vpop.permute.xlu0 %6328
      %6330 = vrot.lane.b32.xlu0 %v5542, 96
      %v6331 = vpop.permute.xlu0 %6330
      %6332 = vrot.lane.b32.xlu0 %v5543, 96
      %v6333 = vpop.permute.xlu0 %6332
      %6334 = vrot.lane.b32.xlu0 %v5544, 96
      %v6335 = vpop.permute.xlu0 %6334
      %6336 = vrot.lane.b32.xlu0 %v5545, 96
      %v6337 = vpop.permute.xlu0 %6336
      %6338 = vrot.lane.b32.xlu0 %v5546, 96
      %v6339 = vpop.permute.xlu0 %6338
      %6340 = vrot.lane.b32.xlu0 %v5547, 96
      %v6341 = vpop.permute.xlu0 %6340
      %6342 = vrot.lane.b32.xlu0 %v5548, 96
      %v6343 = vpop.permute.xlu0 %6342
      %6344 = vrot.lane.b32.xlu0 %v5549, 96
      %v6345 = vpop.permute.xlu0 %6344
      %6346 = vrot.lane.b32.xlu0 %v5550, 96
      %v6347 = vpop.permute.xlu0 %6346
      %6348 = vrot.lane.b32.xlu0 %v5551, 96
      %v6349 = vpop.permute.xlu0 %6348
      %6350 = vrot.lane.b32.xlu0 %v5552, 96
      %v6351 = vpop.permute.xlu0 %6350
      %6352 = vrot.lane.b32.xlu0 %v5553, 96
      %v6353 = vpop.permute.xlu0 %6352
      %6418 = vrot.lane.b32.xlu0 %v5554, 112
      %v6419 = vpop.permute.xlu0 %6418
      %6420 = vrot.lane.b32.xlu0 %v5555, 112
      %v6421 = vpop.permute.xlu0 %6420
      %6422 = vrot.lane.b32.xlu0 %v5556, 112
      %v6423 = vpop.permute.xlu0 %6422
      %6424 = vrot.lane.b32.xlu0 %v5557, 112
      %v6425 = vpop.permute.xlu0 %6424
      %6426 = vrot.lane.b32.xlu0 %v5558, 112
      %v6427 = vpop.permute.xlu0 %6426
      %6428 = vrot.lane.b32.xlu0 %v5559, 112
      %v6429 = vpop.permute.xlu0 %6428
      %6430 = vrot.lane.b32.xlu0 %v5560, 112
      %v6431 = vpop.permute.xlu0 %6430
      %6432 = vrot.lane.b32.xlu0 %v5561, 112
      %v6433 = vpop.permute.xlu0 %6432
      %6434 = vrot.lane.b32.xlu0 %v5562, 112
      %v6435 = vpop.permute.xlu0 %6434
      %6436 = vrot.lane.b32.xlu0 %v5563, 112
      %v6437 = vpop.permute.xlu0 %6436
      %6438 = vrot.lane.b32.xlu0 %v5564, 112
      %v6439 = vpop.permute.xlu0 %6438
      %6440 = vrot.lane.b32.xlu0 %v5565, 112
      %v6441 = vpop.permute.xlu0 %6440
      %6442 = vrot.lane.b32.xlu0 %v5566, 112
      %v6443 = vpop.permute.xlu0 %6442
      %6444 = vrot.lane.b32.xlu0 %v5567, 112
      %v6445 = vpop.permute.xlu0 %6444
      %6446 = vrot.lane.b32.xlu0 %v5568, 112
      %v6447 = vpop.permute.xlu0 %6446
      %6448 = vrot.lane.b32.xlu0 %v5569, 112
      %v6449 = vpop.permute.xlu0 %6448
      %6450 = vrot.lane.b32.xlu0 %v5570, 112
      %v6451 = vpop.permute.xlu0 %6450
      %6452 = vrot.lane.b32.xlu0 %v5571, 112
      %v6453 = vpop.permute.xlu0 %6452
      %6454 = vrot.lane.b32.xlu0 %v5572, 112
      %v6455 = vpop.permute.xlu0 %6454
      %6456 = vrot.lane.b32.xlu0 %v5573, 112
      %v6457 = vpop.permute.xlu0 %6456
      %6458 = vrot.lane.b32.xlu0 %v5574, 112
      %v6459 = vpop.permute.xlu0 %6458
      %6460 = vrot.lane.b32.xlu0 %v5575, 112
      %v6461 = vpop.permute.xlu0 %6460
      %6462 = vrot.lane.b32.xlu0 %v5576, 112
      %v6463 = vpop.permute.xlu0 %6462
      %6464 = vrot.lane.b32.xlu0 %v5577, 112
      %v6465 = vpop.permute.xlu0 %6464
      %6466 = vrot.lane.b32.xlu0 %v5578, 112
      %v6467 = vpop.permute.xlu0 %6466
      %6468 = vrot.lane.b32.xlu0 %v5579, 112
      %v6469 = vpop.permute.xlu0 %6468
      %6470 = vrot.lane.b32.xlu0 %v5580, 112
      %v6471 = vpop.permute.xlu0 %6470
      %6472 = vrot.lane.b32.xlu0 %v5581, 112
      %v6473 = vpop.permute.xlu0 %6472
      %6474 = vrot.lane.b32.xlu0 %v5582, 112
      %v6475 = vpop.permute.xlu0 %6474
      %6476 = vrot.lane.b32.xlu0 %v5583, 112
      %v6477 = vpop.permute.xlu0 %6476
      %6478 = vrot.lane.b32.xlu0 %v5584, 112
      %v6479 = vpop.permute.xlu0 %6478
      %6480 = vrot.lane.b32.xlu0 %v5585, 112
      %v6481 = vpop.permute.xlu0 %6480
      %v6514 = vsel %vm658, %v5330, %v5651
      %v6515 = vsel %vm658, %v5331, %v5653
      %v6516 = vsel %vm658, %v5332, %v5655
      %v6517 = vsel %vm658, %v5333, %v5657
      %v6518 = vsel %vm658, %v5334, %v5659
      %v6519 = vsel %vm658, %v5335, %v5661
      %v6520 = vsel %vm658, %v5336, %v5663
      %v6521 = vsel %vm658, %v5337, %v5665
      %v6522 = vsel %vm658, %v5338, %v5667
      %v6523 = vsel %vm658, %v5339, %v5669
      %v6524 = vsel %vm658, %v5340, %v5671
      %v6525 = vsel %vm658, %v5341, %v5673
      %v6526 = vsel %vm658, %v5342, %v5675
      %v6527 = vsel %vm658, %v5343, %v5677
      %v6528 = vsel %vm658, %v5344, %v5679
      %v6529 = vsel %vm658, %v5345, %v5681
      %v6530 = vsel %vm658, %v5346, %v5683
      %v6531 = vsel %vm658, %v5347, %v5685
      %v6532 = vsel %vm658, %v5348, %v5687
      %v6533 = vsel %vm658, %v5349, %v5689
      %v6534 = vsel %vm658, %v5350, %v5691
      %v6535 = vsel %vm658, %v5351, %v5693
      %v6536 = vsel %vm658, %v5352, %v5695
      %v6537 = vsel %vm658, %v5353, %v5697
      %v6538 = vsel %vm658, %v5354, %v5699
      %v6539 = vsel %vm658, %v5355, %v5701
      %v6540 = vsel %vm658, %v5356, %v5703
      %v6541 = vsel %vm658, %v5357, %v5705
      %v6542 = vsel %vm658, %v5358, %v5707
      %v6543 = vsel %vm658, %v5359, %v5709
      %v6544 = vsel %vm658, %v5360, %v5711
      %v6545 = vsel %vm658, %v5361, %v5713
      %v6546 = vsel %vm2338, %v6514, %v5779
      %v6547 = vsel %vm2338, %v6515, %v5781
      %v6548 = vsel %vm2338, %v6516, %v5783
      %v6549 = vsel %vm2338, %v6517, %v5785
      %v6550 = vsel %vm2338, %v6518, %v5787
      %v6551 = vsel %vm2338, %v6519, %v5789
      %v6552 = vsel %vm2338, %v6520, %v5791
      %v6553 = vsel %vm2338, %v6521, %v5793
      %v6554 = vsel %vm2338, %v6522, %v5795
      %v6555 = vsel %vm2338, %v6523, %v5797
      %v6556 = vsel %vm2338, %v6524, %v5799
      %v6557 = vsel %vm2338, %v6525, %v5801
      %v6558 = vsel %vm2338, %v6526, %v5803
      %v6559 = vsel %vm2338, %v6527, %v5805
      %v6560 = vsel %vm2338, %v6528, %v5807
      %v6561 = vsel %vm2338, %v6529, %v5809
      %v6562 = vsel %vm2338, %v6530, %v5811
      %v6563 = vsel %vm2338, %v6531, %v5813
      %v6564 = vsel %vm2338, %v6532, %v5815
      %v6565 = vsel %vm2338, %v6533, %v5817
      %v6566 = vsel %vm2338, %v6534, %v5819
      %v6567 = vsel %vm2338, %v6535, %v5821
      %v6568 = vsel %vm2338, %v6536, %v5823
      %v6569 = vsel %vm2338, %v6537, %v5825
      %v6570 = vsel %vm2338, %v6538, %v5827
      %v6571 = vsel %vm2338, %v6539, %v5829
      %v6572 = vsel %vm2338, %v6540, %v5831
      %v6573 = vsel %vm2338, %v6541, %v5833
      %v6574 = vsel %vm2338, %v6542, %v5835
      %v6575 = vsel %vm2338, %v6543, %v5837
      %v6576 = vsel %vm2338, %v6544, %v5839
      %v6577 = vsel %vm2338, %v6545, %v5841
      %v6578 = vsel %vm4353, %v6546, %v5907
      %v6579 = vsel %vm4353, %v6547, %v5909
      %v6580 = vsel %vm4353, %v6548, %v5911
      %v6581 = vsel %vm4353, %v6549, %v5913
      %v6582 = vsel %vm4353, %v6550, %v5915
      %v6583 = vsel %vm4353, %v6551, %v5917
      %v6584 = vsel %vm4353, %v6552, %v5919
      %v6585 = vsel %vm4353, %v6553, %v5921
      %v6586 = vsel %vm4353, %v6554, %v5923
      %v6587 = vsel %vm4353, %v6555, %v5925
      %v6588 = vsel %vm4353, %v6556, %v5927
      %v6589 = vsel %vm4353, %v6557, %v5929
      %v6590 = vsel %vm4353, %v6558, %v5931
      %v6591 = vsel %vm4353, %v6559, %v5933
      %v6592 = vsel %vm4353, %v6560, %v5935
      %v6593 = vsel %vm4353, %v6561, %v5937
      %v6594 = vsel %vm4353, %v6562, %v5939
      %v6595 = vsel %vm4353, %v6563, %v5941
      %v6596 = vsel %vm4353, %v6564, %v5943
      %v6597 = vsel %vm4353, %v6565, %v5945
      %v6598 = vsel %vm4353, %v6566, %v5947
      %v6599 = vsel %vm4353, %v6567, %v5949
      %v6600 = vsel %vm4353, %v6568, %v5951
      %v6601 = vsel %vm4353, %v6569, %v5953
      %v6602 = vsel %vm4353, %v6570, %v5955
      %v6603 = vsel %vm4353, %v6571, %v5957
      %v6604 = vsel %vm4353, %v6572, %v5959
      %v6605 = vsel %vm4353, %v6573, %v5961
      %v6606 = vsel %vm4353, %v6574, %v5963
      %v6607 = vsel %vm4353, %v6575, %v5965
      %v6608 = vsel %vm4353, %v6576, %v5967
      %v6609 = vsel %vm4353, %v6577, %v5969
      %v6610 = vsel %vm4386, %v6578, %v6035
      %v6611 = vsel %vm4386, %v6579, %v6037
      %v6612 = vsel %vm4386, %v6580, %v6039
      %v6613 = vsel %vm4386, %v6581, %v6041
      %v6614 = vsel %vm4386, %v6582, %v6043
      %v6615 = vsel %vm4386, %v6583, %v6045
      %v6616 = vsel %vm4386, %v6584, %v6047
      %v6617 = vsel %vm4386, %v6585, %v6049
      %v6618 = vsel %vm4386, %v6586, %v6051
      %v6619 = vsel %vm4386, %v6587, %v6053
      %v6620 = vsel %vm4386, %v6588, %v6055
      %v6621 = vsel %vm4386, %v6589, %v6057
      %v6622 = vsel %vm4386, %v6590, %v6059
      %v6623 = vsel %vm4386, %v6591, %v6061
      %v6624 = vsel %vm4386, %v6592, %v6063
      %v6625 = vsel %vm4386, %v6593, %v6065
      %v6626 = vsel %vm4386, %v6594, %v6067
      %v6627 = vsel %vm4386, %v6595, %v6069
      %v6628 = vsel %vm4386, %v6596, %v6071
      %v6629 = vsel %vm4386, %v6597, %v6073
      %v6630 = vsel %vm4386, %v6598, %v6075
      %v6631 = vsel %vm4386, %v6599, %v6077
      %v6632 = vsel %vm4386, %v6600, %v6079
      %v6633 = vsel %vm4386, %v6601, %v6081
      %v6634 = vsel %vm4386, %v6602, %v6083
      %v6635 = vsel %vm4386, %v6603, %v6085
      %v6636 = vsel %vm4386, %v6604, %v6087
      %v6637 = vsel %vm4386, %v6605, %v6089
      %v6638 = vsel %vm4386, %v6606, %v6091
      %v6639 = vsel %vm4386, %v6607, %v6093
      %v6640 = vsel %vm4386, %v6608, %v6095
      %v6641 = vsel %vm4386, %v6609, %v6097
      %v6642 = vsel %vm4419, %v6610, %v6163
      %v6643 = vsel %vm4419, %v6611, %v6165
      %v6644 = vsel %vm4419, %v6612, %v6167
      %v6645 = vsel %vm4419, %v6613, %v6169
      %v6646 = vsel %vm4419, %v6614, %v6171
      %v6647 = vsel %vm4419, %v6615, %v6173
      %v6648 = vsel %vm4419, %v6616, %v6175
      %v6649 = vsel %vm4419, %v6617, %v6177
      %v6650 = vsel %vm4419, %v6618, %v6179
      %v6651 = vsel %vm4419, %v6619, %v6181
      %v6652 = vsel %vm4419, %v6620, %v6183
      %v6653 = vsel %vm4419, %v6621, %v6185
      %v6654 = vsel %vm4419, %v6622, %v6187
      %v6655 = vsel %vm4419, %v6623, %v6189
      %v6656 = vsel %vm4419, %v6624, %v6191
      %v6657 = vsel %vm4419, %v6625, %v6193
      %v6658 = vsel %vm4419, %v6626, %v6195
      %v6659 = vsel %vm4419, %v6627, %v6197
      %v6660 = vsel %vm4419, %v6628, %v6199
      %v6661 = vsel %vm4419, %v6629, %v6201
      %v6662 = vsel %vm4419, %v6630, %v6203
      %v6663 = vsel %vm4419, %v6631, %v6205
      %v6664 = vsel %vm4419, %v6632, %v6207
      %v6665 = vsel %vm4419, %v6633, %v6209
      %v6666 = vsel %vm4419, %v6634, %v6211
      %v6667 = vsel %vm4419, %v6635, %v6213
      %v6668 = vsel %vm4419, %v6636, %v6215
      %v6669 = vsel %vm4419, %v6637, %v6217
      %v6670 = vsel %vm4419, %v6638, %v6219
      %v6671 = vsel %vm4419, %v6639, %v6221
      %v6672 = vsel %vm4419, %v6640, %v6223
      %v6673 = vsel %vm4419, %v6641, %v6225
      %v6674 = vsel %vm4452, %v6642, %v6291
      %v6675 = vsel %vm4452, %v6643, %v6293
      %v6676 = vsel %vm4452, %v6644, %v6295
      %v6677 = vsel %vm4452, %v6645, %v6297
      %v6678 = vsel %vm4452, %v6646, %v6299
      %v6679 = vsel %vm4452, %v6647, %v6301
      %v6680 = vsel %vm4452, %v6648, %v6303
      %v6681 = vsel %vm4452, %v6649, %v6305
      %v6682 = vsel %vm4452, %v6650, %v6307
      %v6683 = vsel %vm4452, %v6651, %v6309
      %v6684 = vsel %vm4452, %v6652, %v6311
      %v6685 = vsel %vm4452, %v6653, %v6313
      %v6686 = vsel %vm4452, %v6654, %v6315
      %v6687 = vsel %vm4452, %v6655, %v6317
      %v6688 = vsel %vm4452, %v6656, %v6319
      %v6689 = vsel %vm4452, %v6657, %v6321
      %v6690 = vsel %vm4452, %v6658, %v6323
      %v6691 = vsel %vm4452, %v6659, %v6325
      %v6692 = vsel %vm4452, %v6660, %v6327
      %v6693 = vsel %vm4452, %v6661, %v6329
      %v6694 = vsel %vm4452, %v6662, %v6331
      %v6695 = vsel %vm4452, %v6663, %v6333
      %v6696 = vsel %vm4452, %v6664, %v6335
      %v6697 = vsel %vm4452, %v6665, %v6337
      %v6698 = vsel %vm4452, %v6666, %v6339
      %v6699 = vsel %vm4452, %v6667, %v6341
      %v6700 = vsel %vm4452, %v6668, %v6343
      %v6701 = vsel %vm4452, %v6669, %v6345
      %v6702 = vsel %vm4452, %v6670, %v6347
      %v6703 = vsel %vm4452, %v6671, %v6349
      %v6704 = vsel %vm4452, %v6672, %v6351
      %v6705 = vsel %vm4452, %v6673, %v6353
      %v6706 = vsel %vm4485, %v6674, %v6419
      %v6707 = vsel %vm4485, %v6675, %v6421
      %v6708 = vsel %vm4485, %v6676, %v6423
      %v6709 = vsel %vm4485, %v6677, %v6425
      %v6710 = vsel %vm4485, %v6678, %v6427
      %v6711 = vsel %vm4485, %v6679, %v6429
      %v6712 = vsel %vm4485, %v6680, %v6431
      %v6713 = vsel %vm4485, %v6681, %v6433
      %v6714 = vsel %vm4485, %v6682, %v6435
      %v6715 = vsel %vm4485, %v6683, %v6437
      %v6716 = vsel %vm4485, %v6684, %v6439
      %v6717 = vsel %vm4485, %v6685, %v6441
      %v6718 = vsel %vm4485, %v6686, %v6443
      %v6719 = vsel %vm4485, %v6687, %v6445
      %v6720 = vsel %vm4485, %v6688, %v6447
      %v6721 = vsel %vm4485, %v6689, %v6449
      %v6722 = vsel %vm4485, %v6690, %v6451
      %v6723 = vsel %vm4485, %v6691, %v6453
      %v6724 = vsel %vm4485, %v6692, %v6455
      %v6725 = vsel %vm4485, %v6693, %v6457
      %v6726 = vsel %vm4485, %v6694, %v6459
      %v6727 = vsel %vm4485, %v6695, %v6461
      %v6728 = vsel %vm4485, %v6696, %v6463
      %v6729 = vsel %vm4485, %v6697, %v6465
      %v6730 = vsel %vm4485, %v6698, %v6467
      %v6731 = vsel %vm4485, %v6699, %v6469
      %v6732 = vsel %vm4485, %v6700, %v6471
      %v6733 = vsel %vm4485, %v6701, %v6473
      %v6734 = vsel %vm4485, %v6702, %v6475
      %v6735 = vsel %vm4485, %v6703, %v6477
      %v6736 = vsel %vm4485, %v6704, %v6479
      %v6737 = vsel %vm4485, %v6705, %v6481
      %v6738 = vpack.c.bf16 %v6707, %v6706
      %v6739 = vpack.c.bf16 %v5587, %v5586
      %v6740 = vpack.c.bf16 %v6709, %v6708
      %v6741 = vpack.c.bf16 %v5589, %v5588
      %v6742 = vpack.c.bf16 %v6711, %v6710
      %v6743 = vpack.c.bf16 %v5591, %v5590
      %v6744 = vpack.c.bf16 %v6713, %v6712
      %v6745 = vpack.c.bf16 %v5593, %v5592
      %v6746 = vpack.c.bf16 %v6715, %v6714
      %v6747 = vpack.c.bf16 %v5595, %v5594
      %v6748 = vpack.c.bf16 %v6717, %v6716
      %v6749 = vpack.c.bf16 %v5597, %v5596
      %v6750 = vpack.c.bf16 %v6719, %v6718
      %v6751 = vpack.c.bf16 %v5599, %v5598
      %v6752 = vpack.c.bf16 %v6721, %v6720
      %v6753 = vpack.c.bf16 %v5601, %v5600
      %v6754 = vpack.c.bf16 %v6723, %v6722
      %v6755 = vpack.c.bf16 %v5603, %v5602
      %v6756 = vpack.c.bf16 %v6725, %v6724
      %v6757 = vpack.c.bf16 %v5605, %v5604
      %v6758 = vpack.c.bf16 %v6727, %v6726
      %v6759 = vpack.c.bf16 %v5607, %v5606
      %v6760 = vpack.c.bf16 %v6729, %v6728
      %v6761 = vpack.c.bf16 %v5609, %v5608
      %v6762 = vpack.c.bf16 %v6731, %v6730
      %v6763 = vpack.c.bf16 %v5611, %v5610
      %v6764 = vpack.c.bf16 %v6733, %v6732
      %v6765 = vpack.c.bf16 %v5613, %v5612
      %v6766 = vpack.c.bf16 %v6735, %v6734
      %v6767 = vpack.c.bf16 %v5615, %v5614
      %v6768 = vpack.c.bf16 %v6737, %v6736
      %v6769 = vpack.c.bf16 %v5617, %v5616
      %v6770 = vld [vmem:[%s9] sm:$0xf]
      %v6771 = vld [vmem:[%s9 + $0x4] sm:$0xf]
      %v6772 = vld [vmem:[%s9 + $0x8] sm:$0xf]
      %v6773 = vld [vmem:[%s9 + $0xc] sm:$0xf]
      %v6774 = vld [vmem:[%s9 + $0x10] sm:$0xf]
      %v6775 = vld [vmem:[%s9 + $0x14] sm:$0xf]
      %v6776 = vld [vmem:[%s9 + $0x18] sm:$0xf]
      %v6777 = vld [vmem:[%s9 + $0x1c] sm:$0xf]
      %v6778 = vld [vmem:[%s9 + $0x20] sm:$0xf]
      %v6779 = vld [vmem:[%s9 + $0x24] sm:$0xf]
      %v6780 = vld [vmem:[%s9 + $0x28] sm:$0xf]
      %v6781 = vld [vmem:[%s9 + $0x2c] sm:$0xf]
      %v6782 = vld [vmem:[%s9 + $0x30] sm:$0xf]
      %v6783 = vld [vmem:[%s9 + $0x34] sm:$0xf]
      %v6784 = vld [vmem:[%s9 + $0x38] sm:$0xf]
      %v6785 = vld [vmem:[%s9 + $0x3c] sm:$0xf]
      %v6786 = vld [vmem:[%s9 + $0x40] sm:$0xf]
      %v6787 = vld [vmem:[%s9 + $0x44] sm:$0xf]
      %v6788 = vld [vmem:[%s10] sm:$0x1]
      %v6790 = vlaneseq
      %v6791 = vshrl.u32 %v6790, 7
      %v6792 = vsub.s32 0, %v6791
      %v6793 = vrot.slane %v6788, %v6792
      %v6813 = vunpack.c.l.b16 %v6770
      %v6814 = vunpack.c.l.b16 %v6771
      %v6815 = vunpack.c.l.b16 %v6772
      %v6816 = vunpack.c.l.b16 %v6773
      %v6817 = vunpack.c.l.b16 %v6774
      %v6818 = vunpack.c.l.b16 %v6775
      %v6819 = vunpack.c.l.b16 %v6776
      %v6820 = vunpack.c.l.b16 %v6777
      %v6821 = vunpack.c.l.b16 %v6778
      %v6822 = vunpack.c.l.b16 %v6779
      %v6823 = vunpack.c.l.b16 %v6780
      %v6824 = vunpack.c.l.b16 %v6781
      %v6825 = vunpack.c.l.b16 %v6782
      %v6826 = vunpack.c.l.b16 %v6783
      %v6827 = vunpack.c.l.b16 %v6784
      %v6828 = vunpack.c.l.b16 %v6785
      %v6829 = vunpack.c.l.b16 %v6786
      %v6830 = vunpack.c.l.b16 %v6787
      %v6831 = vpack.c.b16 %v6814, %v6813
      %v6832 = vpack.c.b16 %v6816, %v6815
      %v6833 = vpack.c.b16 %v6818, %v6817
      %v6834 = vpack.c.b16 %v6820, %v6819
      %v6835 = vpack.c.b16 %v6822, %v6821
      %v6836 = vpack.c.b16 %v6824, %v6823
      %v6837 = vpack.c.b16 %v6826, %v6825
      %v6838 = vpack.c.b16 %v6828, %v6827
      %v6839 = vpack.c.b16 %v6830, %v6829
      %v6850 = vsel %vm658, %v6739, 0
      %v6853 = vsel %vm658, %v6741, 0
      %v6856 = vsel %vm658, %v6743, 0
      %v6859 = vsel %vm658, %v6745, 0
      %v6862 = vsel %vm658, %v6747, 0
      %v6865 = vsel %vm658, %v6749, 0
      %v6868 = vsel %vm658, %v6751, 0
      %v6871 = vsel %vm658, %v6753, 0
      %v6874 = vsel %vm658, %v6755, 0
      %v6877 = vsel %vm658, %v6757, 0
      %v6880 = vsel %vm658, %v6759, 0
      %v6883 = vsel %vm658, %v6761, 0
      %v6886 = vsel %vm658, %v6763, 0
      %v6889 = vsel %vm658, %v6765, 0
      %v6892 = vsel %vm658, %v6767, 0
      %v6895 = vsel %vm658, %v6769, 0
      %6897 = vmatprep.subr.bf16.mxu0 0
      %6898 = vmatpush1.bf16.msra.mxu0 %v6838
      %6899 = vmatprep.subr.bf16.mxu0 0
      %6900 = vmatpush1.bf16.msra.mxu0 %v6837
      %6901 = vmatprep.subr.bf16.mxu0 0
      %6902 = vmatpush1.bf16.msra.mxu0 %v6836
      %6903 = vmatprep.subr.bf16.mxu0 0
      %6904 = vmatpush1.bf16.msra.mxu0 %v6835
      %6905 = vmatprep.subr.bf16.mxu0 0
      %6906 = vmatpush1.bf16.msra.mxu0 %v6834
      %6907 = vmatprep.subr.bf16.mxu0 0
      %6908 = vmatpush1.bf16.msra.mxu0 %v6833
      %6909 = vmatprep.subr.bf16.mxu0 0
      %6910 = vmatpush1.bf16.msra.mxu0 %v6832
      %6911 = vmatprep.subr.bf16.mxu0 0
      %6912 = vmatpush1.bf16.msra.mxu0 %v6831
      %6913 = vmatprep.subr.bf16.mxu0 0
      %6914 = vmatpush2.bf16.msra.mxu0 0
      %6915 = vmatprep.subr.bf16.mxu0 0
      %6916 = vmatpush2.bf16.msra.mxu0 0
      %6917 = vmatprep.subr.bf16.mxu0 0
      %6918 = vmatpush2.bf16.msra.mxu0 0
      %6919 = vmatprep.subr.bf16.mxu0 0
      %6920 = vmatpush2.bf16.msra.mxu0 0
      %6921 = vmatprep.subr.bf16.mxu0 0
      %6922 = vmatpush2.bf16.msra.mxu0 0
      %6923 = vmatprep.subr.bf16.mxu0 0
      %6924 = vmatpush2.bf16.msra.mxu0 0
      %6925 = vmatprep.subr.bf16.mxu0 0
      %6926 = vmatpush2.bf16.msra.mxu0 0
      %6927 = vmatprep.subr.bf16.mxu0 0
      %6928 = vmatpush2.bf16.msra.mxu0 %v6839
      %6929 = vmatprep.mubr.bf16.mxu0 %v6850
      %6930 = vmatmul.mubr.bf16.gmra.mxu0 %v6738
      %v6931 = vpop.f32.mrf.mxu0
      %v6932 = vadd.f32 %v6793, %v6931
      %v6933 = vpop.f32.mrf.mxu0
      %v6934 = vpop.f32.mrf.mxu0
      %v6935 = vadd.f32 %v6793, %v6934
      %v6936 = vpop.f32.mrf.mxu0
      %6937 = vmatprep.mubr.bf16.mxu0 %v6853
      %6938 = vmatmul.mubr.bf16.gmra.mxu0 %v6740
      %v6939 = vpop.f32.mrf.mxu0
      %v6940 = vadd.f32 %v6793, %v6939
      %v6941 = vpop.f32.mrf.mxu0
      %v6942 = vpop.f32.mrf.mxu0
      %v6943 = vadd.f32 %v6793, %v6942
      %v6944 = vpop.f32.mrf.mxu0
      %6945 = vmatprep.mubr.bf16.mxu0 %v6856
      %6946 = vmatmul.mubr.bf16.gmra.mxu0 %v6742
      %v6947 = vpop.f32.mrf.mxu0
      %v6948 = vadd.f32 %v6793, %v6947
      %v6949 = vpop.f32.mrf.mxu0
      %v6950 = vpop.f32.mrf.mxu0
      %v6951 = vadd.f32 %v6793, %v6950
      %v6952 = vpop.f32.mrf.mxu0
      %6953 = vmatprep.mubr.bf16.mxu0 %v6859
      %6954 = vmatmul.mubr.bf16.gmra.mxu0 %v6744
      %v6955 = vpop.f32.mrf.mxu0
      %v6956 = vadd.f32 %v6793, %v6955
      %v6957 = vpop.f32.mrf.mxu0
      %v6958 = vpop.f32.mrf.mxu0
      %v6959 = vadd.f32 %v6793, %v6958
      %v6960 = vpop.f32.mrf.mxu0
      %6961 = vmatprep.mubr.bf16.mxu0 %v6862
      %6962 = vmatmul.mubr.bf16.gmra.mxu0 %v6746
      %v6963 = vpop.f32.mrf.mxu0
      %v6964 = vadd.f32 %v6793, %v6963
      %v6965 = vpop.f32.mrf.mxu0
      %v6966 = vpop.f32.mrf.mxu0
      %v6967 = vadd.f32 %v6793, %v6966
      %v6968 = vpop.f32.mrf.mxu0
      %6969 = vmatprep.mubr.bf16.mxu0 %v6865
      %6970 = vmatmul.mubr.bf16.gmra.mxu0 %v6748
      %v6971 = vpop.f32.mrf.mxu0
      %v6972 = vadd.f32 %v6793, %v6971
      %v6973 = vpop.f32.mrf.mxu0
      %v6974 = vpop.f32.mrf.mxu0
      %v6975 = vadd.f32 %v6793, %v6974
      %v6976 = vpop.f32.mrf.mxu0
      %6977 = vmatprep.mubr.bf16.mxu0 %v6868
      %6978 = vmatmul.mubr.bf16.gmra.mxu0 %v6750
      %v6979 = vpop.f32.mrf.mxu0
      %v6980 = vadd.f32 %v6793, %v6979
      %v6981 = vpop.f32.mrf.mxu0
      %v6982 = vpop.f32.mrf.mxu0
      %v6983 = vadd.f32 %v6793, %v6982
      %v6984 = vpop.f32.mrf.mxu0
      %6985 = vmatprep.mubr.bf16.mxu0 %v6871
      %6986 = vmatmul.mubr.bf16.gmra.mxu0 %v6752
      %v6987 = vpop.f32.mrf.mxu0
      %v6988 = vadd.f32 %v6793, %v6987
      %v6989 = vpop.f32.mrf.mxu0
      %v6990 = vpop.f32.mrf.mxu0
      %v6991 = vadd.f32 %v6793, %v6990
      %v6992 = vpop.f32.mrf.mxu0
      %6993 = vmatprep.mubr.bf16.mxu0 %v6874
      %6994 = vmatmul.mubr.bf16.gmra.mxu0 %v6754
      %v6995 = vpop.f32.mrf.mxu0
      %v6996 = vadd.f32 %v6793, %v6995
      %v6997 = vpop.f32.mrf.mxu0
      %v6998 = vpop.f32.mrf.mxu0
      %v6999 = vadd.f32 %v6793, %v6998
      %v7000 = vpop.f32.mrf.mxu0
      %7001 = vmatprep.mubr.bf16.mxu0 %v6877
      %7002 = vmatmul.mubr.bf16.gmra.mxu0 %v6756
      %v7003 = vpop.f32.mrf.mxu0
      %v7004 = vadd.f32 %v6793, %v7003
      %v7005 = vpop.f32.mrf.mxu0
      %v7006 = vpop.f32.mrf.mxu0
      %v7007 = vadd.f32 %v6793, %v7006
      %v7008 = vpop.f32.mrf.mxu0
      %7009 = vmatprep.mubr.bf16.mxu0 %v6880
      %7010 = vmatmul.mubr.bf16.gmra.mxu0 %v6758
      %v7011 = vpop.f32.mrf.mxu0
      %v7012 = vadd.f32 %v6793, %v7011
      %v7013 = vpop.f32.mrf.mxu0
      %v7014 = vpop.f32.mrf.mxu0
      %v7015 = vadd.f32 %v6793, %v7014
      %v7016 = vpop.f32.mrf.mxu0
      %7017 = vmatprep.mubr.bf16.mxu0 %v6883
      %7018 = vmatmul.mubr.bf16.gmra.mxu0 %v6760
      %v7019 = vpop.f32.mrf.mxu0
      %v7020 = vadd.f32 %v6793, %v7019
      %v7021 = vpop.f32.mrf.mxu0
      %v7022 = vpop.f32.mrf.mxu0
      %v7023 = vadd.f32 %v6793, %v7022
      %v7024 = vpop.f32.mrf.mxu0
      %7025 = vmatprep.mubr.bf16.mxu0 %v6886
      %7026 = vmatmul.mubr.bf16.gmra.mxu0 %v6762
      %v7027 = vpop.f32.mrf.mxu0
      %v7028 = vadd.f32 %v6793, %v7027
      %v7029 = vpop.f32.mrf.mxu0
      %v7030 = vpop.f32.mrf.mxu0
      %v7031 = vadd.f32 %v6793, %v7030
      %v7032 = vpop.f32.mrf.mxu0
      %7033 = vmatprep.mubr.bf16.mxu0 %v6889
      %7034 = vmatmul.mubr.bf16.gmra.mxu0 %v6764
      %v7035 = vpop.f32.mrf.mxu0
      %v7036 = vadd.f32 %v6793, %v7035
      %v7037 = vpop.f32.mrf.mxu0
      %v7038 = vpop.f32.mrf.mxu0
      %v7039 = vadd.f32 %v6793, %v7038
      %v7040 = vpop.f32.mrf.mxu0
      %7041 = vmatprep.mubr.bf16.mxu0 %v6892
      %7042 = vmatmul.mubr.bf16.gmra.mxu0 %v6766
      %v7043 = vpop.f32.mrf.mxu0
      %v7044 = vadd.f32 %v6793, %v7043
      %v7045 = vpop.f32.mrf.mxu0
      %v7046 = vpop.f32.mrf.mxu0
      %v7047 = vadd.f32 %v6793, %v7046
      %v7048 = vpop.f32.mrf.mxu0
      %7049 = vmatprep.mubr.bf16.mxu0 %v6895
      %7050 = vmatmul.mubr.bf16.gmra.mxu0 %v6768
      %v7051 = vpop.f32.mrf.mxu0
      %v7052 = vadd.f32 %v6793, %v7051
      %v7053 = vpop.f32.mrf.mxu0
      %v7054 = vpop.f32.mrf.mxu0
      %v7055 = vadd.f32 %v6793, %v7054
      %v7056 = vpop.f32.mrf.mxu0
      %7057 = vdwg.mxu0
      %v7058 = vsel %vm2141, %v6932, 0.0
      %v7059 = vsel %vm2141, %v6935, 0.0
      %v7060 = vadd.f32 %v7058, %v7059
      %v7061 = vsel %vm2141, %v6940, 0.0
      %v7062 = vadd.f32 %v7060, %v7061
      %v7063 = vsel %vm2141, %v6943, 0.0
      %v7064 = vadd.f32 %v7062, %v7063
      %v7065 = vsel %vm2141, %v6948, 0.0
      %v7066 = vadd.f32 %v7064, %v7065
      %v7067 = vsel %vm2141, %v6951, 0.0
      %v7068 = vadd.f32 %v7066, %v7067
      %v7069 = vsel %vm2141, %v6956, 0.0
      %v7070 = vadd.f32 %v7068, %v7069
      %v7071 = vsel %vm2141, %v6959, 0.0
      %v7072 = vadd.f32 %v7070, %v7071
      %v7073 = vsel %vm2141, %v6964, 0.0
      %v7074 = vadd.f32 %v7072, %v7073
      %v7075 = vsel %vm2141, %v6967, 0.0
      %v7076 = vadd.f32 %v7074, %v7075
      %v7077 = vsel %vm2141, %v6972, 0.0
      %v7078 = vadd.f32 %v7076, %v7077
      %v7079 = vsel %vm2141, %v6975, 0.0
      %v7080 = vadd.f32 %v7078, %v7079
      %v7081 = vsel %vm2141, %v6980, 0.0
      %v7082 = vadd.f32 %v7080, %v7081
      %v7083 = vsel %vm2141, %v6983, 0.0
      %v7084 = vadd.f32 %v7082, %v7083
      %v7085 = vsel %vm2141, %v6988, 0.0
      %v7086 = vadd.f32 %v7084, %v7085
      %v7087 = vsel %vm2141, %v6991, 0.0
      %v7088 = vadd.f32 %v7086, %v7087
      %v7089 = vsel %vm2141, %v6996, 0.0
      %v7090 = vadd.f32 %v7088, %v7089
      %v7091 = vsel %vm2141, %v6999, 0.0
      %v7092 = vadd.f32 %v7090, %v7091
      %v7093 = vsel %vm2141, %v7004, 0.0
      %v7094 = vadd.f32 %v7092, %v7093
      %v7095 = vsel %vm2141, %v7007, 0.0
      %v7096 = vadd.f32 %v7094, %v7095
      %v7097 = vsel %vm2141, %v7012, 0.0
      %v7098 = vadd.f32 %v7096, %v7097
      %v7099 = vsel %vm2141, %v7015, 0.0
      %v7100 = vadd.f32 %v7098, %v7099
      %v7101 = vsel %vm2141, %v7020, 0.0
      %v7102 = vadd.f32 %v7100, %v7101
      %v7103 = vsel %vm2141, %v7023, 0.0
      %v7104 = vadd.f32 %v7102, %v7103
      %v7105 = vsel %vm2141, %v7028, 0.0
      %v7106 = vadd.f32 %v7104, %v7105
      %v7107 = vsel %vm2141, %v7031, 0.0
      %v7108 = vadd.f32 %v7106, %v7107
      %v7109 = vsel %vm2141, %v7036, 0.0
      %v7110 = vadd.f32 %v7108, %v7109
      %v7111 = vsel %vm2141, %v7039, 0.0
      %v7112 = vadd.f32 %v7110, %v7111
      %v7113 = vsel %vm2141, %v7044, 0.0
      %v7114 = vadd.f32 %v7112, %v7113
      %v7115 = vsel %vm2141, %v7047, 0.0
      %v7116 = vadd.f32 %v7114, %v7115
      %v7117 = vsel %vm2141, %v7052, 0.0
      %v7118 = vadd.f32 %v7116, %v7117
      %v7119 = vsel %vm2141, %v7055, 0.0
      %v7120 = vadd.f32 %v7118, %v7119
      %v7121 = vrot.slane %v7120, 4
      %v7122 = vadd.f32 %v7120, %v7121
      %v7123 = vrot.slane %v7122, 2
      %v7124 = vadd.f32 %v7122, %v7123
      %v7125 = vrot.slane %v7124, 1
      %v7126 = vadd.f32 %v7124, %v7125
      %v7127 = vmul.f32 %v7126, %v2697
      %v7128 = vsub.f32 %v6932, %v7127
      %v7129 = vsub.f32 %v6935, %v7127
      %v7130 = vsub.f32 %v6940, %v7127
      %v7131 = vsub.f32 %v6943, %v7127
      %v7132 = vsub.f32 %v6948, %v7127
      %v7133 = vsub.f32 %v6951, %v7127
      %v7134 = vsub.f32 %v6956, %v7127
      %v7135 = vsub.f32 %v6959, %v7127
      %v7136 = vsub.f32 %v6964, %v7127
      %v7137 = vsub.f32 %v6967, %v7127
      %v7138 = vsub.f32 %v6972, %v7127
      %v7139 = vsub.f32 %v6975, %v7127
      %v7140 = vsub.f32 %v6980, %v7127
      %v7141 = vsub.f32 %v6983, %v7127
      %v7142 = vsub.f32 %v6988, %v7127
      %v7143 = vsub.f32 %v6991, %v7127
      %v7144 = vsub.f32 %v6996, %v7127
      %v7145 = vsub.f32 %v6999, %v7127
      %v7146 = vsub.f32 %v7004, %v7127
      %v7147 = vsub.f32 %v7007, %v7127
      %v7148 = vsub.f32 %v7012, %v7127
      %v7149 = vsub.f32 %v7015, %v7127
      %v7150 = vsub.f32 %v7020, %v7127
      %v7151 = vsub.f32 %v7023, %v7127
      %v7152 = vsub.f32 %v7028, %v7127
      %v7153 = vsub.f32 %v7031, %v7127
      %v7154 = vsub.f32 %v7036, %v7127
      %v7155 = vsub.f32 %v7039, %v7127
      %v7156 = vsub.f32 %v7044, %v7127
      %v7157 = vsub.f32 %v7047, %v7127
      %v7158 = vsub.f32 %v7052, %v7127
      %v7159 = vsub.f32 %v7055, %v7127
      %v7160 = vmul.f32 %v7128, %v7128
      %v7161 = vmul.f32 %v7129, %v7129
      %v7162 = vmul.f32 %v7130, %v7130
      %v7163 = vmul.f32 %v7131, %v7131
      %v7164 = vmul.f32 %v7132, %v7132
      %v7165 = vmul.f32 %v7133, %v7133
      %v7166 = vmul.f32 %v7134, %v7134
      %v7167 = vmul.f32 %v7135, %v7135
      %v7168 = vmul.f32 %v7136, %v7136
      %v7169 = vmul.f32 %v7137, %v7137
      %v7170 = vmul.f32 %v7138, %v7138
      %v7171 = vmul.f32 %v7139, %v7139
      %v7172 = vmul.f32 %v7140, %v7140
      %v7173 = vmul.f32 %v7141, %v7141
      %v7174 = vmul.f32 %v7142, %v7142
      %v7175 = vmul.f32 %v7143, %v7143
      %v7176 = vmul.f32 %v7144, %v7144
      %v7177 = vmul.f32 %v7145, %v7145
      %v7178 = vmul.f32 %v7146, %v7146
      %v7179 = vmul.f32 %v7147, %v7147
      %v7180 = vmul.f32 %v7148, %v7148
      %v7181 = vmul.f32 %v7149, %v7149
      %v7182 = vmul.f32 %v7150, %v7150
      %v7183 = vmul.f32 %v7151, %v7151
      %v7184 = vmul.f32 %v7152, %v7152
      %v7185 = vmul.f32 %v7153, %v7153
      %v7186 = vmul.f32 %v7154, %v7154
      %v7187 = vmul.f32 %v7155, %v7155
      %v7188 = vmul.f32 %v7156, %v7156
      %v7189 = vmul.f32 %v7157, %v7157
      %v7190 = vmul.f32 %v7158, %v7158
      %v7191 = vmul.f32 %v7159, %v7159
      %v7192 = vsel %vm2141, %v7160, 0.0
      %v7193 = vsel %vm2141, %v7161, 0.0
      %v7194 = vadd.f32 %v7192, %v7193
      %v7195 = vsel %vm2141, %v7162, 0.0
      %v7196 = vadd.f32 %v7194, %v7195
      %v7197 = vsel %vm2141, %v7163, 0.0
      %v7198 = vadd.f32 %v7196, %v7197
      %v7199 = vsel %vm2141, %v7164, 0.0
      %v7200 = vadd.f32 %v7198, %v7199
      %v7201 = vsel %vm2141, %v7165, 0.0
      %v7202 = vadd.f32 %v7200, %v7201
      %v7203 = vsel %vm2141, %v7166, 0.0
      %v7204 = vadd.f32 %v7202, %v7203
      %v7205 = vsel %vm2141, %v7167, 0.0
      %v7206 = vadd.f32 %v7204, %v7205
      %v7207 = vsel %vm2141, %v7168, 0.0
      %v7208 = vadd.f32 %v7206, %v7207
      %v7209 = vsel %vm2141, %v7169, 0.0
      %v7210 = vadd.f32 %v7208, %v7209
      %v7211 = vsel %vm2141, %v7170, 0.0
      %v7212 = vadd.f32 %v7210, %v7211
      %v7213 = vsel %vm2141, %v7171, 0.0
      %v7214 = vadd.f32 %v7212, %v7213
      %v7215 = vsel %vm2141, %v7172, 0.0
      %v7216 = vadd.f32 %v7214, %v7215
      %v7217 = vsel %vm2141, %v7173, 0.0
      %v7218 = vadd.f32 %v7216, %v7217
      %v7219 = vsel %vm2141, %v7174, 0.0
      %v7220 = vadd.f32 %v7218, %v7219
      %v7221 = vsel %vm2141, %v7175, 0.0
      %v7222 = vadd.f32 %v7220, %v7221
      %v7223 = vsel %vm2141, %v7176, 0.0
      %v7224 = vadd.f32 %v7222, %v7223
      %v7225 = vsel %vm2141, %v7177, 0.0
      %v7226 = vadd.f32 %v7224, %v7225
      %v7227 = vsel %vm2141, %v7178, 0.0
      %v7228 = vadd.f32 %v7226, %v7227
      %v7229 = vsel %vm2141, %v7179, 0.0
      %v7230 = vadd.f32 %v7228, %v7229
      %v7231 = vsel %vm2141, %v7180, 0.0
      %v7232 = vadd.f32 %v7230, %v7231
      %v7233 = vsel %vm2141, %v7181, 0.0
      %v7234 = vadd.f32 %v7232, %v7233
      %v7235 = vsel %vm2141, %v7182, 0.0
      %v7236 = vadd.f32 %v7234, %v7235
      %v7237 = vsel %vm2141, %v7183, 0.0
      %v7238 = vadd.f32 %v7236, %v7237
      %v7239 = vsel %vm2141, %v7184, 0.0
      %v7240 = vadd.f32 %v7238, %v7239
      %v7241 = vsel %vm2141, %v7185, 0.0
      %v7242 = vadd.f32 %v7240, %v7241
      %v7243 = vsel %vm2141, %v7186, 0.0
      %v7244 = vadd.f32 %v7242, %v7243
      %v7245 = vsel %vm2141, %v7187, 0.0
      %v7246 = vadd.f32 %v7244, %v7245
      %v7247 = vsel %vm2141, %v7188, 0.0
      %v7248 = vadd.f32 %v7246, %v7247
      %v7249 = vsel %vm2141, %v7189, 0.0
      %v7250 = vadd.f32 %v7248, %v7249
      %v7251 = vsel %vm2141, %v7190, 0.0
      %v7252 = vadd.f32 %v7250, %v7251
      %v7253 = vsel %vm2141, %v7191, 0.0
      %v7254 = vadd.f32 %v7252, %v7253
      %v7255 = vrot.slane %v7254, 4
      %v7256 = vadd.f32 %v7254, %v7255
      %v7257 = vrot.slane %v7256, 2
      %v7258 = vadd.f32 %v7256, %v7257
      %v7259 = vrot.slane %v7258, 1
      %v7260 = vadd.f32 %v7258, %v7259
      %v7261 = vmul.f32 %v7260, %v2697
      %v7262 = vadd.f32 %v7261, 1e-05
      %v7263 = vrsqrt.pop %v7262
      %v7264 = vmul.f32 %v7128, %v7263
      %v7265 = vmul.f32 %v7129, %v7263
      %v7266 = vmul.f32 %v7130, %v7263
      %v7267 = vmul.f32 %v7131, %v7263
      %v7268 = vmul.f32 %v7132, %v7263
      %v7269 = vmul.f32 %v7133, %v7263
      %v7270 = vmul.f32 %v7134, %v7263
      %v7271 = vmul.f32 %v7135, %v7263
      %v7272 = vmul.f32 %v7136, %v7263
      %v7273 = vmul.f32 %v7137, %v7263
      %v7274 = vmul.f32 %v7138, %v7263
      %v7275 = vmul.f32 %v7139, %v7263
      %v7276 = vmul.f32 %v7140, %v7263
      %v7277 = vmul.f32 %v7141, %v7263
      %v7278 = vmul.f32 %v7142, %v7263
      %v7279 = vmul.f32 %v7143, %v7263
      %v7280 = vmul.f32 %v7144, %v7263
      %v7281 = vmul.f32 %v7145, %v7263
      %v7282 = vmul.f32 %v7146, %v7263
      %v7283 = vmul.f32 %v7147, %v7263
      %v7284 = vmul.f32 %v7148, %v7263
      %v7285 = vmul.f32 %v7149, %v7263
      %v7286 = vmul.f32 %v7150, %v7263
      %v7287 = vmul.f32 %v7151, %v7263
      %v7288 = vmul.f32 %v7152, %v7263
      %v7289 = vmul.f32 %v7153, %v7263
      %v7290 = vmul.f32 %v7154, %v7263
      %v7291 = vmul.f32 %v7155, %v7263
      %v7292 = vmul.f32 %v7156, %v7263
      %v7293 = vmul.f32 %v7157, %v7263
      %v7294 = vmul.f32 %v7158, %v7263
      %v7295 = vmul.f32 %v7159, %v7263
      %v7296 = vld [vmem:[%s11] sm:$0x1]
      %v7298 = vlaneseq
      %v7299 = vshrl.u32 %v7298, 7
      %v7300 = vsub.s32 0, %v7299
      %v7301 = vrot.slane %v7296, %v7300
      %v7303 = vmul.f32 %v7264, %v7301
      %v7304 = vmul.f32 %v7265, %v7301
      %v7305 = vmul.f32 %v7266, %v7301
      %v7306 = vmul.f32 %v7267, %v7301
      %v7307 = vmul.f32 %v7268, %v7301
      %v7308 = vmul.f32 %v7269, %v7301
      %v7309 = vmul.f32 %v7270, %v7301
      %v7310 = vmul.f32 %v7271, %v7301
      %v7311 = vmul.f32 %v7272, %v7301
      %v7312 = vmul.f32 %v7273, %v7301
      %v7313 = vmul.f32 %v7274, %v7301
      %v7314 = vmul.f32 %v7275, %v7301
      %v7315 = vmul.f32 %v7276, %v7301
      %v7316 = vmul.f32 %v7277, %v7301
      %v7317 = vmul.f32 %v7278, %v7301
      %v7318 = vmul.f32 %v7279, %v7301
      %v7319 = vmul.f32 %v7280, %v7301
      %v7320 = vmul.f32 %v7281, %v7301
      %v7321 = vmul.f32 %v7282, %v7301
      %v7322 = vmul.f32 %v7283, %v7301
      %v7323 = vmul.f32 %v7284, %v7301
      %v7324 = vmul.f32 %v7285, %v7301
      %v7325 = vmul.f32 %v7286, %v7301
      %v7326 = vmul.f32 %v7287, %v7301
      %v7327 = vmul.f32 %v7288, %v7301
      %v7328 = vmul.f32 %v7289, %v7301
      %v7329 = vmul.f32 %v7290, %v7301
      %v7330 = vmul.f32 %v7291, %v7301
      %v7331 = vmul.f32 %v7292, %v7301
      %v7332 = vmul.f32 %v7293, %v7301
      %v7333 = vmul.f32 %v7294, %v7301
      %v7334 = vmul.f32 %v7295, %v7301
      %v7335 = vld [vmem:[%s12] sm:$0x1]
      %v7337 = vlaneseq
      %v7338 = vshrl.u32 %v7337, 7
      %v7339 = vsub.s32 0, %v7338
      %v7340 = vrot.slane %v7335, %v7339
      %v7342 = vadd.f32 %v7303, %v7340
      %v7343 = vadd.f32 %v7304, %v7340
      %v7344 = vadd.f32 %v7305, %v7340
      %v7345 = vadd.f32 %v7306, %v7340
      %v7346 = vadd.f32 %v7307, %v7340
      %v7347 = vadd.f32 %v7308, %v7340
      %v7348 = vadd.f32 %v7309, %v7340
      %v7349 = vadd.f32 %v7310, %v7340
      %v7350 = vadd.f32 %v7311, %v7340
      %v7351 = vadd.f32 %v7312, %v7340
      %v7352 = vadd.f32 %v7313, %v7340
      %v7353 = vadd.f32 %v7314, %v7340
      %v7354 = vadd.f32 %v7315, %v7340
      %v7355 = vadd.f32 %v7316, %v7340
      %v7356 = vadd.f32 %v7317, %v7340
      %v7357 = vadd.f32 %v7318, %v7340
      %v7358 = vadd.f32 %v7319, %v7340
      %v7359 = vadd.f32 %v7320, %v7340
      %v7360 = vadd.f32 %v7321, %v7340
      %v7361 = vadd.f32 %v7322, %v7340
      %v7362 = vadd.f32 %v7323, %v7340
      %v7363 = vadd.f32 %v7324, %v7340
      %v7364 = vadd.f32 %v7325, %v7340
      %v7365 = vadd.f32 %v7326, %v7340
      %v7366 = vadd.f32 %v7327, %v7340
      %v7367 = vadd.f32 %v7328, %v7340
      %v7368 = vadd.f32 %v7329, %v7340
      %v7369 = vadd.f32 %v7330, %v7340
      %v7370 = vadd.f32 %v7331, %v7340
      %v7371 = vadd.f32 %v7332, %v7340
      %v7372 = vadd.f32 %v7333, %v7340
      %v7373 = vadd.f32 %v7334, %v7340
      %v7374 = vsel %vm2141, %v7342, %v6932
      %v7375 = vsel %vm2141, %v7343, %v6935
      %v7376 = vsel %vm2141, %v7344, %v6940
      %v7377 = vsel %vm2141, %v7345, %v6943
      %v7378 = vsel %vm2141, %v7346, %v6948
      %v7379 = vsel %vm2141, %v7347, %v6951
      %v7380 = vsel %vm2141, %v7348, %v6956
      %v7381 = vsel %vm2141, %v7349, %v6959
      %v7382 = vsel %vm2141, %v7350, %v6964
      %v7383 = vsel %vm2141, %v7351, %v6967
      %v7384 = vsel %vm2141, %v7352, %v6972
      %v7385 = vsel %vm2141, %v7353, %v6975
      %v7386 = vsel %vm2141, %v7354, %v6980
      %v7387 = vsel %vm2141, %v7355, %v6983
      %v7388 = vsel %vm2141, %v7356, %v6988
      %v7389 = vsel %vm2141, %v7357, %v6991
      %v7390 = vsel %vm2141, %v7358, %v6996
      %v7391 = vsel %vm2141, %v7359, %v6999
      %v7392 = vsel %vm2141, %v7360, %v7004
      %v7393 = vsel %vm2141, %v7361, %v7007
      %v7394 = vsel %vm2141, %v7362, %v7012
      %v7395 = vsel %vm2141, %v7363, %v7015
      %v7396 = vsel %vm2141, %v7364, %v7020
      %v7397 = vsel %vm2141, %v7365, %v7023
      %v7398 = vsel %vm2141, %v7366, %v7028
      %v7399 = vsel %vm2141, %v7367, %v7031
      %v7400 = vsel %vm2141, %v7368, %v7036
      %v7401 = vsel %vm2141, %v7369, %v7039
      %v7402 = vsel %vm2141, %v7370, %v7044
      %v7403 = vsel %vm2141, %v7371, %v7047
      %v7404 = vsel %vm2141, %v7372, %v7052
      %v7405 = vsel %vm2141, %v7373, %v7055
      %vm7406 = vcmp.ge.f32.partialorder %v7374, 0.0
      %vm7407 = vcmp.ge.f32.partialorder %v7375, 0.0
      %vm7408 = vcmp.ge.f32.partialorder %v7376, 0.0
      %vm7409 = vcmp.ge.f32.partialorder %v7377, 0.0
      %vm7410 = vcmp.ge.f32.partialorder %v7378, 0.0
      %vm7411 = vcmp.ge.f32.partialorder %v7379, 0.0
      %vm7412 = vcmp.ge.f32.partialorder %v7380, 0.0
      %vm7413 = vcmp.ge.f32.partialorder %v7381, 0.0
      %vm7414 = vcmp.ge.f32.partialorder %v7382, 0.0
      %vm7415 = vcmp.ge.f32.partialorder %v7383, 0.0
      %vm7416 = vcmp.ge.f32.partialorder %v7384, 0.0
      %vm7417 = vcmp.ge.f32.partialorder %v7385, 0.0
      %vm7418 = vcmp.ge.f32.partialorder %v7386, 0.0
      %vm7419 = vcmp.ge.f32.partialorder %v7387, 0.0
      %vm7420 = vcmp.ge.f32.partialorder %v7388, 0.0
      %vm7421 = vcmp.ge.f32.partialorder %v7389, 0.0
      %vm7422 = vcmp.ge.f32.partialorder %v7390, 0.0
      %vm7423 = vcmp.ge.f32.partialorder %v7391, 0.0
      %vm7424 = vcmp.ge.f32.partialorder %v7392, 0.0
      %vm7425 = vcmp.ge.f32.partialorder %v7393, 0.0
      %vm7426 = vcmp.ge.f32.partialorder %v7394, 0.0
      %vm7427 = vcmp.ge.f32.partialorder %v7395, 0.0
      %vm7428 = vcmp.ge.f32.partialorder %v7396, 0.0
      %vm7429 = vcmp.ge.f32.partialorder %v7397, 0.0
      %vm7430 = vcmp.ge.f32.partialorder %v7398, 0.0
      %vm7431 = vcmp.ge.f32.partialorder %v7399, 0.0
      %vm7432 = vcmp.ge.f32.partialorder %v7400, 0.0
      %vm7433 = vcmp.ge.f32.partialorder %v7401, 0.0
      %vm7434 = vcmp.ge.f32.partialorder %v7402, 0.0
      %vm7435 = vcmp.ge.f32.partialorder %v7403, 0.0
      %vm7436 = vcmp.ge.f32.partialorder %v7404, 0.0
      %vm7437 = vcmp.ge.f32.partialorder %v7405, 0.0
      %v7438 = vmul.f32 %v7374, 0.1
      %v7439 = vmul.f32 %v7375, 0.1
      %v7440 = vmul.f32 %v7376, 0.1
      %v7441 = vmul.f32 %v7377, 0.1
      %v7442 = vmul.f32 %v7378, 0.1
      %v7443 = vmul.f32 %v7379, 0.1
      %v7444 = vmul.f32 %v7380, 0.1
      %v7445 = vmul.f32 %v7381, 0.1
      %v7446 = vmul.f32 %v7382, 0.1
      %v7447 = vmul.f32 %v7383, 0.1
      %v7448 = vmul.f32 %v7384, 0.1
      %v7449 = vmul.f32 %v7385, 0.1
      %v7450 = vmul.f32 %v7386, 0.1
      %v7451 = vmul.f32 %v7387, 0.1
      %v7452 = vmul.f32 %v7388, 0.1
      %v7453 = vmul.f32 %v7389, 0.1
      %v7454 = vmul.f32 %v7390, 0.1
      %v7455 = vmul.f32 %v7391, 0.1
      %v7456 = vmul.f32 %v7392, 0.1
      %v7457 = vmul.f32 %v7393, 0.1
      %v7458 = vmul.f32 %v7394, 0.1
      %v7459 = vmul.f32 %v7395, 0.1
      %v7460 = vmul.f32 %v7396, 0.1
      %v7461 = vmul.f32 %v7397, 0.1
      %v7462 = vmul.f32 %v7398, 0.1
      %v7463 = vmul.f32 %v7399, 0.1
      %v7464 = vmul.f32 %v7400, 0.1
      %v7465 = vmul.f32 %v7401, 0.1
      %v7466 = vmul.f32 %v7402, 0.1
      %v7467 = vmul.f32 %v7403, 0.1
      %v7468 = vmul.f32 %v7404, 0.1
      %v7469 = vmul.f32 %v7405, 0.1
      %v7470 = vsel %vm7406, %v7374, %v7438
      %v7471 = vsel %vm7407, %v7375, %v7439
      %v7472 = vsel %vm7408, %v7376, %v7440
      %v7473 = vsel %vm7409, %v7377, %v7441
      %v7474 = vsel %vm7410, %v7378, %v7442
      %v7475 = vsel %vm7411, %v7379, %v7443
      %v7476 = vsel %vm7412, %v7380, %v7444
      %v7477 = vsel %vm7413, %v7381, %v7445
      %v7478 = vsel %vm7414, %v7382, %v7446
      %v7479 = vsel %vm7415, %v7383, %v7447
      %v7480 = vsel %vm7416, %v7384, %v7448
      %v7481 = vsel %vm7417, %v7385, %v7449
      %v7482 = vsel %vm7418, %v7386, %v7450
      %v7483 = vsel %vm7419, %v7387, %v7451
      %v7484 = vsel %vm7420, %v7388, %v7452
      %v7485 = vsel %vm7421, %v7389, %v7453
      %v7486 = vsel %vm7422, %v7390, %v7454
      %v7487 = vsel %vm7423, %v7391, %v7455
      %v7488 = vsel %vm7424, %v7392, %v7456
      %v7489 = vsel %vm7425, %v7393, %v7457
      %v7490 = vsel %vm7426, %v7394, %v7458
      %v7491 = vsel %vm7427, %v7395, %v7459
      %v7492 = vsel %vm7428, %v7396, %v7460
      %v7493 = vsel %vm7429, %v7397, %v7461
      %v7494 = vsel %vm7430, %v7398, %v7462
      %v7495 = vsel %vm7431, %v7399, %v7463
      %v7496 = vsel %vm7432, %v7400, %v7464
      %v7497 = vsel %vm7433, %v7401, %v7465
      %v7498 = vsel %vm7434, %v7402, %v7466
      %v7499 = vsel %vm7435, %v7403, %v7467
      %v7500 = vsel %vm7436, %v7404, %v7468
      %v7501 = vsel %vm7437, %v7405, %v7469
      %7502 = vst.msk [vmem:[%s762 + $0x1] sm:$0xff] %vm658, %v7470
      %7503 = vst.msk [vmem:[%s762 + $0x9] sm:$0xff] %vm658, %v7471
      %7504 = vst.msk [vmem:[%s762 + $0x19] sm:$0xff] %vm658, %v7472
      %7505 = vst.msk [vmem:[%s762 + $0x21] sm:$0xff] %vm658, %v7473
      %7506 = vst.msk [vmem:[%s762 + $0x31] sm:$0xff] %vm658, %v7474
      %7507 = vst.msk [vmem:[%s762 + $0x39] sm:$0xff] %vm658, %v7475
      %7508 = vst.msk [vmem:[%s762 + $0x49] sm:$0xff] %vm658, %v7476
      %7509 = vst.msk [vmem:[%s762 + $0x51] sm:$0xff] %vm658, %v7477
      %7510 = vst.msk [vmem:[%s762 + $0x61] sm:$0xff] %vm658, %v7478
      %7511 = vst.msk [vmem:[%s762 + $0x69] sm:$0xff] %vm658, %v7479
      %7512 = vst.msk [vmem:[%s762 + $0x79] sm:$0xff] %vm658, %v7480
      %7513 = vst.msk [vmem:[%s762 + $0x81] sm:$0xff] %vm658, %v7481
      %7514 = vst.msk [vmem:[%s762 + $0x91] sm:$0xff] %vm658, %v7482
      %7515 = vst.msk [vmem:[%s762 + $0x99] sm:$0xff] %vm658, %v7483
      %7516 = vst.msk [vmem:[%s762 + $0xa9] sm:$0xff] %vm658, %v7484
      %7517 = vst.msk [vmem:[%s762 + $0xb1] sm:$0xff] %vm658, %v7485
      %7518 = vst.msk [vmem:[%s762 + $0xc1] sm:$0xff] %vm658, %v7486
      %7519 = vst.msk [vmem:[%s762 + $0xc9] sm:$0xff] %vm658, %v7487
      %7520 = vst.msk [vmem:[%s762 + $0xd9] sm:$0xff] %vm658, %v7488
      %7521 = vst.msk [vmem:[%s762 + $0xe1] sm:$0xff] %vm658, %v7489
      %7522 = vst.msk [vmem:[%s762 + $0xf1] sm:$0xff] %vm658, %v7490
      %7523 = vst.msk [vmem:[%s762 + $0xf9] sm:$0xff] %vm658, %v7491
      %7524 = vst.msk [vmem:[%s762 + $0x109] sm:$0xff] %vm658, %v7492
      %7525 = vst.msk [vmem:[%s762 + $0x111] sm:$0xff] %vm658, %v7493
      %7526 = vst.msk [vmem:[%s762 + $0x121] sm:$0xff] %vm658, %v7494
      %7527 = vst.msk [vmem:[%s762 + $0x129] sm:$0xff] %vm658, %v7495
      %7528 = vst.msk [vmem:[%s762 + $0x139] sm:$0xff] %vm658, %v7496
      %7529 = vst.msk [vmem:[%s762 + $0x141] sm:$0xff] %vm658, %v7497
      %7530 = vst.msk [vmem:[%s762 + $0x151] sm:$0xff] %vm658, %v7498
      %7531 = vst.msk [vmem:[%s762 + $0x159] sm:$0xff] %vm658, %v7499
      %7532 = vst.msk [vmem:[%s762 + $0x169] sm:$0xff] %vm658, %v7500
      %7533 = vst.msk [vmem:[%s762 + $0x171] sm:$0xff] %vm658, %v7501
      %v7534 = vld [vmem:[#allocation2] sm:$0xff]
      %v7535 = vld [vmem:[#allocation2 + $0x8] sm:$0xff]
      %v7536 = vld [vmem:[#allocation2 + $0x18] sm:$0xff]
      %v7537 = vld [vmem:[#allocation2 + $0x20] sm:$0xff]
      %v7538 = vld [vmem:[#allocation2 + $0x30] sm:$0xff]
      %v7539 = vld [vmem:[#allocation2 + $0x38] sm:$0xff]
      %v7540 = vld [vmem:[#allocation2 + $0x48] sm:$0xff]
      %v7541 = vld [vmem:[#allocation2 + $0x50] sm:$0xff]
      %v7542 = vld [vmem:[#allocation2 + $0x60] sm:$0xff]
      %v7543 = vld [vmem:[#allocation2 + $0x68] sm:$0xff]
      %v7544 = vld [vmem:[#allocation2 + $0x78] sm:$0xff]
      %v7545 = vld [vmem:[#allocation2 + $0x80] sm:$0xff]
      %v7546 = vld [vmem:[#allocation2 + $0x90] sm:$0xff]
      %v7547 = vld [vmem:[#allocation2 + $0x98] sm:$0xff]
      %v7548 = vld [vmem:[#allocation2 + $0xa8] sm:$0xff]
      %v7549 = vld [vmem:[#allocation2 + $0xb0] sm:$0xff]
      %v7550 = vld [vmem:[#allocation2 + $0xc0] sm:$0xff]
      %v7551 = vld [vmem:[#allocation2 + $0xc8] sm:$0xff]
      %v7552 = vld [vmem:[#allocation2 + $0xd8] sm:$0xff]
      %v7553 = vld [vmem:[#allocation2 + $0xe0] sm:$0xff]
      %v7554 = vld [vmem:[#allocation2 + $0xf0] sm:$0xff]
      %v7555 = vld [vmem:[#allocation2 + $0xf8] sm:$0xff]
      %v7556 = vld [vmem:[#allocation2 + $0x108] sm:$0xff]
      %v7557 = vld [vmem:[#allocation2 + $0x110] sm:$0xff]
      %v7558 = vld [vmem:[#allocation2 + $0x120] sm:$0xff]
      %v7559 = vld [vmem:[#allocation2 + $0x128] sm:$0xff]
      %v7560 = vld [vmem:[#allocation2 + $0x138] sm:$0xff]
      %v7561 = vld [vmem:[#allocation2 + $0x140] sm:$0xff]
      %v7562 = vld [vmem:[#allocation2 + $0x150] sm:$0xff]
      %v7563 = vld [vmem:[#allocation2 + $0x158] sm:$0xff]
      %v7564 = vld [vmem:[#allocation2 + $0x168] sm:$0xff]
      %v7565 = vld [vmem:[#allocation2 + $0x170] sm:$0xff]
      %v7566 = vld [vmem:[#allocation2 + $0x1] sm:$0xff]
      %v7567 = vld [vmem:[#allocation2 + $0x9] sm:$0xff]
      %v7568 = vld [vmem:[#allocation2 + $0x19] sm:$0xff]
      %v7569 = vld [vmem:[#allocation2 + $0x21] sm:$0xff]
      %v7570 = vld [vmem:[#allocation2 + $0x31] sm:$0xff]
      %v7571 = vld [vmem:[#allocation2 + $0x39] sm:$0xff]
      %v7572 = vld [vmem:[#allocation2 + $0x49] sm:$0xff]
      %v7573 = vld [vmem:[#allocation2 + $0x51] sm:$0xff]
      %v7574 = vld [vmem:[#allocation2 + $0x61] sm:$0xff]
      %v7575 = vld [vmem:[#allocation2 + $0x69] sm:$0xff]
      %v7576 = vld [vmem:[#allocation2 + $0x79] sm:$0xff]
      %v7577 = vld [vmem:[#allocation2 + $0x81] sm:$0xff]
      %v7578 = vld [vmem:[#allocation2 + $0x91] sm:$0xff]
      %v7579 = vld [vmem:[#allocation2 + $0x99] sm:$0xff]
      %v7580 = vld [vmem:[#allocation2 + $0xa9] sm:$0xff]
      %v7581 = vld [vmem:[#allocation2 + $0xb1] sm:$0xff]
      %v7582 = vld [vmem:[#allocation2 + $0xc1] sm:$0xff]
      %v7583 = vld [vmem:[#allocation2 + $0xc9] sm:$0xff]
      %v7584 = vld [vmem:[#allocation2 + $0xd9] sm:$0xff]
      %v7585 = vld [vmem:[#allocation2 + $0xe1] sm:$0xff]
      %v7586 = vld [vmem:[#allocation2 + $0xf1] sm:$0xff]
      %v7587 = vld [vmem:[#allocation2 + $0xf9] sm:$0xff]
      %v7588 = vld [vmem:[#allocation2 + $0x109] sm:$0xff]
      %v7589 = vld [vmem:[#allocation2 + $0x111] sm:$0xff]
      %v7590 = vld [vmem:[#allocation2 + $0x121] sm:$0xff]
      %v7591 = vld [vmem:[#allocation2 + $0x129] sm:$0xff]
      %v7592 = vld [vmem:[#allocation2 + $0x139] sm:$0xff]
      %v7593 = vld [vmem:[#allocation2 + $0x141] sm:$0xff]
      %v7594 = vld [vmem:[#allocation2 + $0x151] sm:$0xff]
      %v7595 = vld [vmem:[#allocation2 + $0x159] sm:$0xff]
      %v7596 = vld [vmem:[#allocation2 + $0x169] sm:$0xff]
      %v7597 = vld [vmem:[#allocation2 + $0x171] sm:$0xff]
      %v7598 = vld [vmem:[#allocation2 + $0x2] sm:$0xff]
      %v7599 = vld [vmem:[#allocation2 + $0xa] sm:$0xff]
      %v7600 = vld [vmem:[#allocation2 + $0x1a] sm:$0xff]
      %v7601 = vld [vmem:[#allocation2 + $0x22] sm:$0xff]
      %v7602 = vld [vmem:[#allocation2 + $0x32] sm:$0xff]
      %v7603 = vld [vmem:[#allocation2 + $0x3a] sm:$0xff]
      %v7604 = vld [vmem:[#allocation2 + $0x4a] sm:$0xff]
      %v7605 = vld [vmem:[#allocation2 + $0x52] sm:$0xff]
      %v7606 = vld [vmem:[#allocation2 + $0x62] sm:$0xff]
      %v7607 = vld [vmem:[#allocation2 + $0x6a] sm:$0xff]
      %v7608 = vld [vmem:[#allocation2 + $0x7a] sm:$0xff]
      %v7609 = vld [vmem:[#allocation2 + $0x82] sm:$0xff]
      %v7610 = vld [vmem:[#allocation2 + $0x92] sm:$0xff]
      %v7611 = vld [vmem:[#allocation2 + $0x9a] sm:$0xff]
      %v7612 = vld [vmem:[#allocation2 + $0xaa] sm:$0xff]
      %v7613 = vld [vmem:[#allocation2 + $0xb2] sm:$0xff]
      %v7614 = vld [vmem:[#allocation2 + $0xc2] sm:$0xff]
      %v7615 = vld [vmem:[#allocation2 + $0xca] sm:$0xff]
      %v7616 = vld [vmem:[#allocation2 + $0xda] sm:$0xff]
      %v7617 = vld [vmem:[#allocation2 + $0xe2] sm:$0xff]
      %v7618 = vld [vmem:[#allocation2 + $0xf2] sm:$0xff]
      %v7619 = vld [vmem:[#allocation2 + $0xfa] sm:$0xff]
      %v7620 = vld [vmem:[#allocation2 + $0x10a] sm:$0xff]
      %v7621 = vld [vmem:[#allocation2 + $0x112] sm:$0xff]
      %v7622 = vld [vmem:[#allocation2 + $0x122] sm:$0xff]
      %v7623 = vld [vmem:[#allocation2 + $0x12a] sm:$0xff]
      %v7624 = vld [vmem:[#allocation2 + $0x13a] sm:$0xff]
      %v7625 = vld [vmem:[#allocation2 + $0x142] sm:$0xff]
      %v7626 = vld [vmem:[#allocation2 + $0x152] sm:$0xff]
      %v7627 = vld [vmem:[#allocation2 + $0x15a] sm:$0xff]
      %v7628 = vld [vmem:[#allocation2 + $0x16a] sm:$0xff]
      %v7629 = vld [vmem:[#allocation2 + $0x172] sm:$0xff]
      %v7630 = vld [vmem:[%s762] sm:$0xff]
      %v7631 = vld [vmem:[%s762 + $0x8] sm:$0xff]
      %v7632 = vld [vmem:[%s762 + $0x18] sm:$0xff]
      %v7633 = vld [vmem:[%s762 + $0x20] sm:$0xff]
      %v7634 = vld [vmem:[%s762 + $0x30] sm:$0xff]
      %v7635 = vld [vmem:[%s762 + $0x38] sm:$0xff]
      %v7636 = vld [vmem:[%s762 + $0x48] sm:$0xff]
      %v7637 = vld [vmem:[%s762 + $0x50] sm:$0xff]
      %v7638 = vld [vmem:[%s762 + $0x60] sm:$0xff]
      %v7639 = vld [vmem:[%s762 + $0x68] sm:$0xff]
      %v7640 = vld [vmem:[%s762 + $0x78] sm:$0xff]
      %v7641 = vld [vmem:[%s762 + $0x80] sm:$0xff]
      %v7642 = vld [vmem:[%s762 + $0x90] sm:$0xff]
      %v7643 = vld [vmem:[%s762 + $0x98] sm:$0xff]
      %v7644 = vld [vmem:[%s762 + $0xa8] sm:$0xff]
      %v7645 = vld [vmem:[%s762 + $0xb0] sm:$0xff]
      %v7646 = vld [vmem:[%s762 + $0xc0] sm:$0xff]
      %v7647 = vld [vmem:[%s762 + $0xc8] sm:$0xff]
      %v7648 = vld [vmem:[%s762 + $0xd8] sm:$0xff]
      %v7649 = vld [vmem:[%s762 + $0xe0] sm:$0xff]
      %v7650 = vld [vmem:[%s762 + $0xf0] sm:$0xff]
      %v7651 = vld [vmem:[%s762 + $0xf8] sm:$0xff]
      %v7652 = vld [vmem:[%s762 + $0x108] sm:$0xff]
      %v7653 = vld [vmem:[%s762 + $0x110] sm:$0xff]
      %v7654 = vld [vmem:[%s762 + $0x120] sm:$0xff]
      %v7655 = vld [vmem:[%s762 + $0x128] sm:$0xff]
      %v7656 = vld [vmem:[%s762 + $0x138] sm:$0xff]
      %v7657 = vld [vmem:[%s762 + $0x140] sm:$0xff]
      %v7658 = vld [vmem:[%s762 + $0x150] sm:$0xff]
      %v7659 = vld [vmem:[%s762 + $0x158] sm:$0xff]
      %v7660 = vld [vmem:[%s762 + $0x168] sm:$0xff]
      %v7661 = vld [vmem:[%s762 + $0x170] sm:$0xff]
      %v7662 = vld [vmem:[%s762 + $0x1] sm:$0xff]
      %v7663 = vld [vmem:[%s762 + $0x9] sm:$0xff]
      %v7664 = vld [vmem:[%s762 + $0x19] sm:$0xff]
      %v7665 = vld [vmem:[%s762 + $0x21] sm:$0xff]
      %v7666 = vld [vmem:[%s762 + $0x31] sm:$0xff]
      %v7667 = vld [vmem:[%s762 + $0x39] sm:$0xff]
      %v7668 = vld [vmem:[%s762 + $0x49] sm:$0xff]
      %v7669 = vld [vmem:[%s762 + $0x51] sm:$0xff]
      %v7670 = vld [vmem:[%s762 + $0x61] sm:$0xff]
      %v7671 = vld [vmem:[%s762 + $0x69] sm:$0xff]
      %v7672 = vld [vmem:[%s762 + $0x79] sm:$0xff]
      %v7673 = vld [vmem:[%s762 + $0x81] sm:$0xff]
      %v7674 = vld [vmem:[%s762 + $0x91] sm:$0xff]
      %v7675 = vld [vmem:[%s762 + $0x99] sm:$0xff]
      %v7676 = vld [vmem:[%s762 + $0xa9] sm:$0xff]
      %v7677 = vld [vmem:[%s762 + $0xb1] sm:$0xff]
      %v7678 = vld [vmem:[%s762 + $0xc1] sm:$0xff]
      %v7679 = vld [vmem:[%s762 + $0xc9] sm:$0xff]
      %v7680 = vld [vmem:[%s762 + $0xd9] sm:$0xff]
      %v7681 = vld [vmem:[%s762 + $0xe1] sm:$0xff]
      %v7682 = vld [vmem:[%s762 + $0xf1] sm:$0xff]
      %v7683 = vld [vmem:[%s762 + $0xf9] sm:$0xff]
      %v7684 = vld [vmem:[%s762 + $0x109] sm:$0xff]
      %v7685 = vld [vmem:[%s762 + $0x111] sm:$0xff]
      %v7686 = vld [vmem:[%s762 + $0x121] sm:$0xff]
      %v7687 = vld [vmem:[%s762 + $0x129] sm:$0xff]
      %v7688 = vld [vmem:[%s762 + $0x139] sm:$0xff]
      %v7689 = vld [vmem:[%s762 + $0x141] sm:$0xff]
      %v7690 = vld [vmem:[%s762 + $0x151] sm:$0xff]
      %v7691 = vld [vmem:[%s762 + $0x159] sm:$0xff]
      %v7692 = vld [vmem:[%s762 + $0x169] sm:$0xff]
      %v7693 = vld [vmem:[%s762 + $0x171] sm:$0xff]
      %v7694 = vld [vmem:[%s762 + $0x2] sm:$0xff]
      %v7695 = vld [vmem:[%s762 + $0xa] sm:$0xff]
      %v7696 = vld [vmem:[%s762 + $0x1a] sm:$0xff]
      %v7697 = vld [vmem:[%s762 + $0x22] sm:$0xff]
      %v7698 = vld [vmem:[%s762 + $0x32] sm:$0xff]
      %v7699 = vld [vmem:[%s762 + $0x3a] sm:$0xff]
      %v7700 = vld [vmem:[%s762 + $0x4a] sm:$0xff]
      %v7701 = vld [vmem:[%s762 + $0x52] sm:$0xff]
      %v7702 = vld [vmem:[%s762 + $0x62] sm:$0xff]
      %v7703 = vld [vmem:[%s762 + $0x6a] sm:$0xff]
      %v7704 = vld [vmem:[%s762 + $0x7a] sm:$0xff]
      %v7705 = vld [vmem:[%s762 + $0x82] sm:$0xff]
      %v7706 = vld [vmem:[%s762 + $0x92] sm:$0xff]
      %v7707 = vld [vmem:[%s762 + $0x9a] sm:$0xff]
      %v7708 = vld [vmem:[%s762 + $0xaa] sm:$0xff]
      %v7709 = vld [vmem:[%s762 + $0xb2] sm:$0xff]
      %v7710 = vld [vmem:[%s762 + $0xc2] sm:$0xff]
      %v7711 = vld [vmem:[%s762 + $0xca] sm:$0xff]
      %v7712 = vld [vmem:[%s762 + $0xda] sm:$0xff]
      %v7713 = vld [vmem:[%s762 + $0xe2] sm:$0xff]
      %v7714 = vld [vmem:[%s762 + $0xf2] sm:$0xff]
      %v7715 = vld [vmem:[%s762 + $0xfa] sm:$0xff]
      %v7716 = vld [vmem:[%s762 + $0x10a] sm:$0xff]
      %v7717 = vld [vmem:[%s762 + $0x112] sm:$0xff]
      %v7718 = vld [vmem:[%s762 + $0x122] sm:$0xff]
      %v7719 = vld [vmem:[%s762 + $0x12a] sm:$0xff]
      %v7720 = vld [vmem:[%s762 + $0x13a] sm:$0xff]
      %v7721 = vld [vmem:[%s762 + $0x142] sm:$0xff]
      %v7722 = vld [vmem:[%s762 + $0x152] sm:$0xff]
      %v7723 = vld [vmem:[%s762 + $0x15a] sm:$0xff]
      %v7724 = vld [vmem:[%s762 + $0x16a] sm:$0xff]
      %v7725 = vld [vmem:[%s762 + $0x172] sm:$0xff]
      %v7726 = vld [vmem:[%s988] sm:$0xff]
      %v7727 = vld [vmem:[%s988 + $0x8] sm:$0xff]
      %v7728 = vld [vmem:[%s988 + $0x18] sm:$0xff]
      %v7729 = vld [vmem:[%s988 + $0x20] sm:$0xff]
      %v7730 = vld [vmem:[%s988 + $0x30] sm:$0xff]
      %v7731 = vld [vmem:[%s988 + $0x38] sm:$0xff]
      %v7732 = vld [vmem:[%s988 + $0x48] sm:$0xff]
      %v7733 = vld [vmem:[%s988 + $0x50] sm:$0xff]
      %v7734 = vld [vmem:[%s988 + $0x60] sm:$0xff]
      %v7735 = vld [vmem:[%s988 + $0x68] sm:$0xff]
      %v7736 = vld [vmem:[%s988 + $0x78] sm:$0xff]
      %v7737 = vld [vmem:[%s988 + $0x80] sm:$0xff]
      %v7738 = vld [vmem:[%s988 + $0x90] sm:$0xff]
      %v7739 = vld [vmem:[%s988 + $0x98] sm:$0xff]
      %v7740 = vld [vmem:[%s988 + $0xa8] sm:$0xff]
      %v7741 = vld [vmem:[%s988 + $0xb0] sm:$0xff]
      %v7742 = vld [vmem:[%s988 + $0xc0] sm:$0xff]
      %v7743 = vld [vmem:[%s988 + $0xc8] sm:$0xff]
      %v7744 = vld [vmem:[%s988 + $0xd8] sm:$0xff]
      %v7745 = vld [vmem:[%s988 + $0xe0] sm:$0xff]
      %v7746 = vld [vmem:[%s988 + $0xf0] sm:$0xff]
      %v7747 = vld [vmem:[%s988 + $0xf8] sm:$0xff]
      %v7748 = vld [vmem:[%s988 + $0x108] sm:$0xff]
      %v7749 = vld [vmem:[%s988 + $0x110] sm:$0xff]
      %v7750 = vld [vmem:[%s988 + $0x120] sm:$0xff]
      %v7751 = vld [vmem:[%s988 + $0x128] sm:$0xff]
      %v7752 = vld [vmem:[%s988 + $0x138] sm:$0xff]
      %v7753 = vld [vmem:[%s988 + $0x140] sm:$0xff]
      %v7754 = vld [vmem:[%s988 + $0x150] sm:$0xff]
      %v7755 = vld [vmem:[%s988 + $0x158] sm:$0xff]
      %v7756 = vld [vmem:[%s988 + $0x168] sm:$0xff]
      %v7757 = vld [vmem:[%s988 + $0x170] sm:$0xff]
      %v7758 = vld [vmem:[%s988 + $0x1] sm:$0xff]
      %v7759 = vld [vmem:[%s988 + $0x9] sm:$0xff]
      %v7760 = vld [vmem:[%s988 + $0x19] sm:$0xff]
      %v7761 = vld [vmem:[%s988 + $0x21] sm:$0xff]
      %v7762 = vld [vmem:[%s988 + $0x31] sm:$0xff]
      %v7763 = vld [vmem:[%s988 + $0x39] sm:$0xff]
      %v7764 = vld [vmem:[%s988 + $0x49] sm:$0xff]
      %v7765 = vld [vmem:[%s988 + $0x51] sm:$0xff]
      %v7766 = vld [vmem:[%s988 + $0x61] sm:$0xff]
      %v7767 = vld [vmem:[%s988 + $0x69] sm:$0xff]
      %v7768 = vld [vmem:[%s988 + $0x79] sm:$0xff]
      %v7769 = vld [vmem:[%s988 + $0x81] sm:$0xff]
      %v7770 = vld [vmem:[%s988 + $0x91] sm:$0xff]
      %v7771 = vld [vmem:[%s988 + $0x99] sm:$0xff]
      %v7772 = vld [vmem:[%s988 + $0xa9] sm:$0xff]
      %v7773 = vld [vmem:[%s988 + $0xb1] sm:$0xff]
      %v7774 = vld [vmem:[%s988 + $0xc1] sm:$0xff]
      %v7775 = vld [vmem:[%s988 + $0xc9] sm:$0xff]
      %v7776 = vld [vmem:[%s988 + $0xd9] sm:$0xff]
      %v7777 = vld [vmem:[%s988 + $0xe1] sm:$0xff]
      %v7778 = vld [vmem:[%s988 + $0xf1] sm:$0xff]
      %v7779 = vld [vmem:[%s988 + $0xf9] sm:$0xff]
      %v7780 = vld [vmem:[%s988 + $0x109] sm:$0xff]
      %v7781 = vld [vmem:[%s988 + $0x111] sm:$0xff]
      %v7782 = vld [vmem:[%s988 + $0x121] sm:$0xff]
      %v7783 = vld [vmem:[%s988 + $0x129] sm:$0xff]
      %v7784 = vld [vmem:[%s988 + $0x139] sm:$0xff]
      %v7785 = vld [vmem:[%s988 + $0x141] sm:$0xff]
      %v7786 = vld [vmem:[%s988 + $0x151] sm:$0xff]
      %v7787 = vld [vmem:[%s988 + $0x159] sm:$0xff]
      %v7788 = vld [vmem:[%s988 + $0x169] sm:$0xff]
      %v7789 = vld [vmem:[%s988 + $0x171] sm:$0xff]
      %v7790 = vld [vmem:[%s988 + $0x2] sm:$0xff]
      %v7791 = vld [vmem:[%s988 + $0xa] sm:$0xff]
      %v7792 = vld [vmem:[%s988 + $0x1a] sm:$0xff]
      %v7793 = vld [vmem:[%s988 + $0x22] sm:$0xff]
      %v7794 = vld [vmem:[%s988 + $0x32] sm:$0xff]
      %v7795 = vld [vmem:[%s988 + $0x3a] sm:$0xff]
      %v7796 = vld [vmem:[%s988 + $0x4a] sm:$0xff]
      %v7797 = vld [vmem:[%s988 + $0x52] sm:$0xff]
      %v7798 = vld [vmem:[%s988 + $0x62] sm:$0xff]
      %v7799 = vld [vmem:[%s988 + $0x6a] sm:$0xff]
      %v7800 = vld [vmem:[%s988 + $0x7a] sm:$0xff]
      %v7801 = vld [vmem:[%s988 + $0x82] sm:$0xff]
      %v7802 = vld [vmem:[%s988 + $0x92] sm:$0xff]
      %v7803 = vld [vmem:[%s988 + $0x9a] sm:$0xff]
      %v7804 = vld [vmem:[%s988 + $0xaa] sm:$0xff]
      %v7805 = vld [vmem:[%s988 + $0xb2] sm:$0xff]
      %v7806 = vld [vmem:[%s988 + $0xc2] sm:$0xff]
      %v7807 = vld [vmem:[%s988 + $0xca] sm:$0xff]
      %v7808 = vld [vmem:[%s988 + $0xda] sm:$0xff]
      %v7809 = vld [vmem:[%s988 + $0xe2] sm:$0xff]
      %v7810 = vld [vmem:[%s988 + $0xf2] sm:$0xff]
      %v7811 = vld [vmem:[%s988 + $0xfa] sm:$0xff]
      %v7812 = vld [vmem:[%s988 + $0x10a] sm:$0xff]
      %v7813 = vld [vmem:[%s988 + $0x112] sm:$0xff]
      %v7814 = vld [vmem:[%s988 + $0x122] sm:$0xff]
      %v7815 = vld [vmem:[%s988 + $0x12a] sm:$0xff]
      %v7816 = vld [vmem:[%s988 + $0x13a] sm:$0xff]
      %v7817 = vld [vmem:[%s988 + $0x142] sm:$0xff]
      %v7818 = vld [vmem:[%s988 + $0x152] sm:$0xff]
      %v7819 = vld [vmem:[%s988 + $0x15a] sm:$0xff]
      %v7820 = vld [vmem:[%s988 + $0x16a] sm:$0xff]
      %v7821 = vld [vmem:[%s988 + $0x172] sm:$0xff]
      %7854 = vrot.lane.b32.xlu0 %v7566, 16
      %v7855 = vpop.permute.xlu0 %7854
      %7856 = vrot.lane.b32.xlu0 %v7567, 16
      %v7857 = vpop.permute.xlu0 %7856
      %7858 = vrot.lane.b32.xlu0 %v7568, 16
      %v7859 = vpop.permute.xlu0 %7858
      %7860 = vrot.lane.b32.xlu0 %v7569, 16
      %v7861 = vpop.permute.xlu0 %7860
      %7862 = vrot.lane.b32.xlu0 %v7570, 16
      %v7863 = vpop.permute.xlu0 %7862
      %7864 = vrot.lane.b32.xlu0 %v7571, 16
      %v7865 = vpop.permute.xlu0 %7864
      %7866 = vrot.lane.b32.xlu0 %v7572, 16
      %v7867 = vpop.permute.xlu0 %7866
      %7868 = vrot.lane.b32.xlu0 %v7573, 16
      %v7869 = vpop.permute.xlu0 %7868
      %7870 = vrot.lane.b32.xlu0 %v7574, 16
      %v7871 = vpop.permute.xlu0 %7870
      %7872 = vrot.lane.b32.xlu0 %v7575, 16
      %v7873 = vpop.permute.xlu0 %7872
      %7874 = vrot.lane.b32.xlu0 %v7576, 16
      %v7875 = vpop.permute.xlu0 %7874
      %7876 = vrot.lane.b32.xlu0 %v7577, 16
      %v7877 = vpop.permute.xlu0 %7876
      %7878 = vrot.lane.b32.xlu0 %v7578, 16
      %v7879 = vpop.permute.xlu0 %7878
      %7880 = vrot.lane.b32.xlu0 %v7579, 16
      %v7881 = vpop.permute.xlu0 %7880
      %7882 = vrot.lane.b32.xlu0 %v7580, 16
      %v7883 = vpop.permute.xlu0 %7882
      %7884 = vrot.lane.b32.xlu0 %v7581, 16
      %v7885 = vpop.permute.xlu0 %7884
      %7886 = vrot.lane.b32.xlu0 %v7582, 16
      %v7887 = vpop.permute.xlu0 %7886
      %7888 = vrot.lane.b32.xlu0 %v7583, 16
      %v7889 = vpop.permute.xlu0 %7888
      %7890 = vrot.lane.b32.xlu0 %v7584, 16
      %v7891 = vpop.permute.xlu0 %7890
      %7892 = vrot.lane.b32.xlu0 %v7585, 16
      %v7893 = vpop.permute.xlu0 %7892
      %7894 = vrot.lane.b32.xlu0 %v7586, 16
      %v7895 = vpop.permute.xlu0 %7894
      %7896 = vrot.lane.b32.xlu0 %v7587, 16
      %v7897 = vpop.permute.xlu0 %7896
      %7898 = vrot.lane.b32.xlu0 %v7588, 16
      %v7899 = vpop.permute.xlu0 %7898
      %7900 = vrot.lane.b32.xlu0 %v7589, 16
      %v7901 = vpop.permute.xlu0 %7900
      %7902 = vrot.lane.b32.xlu0 %v7590, 16
      %v7903 = vpop.permute.xlu0 %7902
      %7904 = vrot.lane.b32.xlu0 %v7591, 16
      %v7905 = vpop.permute.xlu0 %7904
      %7906 = vrot.lane.b32.xlu0 %v7592, 16
      %v7907 = vpop.permute.xlu0 %7906
      %7908 = vrot.lane.b32.xlu0 %v7593, 16
      %v7909 = vpop.permute.xlu0 %7908
      %7910 = vrot.lane.b32.xlu0 %v7594, 16
      %v7911 = vpop.permute.xlu0 %7910
      %7912 = vrot.lane.b32.xlu0 %v7595, 16
      %v7913 = vpop.permute.xlu0 %7912
      %7914 = vrot.lane.b32.xlu0 %v7596, 16
      %v7915 = vpop.permute.xlu0 %7914
      %7916 = vrot.lane.b32.xlu0 %v7597, 16
      %v7917 = vpop.permute.xlu0 %7916
      %7982 = vrot.lane.b32.xlu0 %v7598, 32
      %v7983 = vpop.permute.xlu0 %7982
      %7984 = vrot.lane.b32.xlu0 %v7599, 32
      %v7985 = vpop.permute.xlu0 %7984
      %7986 = vrot.lane.b32.xlu0 %v7600, 32
      %v7987 = vpop.permute.xlu0 %7986
      %7988 = vrot.lane.b32.xlu0 %v7601, 32
      %v7989 = vpop.permute.xlu0 %7988
      %7990 = vrot.lane.b32.xlu0 %v7602, 32
      %v7991 = vpop.permute.xlu0 %7990
      %7992 = vrot.lane.b32.xlu0 %v7603, 32
      %v7993 = vpop.permute.xlu0 %7992
      %7994 = vrot.lane.b32.xlu0 %v7604, 32
      %v7995 = vpop.permute.xlu0 %7994
      %7996 = vrot.lane.b32.xlu0 %v7605, 32
      %v7997 = vpop.permute.xlu0 %7996
      %7998 = vrot.lane.b32.xlu0 %v7606, 32
      %v7999 = vpop.permute.xlu0 %7998
      %8000 = vrot.lane.b32.xlu0 %v7607, 32
      %v8001 = vpop.permute.xlu0 %8000
      %8002 = vrot.lane.b32.xlu0 %v7608, 32
      %v8003 = vpop.permute.xlu0 %8002
      %8004 = vrot.lane.b32.xlu0 %v7609, 32
      %v8005 = vpop.permute.xlu0 %8004
      %8006 = vrot.lane.b32.xlu0 %v7610, 32
      %v8007 = vpop.permute.xlu0 %8006
      %8008 = vrot.lane.b32.xlu0 %v7611, 32
      %v8009 = vpop.permute.xlu0 %8008
      %8010 = vrot.lane.b32.xlu0 %v7612, 32
      %v8011 = vpop.permute.xlu0 %8010
      %8012 = vrot.lane.b32.xlu0 %v7613, 32
      %v8013 = vpop.permute.xlu0 %8012
      %8014 = vrot.lane.b32.xlu0 %v7614, 32
      %v8015 = vpop.permute.xlu0 %8014
      %8016 = vrot.lane.b32.xlu0 %v7615, 32
      %v8017 = vpop.permute.xlu0 %8016
      %8018 = vrot.lane.b32.xlu0 %v7616, 32
      %v8019 = vpop.permute.xlu0 %8018
      %8020 = vrot.lane.b32.xlu0 %v7617, 32
      %v8021 = vpop.permute.xlu0 %8020
      %8022 = vrot.lane.b32.xlu0 %v7618, 32
      %v8023 = vpop.permute.xlu0 %8022
      %8024 = vrot.lane.b32.xlu0 %v7619, 32
      %v8025 = vpop.permute.xlu0 %8024
      %8026 = vrot.lane.b32.xlu0 %v7620, 32
      %v8027 = vpop.permute.xlu0 %8026
      %8028 = vrot.lane.b32.xlu0 %v7621, 32
      %v8029 = vpop.permute.xlu0 %8028
      %8030 = vrot.lane.b32.xlu0 %v7622, 32
      %v8031 = vpop.permute.xlu0 %8030
      %8032 = vrot.lane.b32.xlu0 %v7623, 32
      %v8033 = vpop.permute.xlu0 %8032
      %8034 = vrot.lane.b32.xlu0 %v7624, 32
      %v8035 = vpop.permute.xlu0 %8034
      %8036 = vrot.lane.b32.xlu0 %v7625, 32
      %v8037 = vpop.permute.xlu0 %8036
      %8038 = vrot.lane.b32.xlu0 %v7626, 32
      %v8039 = vpop.permute.xlu0 %8038
      %8040 = vrot.lane.b32.xlu0 %v7627, 32
      %v8041 = vpop.permute.xlu0 %8040
      %8042 = vrot.lane.b32.xlu0 %v7628, 32
      %v8043 = vpop.permute.xlu0 %8042
      %8044 = vrot.lane.b32.xlu0 %v7629, 32
      %v8045 = vpop.permute.xlu0 %8044
      %8110 = vrot.lane.b32.xlu0 %v7630, 48
      %v8111 = vpop.permute.xlu0 %8110
      %8112 = vrot.lane.b32.xlu0 %v7631, 48
      %v8113 = vpop.permute.xlu0 %8112
      %8114 = vrot.lane.b32.xlu0 %v7632, 48
      %v8115 = vpop.permute.xlu0 %8114
      %8116 = vrot.lane.b32.xlu0 %v7633, 48
      %v8117 = vpop.permute.xlu0 %8116
      %8118 = vrot.lane.b32.xlu0 %v7634, 48
      %v8119 = vpop.permute.xlu0 %8118
      %8120 = vrot.lane.b32.xlu0 %v7635, 48
      %v8121 = vpop.permute.xlu0 %8120
      %8122 = vrot.lane.b32.xlu0 %v7636, 48
      %v8123 = vpop.permute.xlu0 %8122
      %8124 = vrot.lane.b32.xlu0 %v7637, 48
      %v8125 = vpop.permute.xlu0 %8124
      %8126 = vrot.lane.b32.xlu0 %v7638, 48
      %v8127 = vpop.permute.xlu0 %8126
      %8128 = vrot.lane.b32.xlu0 %v7639, 48
      %v8129 = vpop.permute.xlu0 %8128
      %8130 = vrot.lane.b32.xlu0 %v7640, 48
      %v8131 = vpop.permute.xlu0 %8130
      %8132 = vrot.lane.b32.xlu0 %v7641, 48
      %v8133 = vpop.permute.xlu0 %8132
      %8134 = vrot.lane.b32.xlu0 %v7642, 48
      %v8135 = vpop.permute.xlu0 %8134
      %8136 = vrot.lane.b32.xlu0 %v7643, 48
      %v8137 = vpop.permute.xlu0 %8136
      %8138 = vrot.lane.b32.xlu0 %v7644, 48
      %v8139 = vpop.permute.xlu0 %8138
      %8140 = vrot.lane.b32.xlu0 %v7645, 48
      %v8141 = vpop.permute.xlu0 %8140
      %8142 = vrot.lane.b32.xlu0 %v7646, 48
      %v8143 = vpop.permute.xlu0 %8142
      %8144 = vrot.lane.b32.xlu0 %v7647, 48
      %v8145 = vpop.permute.xlu0 %8144
      %8146 = vrot.lane.b32.xlu0 %v7648, 48
      %v8147 = vpop.permute.xlu0 %8146
      %8148 = vrot.lane.b32.xlu0 %v7649, 48
      %v8149 = vpop.permute.xlu0 %8148
      %8150 = vrot.lane.b32.xlu0 %v7650, 48
      %v8151 = vpop.permute.xlu0 %8150
      %8152 = vrot.lane.b32.xlu0 %v7651, 48
      %v8153 = vpop.permute.xlu0 %8152
      %8154 = vrot.lane.b32.xlu0 %v7652, 48
      %v8155 = vpop.permute.xlu0 %8154
      %8156 = vrot.lane.b32.xlu0 %v7653, 48
      %v8157 = vpop.permute.xlu0 %8156
      %8158 = vrot.lane.b32.xlu0 %v7654, 48
      %v8159 = vpop.permute.xlu0 %8158
      %8160 = vrot.lane.b32.xlu0 %v7655, 48
      %v8161 = vpop.permute.xlu0 %8160
      %8162 = vrot.lane.b32.xlu0 %v7656, 48
      %v8163 = vpop.permute.xlu0 %8162
      %8164 = vrot.lane.b32.xlu0 %v7657, 48
      %v8165 = vpop.permute.xlu0 %8164
      %8166 = vrot.lane.b32.xlu0 %v7658, 48
      %v8167 = vpop.permute.xlu0 %8166
      %8168 = vrot.lane.b32.xlu0 %v7659, 48
      %v8169 = vpop.permute.xlu0 %8168
      %8170 = vrot.lane.b32.xlu0 %v7660, 48
      %v8171 = vpop.permute.xlu0 %8170
      %8172 = vrot.lane.b32.xlu0 %v7661, 48
      %v8173 = vpop.permute.xlu0 %8172
      %8238 = vrot.lane.b32.xlu0 %v7662, 64
      %v8239 = vpop.permute.xlu0 %8238
      %8240 = vrot.lane.b32.xlu0 %v7663, 64
      %v8241 = vpop.permute.xlu0 %8240
      %8242 = vrot.lane.b32.xlu0 %v7664, 64
      %v8243 = vpop.permute.xlu0 %8242
      %8244 = vrot.lane.b32.xlu0 %v7665, 64
      %v8245 = vpop.permute.xlu0 %8244
      %8246 = vrot.lane.b32.xlu0 %v7666, 64
      %v8247 = vpop.permute.xlu0 %8246
      %8248 = vrot.lane.b32.xlu0 %v7667, 64
      %v8249 = vpop.permute.xlu0 %8248
      %8250 = vrot.lane.b32.xlu0 %v7668, 64
      %v8251 = vpop.permute.xlu0 %8250
      %8252 = vrot.lane.b32.xlu0 %v7669, 64
      %v8253 = vpop.permute.xlu0 %8252
      %8254 = vrot.lane.b32.xlu0 %v7670, 64
      %v8255 = vpop.permute.xlu0 %8254
      %8256 = vrot.lane.b32.xlu0 %v7671, 64
      %v8257 = vpop.permute.xlu0 %8256
      %8258 = vrot.lane.b32.xlu0 %v7672, 64
      %v8259 = vpop.permute.xlu0 %8258
      %8260 = vrot.lane.b32.xlu0 %v7673, 64
      %v8261 = vpop.permute.xlu0 %8260
      %8262 = vrot.lane.b32.xlu0 %v7674, 64
      %v8263 = vpop.permute.xlu0 %8262
      %8264 = vrot.lane.b32.xlu0 %v7675, 64
      %v8265 = vpop.permute.xlu0 %8264
      %8266 = vrot.lane.b32.xlu0 %v7676, 64
      %v8267 = vpop.permute.xlu0 %8266
      %8268 = vrot.lane.b32.xlu0 %v7677, 64
      %v8269 = vpop.permute.xlu0 %8268
      %8270 = vrot.lane.b32.xlu0 %v7678, 64
      %v8271 = vpop.permute.xlu0 %8270
      %8272 = vrot.lane.b32.xlu0 %v7679, 64
      %v8273 = vpop.permute.xlu0 %8272
      %8274 = vrot.lane.b32.xlu0 %v7680, 64
      %v8275 = vpop.permute.xlu0 %8274
      %8276 = vrot.lane.b32.xlu0 %v7681, 64
      %v8277 = vpop.permute.xlu0 %8276
      %8278 = vrot.lane.b32.xlu0 %v7682, 64
      %v8279 = vpop.permute.xlu0 %8278
      %8280 = vrot.lane.b32.xlu0 %v7683, 64
      %v8281 = vpop.permute.xlu0 %8280
      %8282 = vrot.lane.b32.xlu0 %v7684, 64
      %v8283 = vpop.permute.xlu0 %8282
      %8284 = vrot.lane.b32.xlu0 %v7685, 64
      %v8285 = vpop.permute.xlu0 %8284
      %8286 = vrot.lane.b32.xlu0 %v7686, 64
      %v8287 = vpop.permute.xlu0 %8286
      %8288 = vrot.lane.b32.xlu0 %v7687, 64
      %v8289 = vpop.permute.xlu0 %8288
      %8290 = vrot.lane.b32.xlu0 %v7688, 64
      %v8291 = vpop.permute.xlu0 %8290
      %8292 = vrot.lane.b32.xlu0 %v7689, 64
      %v8293 = vpop.permute.xlu0 %8292
      %8294 = vrot.lane.b32.xlu0 %v7690, 64
      %v8295 = vpop.permute.xlu0 %8294
      %8296 = vrot.lane.b32.xlu0 %v7691, 64
      %v8297 = vpop.permute.xlu0 %8296
      %8298 = vrot.lane.b32.xlu0 %v7692, 64
      %v8299 = vpop.permute.xlu0 %8298
      %8300 = vrot.lane.b32.xlu0 %v7693, 64
      %v8301 = vpop.permute.xlu0 %8300
      %8366 = vrot.lane.b32.xlu0 %v7694, 80
      %v8367 = vpop.permute.xlu0 %8366
      %8368 = vrot.lane.b32.xlu0 %v7695, 80
      %v8369 = vpop.permute.xlu0 %8368
      %8370 = vrot.lane.b32.xlu0 %v7696, 80
      %v8371 = vpop.permute.xlu0 %8370
      %8372 = vrot.lane.b32.xlu0 %v7697, 80
      %v8373 = vpop.permute.xlu0 %8372
      %8374 = vrot.lane.b32.xlu0 %v7698, 80
      %v8375 = vpop.permute.xlu0 %8374
      %8376 = vrot.lane.b32.xlu0 %v7699, 80
      %v8377 = vpop.permute.xlu0 %8376
      %8378 = vrot.lane.b32.xlu0 %v7700, 80
      %v8379 = vpop.permute.xlu0 %8378
      %8380 = vrot.lane.b32.xlu0 %v7701, 80
      %v8381 = vpop.permute.xlu0 %8380
      %8382 = vrot.lane.b32.xlu0 %v7702, 80
      %v8383 = vpop.permute.xlu0 %8382
      %8384 = vrot.lane.b32.xlu0 %v7703, 80
      %v8385 = vpop.permute.xlu0 %8384
      %8386 = vrot.lane.b32.xlu0 %v7704, 80
      %v8387 = vpop.permute.xlu0 %8386
      %8388 = vrot.lane.b32.xlu0 %v7705, 80
      %v8389 = vpop.permute.xlu0 %8388
      %8390 = vrot.lane.b32.xlu0 %v7706, 80
      %v8391 = vpop.permute.xlu0 %8390
      %8392 = vrot.lane.b32.xlu0 %v7707, 80
      %v8393 = vpop.permute.xlu0 %8392
      %8394 = vrot.lane.b32.xlu0 %v7708, 80
      %v8395 = vpop.permute.xlu0 %8394
      %8396 = vrot.lane.b32.xlu0 %v7709, 80
      %v8397 = vpop.permute.xlu0 %8396
      %8398 = vrot.lane.b32.xlu0 %v7710, 80
      %v8399 = vpop.permute.xlu0 %8398
      %8400 = vrot.lane.b32.xlu0 %v7711, 80
      %v8401 = vpop.permute.xlu0 %8400
      %8402 = vrot.lane.b32.xlu0 %v7712, 80
      %v8403 = vpop.permute.xlu0 %8402
      %8404 = vrot.lane.b32.xlu0 %v7713, 80
      %v8405 = vpop.permute.xlu0 %8404
      %8406 = vrot.lane.b32.xlu0 %v7714, 80
      %v8407 = vpop.permute.xlu0 %8406
      %8408 = vrot.lane.b32.xlu0 %v7715, 80
      %v8409 = vpop.permute.xlu0 %8408
      %8410 = vrot.lane.b32.xlu0 %v7716, 80
      %v8411 = vpop.permute.xlu0 %8410
      %8412 = vrot.lane.b32.xlu0 %v7717, 80
      %v8413 = vpop.permute.xlu0 %8412
      %8414 = vrot.lane.b32.xlu0 %v7718, 80
      %v8415 = vpop.permute.xlu0 %8414
      %8416 = vrot.lane.b32.xlu0 %v7719, 80
      %v8417 = vpop.permute.xlu0 %8416
      %8418 = vrot.lane.b32.xlu0 %v7720, 80
      %v8419 = vpop.permute.xlu0 %8418
      %8420 = vrot.lane.b32.xlu0 %v7721, 80
      %v8421 = vpop.permute.xlu0 %8420
      %8422 = vrot.lane.b32.xlu0 %v7722, 80
      %v8423 = vpop.permute.xlu0 %8422
      %8424 = vrot.lane.b32.xlu0 %v7723, 80
      %v8425 = vpop.permute.xlu0 %8424
      %8426 = vrot.lane.b32.xlu0 %v7724, 80
      %v8427 = vpop.permute.xlu0 %8426
      %8428 = vrot.lane.b32.xlu0 %v7725, 80
      %v8429 = vpop.permute.xlu0 %8428
      %8494 = vrot.lane.b32.xlu0 %v7726, 96
      %v8495 = vpop.permute.xlu0 %8494
      %8496 = vrot.lane.b32.xlu0 %v7727, 96
      %v8497 = vpop.permute.xlu0 %8496
      %8498 = vrot.lane.b32.xlu0 %v7728, 96
      %v8499 = vpop.permute.xlu0 %8498
      %8500 = vrot.lane.b32.xlu0 %v7729, 96
      %v8501 = vpop.permute.xlu0 %8500
      %8502 = vrot.lane.b32.xlu0 %v7730, 96
      %v8503 = vpop.permute.xlu0 %8502
      %8504 = vrot.lane.b32.xlu0 %v7731, 96
      %v8505 = vpop.permute.xlu0 %8504
      %8506 = vrot.lane.b32.xlu0 %v7732, 96
      %v8507 = vpop.permute.xlu0 %8506
      %8508 = vrot.lane.b32.xlu0 %v7733, 96
      %v8509 = vpop.permute.xlu0 %8508
      %8510 = vrot.lane.b32.xlu0 %v7734, 96
      %v8511 = vpop.permute.xlu0 %8510
      %8512 = vrot.lane.b32.xlu0 %v7735, 96
      %v8513 = vpop.permute.xlu0 %8512
      %8514 = vrot.lane.b32.xlu0 %v7736, 96
      %v8515 = vpop.permute.xlu0 %8514
      %8516 = vrot.lane.b32.xlu0 %v7737, 96
      %v8517 = vpop.permute.xlu0 %8516
      %8518 = vrot.lane.b32.xlu0 %v7738, 96
      %v8519 = vpop.permute.xlu0 %8518
      %8520 = vrot.lane.b32.xlu0 %v7739, 96
      %v8521 = vpop.permute.xlu0 %8520
      %8522 = vrot.lane.b32.xlu0 %v7740, 96
      %v8523 = vpop.permute.xlu0 %8522
      %8524 = vrot.lane.b32.xlu0 %v7741, 96
      %v8525 = vpop.permute.xlu0 %8524
      %8526 = vrot.lane.b32.xlu0 %v7742, 96
      %v8527 = vpop.permute.xlu0 %8526
      %8528 = vrot.lane.b32.xlu0 %v7743, 96
      %v8529 = vpop.permute.xlu0 %8528
      %8530 = vrot.lane.b32.xlu0 %v7744, 96
      %v8531 = vpop.permute.xlu0 %8530
      %8532 = vrot.lane.b32.xlu0 %v7745, 96
      %v8533 = vpop.permute.xlu0 %8532
      %8534 = vrot.lane.b32.xlu0 %v7746, 96
      %v8535 = vpop.permute.xlu0 %8534
      %8536 = vrot.lane.b32.xlu0 %v7747, 96
      %v8537 = vpop.permute.xlu0 %8536
      %8538 = vrot.lane.b32.xlu0 %v7748, 96
      %v8539 = vpop.permute.xlu0 %8538
      %8540 = vrot.lane.b32.xlu0 %v7749, 96
      %v8541 = vpop.permute.xlu0 %8540
      %8542 = vrot.lane.b32.xlu0 %v7750, 96
      %v8543 = vpop.permute.xlu0 %8542
      %8544 = vrot.lane.b32.xlu0 %v7751, 96
      %v8545 = vpop.permute.xlu0 %8544
      %8546 = vrot.lane.b32.xlu0 %v7752, 96
      %v8547 = vpop.permute.xlu0 %8546
      %8548 = vrot.lane.b32.xlu0 %v7753, 96
      %v8549 = vpop.permute.xlu0 %8548
      %8550 = vrot.lane.b32.xlu0 %v7754, 96
      %v8551 = vpop.permute.xlu0 %8550
      %8552 = vrot.lane.b32.xlu0 %v7755, 96
      %v8553 = vpop.permute.xlu0 %8552
      %8554 = vrot.lane.b32.xlu0 %v7756, 96
      %v8555 = vpop.permute.xlu0 %8554
      %8556 = vrot.lane.b32.xlu0 %v7757, 96
      %v8557 = vpop.permute.xlu0 %8556
      %8622 = vrot.lane.b32.xlu0 %v7758, 112
      %v8623 = vpop.permute.xlu0 %8622
      %8624 = vrot.lane.b32.xlu0 %v7759, 112
      %v8625 = vpop.permute.xlu0 %8624
      %8626 = vrot.lane.b32.xlu0 %v7760, 112
      %v8627 = vpop.permute.xlu0 %8626
      %8628 = vrot.lane.b32.xlu0 %v7761, 112
      %v8629 = vpop.permute.xlu0 %8628
      %8630 = vrot.lane.b32.xlu0 %v7762, 112
      %v8631 = vpop.permute.xlu0 %8630
      %8632 = vrot.lane.b32.xlu0 %v7763, 112
      %v8633 = vpop.permute.xlu0 %8632
      %8634 = vrot.lane.b32.xlu0 %v7764, 112
      %v8635 = vpop.permute.xlu0 %8634
      %8636 = vrot.lane.b32.xlu0 %v7765, 112
      %v8637 = vpop.permute.xlu0 %8636
      %8638 = vrot.lane.b32.xlu0 %v7766, 112
      %v8639 = vpop.permute.xlu0 %8638
      %8640 = vrot.lane.b32.xlu0 %v7767, 112
      %v8641 = vpop.permute.xlu0 %8640
      %8642 = vrot.lane.b32.xlu0 %v7768, 112
      %v8643 = vpop.permute.xlu0 %8642
      %8644 = vrot.lane.b32.xlu0 %v7769, 112
      %v8645 = vpop.permute.xlu0 %8644
      %8646 = vrot.lane.b32.xlu0 %v7770, 112
      %v8647 = vpop.permute.xlu0 %8646
      %8648 = vrot.lane.b32.xlu0 %v7771, 112
      %v8649 = vpop.permute.xlu0 %8648
      %8650 = vrot.lane.b32.xlu0 %v7772, 112
      %v8651 = vpop.permute.xlu0 %8650
      %8652 = vrot.lane.b32.xlu0 %v7773, 112
      %v8653 = vpop.permute.xlu0 %8652
      %8654 = vrot.lane.b32.xlu0 %v7774, 112
      %v8655 = vpop.permute.xlu0 %8654
      %8656 = vrot.lane.b32.xlu0 %v7775, 112
      %v8657 = vpop.permute.xlu0 %8656
      %8658 = vrot.lane.b32.xlu0 %v7776, 112
      %v8659 = vpop.permute.xlu0 %8658
      %8660 = vrot.lane.b32.xlu0 %v7777, 112
      %v8661 = vpop.permute.xlu0 %8660
      %8662 = vrot.lane.b32.xlu0 %v7778, 112
      %v8663 = vpop.permute.xlu0 %8662
      %8664 = vrot.lane.b32.xlu0 %v7779, 112
      %v8665 = vpop.permute.xlu0 %8664
      %8666 = vrot.lane.b32.xlu0 %v7780, 112
      %v8667 = vpop.permute.xlu0 %8666
      %8668 = vrot.lane.b32.xlu0 %v7781, 112
      %v8669 = vpop.permute.xlu0 %8668
      %8670 = vrot.lane.b32.xlu0 %v7782, 112
      %v8671 = vpop.permute.xlu0 %8670
      %8672 = vrot.lane.b32.xlu0 %v7783, 112
      %v8673 = vpop.permute.xlu0 %8672
      %8674 = vrot.lane.b32.xlu0 %v7784, 112
      %v8675 = vpop.permute.xlu0 %8674
      %8676 = vrot.lane.b32.xlu0 %v7785, 112
      %v8677 = vpop.permute.xlu0 %8676
      %8678 = vrot.lane.b32.xlu0 %v7786, 112
      %v8679 = vpop.permute.xlu0 %8678
      %8680 = vrot.lane.b32.xlu0 %v7787, 112
      %v8681 = vpop.permute.xlu0 %8680
      %8682 = vrot.lane.b32.xlu0 %v7788, 112
      %v8683 = vpop.permute.xlu0 %8682
      %8684 = vrot.lane.b32.xlu0 %v7789, 112
      %v8685 = vpop.permute.xlu0 %8684
      %v8718 = vsel %vm658, %v7534, %v7855
      %v8719 = vsel %vm658, %v7535, %v7857
      %v8720 = vsel %vm658, %v7536, %v7859
      %v8721 = vsel %vm658, %v7537, %v7861
      %v8722 = vsel %vm658, %v7538, %v7863
      %v8723 = vsel %vm658, %v7539, %v7865
      %v8724 = vsel %vm658, %v7540, %v7867
      %v8725 = vsel %vm658, %v7541, %v7869
      %v8726 = vsel %vm658, %v7542, %v7871
      %v8727 = vsel %vm658, %v7543, %v7873
      %v8728 = vsel %vm658, %v7544, %v7875
      %v8729 = vsel %vm658, %v7545, %v7877
      %v8730 = vsel %vm658, %v7546, %v7879
      %v8731 = vsel %vm658, %v7547, %v7881
      %v8732 = vsel %vm658, %v7548, %v7883
      %v8733 = vsel %vm658, %v7549, %v7885
      %v8734 = vsel %vm658, %v7550, %v7887
      %v8735 = vsel %vm658, %v7551, %v7889
      %v8736 = vsel %vm658, %v7552, %v7891
      %v8737 = vsel %vm658, %v7553, %v7893
      %v8738 = vsel %vm658, %v7554, %v7895
      %v8739 = vsel %vm658, %v7555, %v7897
      %v8740 = vsel %vm658, %v7556, %v7899
      %v8741 = vsel %vm658, %v7557, %v7901
      %v8742 = vsel %vm658, %v7558, %v7903
      %v8743 = vsel %vm658, %v7559, %v7905
      %v8744 = vsel %vm658, %v7560, %v7907
      %v8745 = vsel %vm658, %v7561, %v7909
      %v8746 = vsel %vm658, %v7562, %v7911
      %v8747 = vsel %vm658, %v7563, %v7913
      %v8748 = vsel %vm658, %v7564, %v7915
      %v8749 = vsel %vm658, %v7565, %v7917
      %v8750 = vsel %vm2338, %v8718, %v7983
      %v8751 = vsel %vm2338, %v8719, %v7985
      %v8752 = vsel %vm2338, %v8720, %v7987
      %v8753 = vsel %vm2338, %v8721, %v7989
      %v8754 = vsel %vm2338, %v8722, %v7991
      %v8755 = vsel %vm2338, %v8723, %v7993
      %v8756 = vsel %vm2338, %v8724, %v7995
      %v8757 = vsel %vm2338, %v8725, %v7997
      %v8758 = vsel %vm2338, %v8726, %v7999
      %v8759 = vsel %vm2338, %v8727, %v8001
      %v8760 = vsel %vm2338, %v8728, %v8003
      %v8761 = vsel %vm2338, %v8729, %v8005
      %v8762 = vsel %vm2338, %v8730, %v8007
      %v8763 = vsel %vm2338, %v8731, %v8009
      %v8764 = vsel %vm2338, %v8732, %v8011
      %v8765 = vsel %vm2338, %v8733, %v8013
      %v8766 = vsel %vm2338, %v8734, %v8015
      %v8767 = vsel %vm2338, %v8735, %v8017
      %v8768 = vsel %vm2338, %v8736, %v8019
      %v8769 = vsel %vm2338, %v8737, %v8021
      %v8770 = vsel %vm2338, %v8738, %v8023
      %v8771 = vsel %vm2338, %v8739, %v8025
      %v8772 = vsel %vm2338, %v8740, %v8027
      %v8773 = vsel %vm2338, %v8741, %v8029
      %v8774 = vsel %vm2338, %v8742, %v8031
      %v8775 = vsel %vm2338, %v8743, %v8033
      %v8776 = vsel %vm2338, %v8744, %v8035
      %v8777 = vsel %vm2338, %v8745, %v8037
      %v8778 = vsel %vm2338, %v8746, %v8039
      %v8779 = vsel %vm2338, %v8747, %v8041
      %v8780 = vsel %vm2338, %v8748, %v8043
      %v8781 = vsel %vm2338, %v8749, %v8045
      %v8782 = vsel %vm4353, %v8750, %v8111
      %v8783 = vsel %vm4353, %v8751, %v8113
      %v8784 = vsel %vm4353, %v8752, %v8115
      %v8785 = vsel %vm4353, %v8753, %v8117
      %v8786 = vsel %vm4353, %v8754, %v8119
      %v8787 = vsel %vm4353, %v8755, %v8121
      %v8788 = vsel %vm4353, %v8756, %v8123
      %v8789 = vsel %vm4353, %v8757, %v8125
      %v8790 = vsel %vm4353, %v8758, %v8127
      %v8791 = vsel %vm4353, %v8759, %v8129
      %v8792 = vsel %vm4353, %v8760, %v8131
      %v8793 = vsel %vm4353, %v8761, %v8133
      %v8794 = vsel %vm4353, %v8762, %v8135
      %v8795 = vsel %vm4353, %v8763, %v8137
      %v8796 = vsel %vm4353, %v8764, %v8139
      %v8797 = vsel %vm4353, %v8765, %v8141
      %v8798 = vsel %vm4353, %v8766, %v8143
      %v8799 = vsel %vm4353, %v8767, %v8145
      %v8800 = vsel %vm4353, %v8768, %v8147
      %v8801 = vsel %vm4353, %v8769, %v8149
      %v8802 = vsel %vm4353, %v8770, %v8151
      %v8803 = vsel %vm4353, %v8771, %v8153
      %v8804 = vsel %vm4353, %v8772, %v8155
      %v8805 = vsel %vm4353, %v8773, %v8157
      %v8806 = vsel %vm4353, %v8774, %v8159
      %v8807 = vsel %vm4353, %v8775, %v8161
      %v8808 = vsel %vm4353, %v8776, %v8163
      %v8809 = vsel %vm4353, %v8777, %v8165
      %v8810 = vsel %vm4353, %v8778, %v8167
      %v8811 = vsel %vm4353, %v8779, %v8169
      %v8812 = vsel %vm4353, %v8780, %v8171
      %v8813 = vsel %vm4353, %v8781, %v8173
      %v8814 = vsel %vm4386, %v8782, %v8239
      %v8815 = vsel %vm4386, %v8783, %v8241
      %v8816 = vsel %vm4386, %v8784, %v8243
      %v8817 = vsel %vm4386, %v8785, %v8245
      %v8818 = vsel %vm4386, %v8786, %v8247
      %v8819 = vsel %vm4386, %v8787, %v8249
      %v8820 = vsel %vm4386, %v8788, %v8251
      %v8821 = vsel %vm4386, %v8789, %v8253
      %v8822 = vsel %vm4386, %v8790, %v8255
      %v8823 = vsel %vm4386, %v8791, %v8257
      %v8824 = vsel %vm4386, %v8792, %v8259
      %v8825 = vsel %vm4386, %v8793, %v8261
      %v8826 = vsel %vm4386, %v8794, %v8263
      %v8827 = vsel %vm4386, %v8795, %v8265
      %v8828 = vsel %vm4386, %v8796, %v8267
      %v8829 = vsel %vm4386, %v8797, %v8269
      %v8830 = vsel %vm4386, %v8798, %v8271
      %v8831 = vsel %vm4386, %v8799, %v8273
      %v8832 = vsel %vm4386, %v8800, %v8275
      %v8833 = vsel %vm4386, %v8801, %v8277
      %v8834 = vsel %vm4386, %v8802, %v8279
      %v8835 = vsel %vm4386, %v8803, %v8281
      %v8836 = vsel %vm4386, %v8804, %v8283
      %v8837 = vsel %vm4386, %v8805, %v8285
      %v8838 = vsel %vm4386, %v8806, %v8287
      %v8839 = vsel %vm4386, %v8807, %v8289
      %v8840 = vsel %vm4386, %v8808, %v8291
      %v8841 = vsel %vm4386, %v8809, %v8293
      %v8842 = vsel %vm4386, %v8810, %v8295
      %v8843 = vsel %vm4386, %v8811, %v8297
      %v8844 = vsel %vm4386, %v8812, %v8299
      %v8845 = vsel %vm4386, %v8813, %v8301
      %v8846 = vsel %vm4419, %v8814, %v8367
      %v8847 = vsel %vm4419, %v8815, %v8369
      %v8848 = vsel %vm4419, %v8816, %v8371
      %v8849 = vsel %vm4419, %v8817, %v8373
      %v8850 = vsel %vm4419, %v8818, %v8375
      %v8851 = vsel %vm4419, %v8819, %v8377
      %v8852 = vsel %vm4419, %v8820, %v8379
      %v8853 = vsel %vm4419, %v8821, %v8381
      %v8854 = vsel %vm4419, %v8822, %v8383
      %v8855 = vsel %vm4419, %v8823, %v8385
      %v8856 = vsel %vm4419, %v8824, %v8387
      %v8857 = vsel %vm4419, %v8825, %v8389
      %v8858 = vsel %vm4419, %v8826, %v8391
      %v8859 = vsel %vm4419, %v8827, %v8393
      %v8860 = vsel %vm4419, %v8828, %v8395
      %v8861 = vsel %vm4419, %v8829, %v8397
      %v8862 = vsel %vm4419, %v8830, %v8399
      %v8863 = vsel %vm4419, %v8831, %v8401
      %v8864 = vsel %vm4419, %v8832, %v8403
      %v8865 = vsel %vm4419, %v8833, %v8405
      %v8866 = vsel %vm4419, %v8834, %v8407
      %v8867 = vsel %vm4419, %v8835, %v8409
      %v8868 = vsel %vm4419, %v8836, %v8411
      %v8869 = vsel %vm4419, %v8837, %v8413
      %v8870 = vsel %vm4419, %v8838, %v8415
      %v8871 = vsel %vm4419, %v8839, %v8417
      %v8872 = vsel %vm4419, %v8840, %v8419
      %v8873 = vsel %vm4419, %v8841, %v8421
      %v8874 = vsel %vm4419, %v8842, %v8423
      %v8875 = vsel %vm4419, %v8843, %v8425
      %v8876 = vsel %vm4419, %v8844, %v8427
      %v8877 = vsel %vm4419, %v8845, %v8429
      %v8878 = vsel %vm4452, %v8846, %v8495
      %v8879 = vsel %vm4452, %v8847, %v8497
      %v8880 = vsel %vm4452, %v8848, %v8499
      %v8881 = vsel %vm4452, %v8849, %v8501
      %v8882 = vsel %vm4452, %v8850, %v8503
      %v8883 = vsel %vm4452, %v8851, %v8505
      %v8884 = vsel %vm4452, %v8852, %v8507
      %v8885 = vsel %vm4452, %v8853, %v8509
      %v8886 = vsel %vm4452, %v8854, %v8511
      %v8887 = vsel %vm4452, %v8855, %v8513
      %v8888 = vsel %vm4452, %v8856, %v8515
      %v8889 = vsel %vm4452, %v8857, %v8517
      %v8890 = vsel %vm4452, %v8858, %v8519
      %v8891 = vsel %vm4452, %v8859, %v8521
      %v8892 = vsel %vm4452, %v8860, %v8523
      %v8893 = vsel %vm4452, %v8861, %v8525
      %v8894 = vsel %vm4452, %v8862, %v8527
      %v8895 = vsel %vm4452, %v8863, %v8529
      %v8896 = vsel %vm4452, %v8864, %v8531
      %v8897 = vsel %vm4452, %v8865, %v8533
      %v8898 = vsel %vm4452, %v8866, %v8535
      %v8899 = vsel %vm4452, %v8867, %v8537
      %v8900 = vsel %vm4452, %v8868, %v8539
      %v8901 = vsel %vm4452, %v8869, %v8541
      %v8902 = vsel %vm4452, %v8870, %v8543
      %v8903 = vsel %vm4452, %v8871, %v8545
      %v8904 = vsel %vm4452, %v8872, %v8547
      %v8905 = vsel %vm4452, %v8873, %v8549
      %v8906 = vsel %vm4452, %v8874, %v8551
      %v8907 = vsel %vm4452, %v8875, %v8553
      %v8908 = vsel %vm4452, %v8876, %v8555
      %v8909 = vsel %vm4452, %v8877, %v8557
      %v8910 = vsel %vm4485, %v8878, %v8623
      %v8911 = vsel %vm4485, %v8879, %v8625
      %v8912 = vsel %vm4485, %v8880, %v8627
      %v8913 = vsel %vm4485, %v8881, %v8629
      %v8914 = vsel %vm4485, %v8882, %v8631
      %v8915 = vsel %vm4485, %v8883, %v8633
      %v8916 = vsel %vm4485, %v8884, %v8635
      %v8917 = vsel %vm4485, %v8885, %v8637
      %v8918 = vsel %vm4485, %v8886, %v8639
      %v8919 = vsel %vm4485, %v8887, %v8641
      %v8920 = vsel %vm4485, %v8888, %v8643
      %v8921 = vsel %vm4485, %v8889, %v8645
      %v8922 = vsel %vm4485, %v8890, %v8647
      %v8923 = vsel %vm4485, %v8891, %v8649
      %v8924 = vsel %vm4485, %v8892, %v8651
      %v8925 = vsel %vm4485, %v8893, %v8653
      %v8926 = vsel %vm4485, %v8894, %v8655
      %v8927 = vsel %vm4485, %v8895, %v8657
      %v8928 = vsel %vm4485, %v8896, %v8659
      %v8929 = vsel %vm4485, %v8897, %v8661
      %v8930 = vsel %vm4485, %v8898, %v8663
      %v8931 = vsel %vm4485, %v8899, %v8665
      %v8932 = vsel %vm4485, %v8900, %v8667
      %v8933 = vsel %vm4485, %v8901, %v8669
      %v8934 = vsel %vm4485, %v8902, %v8671
      %v8935 = vsel %vm4485, %v8903, %v8673
      %v8936 = vsel %vm4485, %v8904, %v8675
      %v8937 = vsel %vm4485, %v8905, %v8677
      %v8938 = vsel %vm4485, %v8906, %v8679
      %v8939 = vsel %vm4485, %v8907, %v8681
      %v8940 = vsel %vm4485, %v8908, %v8683
      %v8941 = vsel %vm4485, %v8909, %v8685
      %v8942 = vpack.c.bf16 %v8911, %v8910
      %v8943 = vpack.c.bf16 %v7791, %v7790
      %v8944 = vpack.c.bf16 %v8913, %v8912
      %v8945 = vpack.c.bf16 %v7793, %v7792
      %v8946 = vpack.c.bf16 %v8915, %v8914
      %v8947 = vpack.c.bf16 %v7795, %v7794
      %v8948 = vpack.c.bf16 %v8917, %v8916
      %v8949 = vpack.c.bf16 %v7797, %v7796
      %v8950 = vpack.c.bf16 %v8919, %v8918
      %v8951 = vpack.c.bf16 %v7799, %v7798
      %v8952 = vpack.c.bf16 %v8921, %v8920
      %v8953 = vpack.c.bf16 %v7801, %v7800
      %v8954 = vpack.c.bf16 %v8923, %v8922
      %v8955 = vpack.c.bf16 %v7803, %v7802
      %v8956 = vpack.c.bf16 %v8925, %v8924
      %v8957 = vpack.c.bf16 %v7805, %v7804
      %v8958 = vpack.c.bf16 %v8927, %v8926
      %v8959 = vpack.c.bf16 %v7807, %v7806
      %v8960 = vpack.c.bf16 %v8929, %v8928
      %v8961 = vpack.c.bf16 %v7809, %v7808
      %v8962 = vpack.c.bf16 %v8931, %v8930
      %v8963 = vpack.c.bf16 %v7811, %v7810
      %v8964 = vpack.c.bf16 %v8933, %v8932
      %v8965 = vpack.c.bf16 %v7813, %v7812
      %v8966 = vpack.c.bf16 %v8935, %v8934
      %v8967 = vpack.c.bf16 %v7815, %v7814
      %v8968 = vpack.c.bf16 %v8937, %v8936
      %v8969 = vpack.c.bf16 %v7817, %v7816
      %v8970 = vpack.c.bf16 %v8939, %v8938
      %v8971 = vpack.c.bf16 %v7819, %v7818
      %v8972 = vpack.c.bf16 %v8941, %v8940
      %v8973 = vpack.c.bf16 %v7821, %v7820
      %v8974 = vld [vmem:[%s13] sm:$0xf]
      %v8975 = vld [vmem:[%s13 + $0x4] sm:$0xf]
      %v8976 = vld [vmem:[%s13 + $0x8] sm:$0xf]
      %v8977 = vld [vmem:[%s13 + $0xc] sm:$0xf]
      %v8978 = vld [vmem:[%s13 + $0x10] sm:$0xf]
      %v8979 = vld [vmem:[%s13 + $0x14] sm:$0xf]
      %v8980 = vld [vmem:[%s13 + $0x18] sm:$0xf]
      %v8981 = vld [vmem:[%s13 + $0x1c] sm:$0xf]
      %v8982 = vld [vmem:[%s13 + $0x20] sm:$0xf]
      %v8983 = vld [vmem:[%s13 + $0x24] sm:$0xf]
      %v8984 = vld [vmem:[%s13 + $0x28] sm:$0xf]
      %v8985 = vld [vmem:[%s13 + $0x2c] sm:$0xf]
      %v8986 = vld [vmem:[%s13 + $0x30] sm:$0xf]
      %v8987 = vld [vmem:[%s13 + $0x34] sm:$0xf]
      %v8988 = vld [vmem:[%s13 + $0x38] sm:$0xf]
      %v8989 = vld [vmem:[%s13 + $0x3c] sm:$0xf]
      %v8990 = vld [vmem:[%s13 + $0x40] sm:$0xf]
      %v8991 = vld [vmem:[%s13 + $0x44] sm:$0xf]
      %v8992 = vld [vmem:[%s14] sm:$0x1]
      %v8994 = vlaneseq
      %v8995 = vshrl.u32 %v8994, 7
      %v8996 = vsub.s32 0, %v8995
      %v8997 = vrot.slane %v8992, %v8996
      %v9017 = vunpack.c.l.b16 %v8974
      %v9018 = vunpack.c.l.b16 %v8975
      %v9019 = vunpack.c.l.b16 %v8976
      %v9020 = vunpack.c.l.b16 %v8977
      %v9021 = vunpack.c.l.b16 %v8978
      %v9022 = vunpack.c.l.b16 %v8979
      %v9023 = vunpack.c.l.b16 %v8980
      %v9024 = vunpack.c.l.b16 %v8981
      %v9025 = vunpack.c.l.b16 %v8982
      %v9026 = vunpack.c.l.b16 %v8983
      %v9027 = vunpack.c.l.b16 %v8984
      %v9028 = vunpack.c.l.b16 %v8985
      %v9029 = vunpack.c.l.b16 %v8986
      %v9030 = vunpack.c.l.b16 %v8987
      %v9031 = vunpack.c.l.b16 %v8988
      %v9032 = vunpack.c.l.b16 %v8989
      %v9033 = vunpack.c.l.b16 %v8990
      %v9034 = vunpack.c.l.b16 %v8991
      %v9035 = vpack.c.b16 %v9018, %v9017
      %v9036 = vpack.c.b16 %v9020, %v9019
      %v9037 = vpack.c.b16 %v9022, %v9021
      %v9038 = vpack.c.b16 %v9024, %v9023
      %v9039 = vpack.c.b16 %v9026, %v9025
      %v9040 = vpack.c.b16 %v9028, %v9027
      %v9041 = vpack.c.b16 %v9030, %v9029
      %v9042 = vpack.c.b16 %v9032, %v9031
      %v9043 = vpack.c.b16 %v9034, %v9033
      %v9054 = vsel %vm658, %v8943, 0
      %v9057 = vsel %vm658, %v8945, 0
      %v9060 = vsel %vm658, %v8947, 0
      %v9063 = vsel %vm658, %v8949, 0
      %v9066 = vsel %vm658, %v8951, 0
      %v9069 = vsel %vm658, %v8953, 0
      %v9072 = vsel %vm658, %v8955, 0
      %v9075 = vsel %vm658, %v8957, 0
      %v9078 = vsel %vm658, %v8959, 0
      %v9081 = vsel %vm658, %v8961, 0
      %v9084 = vsel %vm658, %v8963, 0
      %v9087 = vsel %vm658, %v8965, 0
      %v9090 = vsel %vm658, %v8967, 0
      %v9093 = vsel %vm658, %v8969, 0
      %v9096 = vsel %vm658, %v8971, 0
      %v9099 = vsel %vm658, %v8973, 0
      %9101 = vmatprep.subr.bf16.mxu0 0
      %9102 = vmatpush1.bf16.msra.mxu0 %v9042
      %9103 = vmatprep.subr.bf16.mxu0 0
      %9104 = vmatpush1.bf16.msra.mxu0 %v9041
      %9105 = vmatprep.subr.bf16.mxu0 0
      %9106 = vmatpush1.bf16.msra.mxu0 %v9040
      %9107 = vmatprep.subr.bf16.mxu0 0
      %9108 = vmatpush1.bf16.msra.mxu0 %v9039
      %9109 = vmatprep.subr.bf16.mxu0 0
      %9110 = vmatpush1.bf16.msra.mxu0 %v9038
      %9111 = vmatprep.subr.bf16.mxu0 0
      %9112 = vmatpush1.bf16.msra.mxu0 %v9037
      %9113 = vmatprep.subr.bf16.mxu0 0
      %9114 = vmatpush1.bf16.msra.mxu0 %v9036
      %9115 = vmatprep.subr.bf16.mxu0 0
      %9116 = vmatpush1.bf16.msra.mxu0 %v9035
      %9117 = vmatprep.subr.bf16.mxu0 0
      %9118 = vmatpush2.bf16.msra.mxu0 0
      %9119 = vmatprep.subr.bf16.mxu0 0
      %9120 = vmatpush2.bf16.msra.mxu0 0
      %9121 = vmatprep.subr.bf16.mxu0 0
      %9122 = vmatpush2.bf16.msra.mxu0 0
      %9123 = vmatprep.subr.bf16.mxu0 0
      %9124 = vmatpush2.bf16.msra.mxu0 0
      %9125 = vmatprep.subr.bf16.mxu0 0
      %9126 = vmatpush2.bf16.msra.mxu0 0
      %9127 = vmatprep.subr.bf16.mxu0 0
      %9128 = vmatpush2.bf16.msra.mxu0 0
      %9129 = vmatprep.subr.bf16.mxu0 0
      %9130 = vmatpush2.bf16.msra.mxu0 0
      %9131 = vmatprep.subr.bf16.mxu0 0
      %9132 = vmatpush2.bf16.msra.mxu0 %v9043
      %9133 = vmatprep.mubr.bf16.mxu0 %v9054
      %9134 = vmatmul.mubr.bf16.gmra.mxu0 %v8942
      %v9135 = vpop.f32.mrf.mxu0
      %v9136 = vadd.f32 %v8997, %v9135
      %v9137 = vpop.f32.mrf.mxu0
      %v9138 = vpop.f32.mrf.mxu0
      %v9139 = vadd.f32 %v8997, %v9138
      %v9140 = vpop.f32.mrf.mxu0
      %9141 = vmatprep.mubr.bf16.mxu0 %v9057
      %9142 = vmatmul.mubr.bf16.gmra.mxu0 %v8944
      %v9143 = vpop.f32.mrf.mxu0
      %v9144 = vadd.f32 %v8997, %v9143
      %v9145 = vpop.f32.mrf.mxu0
      %v9146 = vpop.f32.mrf.mxu0
      %v9147 = vadd.f32 %v8997, %v9146
      %v9148 = vpop.f32.mrf.mxu0
      %9149 = vmatprep.mubr.bf16.mxu0 %v9060
      %9150 = vmatmul.mubr.bf16.gmra.mxu0 %v8946
      %v9151 = vpop.f32.mrf.mxu0
      %v9152 = vadd.f32 %v8997, %v9151
      %v9153 = vpop.f32.mrf.mxu0
      %v9154 = vpop.f32.mrf.mxu0
      %v9155 = vadd.f32 %v8997, %v9154
      %v9156 = vpop.f32.mrf.mxu0
      %9157 = vmatprep.mubr.bf16.mxu0 %v9063
      %9158 = vmatmul.mubr.bf16.gmra.mxu0 %v8948
      %v9159 = vpop.f32.mrf.mxu0
      %v9160 = vadd.f32 %v8997, %v9159
      %v9161 = vpop.f32.mrf.mxu0
      %v9162 = vpop.f32.mrf.mxu0
      %v9163 = vadd.f32 %v8997, %v9162
      %v9164 = vpop.f32.mrf.mxu0
      %9165 = vmatprep.mubr.bf16.mxu0 %v9066
      %9166 = vmatmul.mubr.bf16.gmra.mxu0 %v8950
      %v9167 = vpop.f32.mrf.mxu0
      %v9168 = vadd.f32 %v8997, %v9167
      %v9169 = vpop.f32.mrf.mxu0
      %v9170 = vpop.f32.mrf.mxu0
      %v9171 = vadd.f32 %v8997, %v9170
      %v9172 = vpop.f32.mrf.mxu0
      %9173 = vmatprep.mubr.bf16.mxu0 %v9069
      %9174 = vmatmul.mubr.bf16.gmra.mxu0 %v8952
      %v9175 = vpop.f32.mrf.mxu0
      %v9176 = vadd.f32 %v8997, %v9175
      %v9177 = vpop.f32.mrf.mxu0
      %v9178 = vpop.f32.mrf.mxu0
      %v9179 = vadd.f32 %v8997, %v9178
      %v9180 = vpop.f32.mrf.mxu0
      %9181 = vmatprep.mubr.bf16.mxu0 %v9072
      %9182 = vmatmul.mubr.bf16.gmra.mxu0 %v8954
      %v9183 = vpop.f32.mrf.mxu0
      %v9184 = vadd.f32 %v8997, %v9183
      %v9185 = vpop.f32.mrf.mxu0
      %v9186 = vpop.f32.mrf.mxu0
      %v9187 = vadd.f32 %v8997, %v9186
      %v9188 = vpop.f32.mrf.mxu0
      %9189 = vmatprep.mubr.bf16.mxu0 %v9075
      %9190 = vmatmul.mubr.bf16.gmra.mxu0 %v8956
      %v9191 = vpop.f32.mrf.mxu0
      %v9192 = vadd.f32 %v8997, %v9191
      %v9193 = vpop.f32.mrf.mxu0
      %v9194 = vpop.f32.mrf.mxu0
      %v9195 = vadd.f32 %v8997, %v9194
      %v9196 = vpop.f32.mrf.mxu0
      %9197 = vmatprep.mubr.bf16.mxu0 %v9078
      %9198 = vmatmul.mubr.bf16.gmra.mxu0 %v8958
      %v9199 = vpop.f32.mrf.mxu0
      %v9200 = vadd.f32 %v8997, %v9199
      %v9201 = vpop.f32.mrf.mxu0
      %v9202 = vpop.f32.mrf.mxu0
      %v9203 = vadd.f32 %v8997, %v9202
      %v9204 = vpop.f32.mrf.mxu0
      %9205 = vmatprep.mubr.bf16.mxu0 %v9081
      %9206 = vmatmul.mubr.bf16.gmra.mxu0 %v8960
      %v9207 = vpop.f32.mrf.mxu0
      %v9208 = vadd.f32 %v8997, %v9207
      %v9209 = vpop.f32.mrf.mxu0
      %v9210 = vpop.f32.mrf.mxu0
      %v9211 = vadd.f32 %v8997, %v9210
      %v9212 = vpop.f32.mrf.mxu0
      %9213 = vmatprep.mubr.bf16.mxu0 %v9084
      %9214 = vmatmul.mubr.bf16.gmra.mxu0 %v8962
      %v9215 = vpop.f32.mrf.mxu0
      %v9216 = vadd.f32 %v8997, %v9215
      %v9217 = vpop.f32.mrf.mxu0
      %v9218 = vpop.f32.mrf.mxu0
      %v9219 = vadd.f32 %v8997, %v9218
      %v9220 = vpop.f32.mrf.mxu0
      %9221 = vmatprep.mubr.bf16.mxu0 %v9087
      %9222 = vmatmul.mubr.bf16.gmra.mxu0 %v8964
      %v9223 = vpop.f32.mrf.mxu0
      %v9224 = vadd.f32 %v8997, %v9223
      %v9225 = vpop.f32.mrf.mxu0
      %v9226 = vpop.f32.mrf.mxu0
      %v9227 = vadd.f32 %v8997, %v9226
      %v9228 = vpop.f32.mrf.mxu0
      %9229 = vmatprep.mubr.bf16.mxu0 %v9090
      %9230 = vmatmul.mubr.bf16.gmra.mxu0 %v8966
      %v9231 = vpop.f32.mrf.mxu0
      %v9232 = vadd.f32 %v8997, %v9231
      %v9233 = vpop.f32.mrf.mxu0
      %v9234 = vpop.f32.mrf.mxu0
      %v9235 = vadd.f32 %v8997, %v9234
      %v9236 = vpop.f32.mrf.mxu0
      %9237 = vmatprep.mubr.bf16.mxu0 %v9093
      %9238 = vmatmul.mubr.bf16.gmra.mxu0 %v8968
      %v9239 = vpop.f32.mrf.mxu0
      %v9240 = vadd.f32 %v8997, %v9239
      %v9241 = vpop.f32.mrf.mxu0
      %v9242 = vpop.f32.mrf.mxu0
      %v9243 = vadd.f32 %v8997, %v9242
      %v9244 = vpop.f32.mrf.mxu0
      %9245 = vmatprep.mubr.bf16.mxu0 %v9096
      %9246 = vmatmul.mubr.bf16.gmra.mxu0 %v8970
      %v9247 = vpop.f32.mrf.mxu0
      %v9248 = vadd.f32 %v8997, %v9247
      %v9249 = vpop.f32.mrf.mxu0
      %v9250 = vpop.f32.mrf.mxu0
      %v9251 = vadd.f32 %v8997, %v9250
      %v9252 = vpop.f32.mrf.mxu0
      %9253 = vmatprep.mubr.bf16.mxu0 %v9099
      %9254 = vmatmul.mubr.bf16.gmra.mxu0 %v8972
      %v9255 = vpop.f32.mrf.mxu0
      %v9256 = vadd.f32 %v8997, %v9255
      %v9257 = vpop.f32.mrf.mxu0
      %v9258 = vpop.f32.mrf.mxu0
      %v9259 = vadd.f32 %v8997, %v9258
      %v9260 = vpop.f32.mrf.mxu0
      %9261 = vdwg.mxu0
      %vm9262 = vcmp.ge.f32.partialorder %v9136, 0.0
      %vm9263 = vcmp.ge.f32.partialorder %v9139, 0.0
      %vm9264 = vcmp.ge.f32.partialorder %v9144, 0.0
      %vm9265 = vcmp.ge.f32.partialorder %v9147, 0.0
      %vm9266 = vcmp.ge.f32.partialorder %v9152, 0.0
      %vm9267 = vcmp.ge.f32.partialorder %v9155, 0.0
      %vm9268 = vcmp.ge.f32.partialorder %v9160, 0.0
      %vm9269 = vcmp.ge.f32.partialorder %v9163, 0.0
      %vm9270 = vcmp.ge.f32.partialorder %v9168, 0.0
      %vm9271 = vcmp.ge.f32.partialorder %v9171, 0.0
      %vm9272 = vcmp.ge.f32.partialorder %v9176, 0.0
      %vm9273 = vcmp.ge.f32.partialorder %v9179, 0.0
      %vm9274 = vcmp.ge.f32.partialorder %v9184, 0.0
      %vm9275 = vcmp.ge.f32.partialorder %v9187, 0.0
      %vm9276 = vcmp.ge.f32.partialorder %v9192, 0.0
      %vm9277 = vcmp.ge.f32.partialorder %v9195, 0.0
      %vm9278 = vcmp.ge.f32.partialorder %v9200, 0.0
      %vm9279 = vcmp.ge.f32.partialorder %v9203, 0.0
      %vm9280 = vcmp.ge.f32.partialorder %v9208, 0.0
      %vm9281 = vcmp.ge.f32.partialorder %v9211, 0.0
      %vm9282 = vcmp.ge.f32.partialorder %v9216, 0.0
      %vm9283 = vcmp.ge.f32.partialorder %v9219, 0.0
      %vm9284 = vcmp.ge.f32.partialorder %v9224, 0.0
      %vm9285 = vcmp.ge.f32.partialorder %v9227, 0.0
      %vm9286 = vcmp.ge.f32.partialorder %v9232, 0.0
      %vm9287 = vcmp.ge.f32.partialorder %v9235, 0.0
      %vm9288 = vcmp.ge.f32.partialorder %v9240, 0.0
      %vm9289 = vcmp.ge.f32.partialorder %v9243, 0.0
      %vm9290 = vcmp.ge.f32.partialorder %v9248, 0.0
      %vm9291 = vcmp.ge.f32.partialorder %v9251, 0.0
      %vm9292 = vcmp.ge.f32.partialorder %v9256, 0.0
      %vm9293 = vcmp.ge.f32.partialorder %v9259, 0.0
      %v9294 = vmul.f32 %v9136, 0.1
      %v9295 = vmul.f32 %v9139, 0.1
      %v9296 = vmul.f32 %v9144, 0.1
      %v9297 = vmul.f32 %v9147, 0.1
      %v9298 = vmul.f32 %v9152, 0.1
      %v9299 = vmul.f32 %v9155, 0.1
      %v9300 = vmul.f32 %v9160, 0.1
      %v9301 = vmul.f32 %v9163, 0.1
      %v9302 = vmul.f32 %v9168, 0.1
      %v9303 = vmul.f32 %v9171, 0.1
      %v9304 = vmul.f32 %v9176, 0.1
      %v9305 = vmul.f32 %v9179, 0.1
      %v9306 = vmul.f32 %v9184, 0.1
      %v9307 = vmul.f32 %v9187, 0.1
      %v9308 = vmul.f32 %v9192, 0.1
      %v9309 = vmul.f32 %v9195, 0.1
      %v9310 = vmul.f32 %v9200, 0.1
      %v9311 = vmul.f32 %v9203, 0.1
      %v9312 = vmul.f32 %v9208, 0.1
      %v9313 = vmul.f32 %v9211, 0.1
      %v9314 = vmul.f32 %v9216, 0.1
      %v9315 = vmul.f32 %v9219, 0.1
      %v9316 = vmul.f32 %v9224, 0.1
      %v9317 = vmul.f32 %v9227, 0.1
      %v9318 = vmul.f32 %v9232, 0.1
      %v9319 = vmul.f32 %v9235, 0.1
      %v9320 = vmul.f32 %v9240, 0.1
      %v9321 = vmul.f32 %v9243, 0.1
      %v9322 = vmul.f32 %v9248, 0.1
      %v9323 = vmul.f32 %v9251, 0.1
      %v9324 = vmul.f32 %v9256, 0.1
      %v9325 = vmul.f32 %v9259, 0.1
      %v9326 = vsel %vm9262, %v9136, %v9294
      %v9327 = vsel %vm9263, %v9139, %v9295
      %v9328 = vsel %vm9264, %v9144, %v9296
      %v9329 = vsel %vm9265, %v9147, %v9297
      %v9330 = vsel %vm9266, %v9152, %v9298
      %v9331 = vsel %vm9267, %v9155, %v9299
      %v9332 = vsel %vm9268, %v9160, %v9300
      %v9333 = vsel %vm9269, %v9163, %v9301
      %v9334 = vsel %vm9270, %v9168, %v9302
      %v9335 = vsel %vm9271, %v9171, %v9303
      %v9336 = vsel %vm9272, %v9176, %v9304
      %v9337 = vsel %vm9273, %v9179, %v9305
      %v9338 = vsel %vm9274, %v9184, %v9306
      %v9339 = vsel %vm9275, %v9187, %v9307
      %v9340 = vsel %vm9276, %v9192, %v9308
      %v9341 = vsel %vm9277, %v9195, %v9309
      %v9342 = vsel %vm9278, %v9200, %v9310
      %v9343 = vsel %vm9279, %v9203, %v9311
      %v9344 = vsel %vm9280, %v9208, %v9312
      %v9345 = vsel %vm9281, %v9211, %v9313
      %v9346 = vsel %vm9282, %v9216, %v9314
      %v9347 = vsel %vm9283, %v9219, %v9315
      %v9348 = vsel %vm9284, %v9224, %v9316
      %v9349 = vsel %vm9285, %v9227, %v9317
      %v9350 = vsel %vm9286, %v9232, %v9318
      %v9351 = vsel %vm9287, %v9235, %v9319
      %v9352 = vsel %vm9288, %v9240, %v9320
      %v9353 = vsel %vm9289, %v9243, %v9321
      %v9354 = vsel %vm9290, %v9248, %v9322
      %v9355 = vsel %vm9291, %v9251, %v9323
      %v9356 = vsel %vm9292, %v9256, %v9324
      %v9357 = vsel %vm9293, %v9259, %v9325
      %v9358 = vld [vmem:[%s15] sm:$0xf]
      %v9359 = vld [vmem:[%s15 + $0x4] sm:$0xf]
      %v9360 = vld [vmem:[%s16] sm:$0x1]
      %v9362 = vlaneseq
      %v9363 = vshrl.u32 %v9362, 7
      %v9364 = vsub.s32 0, %v9363
      %v9365 = vrot.slane %v9360, %v9364
      %v9369 = vunpack.c.l.b16 %v9358
      %v9370 = vunpack.c.l.b16 %v9359
      %v9371 = vpack.c.b16 %v9370, %v9369
      %v9374 = vsel %vm658, %v5282, 0
      %v9377 = vsel %vm658, %v5283, 0
      %v9380 = vsel %vm658, %v5284, 0
      %v9383 = vsel %vm658, %v5285, 0
      %v9386 = vsel %vm658, %v5286, 0
      %v9389 = vsel %vm658, %v5287, 0
      %v9392 = vsel %vm658, %v5288, 0
      %v9395 = vsel %vm658, %v5289, 0
      %v9398 = vsel %vm658, %v5290, 0
      %v9401 = vsel %vm658, %v5291, 0
      %v9404 = vsel %vm658, %v5292, 0
      %v9407 = vsel %vm658, %v5293, 0
      %v9410 = vsel %vm658, %v5294, 0
      %v9413 = vsel %vm658, %v5295, 0
      %v9416 = vsel %vm658, %v5296, 0
      %v9419 = vsel %vm658, %v5297, 0
      %9421 = vmatprep.subr.bf16.mxu0 0
      %9422 = vmatpush1.bf16.msra.mxu0 0
      %9423 = vmatprep.subr.bf16.mxu0 0
      %9424 = vmatpush1.bf16.msra.mxu0 0
      %9425 = vmatprep.subr.bf16.mxu0 0
      %9426 = vmatpush1.bf16.msra.mxu0 0
      %9427 = vmatprep.subr.bf16.mxu0 0
      %9428 = vmatpush1.bf16.msra.mxu0 0
      %9429 = vmatprep.subr.bf16.mxu0 0
      %9430 = vmatpush1.bf16.msra.mxu0 0
      %9431 = vmatprep.subr.bf16.mxu0 0
      %9432 = vmatpush1.bf16.msra.mxu0 0
      %9433 = vmatprep.subr.bf16.mxu0 0
      %9434 = vmatpush1.bf16.msra.mxu0 0
      %9435 = vmatprep.subr.bf16.mxu0 0
      %9436 = vmatpush1.bf16.msra.mxu0 %v9371
      %9437 = vmatprep.subr.bf16.mxu0 0
      %9438 = vmatpush2.bf16.msra.mxu0 0
      %9439 = vmatprep.subr.bf16.mxu0 0
      %9440 = vmatpush2.bf16.msra.mxu0 0
      %9441 = vmatprep.subr.bf16.mxu0 0
      %9442 = vmatpush2.bf16.msra.mxu0 0
      %9443 = vmatprep.subr.bf16.mxu0 0
      %9444 = vmatpush2.bf16.msra.mxu0 0
      %9445 = vmatprep.subr.bf16.mxu0 0
      %9446 = vmatpush2.bf16.msra.mxu0 0
      %9447 = vmatprep.subr.bf16.mxu0 0
      %9448 = vmatpush2.bf16.msra.mxu0 0
      %9449 = vmatprep.subr.bf16.mxu0 0
      %9450 = vmatpush2.bf16.msra.mxu0 0
      %9451 = vmatprep.subr.bf16.mxu0 0
      %9452 = vmatpush2.bf16.msra.mxu0 0
      %9453 = vmatprep.mubr.bf16.mxu0 0
      %9454 = vmatmul.mubr.bf16.gmra.mxu0 %v9374
      %v9455 = vpop.f32.mrf.mxu0
      %v9456 = vadd.f32 %v9365, %v9455
      %v9457 = vpop.f32.mrf.mxu0
      %v9458 = vpop.f32.mrf.mxu0
      %v9459 = vadd.f32 %v9365, %v9458
      %v9460 = vpop.f32.mrf.mxu0
      %9461 = vmatprep.mubr.bf16.mxu0 0
      %9462 = vmatmul.mubr.bf16.gmra.mxu0 %v9377
      %v9463 = vpop.f32.mrf.mxu0
      %v9464 = vadd.f32 %v9365, %v9463
      %v9465 = vpop.f32.mrf.mxu0
      %v9466 = vpop.f32.mrf.mxu0
      %v9467 = vadd.f32 %v9365, %v9466
      %v9468 = vpop.f32.mrf.mxu0
      %9469 = vmatprep.mubr.bf16.mxu0 0
      %9470 = vmatmul.mubr.bf16.gmra.mxu0 %v9380
      %v9471 = vpop.f32.mrf.mxu0
      %v9472 = vadd.f32 %v9365, %v9471
      %v9473 = vpop.f32.mrf.mxu0
      %v9474 = vpop.f32.mrf.mxu0
      %v9475 = vadd.f32 %v9365, %v9474
      %v9476 = vpop.f32.mrf.mxu0
      %9477 = vmatprep.mubr.bf16.mxu0 0
      %9478 = vmatmul.mubr.bf16.gmra.mxu0 %v9383
      %v9479 = vpop.f32.mrf.mxu0
      %v9480 = vadd.f32 %v9365, %v9479
      %v9481 = vpop.f32.mrf.mxu0
      %v9482 = vpop.f32.mrf.mxu0
      %v9483 = vadd.f32 %v9365, %v9482
      %v9484 = vpop.f32.mrf.mxu0
      %9485 = vmatprep.mubr.bf16.mxu0 0
      %9486 = vmatmul.mubr.bf16.gmra.mxu0 %v9386
      %v9487 = vpop.f32.mrf.mxu0
      %v9488 = vadd.f32 %v9365, %v9487
      %v9489 = vpop.f32.mrf.mxu0
      %v9490 = vpop.f32.mrf.mxu0
      %v9491 = vadd.f32 %v9365, %v9490
      %v9492 = vpop.f32.mrf.mxu0
      %9493 = vmatprep.mubr.bf16.mxu0 0
      %9494 = vmatmul.mubr.bf16.gmra.mxu0 %v9389
      %v9495 = vpop.f32.mrf.mxu0
      %v9496 = vadd.f32 %v9365, %v9495
      %v9497 = vpop.f32.mrf.mxu0
      %v9498 = vpop.f32.mrf.mxu0
      %v9499 = vadd.f32 %v9365, %v9498
      %v9500 = vpop.f32.mrf.mxu0
      %9501 = vmatprep.mubr.bf16.mxu0 0
      %9502 = vmatmul.mubr.bf16.gmra.mxu0 %v9392
      %v9503 = vpop.f32.mrf.mxu0
      %v9504 = vadd.f32 %v9365, %v9503
      %v9505 = vpop.f32.mrf.mxu0
      %v9506 = vpop.f32.mrf.mxu0
      %v9507 = vadd.f32 %v9365, %v9506
      %v9508 = vpop.f32.mrf.mxu0
      %9509 = vmatprep.mubr.bf16.mxu0 0
      %9510 = vmatmul.mubr.bf16.gmra.mxu0 %v9395
      %v9511 = vpop.f32.mrf.mxu0
      %v9512 = vadd.f32 %v9365, %v9511
      %v9513 = vpop.f32.mrf.mxu0
      %v9514 = vpop.f32.mrf.mxu0
      %v9515 = vadd.f32 %v9365, %v9514
      %v9516 = vpop.f32.mrf.mxu0
      %9517 = vmatprep.mubr.bf16.mxu0 0
      %9518 = vmatmul.mubr.bf16.gmra.mxu0 %v9398
      %v9519 = vpop.f32.mrf.mxu0
      %v9520 = vadd.f32 %v9365, %v9519
      %v9521 = vpop.f32.mrf.mxu0
      %v9522 = vpop.f32.mrf.mxu0
      %v9523 = vadd.f32 %v9365, %v9522
      %v9524 = vpop.f32.mrf.mxu0
      %9525 = vmatprep.mubr.bf16.mxu0 0
      %9526 = vmatmul.mubr.bf16.gmra.mxu0 %v9401
      %v9527 = vpop.f32.mrf.mxu0
      %v9528 = vadd.f32 %v9365, %v9527
      %v9529 = vpop.f32.mrf.mxu0
      %v9530 = vpop.f32.mrf.mxu0
      %v9531 = vadd.f32 %v9365, %v9530
      %v9532 = vpop.f32.mrf.mxu0
      %9533 = vmatprep.mubr.bf16.mxu0 0
      %9534 = vmatmul.mubr.bf16.gmra.mxu0 %v9404
      %v9535 = vpop.f32.mrf.mxu0
      %v9536 = vadd.f32 %v9365, %v9535
      %v9537 = vpop.f32.mrf.mxu0
      %v9538 = vpop.f32.mrf.mxu0
      %v9539 = vadd.f32 %v9365, %v9538
      %v9540 = vpop.f32.mrf.mxu0
      %9541 = vmatprep.mubr.bf16.mxu0 0
      %9542 = vmatmul.mubr.bf16.gmra.mxu0 %v9407
      %v9543 = vpop.f32.mrf.mxu0
      %v9544 = vadd.f32 %v9365, %v9543
      %v9545 = vpop.f32.mrf.mxu0
      %v9546 = vpop.f32.mrf.mxu0
      %v9547 = vadd.f32 %v9365, %v9546
      %v9548 = vpop.f32.mrf.mxu0
      %9549 = vmatprep.mubr.bf16.mxu0 0
      %9550 = vmatmul.mubr.bf16.gmra.mxu0 %v9410
      %v9551 = vpop.f32.mrf.mxu0
      %v9552 = vadd.f32 %v9365, %v9551
      %v9553 = vpop.f32.mrf.mxu0
      %v9554 = vpop.f32.mrf.mxu0
      %v9555 = vadd.f32 %v9365, %v9554
      %v9556 = vpop.f32.mrf.mxu0
      %9557 = vmatprep.mubr.bf16.mxu0 0
      %9558 = vmatmul.mubr.bf16.gmra.mxu0 %v9413
      %v9559 = vpop.f32.mrf.mxu0
      %v9560 = vadd.f32 %v9365, %v9559
      %v9561 = vpop.f32.mrf.mxu0
      %v9562 = vpop.f32.mrf.mxu0
      %v9563 = vadd.f32 %v9365, %v9562
      %v9564 = vpop.f32.mrf.mxu0
      %9565 = vmatprep.mubr.bf16.mxu0 0
      %9566 = vmatmul.mubr.bf16.gmra.mxu0 %v9416
      %v9567 = vpop.f32.mrf.mxu0
      %v9568 = vadd.f32 %v9365, %v9567
      %v9569 = vpop.f32.mrf.mxu0
      %v9570 = vpop.f32.mrf.mxu0
      %v9571 = vadd.f32 %v9365, %v9570
      %v9572 = vpop.f32.mrf.mxu0
      %9573 = vmatprep.mubr.bf16.mxu0 0
      %9574 = vmatmul.mubr.bf16.gmra.mxu0 %v9419
      %v9575 = vpop.f32.mrf.mxu0
      %v9576 = vadd.f32 %v9365, %v9575
      %v9577 = vpop.f32.mrf.mxu0
      %v9578 = vpop.f32.mrf.mxu0
      %v9579 = vadd.f32 %v9365, %v9578
      %v9580 = vpop.f32.mrf.mxu0
      %9581 = vdwg.mxu0
      %v9582 = vadd.f32 %v9326, %v9456
      %v9583 = vadd.f32 %v9327, %v9459
      %v9584 = vadd.f32 %v9328, %v9464
      %v9585 = vadd.f32 %v9329, %v9467
      %v9586 = vadd.f32 %v9330, %v9472
      %v9587 = vadd.f32 %v9331, %v9475
      %v9588 = vadd.f32 %v9332, %v9480
      %v9589 = vadd.f32 %v9333, %v9483
      %v9590 = vadd.f32 %v9334, %v9488
      %v9591 = vadd.f32 %v9335, %v9491
      %v9592 = vadd.f32 %v9336, %v9496
      %v9593 = vadd.f32 %v9337, %v9499
      %v9594 = vadd.f32 %v9338, %v9504
      %v9595 = vadd.f32 %v9339, %v9507
      %v9596 = vadd.f32 %v9340, %v9512
      %v9597 = vadd.f32 %v9341, %v9515
      %v9598 = vadd.f32 %v9342, %v9520
      %v9599 = vadd.f32 %v9343, %v9523
      %v9600 = vadd.f32 %v9344, %v9528
      %v9601 = vadd.f32 %v9345, %v9531
      %v9602 = vadd.f32 %v9346, %v9536
      %v9603 = vadd.f32 %v9347, %v9539
      %v9604 = vadd.f32 %v9348, %v9544
      %v9605 = vadd.f32 %v9349, %v9547
      %v9606 = vadd.f32 %v9350, %v9552
      %v9607 = vadd.f32 %v9351, %v9555
      %v9608 = vadd.f32 %v9352, %v9560
      %v9609 = vadd.f32 %v9353, %v9563
      %v9610 = vadd.f32 %v9354, %v9568
      %v9611 = vadd.f32 %v9355, %v9571
      %v9612 = vadd.f32 %v9356, %v9576
      %v9613 = vadd.f32 %v9357, %v9579
      %vm9614 = vcmp.ge.f32.partialorder %v9582, 0.0
      %vm9615 = vcmp.ge.f32.partialorder %v9583, 0.0
      %vm9616 = vcmp.ge.f32.partialorder %v9584, 0.0
      %vm9617 = vcmp.ge.f32.partialorder %v9585, 0.0
      %vm9618 = vcmp.ge.f32.partialorder %v9586, 0.0
      %vm9619 = vcmp.ge.f32.partialorder %v9587, 0.0
      %vm9620 = vcmp.ge.f32.partialorder %v9588, 0.0
      %vm9621 = vcmp.ge.f32.partialorder %v9589, 0.0
      %vm9622 = vcmp.ge.f32.partialorder %v9590, 0.0
      %vm9623 = vcmp.ge.f32.partialorder %v9591, 0.0
      %vm9624 = vcmp.ge.f32.partialorder %v9592, 0.0
      %vm9625 = vcmp.ge.f32.partialorder %v9593, 0.0
      %vm9626 = vcmp.ge.f32.partialorder %v9594, 0.0
      %vm9627 = vcmp.ge.f32.partialorder %v9595, 0.0
      %vm9628 = vcmp.ge.f32.partialorder %v9596, 0.0
      %vm9629 = vcmp.ge.f32.partialorder %v9597, 0.0
      %vm9630 = vcmp.ge.f32.partialorder %v9598, 0.0
      %vm9631 = vcmp.ge.f32.partialorder %v9599, 0.0
      %vm9632 = vcmp.ge.f32.partialorder %v9600, 0.0
      %vm9633 = vcmp.ge.f32.partialorder %v9601, 0.0
      %vm9634 = vcmp.ge.f32.partialorder %v9602, 0.0
      %vm9635 = vcmp.ge.f32.partialorder %v9603, 0.0
      %vm9636 = vcmp.ge.f32.partialorder %v9604, 0.0
      %vm9637 = vcmp.ge.f32.partialorder %v9605, 0.0
      %vm9638 = vcmp.ge.f32.partialorder %v9606, 0.0
      %vm9639 = vcmp.ge.f32.partialorder %v9607, 0.0
      %vm9640 = vcmp.ge.f32.partialorder %v9608, 0.0
      %vm9641 = vcmp.ge.f32.partialorder %v9609, 0.0
      %vm9642 = vcmp.ge.f32.partialorder %v9610, 0.0
      %vm9643 = vcmp.ge.f32.partialorder %v9611, 0.0
      %vm9644 = vcmp.ge.f32.partialorder %v9612, 0.0
      %vm9645 = vcmp.ge.f32.partialorder %v9613, 0.0
      %v9646 = vmul.f32 %v9582, 0.2
      %v9647 = vmul.f32 %v9583, 0.2
      %v9648 = vmul.f32 %v9584, 0.2
      %v9649 = vmul.f32 %v9585, 0.2
      %v9650 = vmul.f32 %v9586, 0.2
      %v9651 = vmul.f32 %v9587, 0.2
      %v9652 = vmul.f32 %v9588, 0.2
      %v9653 = vmul.f32 %v9589, 0.2
      %v9654 = vmul.f32 %v9590, 0.2
      %v9655 = vmul.f32 %v9591, 0.2
      %v9656 = vmul.f32 %v9592, 0.2
      %v9657 = vmul.f32 %v9593, 0.2
      %v9658 = vmul.f32 %v9594, 0.2
      %v9659 = vmul.f32 %v9595, 0.2
      %v9660 = vmul.f32 %v9596, 0.2
      %v9661 = vmul.f32 %v9597, 0.2
      %v9662 = vmul.f32 %v9598, 0.2
      %v9663 = vmul.f32 %v9599, 0.2
      %v9664 = vmul.f32 %v9600, 0.2
      %v9665 = vmul.f32 %v9601, 0.2
      %v9666 = vmul.f32 %v9602, 0.2
      %v9667 = vmul.f32 %v9603, 0.2
      %v9668 = vmul.f32 %v9604, 0.2
      %v9669 = vmul.f32 %v9605, 0.2
      %v9670 = vmul.f32 %v9606, 0.2
      %v9671 = vmul.f32 %v9607, 0.2
      %v9672 = vmul.f32 %v9608, 0.2
      %v9673 = vmul.f32 %v9609, 0.2
      %v9674 = vmul.f32 %v9610, 0.2
      %v9675 = vmul.f32 %v9611, 0.2
      %v9676 = vmul.f32 %v9612, 0.2
      %v9677 = vmul.f32 %v9613, 0.2
      %v9678 = vsel %vm9614, %v9582, %v9646
      %v9679 = vsel %vm9615, %v9583, %v9647
      %v9680 = vsel %vm9616, %v9584, %v9648
      %v9681 = vsel %vm9617, %v9585, %v9649
      %v9682 = vsel %vm9618, %v9586, %v9650
      %v9683 = vsel %vm9619, %v9587, %v9651
      %v9684 = vsel %vm9620, %v9588, %v9652
      %v9685 = vsel %vm9621, %v9589, %v9653
      %v9686 = vsel %vm9622, %v9590, %v9654
      %v9687 = vsel %vm9623, %v9591, %v9655
      %v9688 = vsel %vm9624, %v9592, %v9656
      %v9689 = vsel %vm9625, %v9593, %v9657
      %v9690 = vsel %vm9626, %v9594, %v9658
      %v9691 = vsel %vm9627, %v9595, %v9659
      %v9692 = vsel %vm9628, %v9596, %v9660
      %v9693 = vsel %vm9629, %v9597, %v9661
      %v9694 = vsel %vm9630, %v9598, %v9662
      %v9695 = vsel %vm9631, %v9599, %v9663
      %v9696 = vsel %vm9632, %v9600, %v9664
      %v9697 = vsel %vm9633, %v9601, %v9665
      %v9698 = vsel %vm9634, %v9602, %v9666
      %v9699 = vsel %vm9635, %v9603, %v9667
      %v9700 = vsel %vm9636, %v9604, %v9668
      %v9701 = vsel %vm9637, %v9605, %v9669
      %v9702 = vsel %vm9638, %v9606, %v9670
      %v9703 = vsel %vm9639, %v9607, %v9671
      %v9704 = vsel %vm9640, %v9608, %v9672
      %v9705 = vsel %vm9641, %v9609, %v9673
      %v9706 = vsel %vm9642, %v9610, %v9674
      %v9707 = vsel %vm9643, %v9611, %v9675
      %v9708 = vsel %vm9644, %v9612, %v9676
      %v9709 = vsel %vm9645, %v9613, %v9677
      %9710 = vst.msk [vmem:[%s762 + $0x1] sm:$0xff] %vm658, %v9678
      %9711 = vst.msk [vmem:[%s762 + $0x9] sm:$0xff] %vm658, %v9679
      %9712 = vst.msk [vmem:[%s762 + $0x19] sm:$0xff] %vm658, %v9680
      %9713 = vst.msk [vmem:[%s762 + $0x21] sm:$0xff] %vm658, %v9681
      %9714 = vst.msk [vmem:[%s762 + $0x31] sm:$0xff] %vm658, %v9682
      %9715 = vst.msk [vmem:[%s762 + $0x39] sm:$0xff] %vm658, %v9683
      %9716 = vst.msk [vmem:[%s762 + $0x49] sm:$0xff] %vm658, %v9684
      %9717 = vst.msk [vmem:[%s762 + $0x51] sm:$0xff] %vm658, %v9685
      %9718 = vst.msk [vmem:[%s762 + $0x61] sm:$0xff] %vm658, %v9686
      %9719 = vst.msk [vmem:[%s762 + $0x69] sm:$0xff] %vm658, %v9687
      %9720 = vst.msk [vmem:[%s762 + $0x79] sm:$0xff] %vm658, %v9688
      %9721 = vst.msk [vmem:[%s762 + $0x81] sm:$0xff] %vm658, %v9689
      %9722 = vst.msk [vmem:[%s762 + $0x91] sm:$0xff] %vm658, %v9690
      %9723 = vst.msk [vmem:[%s762 + $0x99] sm:$0xff] %vm658, %v9691
      %9724 = vst.msk [vmem:[%s762 + $0xa9] sm:$0xff] %vm658, %v9692
      %9725 = vst.msk [vmem:[%s762 + $0xb1] sm:$0xff] %vm658, %v9693
      %9726 = vst.msk [vmem:[%s762 + $0xc1] sm:$0xff] %vm658, %v9694
      %9727 = vst.msk [vmem:[%s762 + $0xc9] sm:$0xff] %vm658, %v9695
      %9728 = vst.msk [vmem:[%s762 + $0xd9] sm:$0xff] %vm658, %v9696
      %9729 = vst.msk [vmem:[%s762 + $0xe1] sm:$0xff] %vm658, %v9697
      %9730 = vst.msk [vmem:[%s762 + $0xf1] sm:$0xff] %vm658, %v9698
      %9731 = vst.msk [vmem:[%s762 + $0xf9] sm:$0xff] %vm658, %v9699
      %9732 = vst.msk [vmem:[%s762 + $0x109] sm:$0xff] %vm658, %v9700
      %9733 = vst.msk [vmem:[%s762 + $0x111] sm:$0xff] %vm658, %v9701
      %9734 = vst.msk [vmem:[%s762 + $0x121] sm:$0xff] %vm658, %v9702
      %9735 = vst.msk [vmem:[%s762 + $0x129] sm:$0xff] %vm658, %v9703
      %9736 = vst.msk [vmem:[%s762 + $0x139] sm:$0xff] %vm658, %v9704
      %9737 = vst.msk [vmem:[%s762 + $0x141] sm:$0xff] %vm658, %v9705
      %9738 = vst.msk [vmem:[%s762 + $0x151] sm:$0xff] %vm658, %v9706
      %9739 = vst.msk [vmem:[%s762 + $0x159] sm:$0xff] %vm658, %v9707
      %9740 = vst.msk [vmem:[%s762 + $0x169] sm:$0xff] %vm658, %v9708
      %9741 = vst.msk [vmem:[%s762 + $0x171] sm:$0xff] %vm658, %v9709
      %v9742 = vld [vmem:[#allocation2] sm:$0xff]
      %v9743 = vld [vmem:[#allocation2 + $0x8] sm:$0xff]
      %v9744 = vld [vmem:[#allocation2 + $0x18] sm:$0xff]
      %v9745 = vld [vmem:[#allocation2 + $0x20] sm:$0xff]
      %v9746 = vld [vmem:[#allocation2 + $0x30] sm:$0xff]
      %v9747 = vld [vmem:[#allocation2 + $0x38] sm:$0xff]
      %v9748 = vld [vmem:[#allocation2 + $0x48] sm:$0xff]
      %v9749 = vld [vmem:[#allocation2 + $0x50] sm:$0xff]
      %v9750 = vld [vmem:[#allocation2 + $0x60] sm:$0xff]
      %v9751 = vld [vmem:[#allocation2 + $0x68] sm:$0xff]
      %v9752 = vld [vmem:[#allocation2 + $0x78] sm:$0xff]
      %v9753 = vld [vmem:[#allocation2 + $0x80] sm:$0xff]
      %v9754 = vld [vmem:[#allocation2 + $0x90] sm:$0xff]
      %v9755 = vld [vmem:[#allocation2 + $0x98] sm:$0xff]
      %v9756 = vld [vmem:[#allocation2 + $0xa8] sm:$0xff]
      %v9757 = vld [vmem:[#allocation2 + $0xb0] sm:$0xff]
      %v9758 = vld [vmem:[#allocation2 + $0xc0] sm:$0xff]
      %v9759 = vld [vmem:[#allocation2 + $0xc8] sm:$0xff]
      %v9760 = vld [vmem:[#allocation2 + $0xd8] sm:$0xff]
      %v9761 = vld [vmem:[#allocation2 + $0xe0] sm:$0xff]
      %v9762 = vld [vmem:[#allocation2 + $0xf0] sm:$0xff]
      %v9763 = vld [vmem:[#allocation2 + $0xf8] sm:$0xff]
      %v9764 = vld [vmem:[#allocation2 + $0x108] sm:$0xff]
      %v9765 = vld [vmem:[#allocation2 + $0x110] sm:$0xff]
      %v9766 = vld [vmem:[#allocation2 + $0x120] sm:$0xff]
      %v9767 = vld [vmem:[#allocation2 + $0x128] sm:$0xff]
      %v9768 = vld [vmem:[#allocation2 + $0x138] sm:$0xff]
      %v9769 = vld [vmem:[#allocation2 + $0x140] sm:$0xff]
      %v9770 = vld [vmem:[#allocation2 + $0x150] sm:$0xff]
      %v9771 = vld [vmem:[#allocation2 + $0x158] sm:$0xff]
      %v9772 = vld [vmem:[#allocation2 + $0x168] sm:$0xff]
      %v9773 = vld [vmem:[#allocation2 + $0x170] sm:$0xff]
      %v9774 = vld [vmem:[#allocation2 + $0x1] sm:$0xff]
      %v9775 = vld [vmem:[#allocation2 + $0x9] sm:$0xff]
      %v9776 = vld [vmem:[#allocation2 + $0x19] sm:$0xff]
      %v9777 = vld [vmem:[#allocation2 + $0x21] sm:$0xff]
      %v9778 = vld [vmem:[#allocation2 + $0x31] sm:$0xff]
      %v9779 = vld [vmem:[#allocation2 + $0x39] sm:$0xff]
      %v9780 = vld [vmem:[#allocation2 + $0x49] sm:$0xff]
      %v9781 = vld [vmem:[#allocation2 + $0x51] sm:$0xff]
      %v9782 = vld [vmem:[#allocation2 + $0x61] sm:$0xff]
      %v9783 = vld [vmem:[#allocation2 + $0x69] sm:$0xff]
      %v9784 = vld [vmem:[#allocation2 + $0x79] sm:$0xff]
      %v9785 = vld [vmem:[#allocation2 + $0x81] sm:$0xff]
      %v9786 = vld [vmem:[#allocation2 + $0x91] sm:$0xff]
      %v9787 = vld [vmem:[#allocation2 + $0x99] sm:$0xff]
      %v9788 = vld [vmem:[#allocation2 + $0xa9] sm:$0xff]
      %v9789 = vld [vmem:[#allocation2 + $0xb1] sm:$0xff]
      %v9790 = vld [vmem:[#allocation2 + $0xc1] sm:$0xff]
      %v9791 = vld [vmem:[#allocation2 + $0xc9] sm:$0xff]
      %v9792 = vld [vmem:[#allocation2 + $0xd9] sm:$0xff]
      %v9793 = vld [vmem:[#allocation2 + $0xe1] sm:$0xff]
      %v9794 = vld [vmem:[#allocation2 + $0xf1] sm:$0xff]
      %v9795 = vld [vmem:[#allocation2 + $0xf9] sm:$0xff]
      %v9796 = vld [vmem:[#allocation2 + $0x109] sm:$0xff]
      %v9797 = vld [vmem:[#allocation2 + $0x111] sm:$0xff]
      %v9798 = vld [vmem:[#allocation2 + $0x121] sm:$0xff]
      %v9799 = vld [vmem:[#allocation2 + $0x129] sm:$0xff]
      %v9800 = vld [vmem:[#allocation2 + $0x139] sm:$0xff]
      %v9801 = vld [vmem:[#allocation2 + $0x141] sm:$0xff]
      %v9802 = vld [vmem:[#allocation2 + $0x151] sm:$0xff]
      %v9803 = vld [vmem:[#allocation2 + $0x159] sm:$0xff]
      %v9804 = vld [vmem:[#allocation2 + $0x169] sm:$0xff]
      %v9805 = vld [vmem:[#allocation2 + $0x171] sm:$0xff]
      %v9806 = vld [vmem:[#allocation2 + $0x2] sm:$0xff]
      %v9807 = vld [vmem:[#allocation2 + $0xa] sm:$0xff]
      %v9808 = vld [vmem:[#allocation2 + $0x1a] sm:$0xff]
      %v9809 = vld [vmem:[#allocation2 + $0x22] sm:$0xff]
      %v9810 = vld [vmem:[#allocation2 + $0x32] sm:$0xff]
      %v9811 = vld [vmem:[#allocation2 + $0x3a] sm:$0xff]
      %v9812 = vld [vmem:[#allocation2 + $0x4a] sm:$0xff]
      %v9813 = vld [vmem:[#allocation2 + $0x52] sm:$0xff]
      %v9814 = vld [vmem:[#allocation2 + $0x62] sm:$0xff]
      %v9815 = vld [vmem:[#allocation2 + $0x6a] sm:$0xff]
      %v9816 = vld [vmem:[#allocation2 + $0x7a] sm:$0xff]
      %v9817 = vld [vmem:[#allocation2 + $0x82] sm:$0xff]
      %v9818 = vld [vmem:[#allocation2 + $0x92] sm:$0xff]
      %v9819 = vld [vmem:[#allocation2 + $0x9a] sm:$0xff]
      %v9820 = vld [vmem:[#allocation2 + $0xaa] sm:$0xff]
      %v9821 = vld [vmem:[#allocation2 + $0xb2] sm:$0xff]
      %v9822 = vld [vmem:[#allocation2 + $0xc2] sm:$0xff]
      %v9823 = vld [vmem:[#allocation2 + $0xca] sm:$0xff]
      %v9824 = vld [vmem:[#allocation2 + $0xda] sm:$0xff]
      %v9825 = vld [vmem:[#allocation2 + $0xe2] sm:$0xff]
      %v9826 = vld [vmem:[#allocation2 + $0xf2] sm:$0xff]
      %v9827 = vld [vmem:[#allocation2 + $0xfa] sm:$0xff]
      %v9828 = vld [vmem:[#allocation2 + $0x10a] sm:$0xff]
      %v9829 = vld [vmem:[#allocation2 + $0x112] sm:$0xff]
      %v9830 = vld [vmem:[#allocation2 + $0x122] sm:$0xff]
      %v9831 = vld [vmem:[#allocation2 + $0x12a] sm:$0xff]
      %v9832 = vld [vmem:[#allocation2 + $0x13a] sm:$0xff]
      %v9833 = vld [vmem:[#allocation2 + $0x142] sm:$0xff]
      %v9834 = vld [vmem:[#allocation2 + $0x152] sm:$0xff]
      %v9835 = vld [vmem:[#allocation2 + $0x15a] sm:$0xff]
      %v9836 = vld [vmem:[#allocation2 + $0x16a] sm:$0xff]
      %v9837 = vld [vmem:[#allocation2 + $0x172] sm:$0xff]
      %v9838 = vld [vmem:[%s762] sm:$0xff]
      %v9839 = vld [vmem:[%s762 + $0x8] sm:$0xff]
      %v9840 = vld [vmem:[%s762 + $0x18] sm:$0xff]
      %v9841 = vld [vmem:[%s762 + $0x20] sm:$0xff]
      %v9842 = vld [vmem:[%s762 + $0x30] sm:$0xff]
      %v9843 = vld [vmem:[%s762 + $0x38] sm:$0xff]
      %v9844 = vld [vmem:[%s762 + $0x48] sm:$0xff]
      %v9845 = vld [vmem:[%s762 + $0x50] sm:$0xff]
      %v9846 = vld [vmem:[%s762 + $0x60] sm:$0xff]
      %v9847 = vld [vmem:[%s762 + $0x68] sm:$0xff]
      %v9848 = vld [vmem:[%s762 + $0x78] sm:$0xff]
      %v9849 = vld [vmem:[%s762 + $0x80] sm:$0xff]
      %v9850 = vld [vmem:[%s762 + $0x90] sm:$0xff]
      %v9851 = vld [vmem:[%s762 + $0x98] sm:$0xff]
      %v9852 = vld [vmem:[%s762 + $0xa8] sm:$0xff]
      %v9853 = vld [vmem:[%s762 + $0xb0] sm:$0xff]
      %v9854 = vld [vmem:[%s762 + $0xc0] sm:$0xff]
      %v9855 = vld [vmem:[%s762 + $0xc8] sm:$0xff]
      %v9856 = vld [vmem:[%s762 + $0xd8] sm:$0xff]
      %v9857 = vld [vmem:[%s762 + $0xe0] sm:$0xff]
      %v9858 = vld [vmem:[%s762 + $0xf0] sm:$0xff]
      %v9859 = vld [vmem:[%s762 + $0xf8] sm:$0xff]
      %v9860 = vld [vmem:[%s762 + $0x108] sm:$0xff]
      %v9861 = vld [vmem:[%s762 + $0x110] sm:$0xff]
      %v9862 = vld [vmem:[%s762 + $0x120] sm:$0xff]
      %v9863 = vld [vmem:[%s762 + $0x128] sm:$0xff]
      %v9864 = vld [vmem:[%s762 + $0x138] sm:$0xff]
      %v9865 = vld [vmem:[%s762 + $0x140] sm:$0xff]
      %v9866 = vld [vmem:[%s762 + $0x150] sm:$0xff]
      %v9867 = vld [vmem:[%s762 + $0x158] sm:$0xff]
      %v9868 = vld [vmem:[%s762 + $0x168] sm:$0xff]
      %v9869 = vld [vmem:[%s762 + $0x170] sm:$0xff]
      %v9870 = vld [vmem:[%s762 + $0x1] sm:$0xff]
      %v9871 = vld [vmem:[%s762 + $0x9] sm:$0xff]
      %v9872 = vld [vmem:[%s762 + $0x19] sm:$0xff]
      %v9873 = vld [vmem:[%s762 + $0x21] sm:$0xff]
      %v9874 = vld [vmem:[%s762 + $0x31] sm:$0xff]
      %v9875 = vld [vmem:[%s762 + $0x39] sm:$0xff]
      %v9876 = vld [vmem:[%s762 + $0x49] sm:$0xff]
      %v9877 = vld [vmem:[%s762 + $0x51] sm:$0xff]
      %v9878 = vld [vmem:[%s762 + $0x61] sm:$0xff]
      %v9879 = vld [vmem:[%s762 + $0x69] sm:$0xff]
      %v9880 = vld [vmem:[%s762 + $0x79] sm:$0xff]
      %v9881 = vld [vmem:[%s762 + $0x81] sm:$0xff]
      %v9882 = vld [vmem:[%s762 + $0x91] sm:$0xff]
      %v9883 = vld [vmem:[%s762 + $0x99] sm:$0xff]
      %v9884 = vld [vmem:[%s762 + $0xa9] sm:$0xff]
      %v9885 = vld [vmem:[%s762 + $0xb1] sm:$0xff]
      %v9886 = vld [vmem:[%s762 + $0xc1] sm:$0xff]
      %v9887 = vld [vmem:[%s762 + $0xc9] sm:$0xff]
      %v9888 = vld [vmem:[%s762 + $0xd9] sm:$0xff]
      %v9889 = vld [vmem:[%s762 + $0xe1] sm:$0xff]
      %v9890 = vld [vmem:[%s762 + $0xf1] sm:$0xff]
      %v9891 = vld [vmem:[%s762 + $0xf9] sm:$0xff]
      %v9892 = vld [vmem:[%s762 + $0x109] sm:$0xff]
      %v9893 = vld [vmem:[%s762 + $0x111] sm:$0xff]
      %v9894 = vld [vmem:[%s762 + $0x121] sm:$0xff]
      %v9895 = vld [vmem:[%s762 + $0x129] sm:$0xff]
      %v9896 = vld [vmem:[%s762 + $0x139] sm:$0xff]
      %v9897 = vld [vmem:[%s762 + $0x141] sm:$0xff]
      %v9898 = vld [vmem:[%s762 + $0x151] sm:$0xff]
      %v9899 = vld [vmem:[%s762 + $0x159] sm:$0xff]
      %v9900 = vld [vmem:[%s762 + $0x169] sm:$0xff]
      %v9901 = vld [vmem:[%s762 + $0x171] sm:$0xff]
      %v9902 = vld [vmem:[%s762 + $0x2] sm:$0xff]
      %v9903 = vld [vmem:[%s762 + $0xa] sm:$0xff]
      %v9904 = vld [vmem:[%s762 + $0x1a] sm:$0xff]
      %v9905 = vld [vmem:[%s762 + $0x22] sm:$0xff]
      %v9906 = vld [vmem:[%s762 + $0x32] sm:$0xff]
      %v9907 = vld [vmem:[%s762 + $0x3a] sm:$0xff]
      %v9908 = vld [vmem:[%s762 + $0x4a] sm:$0xff]
      %v9909 = vld [vmem:[%s762 + $0x52] sm:$0xff]
      %v9910 = vld [vmem:[%s762 + $0x62] sm:$0xff]
      %v9911 = vld [vmem:[%s762 + $0x6a] sm:$0xff]
      %v9912 = vld [vmem:[%s762 + $0x7a] sm:$0xff]
      %v9913 = vld [vmem:[%s762 + $0x82] sm:$0xff]
      %v9914 = vld [vmem:[%s762 + $0x92] sm:$0xff]
      %v9915 = vld [vmem:[%s762 + $0x9a] sm:$0xff]
      %v9916 = vld [vmem:[%s762 + $0xaa] sm:$0xff]
      %v9917 = vld [vmem:[%s762 + $0xb2] sm:$0xff]
      %v9918 = vld [vmem:[%s762 + $0xc2] sm:$0xff]
      %v9919 = vld [vmem:[%s762 + $0xca] sm:$0xff]
      %v9920 = vld [vmem:[%s762 + $0xda] sm:$0xff]
      %v9921 = vld [vmem:[%s762 + $0xe2] sm:$0xff]
      %v9922 = vld [vmem:[%s762 + $0xf2] sm:$0xff]
      %v9923 = vld [vmem:[%s762 + $0xfa] sm:$0xff]
      %v9924 = vld [vmem:[%s762 + $0x10a] sm:$0xff]
      %v9925 = vld [vmem:[%s762 + $0x112] sm:$0xff]
      %v9926 = vld [vmem:[%s762 + $0x122] sm:$0xff]
      %v9927 = vld [vmem:[%s762 + $0x12a] sm:$0xff]
      %v9928 = vld [vmem:[%s762 + $0x13a] sm:$0xff]
      %v9929 = vld [vmem:[%s762 + $0x142] sm:$0xff]
      %v9930 = vld [vmem:[%s762 + $0x152] sm:$0xff]
      %v9931 = vld [vmem:[%s762 + $0x15a] sm:$0xff]
      %v9932 = vld [vmem:[%s762 + $0x16a] sm:$0xff]
      %v9933 = vld [vmem:[%s762 + $0x172] sm:$0xff]
      %v9934 = vld [vmem:[%s988] sm:$0xff]
      %v9935 = vld [vmem:[%s988 + $0x8] sm:$0xff]
      %v9936 = vld [vmem:[%s988 + $0x18] sm:$0xff]
      %v9937 = vld [vmem:[%s988 + $0x20] sm:$0xff]
      %v9938 = vld [vmem:[%s988 + $0x30] sm:$0xff]
      %v9939 = vld [vmem:[%s988 + $0x38] sm:$0xff]
      %v9940 = vld [vmem:[%s988 + $0x48] sm:$0xff]
      %v9941 = vld [vmem:[%s988 + $0x50] sm:$0xff]
      %v9942 = vld [vmem:[%s988 + $0x60] sm:$0xff]
      %v9943 = vld [vmem:[%s988 + $0x68] sm:$0xff]
      %v9944 = vld [vmem:[%s988 + $0x78] sm:$0xff]
      %v9945 = vld [vmem:[%s988 + $0x80] sm:$0xff]
      %v9946 = vld [vmem:[%s988 + $0x90] sm:$0xff]
      %v9947 = vld [vmem:[%s988 + $0x98] sm:$0xff]
      %v9948 = vld [vmem:[%s988 + $0xa8] sm:$0xff]
      %v9949 = vld [vmem:[%s988 + $0xb0] sm:$0xff]
      %v9950 = vld [vmem:[%s988 + $0xc0] sm:$0xff]
      %v9951 = vld [vmem:[%s988 + $0xc8] sm:$0xff]
      %v9952 = vld [vmem:[%s988 + $0xd8] sm:$0xff]
      %v9953 = vld [vmem:[%s988 + $0xe0] sm:$0xff]
      %v9954 = vld [vmem:[%s988 + $0xf0] sm:$0xff]
      %v9955 = vld [vmem:[%s988 + $0xf8] sm:$0xff]
      %v9956 = vld [vmem:[%s988 + $0x108] sm:$0xff]
      %v9957 = vld [vmem:[%s988 + $0x110] sm:$0xff]
      %v9958 = vld [vmem:[%s988 + $0x120] sm:$0xff]
      %v9959 = vld [vmem:[%s988 + $0x128] sm:$0xff]
      %v9960 = vld [vmem:[%s988 + $0x138] sm:$0xff]
      %v9961 = vld [vmem:[%s988 + $0x140] sm:$0xff]
      %v9962 = vld [vmem:[%s988 + $0x150] sm:$0xff]
      %v9963 = vld [vmem:[%s988 + $0x158] sm:$0xff]
      %v9964 = vld [vmem:[%s988 + $0x168] sm:$0xff]
      %v9965 = vld [vmem:[%s988 + $0x170] sm:$0xff]
      %v9966 = vld [vmem:[%s988 + $0x1] sm:$0xff]
      %v9967 = vld [vmem:[%s988 + $0x9] sm:$0xff]
      %v9968 = vld [vmem:[%s988 + $0x19] sm:$0xff]
      %v9969 = vld [vmem:[%s988 + $0x21] sm:$0xff]
      %v9970 = vld [vmem:[%s988 + $0x31] sm:$0xff]
      %v9971 = vld [vmem:[%s988 + $0x39] sm:$0xff]
      %v9972 = vld [vmem:[%s988 + $0x49] sm:$0xff]
      %v9973 = vld [vmem:[%s988 + $0x51] sm:$0xff]
      %v9974 = vld [vmem:[%s988 + $0x61] sm:$0xff]
      %v9975 = vld [vmem:[%s988 + $0x69] sm:$0xff]
      %v9976 = vld [vmem:[%s988 + $0x79] sm:$0xff]
      %v9977 = vld [vmem:[%s988 + $0x81] sm:$0xff]
      %v9978 = vld [vmem:[%s988 + $0x91] sm:$0xff]
      %v9979 = vld [vmem:[%s988 + $0x99] sm:$0xff]
      %v9980 = vld [vmem:[%s988 + $0xa9] sm:$0xff]
      %v9981 = vld [vmem:[%s988 + $0xb1] sm:$0xff]
      %v9982 = vld [vmem:[%s988 + $0xc1] sm:$0xff]
      %v9983 = vld [vmem:[%s988 + $0xc9] sm:$0xff]
      %v9984 = vld [vmem:[%s988 + $0xd9] sm:$0xff]
      %v9985 = vld [vmem:[%s988 + $0xe1] sm:$0xff]
      %v9986 = vld [vmem:[%s988 + $0xf1] sm:$0xff]
      %v9987 = vld [vmem:[%s988 + $0xf9] sm:$0xff]
      %v9988 = vld [vmem:[%s988 + $0x109] sm:$0xff]
      %v9989 = vld [vmem:[%s988 + $0x111] sm:$0xff]
      %v9990 = vld [vmem:[%s988 + $0x121] sm:$0xff]
      %v9991 = vld [vmem:[%s988 + $0x129] sm:$0xff]
      %v9992 = vld [vmem:[%s988 + $0x139] sm:$0xff]
      %v9993 = vld [vmem:[%s988 + $0x141] sm:$0xff]
      %v9994 = vld [vmem:[%s988 + $0x151] sm:$0xff]
      %v9995 = vld [vmem:[%s988 + $0x159] sm:$0xff]
      %v9996 = vld [vmem:[%s988 + $0x169] sm:$0xff]
      %v9997 = vld [vmem:[%s988 + $0x171] sm:$0xff]
      %v9998 = vld [vmem:[%s988 + $0x2] sm:$0xff]
      %v9999 = vld [vmem:[%s988 + $0xa] sm:$0xff]
      %v10000 = vld [vmem:[%s988 + $0x1a] sm:$0xff]
      %v10001 = vld [vmem:[%s988 + $0x22] sm:$0xff]
      %v10002 = vld [vmem:[%s988 + $0x32] sm:$0xff]
      %v10003 = vld [vmem:[%s988 + $0x3a] sm:$0xff]
      %v10004 = vld [vmem:[%s988 + $0x4a] sm:$0xff]
      %v10005 = vld [vmem:[%s988 + $0x52] sm:$0xff]
      %v10006 = vld [vmem:[%s988 + $0x62] sm:$0xff]
      %v10007 = vld [vmem:[%s988 + $0x6a] sm:$0xff]
      %v10008 = vld [vmem:[%s988 + $0x7a] sm:$0xff]
      %v10009 = vld [vmem:[%s988 + $0x82] sm:$0xff]
      %v10010 = vld [vmem:[%s988 + $0x92] sm:$0xff]
      %v10011 = vld [vmem:[%s988 + $0x9a] sm:$0xff]
      %v10012 = vld [vmem:[%s988 + $0xaa] sm:$0xff]
      %v10013 = vld [vmem:[%s988 + $0xb2] sm:$0xff]
      %v10014 = vld [vmem:[%s988 + $0xc2] sm:$0xff]
      %v10015 = vld [vmem:[%s988 + $0xca] sm:$0xff]
      %v10016 = vld [vmem:[%s988 + $0xda] sm:$0xff]
      %v10017 = vld [vmem:[%s988 + $0xe2] sm:$0xff]
      %v10018 = vld [vmem:[%s988 + $0xf2] sm:$0xff]
      %v10019 = vld [vmem:[%s988 + $0xfa] sm:$0xff]
      %v10020 = vld [vmem:[%s988 + $0x10a] sm:$0xff]
      %v10021 = vld [vmem:[%s988 + $0x112] sm:$0xff]
      %v10022 = vld [vmem:[%s988 + $0x122] sm:$0xff]
      %v10023 = vld [vmem:[%s988 + $0x12a] sm:$0xff]
      %v10024 = vld [vmem:[%s988 + $0x13a] sm:$0xff]
      %v10025 = vld [vmem:[%s988 + $0x142] sm:$0xff]
      %v10026 = vld [vmem:[%s988 + $0x152] sm:$0xff]
      %v10027 = vld [vmem:[%s988 + $0x15a] sm:$0xff]
      %v10028 = vld [vmem:[%s988 + $0x16a] sm:$0xff]
      %v10029 = vld [vmem:[%s988 + $0x172] sm:$0xff]
      %10062 = vrot.lane.b32.xlu0 %v9774, 16
      %v10063 = vpop.permute.xlu0 %10062
      %10064 = vrot.lane.b32.xlu0 %v9775, 16
      %v10065 = vpop.permute.xlu0 %10064
      %10066 = vrot.lane.b32.xlu0 %v9776, 16
      %v10067 = vpop.permute.xlu0 %10066
      %10068 = vrot.lane.b32.xlu0 %v9777, 16
      %v10069 = vpop.permute.xlu0 %10068
      %10070 = vrot.lane.b32.xlu0 %v9778, 16
      %v10071 = vpop.permute.xlu0 %10070
      %10072 = vrot.lane.b32.xlu0 %v9779, 16
      %v10073 = vpop.permute.xlu0 %10072
      %10074 = vrot.lane.b32.xlu0 %v9780, 16
      %v10075 = vpop.permute.xlu0 %10074
      %10076 = vrot.lane.b32.xlu0 %v9781, 16
      %v10077 = vpop.permute.xlu0 %10076
      %10078 = vrot.lane.b32.xlu0 %v9782, 16
      %v10079 = vpop.permute.xlu0 %10078
      %10080 = vrot.lane.b32.xlu0 %v9783, 16
      %v10081 = vpop.permute.xlu0 %10080
      %10082 = vrot.lane.b32.xlu0 %v9784, 16
      %v10083 = vpop.permute.xlu0 %10082
      %10084 = vrot.lane.b32.xlu0 %v9785, 16
      %v10085 = vpop.permute.xlu0 %10084
      %10086 = vrot.lane.b32.xlu0 %v9786, 16
      %v10087 = vpop.permute.xlu0 %10086
      %10088 = vrot.lane.b32.xlu0 %v9787, 16
      %v10089 = vpop.permute.xlu0 %10088
      %10090 = vrot.lane.b32.xlu0 %v9788, 16
      %v10091 = vpop.permute.xlu0 %10090
      %10092 = vrot.lane.b32.xlu0 %v9789, 16
      %v10093 = vpop.permute.xlu0 %10092
      %10094 = vrot.lane.b32.xlu0 %v9790, 16
      %v10095 = vpop.permute.xlu0 %10094
      %10096 = vrot.lane.b32.xlu0 %v9791, 16
      %v10097 = vpop.permute.xlu0 %10096
      %10098 = vrot.lane.b32.xlu0 %v9792, 16
      %v10099 = vpop.permute.xlu0 %10098
      %10100 = vrot.lane.b32.xlu0 %v9793, 16
      %v10101 = vpop.permute.xlu0 %10100
      %10102 = vrot.lane.b32.xlu0 %v9794, 16
      %v10103 = vpop.permute.xlu0 %10102
      %10104 = vrot.lane.b32.xlu0 %v9795, 16
      %v10105 = vpop.permute.xlu0 %10104
      %10106 = vrot.lane.b32.xlu0 %v9796, 16
      %v10107 = vpop.permute.xlu0 %10106
      %10108 = vrot.lane.b32.xlu0 %v9797, 16
      %v10109 = vpop.permute.xlu0 %10108
      %10110 = vrot.lane.b32.xlu0 %v9798, 16
      %v10111 = vpop.permute.xlu0 %10110
      %10112 = vrot.lane.b32.xlu0 %v9799, 16
      %v10113 = vpop.permute.xlu0 %10112
      %10114 = vrot.lane.b32.xlu0 %v9800, 16
      %v10115 = vpop.permute.xlu0 %10114
      %10116 = vrot.lane.b32.xlu0 %v9801, 16
      %v10117 = vpop.permute.xlu0 %10116
      %10118 = vrot.lane.b32.xlu0 %v9802, 16
      %v10119 = vpop.permute.xlu0 %10118
      %10120 = vrot.lane.b32.xlu0 %v9803, 16
      %v10121 = vpop.permute.xlu0 %10120
      %10122 = vrot.lane.b32.xlu0 %v9804, 16
      %v10123 = vpop.permute.xlu0 %10122
      %10124 = vrot.lane.b32.xlu0 %v9805, 16
      %v10125 = vpop.permute.xlu0 %10124
      %10190 = vrot.lane.b32.xlu0 %v9806, 32
      %v10191 = vpop.permute.xlu0 %10190
      %10192 = vrot.lane.b32.xlu0 %v9807, 32
      %v10193 = vpop.permute.xlu0 %10192
      %10194 = vrot.lane.b32.xlu0 %v9808, 32
      %v10195 = vpop.permute.xlu0 %10194
      %10196 = vrot.lane.b32.xlu0 %v9809, 32
      %v10197 = vpop.permute.xlu0 %10196
      %10198 = vrot.lane.b32.xlu0 %v9810, 32
      %v10199 = vpop.permute.xlu0 %10198
      %10200 = vrot.lane.b32.xlu0 %v9811, 32
      %v10201 = vpop.permute.xlu0 %10200
      %10202 = vrot.lane.b32.xlu0 %v9812, 32
      %v10203 = vpop.permute.xlu0 %10202
      %10204 = vrot.lane.b32.xlu0 %v9813, 32
      %v10205 = vpop.permute.xlu0 %10204
      %10206 = vrot.lane.b32.xlu0 %v9814, 32
      %v10207 = vpop.permute.xlu0 %10206
      %10208 = vrot.lane.b32.xlu0 %v9815, 32
      %v10209 = vpop.permute.xlu0 %10208
      %10210 = vrot.lane.b32.xlu0 %v9816, 32
      %v10211 = vpop.permute.xlu0 %10210
      %10212 = vrot.lane.b32.xlu0 %v9817, 32
      %v10213 = vpop.permute.xlu0 %10212
      %10214 = vrot.lane.b32.xlu0 %v9818, 32
      %v10215 = vpop.permute.xlu0 %10214
      %10216 = vrot.lane.b32.xlu0 %v9819, 32
      %v10217 = vpop.permute.xlu0 %10216
      %10218 = vrot.lane.b32.xlu0 %v9820, 32
      %v10219 = vpop.permute.xlu0 %10218
      %10220 = vrot.lane.b32.xlu0 %v9821, 32
      %v10221 = vpop.permute.xlu0 %10220
      %10222 = vrot.lane.b32.xlu0 %v9822, 32
      %v10223 = vpop.permute.xlu0 %10222
      %10224 = vrot.lane.b32.xlu0 %v9823, 32
      %v10225 = vpop.permute.xlu0 %10224
      %10226 = vrot.lane.b32.xlu0 %v9824, 32
      %v10227 = vpop.permute.xlu0 %10226
      %10228 = vrot.lane.b32.xlu0 %v9825, 32
      %v10229 = vpop.permute.xlu0 %10228
      %10230 = vrot.lane.b32.xlu0 %v9826, 32
      %v10231 = vpop.permute.xlu0 %10230
      %10232 = vrot.lane.b32.xlu0 %v9827, 32
      %v10233 = vpop.permute.xlu0 %10232
      %10234 = vrot.lane.b32.xlu0 %v9828, 32
      %v10235 = vpop.permute.xlu0 %10234
      %10236 = vrot.lane.b32.xlu0 %v9829, 32
      %v10237 = vpop.permute.xlu0 %10236
      %10238 = vrot.lane.b32.xlu0 %v9830, 32
      %v10239 = vpop.permute.xlu0 %10238
      %10240 = vrot.lane.b32.xlu0 %v9831, 32
      %v10241 = vpop.permute.xlu0 %10240
      %10242 = vrot.lane.b32.xlu0 %v9832, 32
      %v10243 = vpop.permute.xlu0 %10242
      %10244 = vrot.lane.b32.xlu0 %v9833, 32
      %v10245 = vpop.permute.xlu0 %10244
      %10246 = vrot.lane.b32.xlu0 %v9834, 32
      %v10247 = vpop.permute.xlu0 %10246
      %10248 = vrot.lane.b32.xlu0 %v9835, 32
      %v10249 = vpop.permute.xlu0 %10248
      %10250 = vrot.lane.b32.xlu0 %v9836, 32
      %v10251 = vpop.permute.xlu0 %10250
      %10252 = vrot.lane.b32.xlu0 %v9837, 32
      %v10253 = vpop.permute.xlu0 %10252
      %10318 = vrot.lane.b32.xlu0 %v9838, 48
      %v10319 = vpop.permute.xlu0 %10318
      %10320 = vrot.lane.b32.xlu0 %v9839, 48
      %v10321 = vpop.permute.xlu0 %10320
      %10322 = vrot.lane.b32.xlu0 %v9840, 48
      %v10323 = vpop.permute.xlu0 %10322
      %10324 = vrot.lane.b32.xlu0 %v9841, 48
      %v10325 = vpop.permute.xlu0 %10324
      %10326 = vrot.lane.b32.xlu0 %v9842, 48
      %v10327 = vpop.permute.xlu0 %10326
      %10328 = vrot.lane.b32.xlu0 %v9843, 48
      %v10329 = vpop.permute.xlu0 %10328
      %10330 = vrot.lane.b32.xlu0 %v9844, 48
      %v10331 = vpop.permute.xlu0 %10330
      %10332 = vrot.lane.b32.xlu0 %v9845, 48
      %v10333 = vpop.permute.xlu0 %10332
      %10334 = vrot.lane.b32.xlu0 %v9846, 48
      %v10335 = vpop.permute.xlu0 %10334
      %10336 = vrot.lane.b32.xlu0 %v9847, 48
      %v10337 = vpop.permute.xlu0 %10336
      %10338 = vrot.lane.b32.xlu0 %v9848, 48
      %v10339 = vpop.permute.xlu0 %10338
      %10340 = vrot.lane.b32.xlu0 %v9849, 48
      %v10341 = vpop.permute.xlu0 %10340
      %10342 = vrot.lane.b32.xlu0 %v9850, 48
      %v10343 = vpop.permute.xlu0 %10342
      %10344 = vrot.lane.b32.xlu0 %v9851, 48
      %v10345 = vpop.permute.xlu0 %10344
      %10346 = vrot.lane.b32.xlu0 %v9852, 48
      %v10347 = vpop.permute.xlu0 %10346
      %10348 = vrot.lane.b32.xlu0 %v9853, 48
      %v10349 = vpop.permute.xlu0 %10348
      %10350 = vrot.lane.b32.xlu0 %v9854, 48
      %v10351 = vpop.permute.xlu0 %10350
      %10352 = vrot.lane.b32.xlu0 %v9855, 48
      %v10353 = vpop.permute.xlu0 %10352
      %10354 = vrot.lane.b32.xlu0 %v9856, 48
      %v10355 = vpop.permute.xlu0 %10354
      %10356 = vrot.lane.b32.xlu0 %v9857, 48
      %v10357 = vpop.permute.xlu0 %10356
      %10358 = vrot.lane.b32.xlu0 %v9858, 48
      %v10359 = vpop.permute.xlu0 %10358
      %10360 = vrot.lane.b32.xlu0 %v9859, 48
      %v10361 = vpop.permute.xlu0 %10360
      %10362 = vrot.lane.b32.xlu0 %v9860, 48
      %v10363 = vpop.permute.xlu0 %10362
      %10364 = vrot.lane.b32.xlu0 %v9861, 48
      %v10365 = vpop.permute.xlu0 %10364
      %10366 = vrot.lane.b32.xlu0 %v9862, 48
      %v10367 = vpop.permute.xlu0 %10366
      %10368 = vrot.lane.b32.xlu0 %v9863, 48
      %v10369 = vpop.permute.xlu0 %10368
      %10370 = vrot.lane.b32.xlu0 %v9864, 48
      %v10371 = vpop.permute.xlu0 %10370
      %10372 = vrot.lane.b32.xlu0 %v9865, 48
      %v10373 = vpop.permute.xlu0 %10372
      %10374 = vrot.lane.b32.xlu0 %v9866, 48
      %v10375 = vpop.permute.xlu0 %10374
      %10376 = vrot.lane.b32.xlu0 %v9867, 48
      %v10377 = vpop.permute.xlu0 %10376
      %10378 = vrot.lane.b32.xlu0 %v9868, 48
      %v10379 = vpop.permute.xlu0 %10378
      %10380 = vrot.lane.b32.xlu0 %v9869, 48
      %v10381 = vpop.permute.xlu0 %10380
      %10446 = vrot.lane.b32.xlu0 %v9870, 64
      %v10447 = vpop.permute.xlu0 %10446
      %10448 = vrot.lane.b32.xlu0 %v9871, 64
      %v10449 = vpop.permute.xlu0 %10448
      %10450 = vrot.lane.b32.xlu0 %v9872, 64
      %v10451 = vpop.permute.xlu0 %10450
      %10452 = vrot.lane.b32.xlu0 %v9873, 64
      %v10453 = vpop.permute.xlu0 %10452
      %10454 = vrot.lane.b32.xlu0 %v9874, 64
      %v10455 = vpop.permute.xlu0 %10454
      %10456 = vrot.lane.b32.xlu0 %v9875, 64
      %v10457 = vpop.permute.xlu0 %10456
      %10458 = vrot.lane.b32.xlu0 %v9876, 64
      %v10459 = vpop.permute.xlu0 %10458
      %10460 = vrot.lane.b32.xlu0 %v9877, 64
      %v10461 = vpop.permute.xlu0 %10460
      %10462 = vrot.lane.b32.xlu0 %v9878, 64
      %v10463 = vpop.permute.xlu0 %10462
      %10464 = vrot.lane.b32.xlu0 %v9879, 64
      %v10465 = vpop.permute.xlu0 %10464
      %10466 = vrot.lane.b32.xlu0 %v9880, 64
      %v10467 = vpop.permute.xlu0 %10466
      %10468 = vrot.lane.b32.xlu0 %v9881, 64
      %v10469 = vpop.permute.xlu0 %10468
      %10470 = vrot.lane.b32.xlu0 %v9882, 64
      %v10471 = vpop.permute.xlu0 %10470
      %10472 = vrot.lane.b32.xlu0 %v9883, 64
      %v10473 = vpop.permute.xlu0 %10472
      %10474 = vrot.lane.b32.xlu0 %v9884, 64
      %v10475 = vpop.permute.xlu0 %10474
      %10476 = vrot.lane.b32.xlu0 %v9885, 64
      %v10477 = vpop.permute.xlu0 %10476
      %10478 = vrot.lane.b32.xlu0 %v9886, 64
      %v10479 = vpop.permute.xlu0 %10478
      %10480 = vrot.lane.b32.xlu0 %v9887, 64
      %v10481 = vpop.permute.xlu0 %10480
      %10482 = vrot.lane.b32.xlu0 %v9888, 64
      %v10483 = vpop.permute.xlu0 %10482
      %10484 = vrot.lane.b32.xlu0 %v9889, 64
      %v10485 = vpop.permute.xlu0 %10484
      %10486 = vrot.lane.b32.xlu0 %v9890, 64
      %v10487 = vpop.permute.xlu0 %10486
      %10488 = vrot.lane.b32.xlu0 %v9891, 64
      %v10489 = vpop.permute.xlu0 %10488
      %10490 = vrot.lane.b32.xlu0 %v9892, 64
      %v10491 = vpop.permute.xlu0 %10490
      %10492 = vrot.lane.b32.xlu0 %v9893, 64
      %v10493 = vpop.permute.xlu0 %10492
      %10494 = vrot.lane.b32.xlu0 %v9894, 64
      %v10495 = vpop.permute.xlu0 %10494
      %10496 = vrot.lane.b32.xlu0 %v9895, 64
      %v10497 = vpop.permute.xlu0 %10496
      %10498 = vrot.lane.b32.xlu0 %v9896, 64
      %v10499 = vpop.permute.xlu0 %10498
      %10500 = vrot.lane.b32.xlu0 %v9897, 64
      %v10501 = vpop.permute.xlu0 %10500
      %10502 = vrot.lane.b32.xlu0 %v9898, 64
      %v10503 = vpop.permute.xlu0 %10502
      %10504 = vrot.lane.b32.xlu0 %v9899, 64
      %v10505 = vpop.permute.xlu0 %10504
      %10506 = vrot.lane.b32.xlu0 %v9900, 64
      %v10507 = vpop.permute.xlu0 %10506
      %10508 = vrot.lane.b32.xlu0 %v9901, 64
      %v10509 = vpop.permute.xlu0 %10508
      %10574 = vrot.lane.b32.xlu0 %v9902, 80
      %v10575 = vpop.permute.xlu0 %10574
      %10576 = vrot.lane.b32.xlu0 %v9903, 80
      %v10577 = vpop.permute.xlu0 %10576
      %10578 = vrot.lane.b32.xlu0 %v9904, 80
      %v10579 = vpop.permute.xlu0 %10578
      %10580 = vrot.lane.b32.xlu0 %v9905, 80
      %v10581 = vpop.permute.xlu0 %10580
      %10582 = vrot.lane.b32.xlu0 %v9906, 80
      %v10583 = vpop.permute.xlu0 %10582
      %10584 = vrot.lane.b32.xlu0 %v9907, 80
      %v10585 = vpop.permute.xlu0 %10584
      %10586 = vrot.lane.b32.xlu0 %v9908, 80
      %v10587 = vpop.permute.xlu0 %10586
      %10588 = vrot.lane.b32.xlu0 %v9909, 80
      %v10589 = vpop.permute.xlu0 %10588
      %10590 = vrot.lane.b32.xlu0 %v9910, 80
      %v10591 = vpop.permute.xlu0 %10590
      %10592 = vrot.lane.b32.xlu0 %v9911, 80
      %v10593 = vpop.permute.xlu0 %10592
      %10594 = vrot.lane.b32.xlu0 %v9912, 80
      %v10595 = vpop.permute.xlu0 %10594
      %10596 = vrot.lane.b32.xlu0 %v9913, 80
      %v10597 = vpop.permute.xlu0 %10596
      %10598 = vrot.lane.b32.xlu0 %v9914, 80
      %v10599 = vpop.permute.xlu0 %10598
      %10600 = vrot.lane.b32.xlu0 %v9915, 80
      %v10601 = vpop.permute.xlu0 %10600
      %10602 = vrot.lane.b32.xlu0 %v9916, 80
      %v10603 = vpop.permute.xlu0 %10602
      %10604 = vrot.lane.b32.xlu0 %v9917, 80
      %v10605 = vpop.permute.xlu0 %10604
      %10606 = vrot.lane.b32.xlu0 %v9918, 80
      %v10607 = vpop.permute.xlu0 %10606
      %10608 = vrot.lane.b32.xlu0 %v9919, 80
      %v10609 = vpop.permute.xlu0 %10608
      %10610 = vrot.lane.b32.xlu0 %v9920, 80
      %v10611 = vpop.permute.xlu0 %10610
      %10612 = vrot.lane.b32.xlu0 %v9921, 80
      %v10613 = vpop.permute.xlu0 %10612
      %10614 = vrot.lane.b32.xlu0 %v9922, 80
      %v10615 = vpop.permute.xlu0 %10614
      %10616 = vrot.lane.b32.xlu0 %v9923, 80
      %v10617 = vpop.permute.xlu0 %10616
      %10618 = vrot.lane.b32.xlu0 %v9924, 80
      %v10619 = vpop.permute.xlu0 %10618
      %10620 = vrot.lane.b32.xlu0 %v9925, 80
      %v10621 = vpop.permute.xlu0 %10620
      %10622 = vrot.lane.b32.xlu0 %v9926, 80
      %v10623 = vpop.permute.xlu0 %10622
      %10624 = vrot.lane.b32.xlu0 %v9927, 80
      %v10625 = vpop.permute.xlu0 %10624
      %10626 = vrot.lane.b32.xlu0 %v9928, 80
      %v10627 = vpop.permute.xlu0 %10626
      %10628 = vrot.lane.b32.xlu0 %v9929, 80
      %v10629 = vpop.permute.xlu0 %10628
      %10630 = vrot.lane.b32.xlu0 %v9930, 80
      %v10631 = vpop.permute.xlu0 %10630
      %10632 = vrot.lane.b32.xlu0 %v9931, 80
      %v10633 = vpop.permute.xlu0 %10632
      %10634 = vrot.lane.b32.xlu0 %v9932, 80
      %v10635 = vpop.permute.xlu0 %10634
      %10636 = vrot.lane.b32.xlu0 %v9933, 80
      %v10637 = vpop.permute.xlu0 %10636
      %10702 = vrot.lane.b32.xlu0 %v9934, 96
      %v10703 = vpop.permute.xlu0 %10702
      %10704 = vrot.lane.b32.xlu0 %v9935, 96
      %v10705 = vpop.permute.xlu0 %10704
      %10706 = vrot.lane.b32.xlu0 %v9936, 96
      %v10707 = vpop.permute.xlu0 %10706
      %10708 = vrot.lane.b32.xlu0 %v9937, 96
      %v10709 = vpop.permute.xlu0 %10708
      %10710 = vrot.lane.b32.xlu0 %v9938, 96
      %v10711 = vpop.permute.xlu0 %10710
      %10712 = vrot.lane.b32.xlu0 %v9939, 96
      %v10713 = vpop.permute.xlu0 %10712
      %10714 = vrot.lane.b32.xlu0 %v9940, 96
      %v10715 = vpop.permute.xlu0 %10714
      %10716 = vrot.lane.b32.xlu0 %v9941, 96
      %v10717 = vpop.permute.xlu0 %10716
      %10718 = vrot.lane.b32.xlu0 %v9942, 96
      %v10719 = vpop.permute.xlu0 %10718
      %10720 = vrot.lane.b32.xlu0 %v9943, 96
      %v10721 = vpop.permute.xlu0 %10720
      %10722 = vrot.lane.b32.xlu0 %v9944, 96
      %v10723 = vpop.permute.xlu0 %10722
      %10724 = vrot.lane.b32.xlu0 %v9945, 96
      %v10725 = vpop.permute.xlu0 %10724
      %10726 = vrot.lane.b32.xlu0 %v9946, 96
      %v10727 = vpop.permute.xlu0 %10726
      %10728 = vrot.lane.b32.xlu0 %v9947, 96
      %v10729 = vpop.permute.xlu0 %10728
      %10730 = vrot.lane.b32.xlu0 %v9948, 96
      %v10731 = vpop.permute.xlu0 %10730
      %10732 = vrot.lane.b32.xlu0 %v9949, 96
      %v10733 = vpop.permute.xlu0 %10732
      %10734 = vrot.lane.b32.xlu0 %v9950, 96
      %v10735 = vpop.permute.xlu0 %10734
      %10736 = vrot.lane.b32.xlu0 %v9951, 96
      %v10737 = vpop.permute.xlu0 %10736
      %10738 = vrot.lane.b32.xlu0 %v9952, 96
      %v10739 = vpop.permute.xlu0 %10738
      %10740 = vrot.lane.b32.xlu0 %v9953, 96
      %v10741 = vpop.permute.xlu0 %10740
      %10742 = vrot.lane.b32.xlu0 %v9954, 96
      %v10743 = vpop.permute.xlu0 %10742
      %10744 = vrot.lane.b32.xlu0 %v9955, 96
      %v10745 = vpop.permute.xlu0 %10744
      %10746 = vrot.lane.b32.xlu0 %v9956, 96
      %v10747 = vpop.permute.xlu0 %10746
      %10748 = vrot.lane.b32.xlu0 %v9957, 96
      %v10749 = vpop.permute.xlu0 %10748
      %10750 = vrot.lane.b32.xlu0 %v9958, 96
      %v10751 = vpop.permute.xlu0 %10750
      %10752 = vrot.lane.b32.xlu0 %v9959, 96
      %v10753 = vpop.permute.xlu0 %10752
      %10754 = vrot.lane.b32.xlu0 %v9960, 96
      %v10755 = vpop.permute.xlu0 %10754
      %10756 = vrot.lane.b32.xlu0 %v9961, 96
      %v10757 = vpop.permute.xlu0 %10756
      %10758 = vrot.lane.b32.xlu0 %v9962, 96
      %v10759 = vpop.permute.xlu0 %10758
      %10760 = vrot.lane.b32.xlu0 %v9963, 96
      %v10761 = vpop.permute.xlu0 %10760
      %10762 = vrot.lane.b32.xlu0 %v9964, 96
      %v10763 = vpop.permute.xlu0 %10762
      %10764 = vrot.lane.b32.xlu0 %v9965, 96
      %v10765 = vpop.permute.xlu0 %10764
      %10830 = vrot.lane.b32.xlu0 %v9966, 112
      %v10831 = vpop.permute.xlu0 %10830
      %10832 = vrot.lane.b32.xlu0 %v9967, 112
      %v10833 = vpop.permute.xlu0 %10832
      %10834 = vrot.lane.b32.xlu0 %v9968, 112
      %v10835 = vpop.permute.xlu0 %10834
      %10836 = vrot.lane.b32.xlu0 %v9969, 112
      %v10837 = vpop.permute.xlu0 %10836
      %10838 = vrot.lane.b32.xlu0 %v9970, 112
      %v10839 = vpop.permute.xlu0 %10838
      %10840 = vrot.lane.b32.xlu0 %v9971, 112
      %v10841 = vpop.permute.xlu0 %10840
      %10842 = vrot.lane.b32.xlu0 %v9972, 112
      %v10843 = vpop.permute.xlu0 %10842
      %10844 = vrot.lane.b32.xlu0 %v9973, 112
      %v10845 = vpop.permute.xlu0 %10844
      %10846 = vrot.lane.b32.xlu0 %v9974, 112
      %v10847 = vpop.permute.xlu0 %10846
      %10848 = vrot.lane.b32.xlu0 %v9975, 112
      %v10849 = vpop.permute.xlu0 %10848
      %10850 = vrot.lane.b32.xlu0 %v9976, 112
      %v10851 = vpop.permute.xlu0 %10850
      %10852 = vrot.lane.b32.xlu0 %v9977, 112
      %v10853 = vpop.permute.xlu0 %10852
      %10854 = vrot.lane.b32.xlu0 %v9978, 112
      %v10855 = vpop.permute.xlu0 %10854
      %10856 = vrot.lane.b32.xlu0 %v9979, 112
      %v10857 = vpop.permute.xlu0 %10856
      %10858 = vrot.lane.b32.xlu0 %v9980, 112
      %v10859 = vpop.permute.xlu0 %10858
      %10860 = vrot.lane.b32.xlu0 %v9981, 112
      %v10861 = vpop.permute.xlu0 %10860
      %10862 = vrot.lane.b32.xlu0 %v9982, 112
      %v10863 = vpop.permute.xlu0 %10862
      %10864 = vrot.lane.b32.xlu0 %v9983, 112
      %v10865 = vpop.permute.xlu0 %10864
      %10866 = vrot.lane.b32.xlu0 %v9984, 112
      %v10867 = vpop.permute.xlu0 %10866
      %10868 = vrot.lane.b32.xlu0 %v9985, 112
      %v10869 = vpop.permute.xlu0 %10868
      %10870 = vrot.lane.b32.xlu0 %v9986, 112
      %v10871 = vpop.permute.xlu0 %10870
      %10872 = vrot.lane.b32.xlu0 %v9987, 112
      %v10873 = vpop.permute.xlu0 %10872
      %10874 = vrot.lane.b32.xlu0 %v9988, 112
      %v10875 = vpop.permute.xlu0 %10874
      %10876 = vrot.lane.b32.xlu0 %v9989, 112
      %v10877 = vpop.permute.xlu0 %10876
      %10878 = vrot.lane.b32.xlu0 %v9990, 112
      %v10879 = vpop.permute.xlu0 %10878
      %10880 = vrot.lane.b32.xlu0 %v9991, 112
      %v10881 = vpop.permute.xlu0 %10880
      %10882 = vrot.lane.b32.xlu0 %v9992, 112
      %v10883 = vpop.permute.xlu0 %10882
      %10884 = vrot.lane.b32.xlu0 %v9993, 112
      %v10885 = vpop.permute.xlu0 %10884
      %10886 = vrot.lane.b32.xlu0 %v9994, 112
      %v10887 = vpop.permute.xlu0 %10886
      %10888 = vrot.lane.b32.xlu0 %v9995, 112
      %v10889 = vpop.permute.xlu0 %10888
      %10890 = vrot.lane.b32.xlu0 %v9996, 112
      %v10891 = vpop.permute.xlu0 %10890
      %10892 = vrot.lane.b32.xlu0 %v9997, 112
      %v10893 = vpop.permute.xlu0 %10892
      %v10926 = vsel %vm658, %v9742, %v10063
      %v10927 = vsel %vm658, %v9743, %v10065
      %v10928 = vsel %vm658, %v9744, %v10067
      %v10929 = vsel %vm658, %v9745, %v10069
      %v10930 = vsel %vm658, %v9746, %v10071
      %v10931 = vsel %vm658, %v9747, %v10073
      %v10932 = vsel %vm658, %v9748, %v10075
      %v10933 = vsel %vm658, %v9749, %v10077
      %v10934 = vsel %vm658, %v9750, %v10079
      %v10935 = vsel %vm658, %v9751, %v10081
      %v10936 = vsel %vm658, %v9752, %v10083
      %v10937 = vsel %vm658, %v9753, %v10085
      %v10938 = vsel %vm658, %v9754, %v10087
      %v10939 = vsel %vm658, %v9755, %v10089
      %v10940 = vsel %vm658, %v9756, %v10091
      %v10941 = vsel %vm658, %v9757, %v10093
      %v10942 = vsel %vm658, %v9758, %v10095
      %v10943 = vsel %vm658, %v9759, %v10097
      %v10944 = vsel %vm658, %v9760, %v10099
      %v10945 = vsel %vm658, %v9761, %v10101
      %v10946 = vsel %vm658, %v9762, %v10103
      %v10947 = vsel %vm658, %v9763, %v10105
      %v10948 = vsel %vm658, %v9764, %v10107
      %v10949 = vsel %vm658, %v9765, %v10109
      %v10950 = vsel %vm658, %v9766, %v10111
      %v10951 = vsel %vm658, %v9767, %v10113
      %v10952 = vsel %vm658, %v9768, %v10115
      %v10953 = vsel %vm658, %v9769, %v10117
      %v10954 = vsel %vm658, %v9770, %v10119
      %v10955 = vsel %vm658, %v9771, %v10121
      %v10956 = vsel %vm658, %v9772, %v10123
      %v10957 = vsel %vm658, %v9773, %v10125
      %v10958 = vsel %vm2338, %v10926, %v10191
      %v10959 = vsel %vm2338, %v10927, %v10193
      %v10960 = vsel %vm2338, %v10928, %v10195
      %v10961 = vsel %vm2338, %v10929, %v10197
      %v10962 = vsel %vm2338, %v10930, %v10199
      %v10963 = vsel %vm2338, %v10931, %v10201
      %v10964 = vsel %vm2338, %v10932, %v10203
      %v10965 = vsel %vm2338, %v10933, %v10205
      %v10966 = vsel %vm2338, %v10934, %v10207
      %v10967 = vsel %vm2338, %v10935, %v10209
      %v10968 = vsel %vm2338, %v10936, %v10211
      %v10969 = vsel %vm2338, %v10937, %v10213
      %v10970 = vsel %vm2338, %v10938, %v10215
      %v10971 = vsel %vm2338, %v10939, %v10217
      %v10972 = vsel %vm2338, %v10940, %v10219
      %v10973 = vsel %vm2338, %v10941, %v10221
      %v10974 = vsel %vm2338, %v10942, %v10223
      %v10975 = vsel %vm2338, %v10943, %v10225
      %v10976 = vsel %vm2338, %v10944, %v10227
      %v10977 = vsel %vm2338, %v10945, %v10229
      %v10978 = vsel %vm2338, %v10946, %v10231
      %v10979 = vsel %vm2338, %v10947, %v10233
      %v10980 = vsel %vm2338, %v10948, %v10235
      %v10981 = vsel %vm2338, %v10949, %v10237
      %v10982 = vsel %vm2338, %v10950, %v10239
      %v10983 = vsel %vm2338, %v10951, %v10241
      %v10984 = vsel %vm2338, %v10952, %v10243
      %v10985 = vsel %vm2338, %v10953, %v10245
      %v10986 = vsel %vm2338, %v10954, %v10247
      %v10987 = vsel %vm2338, %v10955, %v10249
      %v10988 = vsel %vm2338, %v10956, %v10251
      %v10989 = vsel %vm2338, %v10957, %v10253
      %v10990 = vsel %vm4353, %v10958, %v10319
      %v10991 = vsel %vm4353, %v10959, %v10321
      %v10992 = vsel %vm4353, %v10960, %v10323
      %v10993 = vsel %vm4353, %v10961, %v10325
      %v10994 = vsel %vm4353, %v10962, %v10327
      %v10995 = vsel %vm4353, %v10963, %v10329
      %v10996 = vsel %vm4353, %v10964, %v10331
      %v10997 = vsel %vm4353, %v10965, %v10333
      %v10998 = vsel %vm4353, %v10966, %v10335
      %v10999 = vsel %vm4353, %v10967, %v10337
      %v11000 = vsel %vm4353, %v10968, %v10339
      %v11001 = vsel %vm4353, %v10969, %v10341
      %v11002 = vsel %vm4353, %v10970, %v10343
      %v11003 = vsel %vm4353, %v10971, %v10345
      %v11004 = vsel %vm4353, %v10972, %v10347
      %v11005 = vsel %vm4353, %v10973, %v10349
      %v11006 = vsel %vm4353, %v10974, %v10351
      %v11007 = vsel %vm4353, %v10975, %v10353
      %v11008 = vsel %vm4353, %v10976, %v10355
      %v11009 = vsel %vm4353, %v10977, %v10357
      %v11010 = vsel %vm4353, %v10978, %v10359
      %v11011 = vsel %vm4353, %v10979, %v10361
      %v11012 = vsel %vm4353, %v10980, %v10363
      %v11013 = vsel %vm4353, %v10981, %v10365
      %v11014 = vsel %vm4353, %v10982, %v10367
      %v11015 = vsel %vm4353, %v10983, %v10369
      %v11016 = vsel %vm4353, %v10984, %v10371
      %v11017 = vsel %vm4353, %v10985, %v10373
      %v11018 = vsel %vm4353, %v10986, %v10375
      %v11019 = vsel %vm4353, %v10987, %v10377
      %v11020 = vsel %vm4353, %v10988, %v10379
      %v11021 = vsel %vm4353, %v10989, %v10381
      %v11022 = vsel %vm4386, %v10990, %v10447
      %v11023 = vsel %vm4386, %v10991, %v10449
      %v11024 = vsel %vm4386, %v10992, %v10451
      %v11025 = vsel %vm4386, %v10993, %v10453
      %v11026 = vsel %vm4386, %v10994, %v10455
      %v11027 = vsel %vm4386, %v10995, %v10457
      %v11028 = vsel %vm4386, %v10996, %v10459
      %v11029 = vsel %vm4386, %v10997, %v10461
      %v11030 = vsel %vm4386, %v10998, %v10463
      %v11031 = vsel %vm4386, %v10999, %v10465
      %v11032 = vsel %vm4386, %v11000, %v10467
      %v11033 = vsel %vm4386, %v11001, %v10469
      %v11034 = vsel %vm4386, %v11002, %v10471
      %v11035 = vsel %vm4386, %v11003, %v10473
      %v11036 = vsel %vm4386, %v11004, %v10475
      %v11037 = vsel %vm4386, %v11005, %v10477
      %v11038 = vsel %vm4386, %v11006, %v10479
      %v11039 = vsel %vm4386, %v11007, %v10481
      %v11040 = vsel %vm4386, %v11008, %v10483
      %v11041 = vsel %vm4386, %v11009, %v10485
      %v11042 = vsel %vm4386, %v11010, %v10487
      %v11043 = vsel %vm4386, %v11011, %v10489
      %v11044 = vsel %vm4386, %v11012, %v10491
      %v11045 = vsel %vm4386, %v11013, %v10493
      %v11046 = vsel %vm4386, %v11014, %v10495
      %v11047 = vsel %vm4386, %v11015, %v10497
      %v11048 = vsel %vm4386, %v11016, %v10499
      %v11049 = vsel %vm4386, %v11017, %v10501
      %v11050 = vsel %vm4386, %v11018, %v10503
      %v11051 = vsel %vm4386, %v11019, %v10505
      %v11052 = vsel %vm4386, %v11020, %v10507
      %v11053 = vsel %vm4386, %v11021, %v10509
      %v11054 = vsel %vm4419, %v11022, %v10575
      %v11055 = vsel %vm4419, %v11023, %v10577
      %v11056 = vsel %vm4419, %v11024, %v10579
      %v11057 = vsel %vm4419, %v11025, %v10581
      %v11058 = vsel %vm4419, %v11026, %v10583
      %v11059 = vsel %vm4419, %v11027, %v10585
      %v11060 = vsel %vm4419, %v11028, %v10587
      %v11061 = vsel %vm4419, %v11029, %v10589
      %v11062 = vsel %vm4419, %v11030, %v10591
      %v11063 = vsel %vm4419, %v11031, %v10593
      %v11064 = vsel %vm4419, %v11032, %v10595
      %v11065 = vsel %vm4419, %v11033, %v10597
      %v11066 = vsel %vm4419, %v11034, %v10599
      %v11067 = vsel %vm4419, %v11035, %v10601
      %v11068 = vsel %vm4419, %v11036, %v10603
      %v11069 = vsel %vm4419, %v11037, %v10605
      %v11070 = vsel %vm4419, %v11038, %v10607
      %v11071 = vsel %vm4419, %v11039, %v10609
      %v11072 = vsel %vm4419, %v11040, %v10611
      %v11073 = vsel %vm4419, %v11041, %v10613
      %v11074 = vsel %vm4419, %v11042, %v10615
      %v11075 = vsel %vm4419, %v11043, %v10617
      %v11076 = vsel %vm4419, %v11044, %v10619
      %v11077 = vsel %vm4419, %v11045, %v10621
      %v11078 = vsel %vm4419, %v11046, %v10623
      %v11079 = vsel %vm4419, %v11047, %v10625
      %v11080 = vsel %vm4419, %v11048, %v10627
      %v11081 = vsel %vm4419, %v11049, %v10629
      %v11082 = vsel %vm4419, %v11050, %v10631
      %v11083 = vsel %vm4419, %v11051, %v10633
      %v11084 = vsel %vm4419, %v11052, %v10635
      %v11085 = vsel %vm4419, %v11053, %v10637
      %v11086 = vsel %vm4452, %v11054, %v10703
      %v11087 = vsel %vm4452, %v11055, %v10705
      %v11088 = vsel %vm4452, %v11056, %v10707
      %v11089 = vsel %vm4452, %v11057, %v10709
      %v11090 = vsel %vm4452, %v11058, %v10711
      %v11091 = vsel %vm4452, %v11059, %v10713
      %v11092 = vsel %vm4452, %v11060, %v10715
      %v11093 = vsel %vm4452, %v11061, %v10717
      %v11094 = vsel %vm4452, %v11062, %v10719
      %v11095 = vsel %vm4452, %v11063, %v10721
      %v11096 = vsel %vm4452, %v11064, %v10723
      %v11097 = vsel %vm4452, %v11065, %v10725
      %v11098 = vsel %vm4452, %v11066, %v10727
      %v11099 = vsel %vm4452, %v11067, %v10729
      %v11100 = vsel %vm4452, %v11068, %v10731
      %v11101 = vsel %vm4452, %v11069, %v10733
      %v11102 = vsel %vm4452, %v11070, %v10735
      %v11103 = vsel %vm4452, %v11071, %v10737
      %v11104 = vsel %vm4452, %v11072, %v10739
      %v11105 = vsel %vm4452, %v11073, %v10741
      %v11106 = vsel %vm4452, %v11074, %v10743
      %v11107 = vsel %vm4452, %v11075, %v10745
      %v11108 = vsel %vm4452, %v11076, %v10747
      %v11109 = vsel %vm4452, %v11077, %v10749
      %v11110 = vsel %vm4452, %v11078, %v10751
      %v11111 = vsel %vm4452, %v11079, %v10753
      %v11112 = vsel %vm4452, %v11080, %v10755
      %v11113 = vsel %vm4452, %v11081, %v10757
      %v11114 = vsel %vm4452, %v11082, %v10759
      %v11115 = vsel %vm4452, %v11083, %v10761
      %v11116 = vsel %vm4452, %v11084, %v10763
      %v11117 = vsel %vm4452, %v11085, %v10765
      %v11118 = vsel %vm4485, %v11086, %v10831
      %v11119 = vsel %vm4485, %v11087, %v10833
      %v11120 = vsel %vm4485, %v11088, %v10835
      %v11121 = vsel %vm4485, %v11089, %v10837
      %v11122 = vsel %vm4485, %v11090, %v10839
      %v11123 = vsel %vm4485, %v11091, %v10841
      %v11124 = vsel %vm4485, %v11092, %v10843
      %v11125 = vsel %vm4485, %v11093, %v10845
      %v11126 = vsel %vm4485, %v11094, %v10847
      %v11127 = vsel %vm4485, %v11095, %v10849
      %v11128 = vsel %vm4485, %v11096, %v10851
      %v11129 = vsel %vm4485, %v11097, %v10853
      %v11130 = vsel %vm4485, %v11098, %v10855
      %v11131 = vsel %vm4485, %v11099, %v10857
      %v11132 = vsel %vm4485, %v11100, %v10859
      %v11133 = vsel %vm4485, %v11101, %v10861
      %v11134 = vsel %vm4485, %v11102, %v10863
      %v11135 = vsel %vm4485, %v11103, %v10865
      %v11136 = vsel %vm4485, %v11104, %v10867
      %v11137 = vsel %vm4485, %v11105, %v10869
      %v11138 = vsel %vm4485, %v11106, %v10871
      %v11139 = vsel %vm4485, %v11107, %v10873
      %v11140 = vsel %vm4485, %v11108, %v10875
      %v11141 = vsel %vm4485, %v11109, %v10877
      %v11142 = vsel %vm4485, %v11110, %v10879
      %v11143 = vsel %vm4485, %v11111, %v10881
      %v11144 = vsel %vm4485, %v11112, %v10883
      %v11145 = vsel %vm4485, %v11113, %v10885
      %v11146 = vsel %vm4485, %v11114, %v10887
      %v11147 = vsel %vm4485, %v11115, %v10889
      %v11148 = vsel %vm4485, %v11116, %v10891
      %v11149 = vsel %vm4485, %v11117, %v10893
      %v11150 = vpack.c.bf16 %v11119, %v11118
      %v11151 = vpack.c.bf16 %v9999, %v9998
      %v11152 = vpack.c.bf16 %v11121, %v11120
      %v11153 = vpack.c.bf16 %v10001, %v10000
      %v11154 = vpack.c.bf16 %v11123, %v11122
      %v11155 = vpack.c.bf16 %v10003, %v10002
      %v11156 = vpack.c.bf16 %v11125, %v11124
      %v11157 = vpack.c.bf16 %v10005, %v10004
      %v11158 = vpack.c.bf16 %v11127, %v11126
      %v11159 = vpack.c.bf16 %v10007, %v10006
      %v11160 = vpack.c.bf16 %v11129, %v11128
      %v11161 = vpack.c.bf16 %v10009, %v10008
      %v11162 = vpack.c.bf16 %v11131, %v11130
      %v11163 = vpack.c.bf16 %v10011, %v10010
      %v11164 = vpack.c.bf16 %v11133, %v11132
      %v11165 = vpack.c.bf16 %v10013, %v10012
      %v11166 = vpack.c.bf16 %v11135, %v11134
      %v11167 = vpack.c.bf16 %v10015, %v10014
      %v11168 = vpack.c.bf16 %v11137, %v11136
      %v11169 = vpack.c.bf16 %v10017, %v10016
      %v11170 = vpack.c.bf16 %v11139, %v11138
      %v11171 = vpack.c.bf16 %v10019, %v10018
      %v11172 = vpack.c.bf16 %v11141, %v11140
      %v11173 = vpack.c.bf16 %v10021, %v10020
      %v11174 = vpack.c.bf16 %v11143, %v11142
      %v11175 = vpack.c.bf16 %v10023, %v10022
      %v11176 = vpack.c.bf16 %v11145, %v11144
      %v11177 = vpack.c.bf16 %v10025, %v10024
      %v11178 = vpack.c.bf16 %v11147, %v11146
      %v11179 = vpack.c.bf16 %v10027, %v10026
      %v11180 = vpack.c.bf16 %v11149, %v11148
      %v11181 = vpack.c.bf16 %v10029, %v10028
      %v11182 = vld [vmem:[%s17] sm:$0xf]
      %v11183 = vld [vmem:[%s17 + $0x4] sm:$0xf]
      %v11184 = vld [vmem:[%s17 + $0x8] sm:$0xf]
      %v11185 = vld [vmem:[%s17 + $0xc] sm:$0xf]
      %v11186 = vld [vmem:[%s17 + $0x10] sm:$0x3]
      %v11187 = vld [vmem:[%s18] sm:$0xf]
      %v11188 = vld [vmem:[%s18 + $0x4] sm:$0xf]
      %v11189 = vld [vmem:[%s18 + $0x8] sm:$0xf]
      %v11190 = vld [vmem:[%s18 + $0xc] sm:$0xf]
      %v11191 = vld [vmem:[%s18 + $0x10] sm:$0xf]
      %v11192 = vld [vmem:[%s18 + $0x14] sm:$0xf]
      %v11193 = vld [vmem:[%s18 + $0x18] sm:$0xf]
      %v11194 = vld [vmem:[%s18 + $0x1c] sm:$0xf]
      %v11195 = vld [vmem:[%s18 + $0x20] sm:$0xf]
      %v11196 = vld [vmem:[%s18 + $0x24] sm:$0xf]
      %v11197 = vld [vmem:[%s18 + $0x28] sm:$0xf]
      %v11198 = vld [vmem:[%s18 + $0x2c] sm:$0xf]
      %v11199 = vld [vmem:[%s18 + $0x30] sm:$0xf]
      %v11200 = vld [vmem:[%s18 + $0x34] sm:$0xf]
      %v11201 = vld [vmem:[%s18 + $0x38] sm:$0xf]
      %v11202 = vld [vmem:[%s18 + $0x3c] sm:$0xf]
      %v11203 = vld [vmem:[%s18 + $0x40] sm:$0xf]
      %v11204 = vld [vmem:[%s18 + $0x44] sm:$0xf]
      %v11223 = vunpack.c.l.b16 %v11187
      %v11224 = vunpack.c.l.b16 %v11188
      %v11225 = vunpack.c.l.b16 %v11189
      %v11226 = vunpack.c.l.b16 %v11190
      %v11227 = vunpack.c.l.b16 %v11191
      %v11228 = vunpack.c.l.b16 %v11192
      %v11229 = vunpack.c.l.b16 %v11193
      %v11230 = vunpack.c.l.b16 %v11194
      %v11231 = vunpack.c.l.b16 %v11195
      %v11232 = vunpack.c.l.b16 %v11196
      %v11233 = vunpack.c.l.b16 %v11197
      %v11234 = vunpack.c.l.b16 %v11198
      %v11235 = vunpack.c.l.b16 %v11199
      %v11236 = vunpack.c.l.b16 %v11200
      %v11237 = vunpack.c.l.b16 %v11201
      %v11238 = vunpack.c.l.b16 %v11202
      %v11239 = vunpack.c.l.b16 %v11203
      %v11240 = vunpack.c.l.b16 %v11204
      %v11241 = vpack.c.b16 %v11224, %v11223
      %v11242 = vpack.c.b16 %v11226, %v11225
      %v11243 = vpack.c.b16 %v11228, %v11227
      %v11244 = vpack.c.b16 %v11230, %v11229
      %v11245 = vpack.c.b16 %v11232, %v11231
      %v11246 = vpack.c.b16 %v11234, %v11233
      %v11247 = vpack.c.b16 %v11236, %v11235
      %v11248 = vpack.c.b16 %v11238, %v11237
      %v11249 = vpack.c.b16 %v11240, %v11239
      %11259 = vmatprep.subr.bf16.mxu0 0
      %11260 = vmatpush1.bf16.msra.mxu0 %v11248
      %11261 = vmatprep.subr.bf16.mxu0 0
      %11262 = vmatpush1.bf16.msra.mxu0 %v11247
      %11263 = vmatprep.subr.bf16.mxu0 0
      %11264 = vmatpush1.bf16.msra.mxu0 %v11246
      %11265 = vmatprep.subr.bf16.mxu0 0
      %11266 = vmatpush1.bf16.msra.mxu0 %v11245
      %11267 = vmatprep.subr.bf16.mxu0 0
      %11268 = vmatpush1.bf16.msra.mxu0 %v11244
      %11269 = vmatprep.subr.bf16.mxu0 0
      %11270 = vmatpush1.bf16.msra.mxu0 %v11243
      %11271 = vmatprep.subr.bf16.mxu0 0
      %11272 = vmatpush1.bf16.msra.mxu0 %v11242
      %11273 = vmatprep.subr.bf16.mxu0 0
      %11274 = vmatpush1.bf16.msra.mxu0 %v11241
      %11275 = vmatprep.subr.bf16.mxu0 0
      %11276 = vmatpush2.bf16.msra.mxu0 0
      %11277 = vmatprep.subr.bf16.mxu0 0
      %11278 = vmatpush2.bf16.msra.mxu0 0
      %11279 = vmatprep.subr.bf16.mxu0 0
      %11280 = vmatpush2.bf16.msra.mxu0 0
      %11281 = vmatprep.subr.bf16.mxu0 0
      %11282 = vmatpush2.bf16.msra.mxu0 0
      %11283 = vmatprep.subr.bf16.mxu0 0
      %11284 = vmatpush2.bf16.msra.mxu0 0
      %11285 = vmatprep.subr.bf16.mxu0 0
      %11286 = vmatpush2.bf16.msra.mxu0 0
      %11287 = vmatprep.subr.bf16.mxu0 0
      %11288 = vmatpush2.bf16.msra.mxu0 0
      %11289 = vmatprep.subr.bf16.mxu0 0
      %11290 = vmatpush2.bf16.msra.mxu0 %v11249
      %11291 = vmatprep.mubr.bf16.mxu0 %v6850
      %11292 = vmatmul.mubr.bf16.gmra.mxu0 %v6738
      %v11293 = vpop.f32.mrf.mxu0
      %v11294 = vadd.f32 0.0, %v11293
      %v11295 = vpop.f32.mrf.mxu0
      %v11296 = vpop.f32.mrf.mxu0
      %v11297 = vadd.f32 0.0, %v11296
      %v11298 = vpop.f32.mrf.mxu0
      %11299 = vmatprep.mubr.bf16.mxu0 %v6853
      %11300 = vmatmul.mubr.bf16.gmra.mxu0 %v6740
      %v11301 = vpop.f32.mrf.mxu0
      %v11302 = vadd.f32 0.0, %v11301
      %v11303 = vpop.f32.mrf.mxu0
      %v11304 = vpop.f32.mrf.mxu0
      %v11305 = vadd.f32 0.0, %v11304
      %v11306 = vpop.f32.mrf.mxu0
      %11307 = vmatprep.mubr.bf16.mxu0 %v6856
      %11308 = vmatmul.mubr.bf16.gmra.mxu0 %v6742
      %v11309 = vpop.f32.mrf.mxu0
      %v11310 = vadd.f32 0.0, %v11309
      %v11311 = vpop.f32.mrf.mxu0
      %v11312 = vpop.f32.mrf.mxu0
      %v11313 = vadd.f32 0.0, %v11312
      %v11314 = vpop.f32.mrf.mxu0
      %11315 = vmatprep.mubr.bf16.mxu0 %v6859
      %11316 = vmatmul.mubr.bf16.gmra.mxu0 %v6744
      %v11317 = vpop.f32.mrf.mxu0
      %v11318 = vadd.f32 0.0, %v11317
      %v11319 = vpop.f32.mrf.mxu0
      %v11320 = vpop.f32.mrf.mxu0
      %v11321 = vadd.f32 0.0, %v11320
      %v11322 = vpop.f32.mrf.mxu0
      %11323 = vmatprep.mubr.bf16.mxu0 %v6862
      %11324 = vmatmul.mubr.bf16.gmra.mxu0 %v6746
      %v11325 = vpop.f32.mrf.mxu0
      %v11326 = vadd.f32 0.0, %v11325
      %v11327 = vpop.f32.mrf.mxu0
      %v11328 = vpop.f32.mrf.mxu0
      %v11329 = vadd.f32 0.0, %v11328
      %v11330 = vpop.f32.mrf.mxu0
      %11331 = vmatprep.mubr.bf16.mxu0 %v6865
      %11332 = vmatmul.mubr.bf16.gmra.mxu0 %v6748
      %v11333 = vpop.f32.mrf.mxu0
      %v11334 = vadd.f32 0.0, %v11333
      %v11335 = vpop.f32.mrf.mxu0
      %v11336 = vpop.f32.mrf.mxu0
      %v11337 = vadd.f32 0.0, %v11336
      %v11338 = vpop.f32.mrf.mxu0
      %11339 = vmatprep.mubr.bf16.mxu0 %v6868
      %11340 = vmatmul.mubr.bf16.gmra.mxu0 %v6750
      %v11341 = vpop.f32.mrf.mxu0
      %v11342 = vadd.f32 0.0, %v11341
      %v11343 = vpop.f32.mrf.mxu0
      %v11344 = vpop.f32.mrf.mxu0
      %v11345 = vadd.f32 0.0, %v11344
      %v11346 = vpop.f32.mrf.mxu0
      %11347 = vmatprep.mubr.bf16.mxu0 %v6871
      %11348 = vmatmul.mubr.bf16.gmra.mxu0 %v6752
      %v11349 = vpop.f32.mrf.mxu0
      %v11350 = vadd.f32 0.0, %v11349
      %v11351 = vpop.f32.mrf.mxu0
      %v11352 = vpop.f32.mrf.mxu0
      %v11353 = vadd.f32 0.0, %v11352
      %v11354 = vpop.f32.mrf.mxu0
      %11355 = vmatprep.mubr.bf16.mxu0 %v6874
      %11356 = vmatmul.mubr.bf16.gmra.mxu0 %v6754
      %v11357 = vpop.f32.mrf.mxu0
      %v11358 = vadd.f32 0.0, %v11357
      %v11359 = vpop.f32.mrf.mxu0
      %v11360 = vpop.f32.mrf.mxu0
      %v11361 = vadd.f32 0.0, %v11360
      %v11362 = vpop.f32.mrf.mxu0
      %11363 = vmatprep.mubr.bf16.mxu0 %v6877
      %11364 = vmatmul.mubr.bf16.gmra.mxu0 %v6756
      %v11365 = vpop.f32.mrf.mxu0
      %v11366 = vadd.f32 0.0, %v11365
      %v11367 = vpop.f32.mrf.mxu0
      %v11368 = vpop.f32.mrf.mxu0
      %v11369 = vadd.f32 0.0, %v11368
      %v11370 = vpop.f32.mrf.mxu0
      %11371 = vmatprep.mubr.bf16.mxu0 %v6880
      %11372 = vmatmul.mubr.bf16.gmra.mxu0 %v6758
      %v11373 = vpop.f32.mrf.mxu0
      %v11374 = vadd.f32 0.0, %v11373
      %v11375 = vpop.f32.mrf.mxu0
      %v11376 = vpop.f32.mrf.mxu0
      %v11377 = vadd.f32 0.0, %v11376
      %v11378 = vpop.f32.mrf.mxu0
      %11379 = vmatprep.mubr.bf16.mxu0 %v6883
      %11380 = vmatmul.mubr.bf16.gmra.mxu0 %v6760
      %v11381 = vpop.f32.mrf.mxu0
      %v11382 = vadd.f32 0.0, %v11381
      %v11383 = vpop.f32.mrf.mxu0
      %v11384 = vpop.f32.mrf.mxu0
      %v11385 = vadd.f32 0.0, %v11384
      %v11386 = vpop.f32.mrf.mxu0
      %11387 = vmatprep.mubr.bf16.mxu0 %v6886
      %11388 = vmatmul.mubr.bf16.gmra.mxu0 %v6762
      %v11389 = vpop.f32.mrf.mxu0
      %v11390 = vadd.f32 0.0, %v11389
      %v11391 = vpop.f32.mrf.mxu0
      %v11392 = vpop.f32.mrf.mxu0
      %v11393 = vadd.f32 0.0, %v11392
      %v11394 = vpop.f32.mrf.mxu0
      %11395 = vmatprep.mubr.bf16.mxu0 %v6889
      %11396 = vmatmul.mubr.bf16.gmra.mxu0 %v6764
      %v11397 = vpop.f32.mrf.mxu0
      %v11398 = vadd.f32 0.0, %v11397
      %v11399 = vpop.f32.mrf.mxu0
      %v11400 = vpop.f32.mrf.mxu0
      %v11401 = vadd.f32 0.0, %v11400
      %v11402 = vpop.f32.mrf.mxu0
      %11403 = vmatprep.mubr.bf16.mxu0 %v6892
      %11404 = vmatmul.mubr.bf16.gmra.mxu0 %v6766
      %v11405 = vpop.f32.mrf.mxu0
      %v11406 = vadd.f32 0.0, %v11405
      %v11407 = vpop.f32.mrf.mxu0
      %v11408 = vpop.f32.mrf.mxu0
      %v11409 = vadd.f32 0.0, %v11408
      %v11410 = vpop.f32.mrf.mxu0
      %11411 = vmatprep.mubr.bf16.mxu0 %v6895
      %11412 = vmatmul.mubr.bf16.gmra.mxu0 %v6768
      %v11413 = vpop.f32.mrf.mxu0
      %v11414 = vadd.f32 0.0, %v11413
      %v11415 = vpop.f32.mrf.mxu0
      %v11416 = vpop.f32.mrf.mxu0
      %v11417 = vadd.f32 0.0, %v11416
      %v11418 = vpop.f32.mrf.mxu0
      %11419 = vdwg.mxu0
      %v11425 = vunpack.c.l.b16 %v11182
      %v11426 = vunpack.c.l.b16 %v11183
      %v11427 = vunpack.c.l.b16 %v11184
      %v11428 = vunpack.c.l.b16 %v11185
      %v11429 = vunpack.c.l.b16 %v11186
      %v11430 = vpack.c.b16 %v11426, %v11425
      %v11431 = vpack.c.b16 %v11428, %v11427
      %v11432 = vpack.c.b16 %v11429, %v11429
      %v11436 = vsel %vm2463, %v11432, 0
      %11438 = vmatprep.subr.bf16.mxu0 0
      %11439 = vmatpush1.bf16.msra.mxu0 0
      %11440 = vmatprep.subr.bf16.mxu0 0
      %11441 = vmatpush1.bf16.msra.mxu0 0
      %11442 = vmatprep.subr.bf16.mxu0 0
      %11443 = vmatpush1.bf16.msra.mxu0 0
      %11444 = vmatprep.subr.bf16.mxu0 0
      %11445 = vmatpush1.bf16.msra.mxu0 0
      %11446 = vmatprep.subr.bf16.mxu0 0
      %11447 = vmatpush1.bf16.msra.mxu0 0
      %11448 = vmatprep.subr.bf16.mxu0 0
      %11449 = vmatpush1.bf16.msra.mxu0 %v11436
      %11450 = vmatprep.subr.bf16.mxu0 0
      %11451 = vmatpush1.bf16.msra.mxu0 %v11431
      %11452 = vmatprep.subr.bf16.mxu0 0
      %11453 = vmatpush1.bf16.msra.mxu0 %v11430
      %11454 = vmatprep.subr.bf16.mxu0 0
      %11455 = vmatpush2.bf16.msra.mxu0 0
      %11456 = vmatprep.subr.bf16.mxu0 0
      %11457 = vmatpush2.bf16.msra.mxu0 0
      %11458 = vmatprep.subr.bf16.mxu0 0
      %11459 = vmatpush2.bf16.msra.mxu0 0
      %11460 = vmatprep.subr.bf16.mxu0 0
      %11461 = vmatpush2.bf16.msra.mxu0 0
      %11462 = vmatprep.subr.bf16.mxu0 0
      %11463 = vmatpush2.bf16.msra.mxu0 0
      %11464 = vmatprep.subr.bf16.mxu0 0
      %11465 = vmatpush2.bf16.msra.mxu0 0
      %11466 = vmatprep.subr.bf16.mxu0 0
      %11467 = vmatpush2.bf16.msra.mxu0 0
      %11468 = vmatprep.subr.bf16.mxu0 0
      %11469 = vmatpush2.bf16.msra.mxu0 0
      %11470 = vmatprep.mubr.bf16.mxu0 0
      %11471 = vmatmul.mubr.bf16.gmra.mxu0 %v2416
      %v11472 = vpop.f32.mrf.mxu0
      %v11473 = vadd.f32 %v11294, %v11472
      %v11474 = vpop.f32.mrf.mxu0
      %v11475 = vpop.f32.mrf.mxu0
      %v11476 = vadd.f32 %v11297, %v11475
      %v11477 = vpop.f32.mrf.mxu0
      %11478 = vmatprep.mubr.bf16.mxu0 0
      %11479 = vmatmul.mubr.bf16.gmra.mxu0 %v2419
      %v11480 = vpop.f32.mrf.mxu0
      %v11481 = vadd.f32 %v11302, %v11480
      %v11482 = vpop.f32.mrf.mxu0
      %v11483 = vpop.f32.mrf.mxu0
      %v11484 = vadd.f32 %v11305, %v11483
      %v11485 = vpop.f32.mrf.mxu0
      %11486 = vmatprep.mubr.bf16.mxu0 0
      %11487 = vmatmul.mubr.bf16.gmra.mxu0 %v2422
      %v11488 = vpop.f32.mrf.mxu0
      %v11489 = vadd.f32 %v11310, %v11488
      %v11490 = vpop.f32.mrf.mxu0
      %v11491 = vpop.f32.mrf.mxu0
      %v11492 = vadd.f32 %v11313, %v11491
      %v11493 = vpop.f32.mrf.mxu0
      %11494 = vmatprep.mubr.bf16.mxu0 0
      %11495 = vmatmul.mubr.bf16.gmra.mxu0 %v2425
      %v11496 = vpop.f32.mrf.mxu0
      %v11497 = vadd.f32 %v11318, %v11496
      %v11498 = vpop.f32.mrf.mxu0
      %v11499 = vpop.f32.mrf.mxu0
      %v11500 = vadd.f32 %v11321, %v11499
      %v11501 = vpop.f32.mrf.mxu0
      %11502 = vmatprep.mubr.bf16.mxu0 0
      %11503 = vmatmul.mubr.bf16.gmra.mxu0 %v2428
      %v11504 = vpop.f32.mrf.mxu0
      %v11505 = vadd.f32 %v11326, %v11504
      %v11506 = vpop.f32.mrf.mxu0
      %v11507 = vpop.f32.mrf.mxu0
      %v11508 = vadd.f32 %v11329, %v11507
      %v11509 = vpop.f32.mrf.mxu0
      %11510 = vmatprep.mubr.bf16.mxu0 0
      %11511 = vmatmul.mubr.bf16.gmra.mxu0 %v2431
      %v11512 = vpop.f32.mrf.mxu0
      %v11513 = vadd.f32 %v11334, %v11512
      %v11514 = vpop.f32.mrf.mxu0
      %v11515 = vpop.f32.mrf.mxu0
      %v11516 = vadd.f32 %v11337, %v11515
      %v11517 = vpop.f32.mrf.mxu0
      %11518 = vmatprep.mubr.bf16.mxu0 0
      %11519 = vmatmul.mubr.bf16.gmra.mxu0 %v2434
      %v11520 = vpop.f32.mrf.mxu0
      %v11521 = vadd.f32 %v11342, %v11520
      %v11522 = vpop.f32.mrf.mxu0
      %v11523 = vpop.f32.mrf.mxu0
      %v11524 = vadd.f32 %v11345, %v11523
      %v11525 = vpop.f32.mrf.mxu0
      %11526 = vmatprep.mubr.bf16.mxu0 0
      %11527 = vmatmul.mubr.bf16.gmra.mxu0 %v2437
      %v11528 = vpop.f32.mrf.mxu0
      %v11529 = vadd.f32 %v11350, %v11528
      %v11530 = vpop.f32.mrf.mxu0
      %v11531 = vpop.f32.mrf.mxu0
      %v11532 = vadd.f32 %v11353, %v11531
      %v11533 = vpop.f32.mrf.mxu0
      %11534 = vmatprep.mubr.bf16.mxu0 0
      %11535 = vmatmul.mubr.bf16.gmra.mxu0 %v2440
      %v11536 = vpop.f32.mrf.mxu0
      %v11537 = vadd.f32 %v11358, %v11536
      %v11538 = vpop.f32.mrf.mxu0
      %v11539 = vpop.f32.mrf.mxu0
      %v11540 = vadd.f32 %v11361, %v11539
      %v11541 = vpop.f32.mrf.mxu0
      %11542 = vmatprep.mubr.bf16.mxu0 0
      %11543 = vmatmul.mubr.bf16.gmra.mxu0 %v2443
      %v11544 = vpop.f32.mrf.mxu0
      %v11545 = vadd.f32 %v11366, %v11544
      %v11546 = vpop.f32.mrf.mxu0
      %v11547 = vpop.f32.mrf.mxu0
      %v11548 = vadd.f32 %v11369, %v11547
      %v11549 = vpop.f32.mrf.mxu0
      %11550 = vmatprep.mubr.bf16.mxu0 0
      %11551 = vmatmul.mubr.bf16.gmra.mxu0 %v2446
      %v11552 = vpop.f32.mrf.mxu0
      %v11553 = vadd.f32 %v11374, %v11552
      %v11554 = vpop.f32.mrf.mxu0
      %v11555 = vpop.f32.mrf.mxu0
      %v11556 = vadd.f32 %v11377, %v11555
      %v11557 = vpop.f32.mrf.mxu0
      %11558 = vmatprep.mubr.bf16.mxu0 0
      %11559 = vmatmul.mubr.bf16.gmra.mxu0 %v2449
      %v11560 = vpop.f32.mrf.mxu0
      %v11561 = vadd.f32 %v11382, %v11560
      %v11562 = vpop.f32.mrf.mxu0
      %v11563 = vpop.f32.mrf.mxu0
      %v11564 = vadd.f32 %v11385, %v11563
      %v11565 = vpop.f32.mrf.mxu0
      %11566 = vmatprep.mubr.bf16.mxu0 0
      %11567 = vmatmul.mubr.bf16.gmra.mxu0 %v2452
      %v11568 = vpop.f32.mrf.mxu0
      %v11569 = vadd.f32 %v11390, %v11568
      %v11570 = vpop.f32.mrf.mxu0
      %v11571 = vpop.f32.mrf.mxu0
      %v11572 = vadd.f32 %v11393, %v11571
      %v11573 = vpop.f32.mrf.mxu0
      %11574 = vmatprep.mubr.bf16.mxu0 0
      %11575 = vmatmul.mubr.bf16.gmra.mxu0 %v2455
      %v11576 = vpop.f32.mrf.mxu0
      %v11577 = vadd.f32 %v11398, %v11576
      %v11578 = vpop.f32.mrf.mxu0
      %v11579 = vpop.f32.mrf.mxu0
      %v11580 = vadd.f32 %v11401, %v11579
      %v11581 = vpop.f32.mrf.mxu0
      %11582 = vmatprep.mubr.bf16.mxu0 0
      %11583 = vmatmul.mubr.bf16.gmra.mxu0 %v2458
      %v11584 = vpop.f32.mrf.mxu0
      %v11585 = vadd.f32 %v11406, %v11584
      %v11586 = vpop.f32.mrf.mxu0
      %v11587 = vpop.f32.mrf.mxu0
      %v11588 = vadd.f32 %v11409, %v11587
      %v11589 = vpop.f32.mrf.mxu0
      %11590 = vmatprep.mubr.bf16.mxu0 0
      %11591 = vmatmul.mubr.bf16.gmra.mxu0 %v2461
      %v11592 = vpop.f32.mrf.mxu0
      %v11593 = vadd.f32 %v11414, %v11592
      %v11594 = vpop.f32.mrf.mxu0
      %v11595 = vpop.f32.mrf.mxu0
      %v11596 = vadd.f32 %v11417, %v11595
      %v11597 = vpop.f32.mrf.mxu0
      %11598 = vdwg.mxu0
      %v11599 = vld [vmem:[%s19] sm:$0xf]
      %v11600 = vld [vmem:[%s19 + $0x4] sm:$0xf]
      %v11601 = vld [vmem:[%s19 + $0x8] sm:$0xf]
      %v11602 = vld [vmem:[%s19 + $0xc] sm:$0xf]
      %v11603 = vld [vmem:[%s19 + $0x10] sm:$0xf]
      %v11604 = vld [vmem:[%s19 + $0x14] sm:$0xf]
      %v11605 = vld [vmem:[%s19 + $0x18] sm:$0xf]
      %v11606 = vld [vmem:[%s19 + $0x1c] sm:$0xf]
      %v11607 = vld [vmem:[%s19 + $0x20] sm:$0xf]
      %v11608 = vld [vmem:[%s19 + $0x24] sm:$0xf]
      %v11609 = vld [vmem:[%s19 + $0x28] sm:$0xf]
      %v11610 = vld [vmem:[%s19 + $0x2c] sm:$0xf]
      %v11611 = vld [vmem:[%s19 + $0x30] sm:$0xf]
      %v11612 = vld [vmem:[%s19 + $0x34] sm:$0xf]
      %v11613 = vld [vmem:[%s19 + $0x38] sm:$0xf]
      %v11614 = vld [vmem:[%s19 + $0x3c] sm:$0xf]
      %v11615 = vld [vmem:[%s19 + $0x40] sm:$0xf]
      %v11616 = vld [vmem:[%s19 + $0x44] sm:$0xf]
      %v11635 = vunpack.c.l.b16 %v11599
      %v11636 = vunpack.c.l.b16 %v11600
      %v11637 = vunpack.c.l.b16 %v11601
      %v11638 = vunpack.c.l.b16 %v11602
      %v11639 = vunpack.c.l.b16 %v11603
      %v11640 = vunpack.c.l.b16 %v11604
      %v11641 = vunpack.c.l.b16 %v11605
      %v11642 = vunpack.c.l.b16 %v11606
      %v11643 = vunpack.c.l.b16 %v11607
      %v11644 = vunpack.c.l.b16 %v11608
      %v11645 = vunpack.c.l.b16 %v11609
      %v11646 = vunpack.c.l.b16 %v11610
      %v11647 = vunpack.c.l.b16 %v11611
      %v11648 = vunpack.c.l.b16 %v11612
      %v11649 = vunpack.c.l.b16 %v11613
      %v11650 = vunpack.c.l.b16 %v11614
      %v11651 = vunpack.c.l.b16 %v11615
      %v11652 = vunpack.c.l.b16 %v11616
      %v11653 = vpack.c.b16 %v11636, %v11635
      %v11654 = vpack.c.b16 %v11638, %v11637
      %v11655 = vpack.c.b16 %v11640, %v11639
      %v11656 = vpack.c.b16 %v11642, %v11641
      %v11657 = vpack.c.b16 %v11644, %v11643
      %v11658 = vpack.c.b16 %v11646, %v11645
      %v11659 = vpack.c.b16 %v11648, %v11647
      %v11660 = vpack.c.b16 %v11650, %v11649
      %v11661 = vpack.c.b16 %v11652, %v11651
      %v11672 = vsel %vm658, %v11151, 0
      %v11675 = vsel %vm658, %v11153, 0
      %v11678 = vsel %vm658, %v11155, 0
      %v11681 = vsel %vm658, %v11157, 0
      %v11684 = vsel %vm658, %v11159, 0
      %v11687 = vsel %vm658, %v11161, 0
      %v11690 = vsel %vm658, %v11163, 0
      %v11693 = vsel %vm658, %v11165, 0
      %v11696 = vsel %vm658, %v11167, 0
      %v11699 = vsel %vm658, %v11169, 0
      %v11702 = vsel %vm658, %v11171, 0
      %v11705 = vsel %vm658, %v11173, 0
      %v11708 = vsel %vm658, %v11175, 0
      %v11711 = vsel %vm658, %v11177, 0
      %v11714 = vsel %vm658, %v11179, 0
      %v11717 = vsel %vm658, %v11181, 0
      %11719 = vmatprep.subr.bf16.mxu0 0
      %11720 = vmatpush1.bf16.msra.mxu0 %v11660
      %11721 = vmatprep.subr.bf16.mxu0 0
      %11722 = vmatpush1.bf16.msra.mxu0 %v11659
      %11723 = vmatprep.subr.bf16.mxu0 0
      %11724 = vmatpush1.bf16.msra.mxu0 %v11658
      %11725 = vmatprep.subr.bf16.mxu0 0
      %11726 = vmatpush1.bf16.msra.mxu0 %v11657
      %11727 = vmatprep.subr.bf16.mxu0 0
      %11728 = vmatpush1.bf16.msra.mxu0 %v11656
      %11729 = vmatprep.subr.bf16.mxu0 0
      %11730 = vmatpush1.bf16.msra.mxu0 %v11655
      %11731 = vmatprep.subr.bf16.mxu0 0
      %11732 = vmatpush1.bf16.msra.mxu0 %v11654
      %11733 = vmatprep.subr.bf16.mxu0 0
      %11734 = vmatpush1.bf16.msra.mxu0 %v11653
      %11735 = vmatprep.subr.bf16.mxu0 0
      %11736 = vmatpush2.bf16.msra.mxu0 0
      %11737 = vmatprep.subr.bf16.mxu0 0
      %11738 = vmatpush2.bf16.msra.mxu0 0
      %11739 = vmatprep.subr.bf16.mxu0 0
      %11740 = vmatpush2.bf16.msra.mxu0 0
      %11741 = vmatprep.subr.bf16.mxu0 0
      %11742 = vmatpush2.bf16.msra.mxu0 0
      %11743 = vmatprep.subr.bf16.mxu0 0
      %11744 = vmatpush2.bf16.msra.mxu0 0
      %11745 = vmatprep.subr.bf16.mxu0 0
      %11746 = vmatpush2.bf16.msra.mxu0 0
      %11747 = vmatprep.subr.bf16.mxu0 0
      %11748 = vmatpush2.bf16.msra.mxu0 0
      %11749 = vmatprep.subr.bf16.mxu0 0
      %11750 = vmatpush2.bf16.msra.mxu0 %v11661
      %11751 = vmatprep.mubr.bf16.mxu0 %v11672
      %11752 = vmatmul.mubr.bf16.gmra.mxu0 %v11150
      %v11753 = vpop.f32.mrf.mxu0
      %v11754 = vadd.f32 0.0, %v11753
      %v11755 = vpop.f32.mrf.mxu0
      %v11756 = vpop.f32.mrf.mxu0
      %v11757 = vadd.f32 0.0, %v11756
      %v11758 = vpop.f32.mrf.mxu0
      %11759 = vmatprep.mubr.bf16.mxu0 %v11675
      %11760 = vmatmul.mubr.bf16.gmra.mxu0 %v11152
      %v11761 = vpop.f32.mrf.mxu0
      %v11762 = vadd.f32 0.0, %v11761
      %v11763 = vpop.f32.mrf.mxu0
      %v11764 = vpop.f32.mrf.mxu0
      %v11765 = vadd.f32 0.0, %v11764
      %v11766 = vpop.f32.mrf.mxu0
      %11767 = vmatprep.mubr.bf16.mxu0 %v11678
      %11768 = vmatmul.mubr.bf16.gmra.mxu0 %v11154
      %v11769 = vpop.f32.mrf.mxu0
      %v11770 = vadd.f32 0.0, %v11769
      %v11771 = vpop.f32.mrf.mxu0
      %v11772 = vpop.f32.mrf.mxu0
      %v11773 = vadd.f32 0.0, %v11772
      %v11774 = vpop.f32.mrf.mxu0
      %11775 = vmatprep.mubr.bf16.mxu0 %v11681
      %11776 = vmatmul.mubr.bf16.gmra.mxu0 %v11156
      %v11777 = vpop.f32.mrf.mxu0
      %v11778 = vadd.f32 0.0, %v11777
      %v11779 = vpop.f32.mrf.mxu0
      %v11780 = vpop.f32.mrf.mxu0
      %v11781 = vadd.f32 0.0, %v11780
      %v11782 = vpop.f32.mrf.mxu0
      %11783 = vmatprep.mubr.bf16.mxu0 %v11684
      %11784 = vmatmul.mubr.bf16.gmra.mxu0 %v11158
      %v11785 = vpop.f32.mrf.mxu0
      %v11786 = vadd.f32 0.0, %v11785
      %v11787 = vpop.f32.mrf.mxu0
      %v11788 = vpop.f32.mrf.mxu0
      %v11789 = vadd.f32 0.0, %v11788
      %v11790 = vpop.f32.mrf.mxu0
      %11791 = vmatprep.mubr.bf16.mxu0 %v11687
      %11792 = vmatmul.mubr.bf16.gmra.mxu0 %v11160
      %v11793 = vpop.f32.mrf.mxu0
      %v11794 = vadd.f32 0.0, %v11793
      %v11795 = vpop.f32.mrf.mxu0
      %v11796 = vpop.f32.mrf.mxu0
      %v11797 = vadd.f32 0.0, %v11796
      %v11798 = vpop.f32.mrf.mxu0
      %11799 = vmatprep.mubr.bf16.mxu0 %v11690
      %11800 = vmatmul.mubr.bf16.gmra.mxu0 %v11162
      %v11801 = vpop.f32.mrf.mxu0
      %v11802 = vadd.f32 0.0, %v11801
      %v11803 = vpop.f32.mrf.mxu0
      %v11804 = vpop.f32.mrf.mxu0
      %v11805 = vadd.f32 0.0, %v11804
      %v11806 = vpop.f32.mrf.mxu0
      %11807 = vmatprep.mubr.bf16.mxu0 %v11693
      %11808 = vmatmul.mubr.bf16.gmra.mxu0 %v11164
      %v11809 = vpop.f32.mrf.mxu0
      %v11810 = vadd.f32 0.0, %v11809
      %v11811 = vpop.f32.mrf.mxu0
      %v11812 = vpop.f32.mrf.mxu0
      %v11813 = vadd.f32 0.0, %v11812
      %v11814 = vpop.f32.mrf.mxu0
      %11815 = vmatprep.mubr.bf16.mxu0 %v11696
      %11816 = vmatmul.mubr.bf16.gmra.mxu0 %v11166
      %v11817 = vpop.f32.mrf.mxu0
      %v11818 = vadd.f32 0.0, %v11817
      %v11819 = vpop.f32.mrf.mxu0
      %v11820 = vpop.f32.mrf.mxu0
      %v11821 = vadd.f32 0.0, %v11820
      %v11822 = vpop.f32.mrf.mxu0
      %11823 = vmatprep.mubr.bf16.mxu0 %v11699
      %11824 = vmatmul.mubr.bf16.gmra.mxu0 %v11168
      %v11825 = vpop.f32.mrf.mxu0
      %v11826 = vadd.f32 0.0, %v11825
      %v11827 = vpop.f32.mrf.mxu0
      %v11828 = vpop.f32.mrf.mxu0
      %v11829 = vadd.f32 0.0, %v11828
      %v11830 = vpop.f32.mrf.mxu0
      %11831 = vmatprep.mubr.bf16.mxu0 %v11702
      %11832 = vmatmul.mubr.bf16.gmra.mxu0 %v11170
      %v11833 = vpop.f32.mrf.mxu0
      %v11834 = vadd.f32 0.0, %v11833
      %v11835 = vpop.f32.mrf.mxu0
      %v11836 = vpop.f32.mrf.mxu0
      %v11837 = vadd.f32 0.0, %v11836
      %v11838 = vpop.f32.mrf.mxu0
      %11839 = vmatprep.mubr.bf16.mxu0 %v11705
      %11840 = vmatmul.mubr.bf16.gmra.mxu0 %v11172
      %v11841 = vpop.f32.mrf.mxu0
      %v11842 = vadd.f32 0.0, %v11841
      %v11843 = vpop.f32.mrf.mxu0
      %v11844 = vpop.f32.mrf.mxu0
      %v11845 = vadd.f32 0.0, %v11844
      %v11846 = vpop.f32.mrf.mxu0
      %11847 = vmatprep.mubr.bf16.mxu0 %v11708
      %11848 = vmatmul.mubr.bf16.gmra.mxu0 %v11174
      %v11849 = vpop.f32.mrf.mxu0
      %v11850 = vadd.f32 0.0, %v11849
      %v11851 = vpop.f32.mrf.mxu0
      %v11852 = vpop.f32.mrf.mxu0
      %v11853 = vadd.f32 0.0, %v11852
      %v11854 = vpop.f32.mrf.mxu0
      %11855 = vmatprep.mubr.bf16.mxu0 %v11711
      %11856 = vmatmul.mubr.bf16.gmra.mxu0 %v11176
      %v11857 = vpop.f32.mrf.mxu0
      %v11858 = vadd.f32 0.0, %v11857
      %v11859 = vpop.f32.mrf.mxu0
      %v11860 = vpop.f32.mrf.mxu0
      %v11861 = vadd.f32 0.0, %v11860
      %v11862 = vpop.f32.mrf.mxu0
      %11863 = vmatprep.mubr.bf16.mxu0 %v11714
      %11864 = vmatmul.mubr.bf16.gmra.mxu0 %v11178
      %v11865 = vpop.f32.mrf.mxu0
      %v11866 = vadd.f32 0.0, %v11865
      %v11867 = vpop.f32.mrf.mxu0
      %v11868 = vpop.f32.mrf.mxu0
      %v11869 = vadd.f32 0.0, %v11868
      %v11870 = vpop.f32.mrf.mxu0
      %11871 = vmatprep.mubr.bf16.mxu0 %v11717
      %11872 = vmatmul.mubr.bf16.gmra.mxu0 %v11180
      %v11873 = vpop.f32.mrf.mxu0
      %v11874 = vadd.f32 0.0, %v11873
      %v11875 = vpop.f32.mrf.mxu0
      %v11876 = vpop.f32.mrf.mxu0
      %v11877 = vadd.f32 0.0, %v11876
      %v11878 = vpop.f32.mrf.mxu0
      %11879 = vdwg.mxu0
      %v11880 = vadd.f32 %v11473, %v11754
      %v11881 = vadd.f32 %v11476, %v11757
      %v11882 = vadd.f32 %v11481, %v11762
      %v11883 = vadd.f32 %v11484, %v11765
      %v11884 = vadd.f32 %v11489, %v11770
      %v11885 = vadd.f32 %v11492, %v11773
      %v11886 = vadd.f32 %v11497, %v11778
      %v11887 = vadd.f32 %v11500, %v11781
      %v11888 = vadd.f32 %v11505, %v11786
      %v11889 = vadd.f32 %v11508, %v11789
      %v11890 = vadd.f32 %v11513, %v11794
      %v11891 = vadd.f32 %v11516, %v11797
      %v11892 = vadd.f32 %v11521, %v11802
      %v11893 = vadd.f32 %v11524, %v11805
      %v11894 = vadd.f32 %v11529, %v11810
      %v11895 = vadd.f32 %v11532, %v11813
      %v11896 = vadd.f32 %v11537, %v11818
      %v11897 = vadd.f32 %v11540, %v11821
      %v11898 = vadd.f32 %v11545, %v11826
      %v11899 = vadd.f32 %v11548, %v11829
      %v11900 = vadd.f32 %v11553, %v11834
      %v11901 = vadd.f32 %v11556, %v11837
      %v11902 = vadd.f32 %v11561, %v11842
      %v11903 = vadd.f32 %v11564, %v11845
      %v11904 = vadd.f32 %v11569, %v11850
      %v11905 = vadd.f32 %v11572, %v11853
      %v11906 = vadd.f32 %v11577, %v11858
      %v11907 = vadd.f32 %v11580, %v11861
      %v11908 = vadd.f32 %v11585, %v11866
      %v11909 = vadd.f32 %v11588, %v11869
      %v11910 = vadd.f32 %v11593, %v11874
      %v11911 = vadd.f32 %v11596, %v11877
      %v11912 = vld [vmem:[%s20] sm:$0x1]
      %v11914 = vlaneseq
      %v11915 = vshrl.u32 %v11914, 7
      %v11916 = vsub.s32 0, %v11915
      %v11917 = vrot.slane %v11912, %v11916
      %v11919 = vadd.f32 %v11880, %v11917
      %v11920 = vadd.f32 %v11881, %v11917
      %v11921 = vadd.f32 %v11882, %v11917
      %v11922 = vadd.f32 %v11883, %v11917
      %v11923 = vadd.f32 %v11884, %v11917
      %v11924 = vadd.f32 %v11885, %v11917
      %v11925 = vadd.f32 %v11886, %v11917
      %v11926 = vadd.f32 %v11887, %v11917
      %v11927 = vadd.f32 %v11888, %v11917
      %v11928 = vadd.f32 %v11889, %v11917
      %v11929 = vadd.f32 %v11890, %v11917
      %v11930 = vadd.f32 %v11891, %v11917
      %v11931 = vadd.f32 %v11892, %v11917
      %v11932 = vadd.f32 %v11893, %v11917
      %v11933 = vadd.f32 %v11894, %v11917
      %v11934 = vadd.f32 %v11895, %v11917
      %v11935 = vadd.f32 %v11896, %v11917
      %v11936 = vadd.f32 %v11897, %v11917
      %v11937 = vadd.f32 %v11898, %v11917
      %v11938 = vadd.f32 %v11899, %v11917
      %v11939 = vadd.f32 %v11900, %v11917
      %v11940 = vadd.f32 %v11901, %v11917
      %v11941 = vadd.f32 %v11902, %v11917
      %v11942 = vadd.f32 %v11903, %v11917
      %v11943 = vadd.f32 %v11904, %v11917
      %v11944 = vadd.f32 %v11905, %v11917
      %v11945 = vadd.f32 %v11906, %v11917
      %v11946 = vadd.f32 %v11907, %v11917
      %v11947 = vadd.f32 %v11908, %v11917
      %v11948 = vadd.f32 %v11909, %v11917
      %v11949 = vadd.f32 %v11910, %v11917
      %v11950 = vadd.f32 %v11911, %v11917
      %vm11951 = vcmp.ge.f32.partialorder %v11919, 0.0
      %vm11952 = vcmp.ge.f32.partialorder %v11920, 0.0
      %vm11953 = vcmp.ge.f32.partialorder %v11921, 0.0
      %vm11954 = vcmp.ge.f32.partialorder %v11922, 0.0
      %vm11955 = vcmp.ge.f32.partialorder %v11923, 0.0
      %vm11956 = vcmp.ge.f32.partialorder %v11924, 0.0
      %vm11957 = vcmp.ge.f32.partialorder %v11925, 0.0
      %vm11958 = vcmp.ge.f32.partialorder %v11926, 0.0
      %vm11959 = vcmp.ge.f32.partialorder %v11927, 0.0
      %vm11960 = vcmp.ge.f32.partialorder %v11928, 0.0
      %vm11961 = vcmp.ge.f32.partialorder %v11929, 0.0
      %vm11962 = vcmp.ge.f32.partialorder %v11930, 0.0
      %vm11963 = vcmp.ge.f32.partialorder %v11931, 0.0
      %vm11964 = vcmp.ge.f32.partialorder %v11932, 0.0
      %vm11965 = vcmp.ge.f32.partialorder %v11933, 0.0
      %vm11966 = vcmp.ge.f32.partialorder %v11934, 0.0
      %vm11967 = vcmp.ge.f32.partialorder %v11935, 0.0
      %vm11968 = vcmp.ge.f32.partialorder %v11936, 0.0
      %vm11969 = vcmp.ge.f32.partialorder %v11937, 0.0
      %vm11970 = vcmp.ge.f32.partialorder %v11938, 0.0
      %vm11971 = vcmp.ge.f32.partialorder %v11939, 0.0
      %vm11972 = vcmp.ge.f32.partialorder %v11940, 0.0
      %vm11973 = vcmp.ge.f32.partialorder %v11941, 0.0
      %vm11974 = vcmp.ge.f32.partialorder %v11942, 0.0
      %vm11975 = vcmp.ge.f32.partialorder %v11943, 0.0
      %vm11976 = vcmp.ge.f32.partialorder %v11944, 0.0
      %vm11977 = vcmp.ge.f32.partialorder %v11945, 0.0
      %vm11978 = vcmp.ge.f32.partialorder %v11946, 0.0
      %vm11979 = vcmp.ge.f32.partialorder %v11947, 0.0
      %vm11980 = vcmp.ge.f32.partialorder %v11948, 0.0
      %vm11981 = vcmp.ge.f32.partialorder %v11949, 0.0
      %vm11982 = vcmp.ge.f32.partialorder %v11950, 0.0
      %v11983 = vmul.f32 %v11919, 0.2
      %v11984 = vmul.f32 %v11920, 0.2
      %v11985 = vmul.f32 %v11921, 0.2
      %v11986 = vmul.f32 %v11922, 0.2
      %v11987 = vmul.f32 %v11923, 0.2
      %v11988 = vmul.f32 %v11924, 0.2
      %v11989 = vmul.f32 %v11925, 0.2
      %v11990 = vmul.f32 %v11926, 0.2
      %v11991 = vmul.f32 %v11927, 0.2
      %v11992 = vmul.f32 %v11928, 0.2
      %v11993 = vmul.f32 %v11929, 0.2
      %v11994 = vmul.f32 %v11930, 0.2
      %v11995 = vmul.f32 %v11931, 0.2
      %v11996 = vmul.f32 %v11932, 0.2
      %v11997 = vmul.f32 %v11933, 0.2
      %v11998 = vmul.f32 %v11934, 0.2
      %v11999 = vmul.f32 %v11935, 0.2
      %v12000 = vmul.f32 %v11936, 0.2
      %v12001 = vmul.f32 %v11937, 0.2
      %v12002 = vmul.f32 %v11938, 0.2
      %v12003 = vmul.f32 %v11939, 0.2
      %v12004 = vmul.f32 %v11940, 0.2
      %v12005 = vmul.f32 %v11941, 0.2
      %v12006 = vmul.f32 %v11942, 0.2
      %v12007 = vmul.f32 %v11943, 0.2
      %v12008 = vmul.f32 %v11944, 0.2
      %v12009 = vmul.f32 %v11945, 0.2
      %v12010 = vmul.f32 %v11946, 0.2
      %v12011 = vmul.f32 %v11947, 0.2
      %v12012 = vmul.f32 %v11948, 0.2
      %v12013 = vmul.f32 %v11949, 0.2
      %v12014 = vmul.f32 %v11950, 0.2
      %v12015 = vsel %vm11951, %v11919, %v11983
      %v12016 = vsel %vm11952, %v11920, %v11984
      %v12017 = vsel %vm11953, %v11921, %v11985
      %v12018 = vsel %vm11954, %v11922, %v11986
      %v12019 = vsel %vm11955, %v11923, %v11987
      %v12020 = vsel %vm11956, %v11924, %v11988
      %v12021 = vsel %vm11957, %v11925, %v11989
      %v12022 = vsel %vm11958, %v11926, %v11990
      %v12023 = vsel %vm11959, %v11927, %v11991
      %v12024 = vsel %vm11960, %v11928, %v11992
      %v12025 = vsel %vm11961, %v11929, %v11993
      %v12026 = vsel %vm11962, %v11930, %v11994
      %v12027 = vsel %vm11963, %v11931, %v11995
      %v12028 = vsel %vm11964, %v11932, %v11996
      %v12029 = vsel %vm11965, %v11933, %v11997
      %v12030 = vsel %vm11966, %v11934, %v11998
      %v12031 = vsel %vm11967, %v11935, %v11999
      %v12032 = vsel %vm11968, %v11936, %v12000
      %v12033 = vsel %vm11969, %v11937, %v12001
      %v12034 = vsel %vm11970, %v11938, %v12002
      %v12035 = vsel %vm11971, %v11939, %v12003
      %v12036 = vsel %vm11972, %v11940, %v12004
      %v12037 = vsel %vm11973, %v11941, %v12005
      %v12038 = vsel %vm11974, %v11942, %v12006
      %v12039 = vsel %vm11975, %v11943, %v12007
      %v12040 = vsel %vm11976, %v11944, %v12008
      %v12041 = vsel %vm11977, %v11945, %v12009
      %v12042 = vsel %vm11978, %v11946, %v12010
      %v12043 = vsel %vm11979, %v11947, %v12011
      %v12044 = vsel %vm11980, %v11948, %v12012
      %v12045 = vsel %vm11981, %v11949, %v12013
      %v12046 = vsel %vm11982, %v11950, %v12014
      %12047 = vst.msk [vmem:[%s656] sm:$0xff] %vm763, %v12015
      %12048 = vst.msk [vmem:[%s656 + $0x8] sm:$0xff] %vm763, %v12016
      %12049 = vst.msk [vmem:[%s656 + $0x10] sm:$0xff] %vm763, %v12017
      %12050 = vst.msk [vmem:[%s656 + $0x18] sm:$0xff] %vm763, %v12018
      %12051 = vst.msk [vmem:[%s656 + $0x20] sm:$0xff] %vm763, %v12019
      %12052 = vst.msk [vmem:[%s656 + $0x28] sm:$0xff] %vm763, %v12020
      %12053 = vst.msk [vmem:[%s656 + $0x30] sm:$0xff] %vm763, %v12021
      %12054 = vst.msk [vmem:[%s656 + $0x38] sm:$0xff] %vm763, %v12022
      %12055 = vst.msk [vmem:[%s656 + $0x40] sm:$0xff] %vm763, %v12023
      %12056 = vst.msk [vmem:[%s656 + $0x48] sm:$0xff] %vm763, %v12024
      %12057 = vst.msk [vmem:[%s656 + $0x50] sm:$0xff] %vm763, %v12025
      %12058 = vst.msk [vmem:[%s656 + $0x58] sm:$0xff] %vm763, %v12026
      %12059 = vst.msk [vmem:[%s656 + $0x60] sm:$0xff] %vm763, %v12027
      %12060 = vst.msk [vmem:[%s656 + $0x68] sm:$0xff] %vm763, %v12028
      %12061 = vst.msk [vmem:[%s656 + $0x70] sm:$0xff] %vm763, %v12029
      %12062 = vst.msk [vmem:[%s656 + $0x78] sm:$0xff] %vm763, %v12030
      %12063 = vst.msk [vmem:[%s656 + $0x80] sm:$0xff] %vm763, %v12031
      %12064 = vst.msk [vmem:[%s656 + $0x88] sm:$0xff] %vm763, %v12032
      %12065 = vst.msk [vmem:[%s656 + $0x90] sm:$0xff] %vm763, %v12033
      %12066 = vst.msk [vmem:[%s656 + $0x98] sm:$0xff] %vm763, %v12034
      %12067 = vst.msk [vmem:[%s656 + $0xa0] sm:$0xff] %vm763, %v12035
      %12068 = vst.msk [vmem:[%s656 + $0xa8] sm:$0xff] %vm763, %v12036
      %12069 = vst.msk [vmem:[%s656 + $0xb0] sm:$0xff] %vm763, %v12037
      %12070 = vst.msk [vmem:[%s656 + $0xb8] sm:$0xff] %vm763, %v12038
      %12071 = vst.msk [vmem:[%s656 + $0xc0] sm:$0xff] %vm763, %v12039
      %12072 = vst.msk [vmem:[%s656 + $0xc8] sm:$0xff] %vm763, %v12040
      %12073 = vst.msk [vmem:[%s656 + $0xd0] sm:$0xff] %vm763, %v12041
      %12074 = vst.msk [vmem:[%s656 + $0xd8] sm:$0xff] %vm763, %v12042
      %12075 = vst.msk [vmem:[%s656 + $0xe0] sm:$0xff] %vm763, %v12043
      %12076 = vst.msk [vmem:[%s656 + $0xe8] sm:$0xff] %vm763, %v12044
      %12077 = vst.msk [vmem:[%s656 + $0xf0] sm:$0xff] %vm763, %v12045
      %12078 = vst.msk [vmem:[%s656 + $0xf8] sm:$0xff] %vm763, %v12046
      %p12079 = scmp.lt.s32.totalorder %s32, 1
      %s12080 = scalar_select %p12079, %s32, 1
      %s12081 = smul.addr %s12080, 32
      %s12082 = smul.addr %s12081, 8
      %s12083 = scalar_lea.vmem %s21, %s12082
      // Predicated region
      $region105: #{dense_block.1} parent=103 // pred_check
        %p12084 = pneg %p496
      $region106: #{dense_block.1} parent=103 // pred_check_branch
        %12086 = sbr.rel (%p12084) target = $region108
      $region107: #{dense_block.1} parent=103 // pred_region
        _
      $region108: #{dense_block.1} parent=103 // pred_fallthru
        _
    $region104: #{dense_block.1} parent=5 // pred_fallthru
      _
    %p12087 = scmp.le.s32.totalorder 2, %s27
    // Predicated region
    $region109: #{dense_block.1} parent=5 // pred_check
      %p12088 = pneg %p12087
    $region110: #{dense_block.1} parent=5 // pred_check_branch
      %12090 = sbr.rel (%p12088) target = $region112
    $region111: #{dense_block.1} parent=5 // pred_region
      %s12091 = ssub.s32 %s27, 2
      // Predicated region
      $region113: #{dense_block.1} parent=111 // pred_check
        %p12092 = pneg %p502
      $region114: #{dense_block.1} parent=111 // pred_check_branch
        %12094 = sbr.rel (%p12092) target = $region116
      $region115: #{dense_block.1} parent=111 // pred_region
        %p12095 = scmp.lt.s32.totalorder %s33, 1
        %s12096 = scalar_select %p12095, %s33, 1
        %s12097 = smul.addr %s12096, 32
        %s12098 = smul.addr %s12097, 8
        %s12099 = scalar_lea.vmem %s21, %s12098
      $region116: #{dense_block.1} parent=111 // pred_fallthru
        _
    $region112: #{dense_block.1} parent=5 // pred_fallthru
      _
  $region6: #{dense_block.1} parent=0 // loop_footer
    %s31 = sadd.s32 1, %s27
  $region7: #{dense_block.1} parent=0 // loop_footer_branch
    %26 = sbr.rel target = $region3
  $region8: #{dense_block.1} parent=0 // loop_exit
    _

</llo_original>
